<compile_context>
chip_gen: v6e
topology: v6e:2x2x1
jax: 0.10.0
libtpu: 0.0.40
codegen_flags: <defaults>
</compile_context>

<pallas_src>
import math

import jax
import jax.numpy as jnp
from jax.experimental import pallas as pl
from jax.experimental.pallas import tpu as pltpu

EPS = 1e-5
LANES = 128


def _round_up(x, m):
    return ((x + m - 1) // m) * m


# ---------------------------------------------------------------------------
# Fused kernel: im2col -> one MXU matmul -> training-mode BatchNorm -> ReLU.
# ---------------------------------------------------------------------------
def _make_rcl_kernel(n_streams):
    """refs = (*x_pad_refs, w_ref, gb_ref, o_ref, opad_ref, col_ref)

    x_pad_refs : n_streams x (N, H+2, W+2, Cp) bf16, zero spatial halo
    w_ref      : (n_streams*9*Cp, Cp) bf16, flattened channel-padded HWIO taps
    gb_ref     : (2, Cp) f32, row 0 = gamma, row 1 = beta
    o_ref      : (N, H, W, Cp) f32, BN+ReLU output (lane-dense channels)
    opad_ref   : (N, H+2, W+2, Cp) bf16, same output pre-padded for next step
    col_ref    : (N*H*W, n_streams*9*Cp) bf16 im2col scratch
    """

    def kernel(*refs):
        x_refs = refs[:n_streams]
        w_ref, gb_ref, o_ref, opad_ref, col_ref = refs[n_streams:]

        N, Hp, Wp, Cp = x_refs[0].shape
        H, W = Hp - 2, Wp - 2
        M = N * H * W
        Cout = o_ref.shape[-1]

        # --- im2col: one repack pass per tap; column stores are 128-lane
        #     aligned because Cp is a multiple of 128.
        for s, xr in enumerate(x_refs):
            for dh in range(3):
                for dw in range(3):
                    t = s * 9 + dh * 3 + dw
                    col_ref[:, t * Cp:(t + 1) * Cp] = (
                        xr[:, dh:dh + H, dw:dw + W, :].reshape(M, Cp))

        # --- single deep-K matmul (bf16 x bf16 -> f32 accumulator, registers).
        z = jnp.dot(col_ref[...], w_ref[...],
                    preferred_element_type=jnp.float32)          # (M, Cout)

        # --- training-mode BatchNorm stats from the live accumulator (XLU).
        inv_m = 1.0 / M
        mean = jnp.sum(z, axis=0, keepdims=True) * inv_m
        var = jnp.sum(z * z, axis=0, keepdims=True) * inv_m - mean * mean
        var = jnp.maximum(var, 0.0)               # one-pass formula cancellation guard
        gamma = gb_ref[0:1, :]
        beta = gb_ref[1:2, :]
        y = (z - mean) * jax.lax.rsqrt(var + EPS) * gamma + beta
        y = jnp.maximum(y, 0.0)                   # fused ReLU (free VPU epilogue)

        o_ref[...] = y.reshape(N, H, W, Cout)
        # Pre-padded bf16 copy for the next step's recurrent input.
        opad_ref[...] = jnp.zeros_like(opad_ref)
        opad_ref[:, 1:1 + H, 1:1 + W, :] = (
            y.astype(opad_ref.dtype).reshape(N, H, W, Cout))

    return kernel


def _full_spec(shape):
    nd = len(shape)
    return pl.BlockSpec(shape, lambda i, nd=nd: (0,) * nd)


def _rcl_call(x_streams, w_flat, gb):
    n_streams = len(x_streams)
    N, Hp, Wp, Cp = x_streams[0].shape
    H, W = Hp - 2, Wp - 2
    M = N * H * W
    K = n_streams * 9 * Cp
    Cout = w_flat.shape[-1]

    out_shapes = (jax.ShapeDtypeStruct((N, H, W, Cout), jnp.float32),
                  jax.ShapeDtypeStruct((N, Hp, Wp, Cout), jnp.bfloat16))

    # VMEM budget: double-buffered ins/outs + im2col scratch + headroom.
    io_bytes = (sum(s.size * s.dtype.itemsize for s in x_streams)
                + w_flat.size * w_flat.dtype.itemsize
                + gb.size * gb.dtype.itemsize
                + N * H * W * Cout * 4 + N * Hp * Wp * Cout * 2)
    vmem_limit = int(min(2 * io_bytes + M * K * 2 + (8 << 20), 48 << 20))

    return pl.pallas_call(
        _make_rcl_kernel(n_streams),
        out_shape=out_shapes,
        grid=(1,),  # BN stats span the whole batch; all buffers VMEM-resident.
        in_specs=[_full_spec(s.shape) for s in x_streams]
                + [_full_spec(w_flat.shape), _full_spec(gb.shape)],
        out_specs=(_full_spec((N, H, W, Cout)),
                   _full_spec((N, Hp, Wp, Cout))),
        scratch_shapes=[pltpu.VMEM((M, K), jnp.bfloat16)],
        compiler_params=pltpu.CompilerParams(
            dimension_semantics=("arbitrary",),
            vmem_limit_bytes=vmem_limit),
    )(*x_streams, w_flat, gb)


# ---------------------------------------------------------------------------
# jitted per-step wrappers (transpose / pad / channel-pad fuse into one exec).
# ---------------------------------------------------------------------------
def _to_padded_nhwc(x_nchw, cp):
    """NCHW -> bf16 NHWC with 1px zero spatial halo and channels padded to cp."""
    c = x_nchw.shape[1]
    x = jnp.transpose(x_nchw, (0, 2, 3, 1)).astype(jnp.bfloat16)
    return jnp.pad(x, ((0, 0), (1, 1), (1, 1), (0, cp - c)))


@jax.jit
def _step_first(x_nchw, w1_flat, gb):
    c = x_nchw.shape[1]
    cp = gb.shape[-1]
    xp = _to_padded_nhwc(x_nchw, cp)
    out, out_pad = _rcl_call([xp], w1_flat, gb)
    return jnp.transpose(out[..., :c], (0, 3, 1, 2)), out_pad


@jax.jit
def _step_recurrent(x_nchw, last_pad, w2_flat, gb):
    c = x_nchw.shape[1]
    cp = gb.shape[-1]
    xp = _to_padded_nhwc(x_nchw, cp)
    # stream 0 = lastresult (conv weights), stream 1 = x (shortcut weights)
    out, out_pad = _rcl_call([last_pad, xp], w2_flat, gb)
    return jnp.transpose(out[..., :c], (0, 3, 1, 2)), out_pad


# ---------------------------------------------------------------------------
# Stateful module mirroring the PyTorch class (self.i / self.lastresult).
# ---------------------------------------------------------------------------
class SpikingRCL2:
    def __init__(self, inplanes, steps=4, key=None):
        if key is None:
            key = jax.random.PRNGKey(0)
        k_conv, k_short = jax.random.split(key)
        n = 3 * 3 * inplanes                        # kernel_size^2 * out_channels
        std = math.sqrt(2.0 / n)
        self.inplanes = inplanes
        self.steps = steps
        self.cp = max(LANES, _round_up(inplanes, LANES))   # lane-dense channels

        # f32 HWIO master weights (also used by the reference check).
        self.w_conv = std * jax.random.normal(
            k_conv, (3, 3, inplanes, inplanes), jnp.float32)
        wc_p = jnp.zeros((3, 3, self.cp, self.cp), jnp.float32
                         ).at[:, :, :inplanes, :inplanes].set(self.w_conv)
        # Flattened, channel-padded, bf16 weights for the kernel matmul.
        self.w1_flat = wc_p.reshape(9 * self.cp, self.cp).astype(jnp.bfloat16)

        if steps > 1:
            self.w_shortcut = std * jax.random.normal(
                k_short, (3, 3, inplanes, inplanes), jnp.float32)
            ws_p = jnp.zeros((3, 3, self.cp, self.cp), jnp.float32
                             ).at[:, :, :inplanes, :inplanes].set(self.w_shortcut)
            # Fused weight for the 2-stream step: [conv(last) | shortcut(x)].
            self.w2_flat = jnp.stack([wc_p, ws_p], axis=0
                                     ).reshape(18 * self.cp, self.cp
                                               ).astype(jnp.bfloat16)

        # Per-step BN affine params (gamma=1, beta=0 as in the torch init).
        self.bn_gb = jnp.stack(
            [jnp.ones((steps, self.cp), jnp.float32),
             jnp.zeros((steps, self.cp), jnp.float32)], axis=1)  # (steps, 2, Cp)

        self.i = 0
        self.lastresult = None      # padded bf16 NHWC, produced by the kernel

    def forward(self, x_nchw):
        gb = self.bn_gb[self.i]
        if self.i == 0:
            y, last_pad = _step_first(x_nchw, self.w1_flat, gb)
        else:
            y, last_pad = _step_recurrent(x_nchw, self.lastresult,
                                          self.w2_flat, gb)
        self.lastresult = last_pad                  # already padded for reuse
        self.i += 1
        return y                                    # NCHW f32, like PyTorch

    def n_reset(self):
        self.i = 0
        self.lastresult = None


# ---------------------------------------------------------------------------
# Pure-JAX f32 reference (training-mode BN) for a correctness cross-check.
# ---------------------------------------------------------------------------
def _ref_conv(x_nhwc, w_hwio):
    return jax.lax.conv_general_dilated(
        x_nhwc, w_hwio, window_strides=(1, 1), padding="SAME",
        dimension_numbers=("NHWC", "HWIO", "NHWC"),
        precision=jax.lax.Precision.HIGHEST)


def _ref_bn_relu(z):
    mean = jnp.mean(z, axis=(0, 1, 2), keepdims=True)
    var = jnp.mean((z - mean) ** 2, axis=(0, 1, 2), keepdims=True)
    return jnp.maximum((z - mean) * jax.lax.rsqrt(var + EPS), 0.0)


if __name__ == "__main__":
    key = jax.random.PRNGKey(0)
    k_param, k_x1, k_x2, k_x3 = jax.random.split(key, 4)

    N, C, H, W = 2, 4, 16, 16
    model = SpikingRCL2(inplanes=C, steps=4, key=k_param)

    x1 = jax.random.normal(k_x1, (N, C, H, W), jnp.float32)
    x2 = jax.random.normal(k_x2, (N, C, H, W), jnp.float32)
    x3 = jax.random.normal(k_x3, (N, C, H, W), jnp.float32)

    y1 = model.forward(x1)       # step 0: relu(bn0(conv(x1)))
    y2 = model.forward(x2)       # step 1: relu(bn1(conv(y1) + shortcut(x2)))
    y3 = model.forward(x3)       # step 2: relu(bn2(conv(y2) + shortcut(x3)))
    jax.block_until_ready((y1, y2, y3))

    # Reference recurrence in plain JAX (all f32).
    x1n = jnp.transpose(x1, (0, 2, 3, 1))
    x2n = jnp.transpose(x2, (0, 2, 3, 1))
    x3n = jnp.transpose(x3, (0, 2, 3, 1))
    r1 = _ref_bn_relu(_ref_conv(x1n, model.w_conv))
    r2 = _ref_bn_relu(_ref_conv(r1, model.w_conv)
                      + _ref_conv(x2n, model.w_shortcut))
    r3 = _ref_bn_relu(_ref_conv(r2, model.w_conv)
                      + _ref_conv(x3n, model.w_shortcut))
    refs = [jnp.transpose(r, (0, 3, 1, 2)) for r in (r1, r2, r3)]

    errs = [float(jnp.max(jnp.abs(y - r))) for y, r in zip((y1, y2, y3), refs)]

    for y in (y1, y2, y3):
        assert y.shape == (N, C, H, W)
        assert bool(jnp.all(y >= 0)) and bool(jnp.all(jnp.isfinite(y)))
    # bf16 matmul operands with f32 accumulation: ~1e-2 level deviation max.
    assert all(e < 1e-1 for e in errs), errs
    print("KERNEL_OK")
</pallas_src>

<mosaic_0001>
module attributes {stable_mosaic.version = 11 : i64} {
  func.func @kernel(%arg0: i32, %arg1: memref<2x18x18x128xbf16, #tpu.memory_space<vmem>>, %arg2: memref<1152x128xbf16, #tpu.memory_space<vmem>>, %arg3: memref<2x128xf32, #tpu.memory_space<vmem>>, %arg4: memref<2x16x16x128xf32, #tpu.memory_space<vmem>>, %arg5: memref<2x18x18x128xbf16, #tpu.memory_space<vmem>>, %arg6: memref<512x1152xbf16, #tpu.memory_space<vmem>>) attributes {dimension_semantics = [#tpu.dimension_semantics<arbitrary>], iteration_bounds = array<i64: 1>, scalar_prefetch = 0 : i64, scratch_operands = 1 : i64, tpu.core_type = #tpu.core_type<tc>, window_params = [{pipeline_mode = #tpu.pipeline_mode<synchronous>, transform_indices = @transform_0, window_bounds = array<i64: 2, 18, 18, 128>}, {pipeline_mode = #tpu.pipeline_mode<synchronous>, transform_indices = @transform_1, window_bounds = array<i64: 1152, 128>}, {pipeline_mode = #tpu.pipeline_mode<synchronous>, transform_indices = @transform_2, window_bounds = array<i64: 2, 128>}, {pipeline_mode = #tpu.pipeline_mode<synchronous>, transform_indices = @transform_3, window_bounds = array<i64: 2, 16, 16, 128>}, {pipeline_mode = #tpu.pipeline_mode<synchronous>, transform_indices = @transform_4, window_bounds = array<i64: 2, 18, 18, 128>}]} {
    %c0 = arith.constant 0 : index
    %c0_0 = arith.constant 0 : index
    %c0_1 = arith.constant 0 : index
    %c0_2 = arith.constant 0 : index
    %0 = vector.load %arg1[%c0, %c0_0, %c0_1, %c0_2] : memref<2x18x18x128xbf16, #tpu.memory_space<vmem>>, vector<2x16x16x128xbf16>
    %1 = vector.shape_cast %0 : vector<2x16x16x128xbf16> to vector<512x128xbf16>
    %c0_3 = arith.constant 0 : index
    %c0_4 = arith.constant 0 : index
    %2 = vector.load %arg6[%c0_3, %c0_4] : memref<512x1152xbf16, #tpu.memory_space<vmem>>, vector<512x128xbf16>
    tpu.vector_store %arg6[%c0_3, %c0_4], %1 {strides = array<i32>} : memref<512x1152xbf16, #tpu.memory_space<vmem>>, vector<512x128xbf16>,
    %c0_5 = arith.constant 0 : index
    %c0_6 = arith.constant 0 : index
    %c1 = arith.constant 1 : index
    %c0_7 = arith.constant 0 : index
    %3 = vector.load %arg1[%c0_5, %c0_6, %c1, %c0_7] : memref<2x18x18x128xbf16, #tpu.memory_space<vmem>>, vector<2x16x16x128xbf16>
    %4 = vector.shape_cast %3 : vector<2x16x16x128xbf16> to vector<512x128xbf16>
    %c0_8 = arith.constant 0 : index
    %c128 = arith.constant 128 : index
    %5 = vector.load %arg6[%c0_8, %c128] : memref<512x1152xbf16, #tpu.memory_space<vmem>>, vector<512x128xbf16>
    tpu.vector_store %arg6[%c0_8, %c128], %4 {strides = array<i32>} : memref<512x1152xbf16, #tpu.memory_space<vmem>>, vector<512x128xbf16>,
    %c0_9 = arith.constant 0 : index
    %c0_10 = arith.constant 0 : index
    %c2 = arith.constant 2 : index
    %c0_11 = arith.constant 0 : index
    %6 = vector.load %arg1[%c0_9, %c0_10, %c2, %c0_11] : memref<2x18x18x128xbf16, #tpu.memory_space<vmem>>, vector<2x16x16x128xbf16>
    %7 = vector.shape_cast %6 : vector<2x16x16x128xbf16> to vector<512x128xbf16>
    %c0_12 = arith.constant 0 : index
    %c256 = arith.constant 256 : index
    %8 = vector.load %arg6[%c0_12, %c256] : memref<512x1152xbf16, #tpu.memory_space<vmem>>, vector<512x128xbf16>
    tpu.vector_store %arg6[%c0_12, %c256], %7 {strides = array<i32>} : memref<512x1152xbf16, #tpu.memory_space<vmem>>, vector<512x128xbf16>,
    %c0_13 = arith.constant 0 : index
    %c1_14 = arith.constant 1 : index
    %c0_15 = arith.constant 0 : index
    %c0_16 = arith.constant 0 : index
    %9 = vector.load %arg1[%c0_13, %c1_14, %c0_15, %c0_16] : memref<2x18x18x128xbf16, #tpu.memory_space<vmem>>, vector<2x16x16x128xbf16>
    %10 = vector.shape_cast %9 : vector<2x16x16x128xbf16> to vector<512x128xbf16>
    %c0_17 = arith.constant 0 : index
    %c384 = arith.constant 384 : index
    %11 = vector.load %arg6[%c0_17, %c384] : memref<512x1152xbf16, #tpu.memory_space<vmem>>, vector<512x128xbf16>
    tpu.vector_store %arg6[%c0_17, %c384], %10 {strides = array<i32>} : memref<512x1152xbf16, #tpu.memory_space<vmem>>, vector<512x128xbf16>,
    %c0_18 = arith.constant 0 : index
    %c1_19 = arith.constant 1 : index
    %c1_20 = arith.constant 1 : index
    %c0_21 = arith.constant 0 : index
    %12 = vector.load %arg1[%c0_18, %c1_19, %c1_20, %c0_21] : memref<2x18x18x128xbf16, #tpu.memory_space<vmem>>, vector<2x16x16x128xbf16>
    %13 = vector.shape_cast %12 : vector<2x16x16x128xbf16> to vector<512x128xbf16>
    %c0_22 = arith.constant 0 : index
    %c512 = arith.constant 512 : index
    %14 = vector.load %arg6[%c0_22, %c512] : memref<512x1152xbf16, #tpu.memory_space<vmem>>, vector<512x128xbf16>
    tpu.vector_store %arg6[%c0_22, %c512], %13 {strides = array<i32>} : memref<512x1152xbf16, #tpu.memory_space<vmem>>, vector<512x128xbf16>,
    %c0_23 = arith.constant 0 : index
    %c1_24 = arith.constant 1 : index
    %c2_25 = arith.constant 2 : index
    %c0_26 = arith.constant 0 : index
    %15 = vector.load %arg1[%c0_23, %c1_24, %c2_25, %c0_26] : memref<2x18x18x128xbf16, #tpu.memory_space<vmem>>, vector<2x16x16x128xbf16>
    %16 = vector.shape_cast %15 : vector<2x16x16x128xbf16> to vector<512x128xbf16>
    %c0_27 = arith.constant 0 : index
    %c640 = arith.constant 640 : index
    %17 = vector.load %arg6[%c0_27, %c640] : memref<512x1152xbf16, #tpu.memory_space<vmem>>, vector<512x128xbf16>
    tpu.vector_store %arg6[%c0_27, %c640], %16 {strides = array<i32>} : memref<512x1152xbf16, #tpu.memory_space<vmem>>, vector<512x128xbf16>,
    %c0_28 = arith.constant 0 : index
    %c2_29 = arith.constant 2 : index
    %c0_30 = arith.constant 0 : index
    %c0_31 = arith.constant 0 : index
    %18 = vector.load %arg1[%c0_28, %c2_29, %c0_30, %c0_31] : memref<2x18x18x128xbf16, #tpu.memory_space<vmem>>, vector<2x16x16x128xbf16>
    %19 = vector.shape_cast %18 : vector<2x16x16x128xbf16> to vector<512x128xbf16>
    %c0_32 = arith.constant 0 : index
    %c768 = arith.constant 768 : index
    %20 = vector.load %arg6[%c0_32, %c768] : memref<512x1152xbf16, #tpu.memory_space<vmem>>, vector<512x128xbf16>
    tpu.vector_store %arg6[%c0_32, %c768], %19 {strides = array<i32>} : memref<512x1152xbf16, #tpu.memory_space<vmem>>, vector<512x128xbf16>,
    %c0_33 = arith.constant 0 : index
    %c2_34 = arith.constant 2 : index
    %c1_35 = arith.constant 1 : index
    %c0_36 = arith.constant 0 : index
    %21 = vector.load %arg1[%c0_33, %c2_34, %c1_35, %c0_36] : memref<2x18x18x128xbf16, #tpu.memory_space<vmem>>, vector<2x16x16x128xbf16>
    %22 = vector.shape_cast %21 : vector<2x16x16x128xbf16> to vector<512x128xbf16>
    %c0_37 = arith.constant 0 : index
    %c896 = arith.constant 896 : index
    %23 = vector.load %arg6[%c0_37, %c896] : memref<512x1152xbf16, #tpu.memory_space<vmem>>, vector<512x128xbf16>
    tpu.vector_store %arg6[%c0_37, %c896], %22 {strides = array<i32>} : memref<512x1152xbf16, #tpu.memory_space<vmem>>, vector<512x128xbf16>,
    %c0_38 = arith.constant 0 : index
    %c2_39 = arith.constant 2 : index
    %c2_40 = arith.constant 2 : index
    %c0_41 = arith.constant 0 : index
    %24 = vector.load %arg1[%c0_38, %c2_39, %c2_40, %c0_41] : memref<2x18x18x128xbf16, #tpu.memory_space<vmem>>, vector<2x16x16x128xbf16>
    %25 = vector.shape_cast %24 : vector<2x16x16x128xbf16> to vector<512x128xbf16>
    %c0_42 = arith.constant 0 : index
    %c1024 = arith.constant 1024 : index
    %26 = vector.load %arg6[%c0_42, %c1024] : memref<512x1152xbf16, #tpu.memory_space<vmem>>, vector<512x128xbf16>
    tpu.vector_store %arg6[%c0_42, %c1024], %25 {strides = array<i32>} : memref<512x1152xbf16, #tpu.memory_space<vmem>>, vector<512x128xbf16>,
    %c0_43 = arith.constant 0 : index
    %c0_44 = arith.constant 0 : index
    %27 = vector.load %arg6[%c0_43, %c0_44] : memref<512x1152xbf16, #tpu.memory_space<vmem>>, vector<512x1152xbf16>
    %c0_45 = arith.constant 0 : index
    %c0_46 = arith.constant 0 : index
    %28 = vector.load %arg2[%c0_45, %c0_46] : memref<1152x128xbf16, #tpu.memory_space<vmem>>, vector<1152x128xbf16>
    %cst = arith.constant dense<0.000000e+00> : vector<512x128xf32>
    %29 = tpu.matmul %27, %28, %cst {dimension_numbers = #tpu.dot_dimension_numbers<[1], [0], [0], [1], [0, 0, 1, 1], [], []>} : vector<512x1152xbf16>, vector<1152x128xbf16>, vector<512x128xf32> -> vector<512x128xf32>
    %cst_47 = arith.constant dense<0.000000e+00> : vector<128xf32>
    %30 = vector.multi_reduction <add>, %29, %cst_47 [0] : vector<512x128xf32> to vector<128xf32>
    %31 = vector.shape_cast %30 : vector<128xf32> to vector<1x128xf32>
    %cst_48 = arith.constant 0.001953125 : f32
    %32 = vector.broadcast %cst_48 : f32 to vector<1x128xf32>
    %33 = arith.mulf %31, %32 : vector<1x128xf32>
    %34 = arith.mulf %29, %29 : vector<512x128xf32>
    %cst_49 = arith.constant dense<0.000000e+00> : vector<128xf32>
    %35 = vector.multi_reduction <add>, %34, %cst_49 [0] : vector<512x128xf32> to vector<128xf32>
    %36 = vector.shape_cast %35 : vector<128xf32> to vector<1x128xf32>
    %cst_50 = arith.constant 0.001953125 : f32
    %37 = vector.broadcast %cst_50 : f32 to vector<1x128xf32>
    %38 = arith.mulf %36, %37 : vector<1x128xf32>
    %39 = arith.mulf %33, %33 : vector<1x128xf32>
    %40 = arith.subf %38, %39 : vector<1x128xf32>
    %cst_51 = arith.constant 0.000000e+00 : f32
    %41 = vector.broadcast %cst_51 : f32 to vector<1x128xf32>
    %42 = arith.maximumf %40, %41 : vector<1x128xf32>
    %c0_52 = arith.constant 0 : index
    %c0_53 = arith.constant 0 : index
    %43 = vector.load %arg3[%c0_52, %c0_53] : memref<2x128xf32, #tpu.memory_space<vmem>>, vector<1x128xf32>
    %c1_54 = arith.constant 1 : index
    %c0_55 = arith.constant 0 : index
    %44 = vector.load %arg3[%c1_54, %c0_55] : memref<2x128xf32, #tpu.memory_space<vmem>>, vector<1x128xf32>
    %45 = vector.broadcast %33 : vector<1x128xf32> to vector<512x128xf32>
    %46 = arith.subf %29, %45 : vector<512x128xf32>
    %cst_56 = arith.constant 9.99999974E-6 : f32
    %47 = vector.broadcast %cst_56 : f32 to vector<1x128xf32>
    %48 = arith.addf %42, %47 : vector<1x128xf32>
    %49 = math.rsqrt %48 : vector<1x128xf32>
    %50 = vector.broadcast %49 : vector<1x128xf32> to vector<512x128xf32>
    %51 = arith.mulf %46, %50 : vector<512x128xf32>
    %52 = vector.broadcast %43 : vector<1x128xf32> to vector<512x128xf32>
    %53 = arith.mulf %51, %52 : vector<512x128xf32>
    %54 = vector.broadcast %44 : vector<1x128xf32> to vector<512x128xf32>
    %55 = arith.addf %53, %54 : vector<512x128xf32>
    %cst_57 = arith.constant 0.000000e+00 : f32
    %56 = vector.broadcast %cst_57 : f32 to vector<512x128xf32>
    %57 = arith.maximumf %55, %56 : vector<512x128xf32>
    %58 = vector.shape_cast %57 : vector<512x128xf32> to vector<2x16x16x128xf32>
    %c0_58 = arith.constant 0 : index
    %c0_59 = arith.constant 0 : index
    %c0_60 = arith.constant 0 : index
    %c0_61 = arith.constant 0 : index
    %59 = vector.load %arg4[%c0_58, %c0_59, %c0_60, %c0_61] : memref<2x16x16x128xf32, #tpu.memory_space<vmem>>, vector<2x16x16x128xf32>
    tpu.vector_store %arg4[%c0_58, %c0_59, %c0_60, %c0_61], %58 {strides = array<i32>} : memref<2x16x16x128xf32, #tpu.memory_space<vmem>>, vector<2x16x16x128xf32>,
    %cst_62 = arith.constant 0.000000e+00 : bf16
    %60 = vector.broadcast %cst_62 : bf16 to vector<2x18x18x128xbf16>
    %c0_63 = arith.constant 0 : index
    %c0_64 = arith.constant 0 : index
    %c0_65 = arith.constant 0 : index
    %c0_66 = arith.constant 0 : index
    %61 = vector.load %arg5[%c0_63, %c0_64, %c0_65, %c0_66] : memref<2x18x18x128xbf16, #tpu.memory_space<vmem>>, vector<2x18x18x128xbf16>
    tpu.vector_store %arg5[%c0_63, %c0_64, %c0_65, %c0_66], %60 {strides = array<i32>} : memref<2x18x18x128xbf16, #tpu.memory_space<vmem>>, vector<2x18x18x128xbf16>,
    %62 = arith.truncf %57 : vector<512x128xf32> to vector<512x128xbf16>
    %63 = vector.shape_cast %62 : vector<512x128xbf16> to vector<2x16x16x128xbf16>
    %c0_67 = arith.constant 0 : index
    %c1_68 = arith.constant 1 : index
    %c1_69 = arith.constant 1 : index
    %c0_70 = arith.constant 0 : index
    %64 = vector.load %arg5[%c0_67, %c1_68, %c1_69, %c0_70] : memref<2x18x18x128xbf16, #tpu.memory_space<vmem>>, vector<2x16x16x128xbf16>
    tpu.vector_store %arg5[%c0_67, %c1_68, %c1_69, %c0_70], %63 {strides = array<i32>} : memref<2x18x18x128xbf16, #tpu.memory_space<vmem>>, vector<2x16x16x128xbf16>,
    return
  }
  func.func @transform_0(%arg0: i32) -> (i32, i32, i32, i32) {
    %c0_i32 = arith.constant 0 : i32
    %c0_i32_0 = arith.constant 0 : i32
    %c0_i32_1 = arith.constant 0 : i32
    %c0_i32_2 = arith.constant 0 : i32
    %c0_i32_3 = arith.constant 0 : i32
    return %c0_i32, %c0_i32_0, %c0_i32_1, %c0_i32_2 : i32, i32, i32, i32
  }
  func.func @transform_1(%arg0: i32) -> (i32, i32) {
    %c0_i32 = arith.constant 0 : i32
    %c0_i32_0 = arith.constant 0 : i32
    %c0_i32_1 = arith.constant 0 : i32
    return %c0_i32, %c0_i32_0 : i32, i32
  }
  func.func @transform_2(%arg0: i32) -> (i32, i32) {
    %c0_i32 = arith.constant 0 : i32
    %c0_i32_0 = arith.constant 0 : i32
    %c0_i32_1 = arith.constant 0 : i32
    return %c0_i32, %c0_i32_0 : i32, i32
  }
  func.func @transform_3(%arg0: i32) -> (i32, i32, i32, i32) {
    %c0_i32 = arith.constant 0 : i32
    %c0_i32_0 = arith.constant 0 : i32
    %c0_i32_1 = arith.constant 0 : i32
    %c0_i32_2 = arith.constant 0 : i32
    %c0_i32_3 = arith.constant 0 : i32
    return %c0_i32, %c0_i32_0, %c0_i32_1, %c0_i32_2 : i32, i32, i32, i32
  }
  func.func @transform_4(%arg0: i32) -> (i32, i32, i32, i32) {
    %c0_i32 = arith.constant 0 : i32
    %c0_i32_0 = arith.constant 0 : i32
    %c0_i32_1 = arith.constant 0 : i32
    %c0_i32_2 = arith.constant 0 : i32
    %c0_i32_3 = arith.constant 0 : i32
    return %c0_i32, %c0_i32_0, %c0_i32_1, %c0_i32_2 : i32, i32, i32, i32
  }
}

</mosaic_0001>

<llo_original>
// kernel: _step_first.1
$region0: #{_step_first.1}
  #allocation0 [shape = 'u32[]', space=smem, size = 0x4, offset = 0x4, fixed_abs, tag = 'smem constant byte address 0x4 - core index']
  #allocation1 [shape = 'u32[144,128]{1,0:T(1,128)}', space=vmem, size = 0x12000, scoped, tag = 'internal scratch']
  #allocation2 [shape = 'bf16[512,1152]{1,0:T(8,128)(2,1)}', space=vmem, size = 0x120000, scoped, tag = 'scratch operand']
  %s0 = inlined_call_operand.vmem [shape: bf16[2,18,18,128], index: 0, kind: input, shape index: {}]
  %s1 = inlined_call_operand.vmem [shape: bf16[1152,128], index: 1, kind: input, shape index: {}]
  %s2 = inlined_call_operand.vmem [shape: f32[2,128], index: 2, kind: input, shape index: {}]
  %s3 = inlined_call_operand.vmem [shape: f32[2,16,16,128], index: 3, kind: output, shape index: {0}]
  %s4 = inlined_call_operand.vmem [shape: bf16[2,18,18,128], index: 4, kind: output, shape index: {1}]
  %5 = xla_tuple %s3, %s4
  %s6 = sld [smem:[#allocation0]]
  $region30: #{_step_first.1} parent=0
    _
  %s8 = ssub.s32 1, %s6
  %s9 = scalar_select 0, %s8, %s6
  // Predicated region
  $region2: #{_step_first.1} parent=0 // pred_check
    _
  $region3: #{_step_first.1} parent=0 // pred_check_branch
    %11 = sbr.rel (0) target = $region5
  $region4: #{_step_first.1} parent=0 // pred_region
    _
  $region5: #{_step_first.1} parent=0 // pred_fallthru
    _
  // Predicated region
  $region6: #{_step_first.1} parent=0 // pred_check
    _
  $region7: #{_step_first.1} parent=0 // pred_check_branch
    %13 = sbr.rel (0) target = $region9
  $region8: #{_step_first.1} parent=0 // pred_region
    _
  $region9: #{_step_first.1} parent=0 // pred_fallthru
    _
  // Predicated region
  $region10: #{_step_first.1} parent=0 // pred_check
    _
  $region11: #{_step_first.1} parent=0 // pred_check_branch
    %15 = sbr.rel (0) target = $region13
  $region12: #{_step_first.1} parent=0 // pred_region
    _
  $region13: #{_step_first.1} parent=0 // pred_fallthru
    _
  %v17 = vld [vmem:[%s0] sm:$0xf]
  %v18 = vld [vmem:[%s0 + $0x4] sm:$0xf]
  %v19 = vld [vmem:[%s0 + $0xc] sm:$0xf]
  %v20 = vld [vmem:[%s0 + $0x10] sm:$0xf]
  %v21 = vld [vmem:[%s0 + $0x18] sm:$0xf]
  %v22 = vld [vmem:[%s0 + $0x1c] sm:$0xf]
  %v23 = vld [vmem:[%s0 + $0x24] sm:$0xf]
  %v24 = vld [vmem:[%s0 + $0x28] sm:$0xf]
  %v25 = vld [vmem:[%s0 + $0x30] sm:$0xf]
  %v26 = vld [vmem:[%s0 + $0x34] sm:$0xf]
  %v27 = vld [vmem:[%s0 + $0x3c] sm:$0xf]
  %v28 = vld [vmem:[%s0 + $0x40] sm:$0xf]
  %v29 = vld [vmem:[%s0 + $0x48] sm:$0xf]
  %v30 = vld [vmem:[%s0 + $0x4c] sm:$0xf]
  %v31 = vld [vmem:[%s0 + $0x54] sm:$0xf]
  %v32 = vld [vmem:[%s0 + $0x58] sm:$0xf]
  %v33 = vld [vmem:[%s0 + $0x60] sm:$0xf]
  %v34 = vld [vmem:[%s0 + $0x64] sm:$0xf]
  %v35 = vld [vmem:[%s0 + $0x6c] sm:$0xf]
  %v36 = vld [vmem:[%s0 + $0x70] sm:$0xf]
  %v37 = vld [vmem:[%s0 + $0x78] sm:$0xf]
  %v38 = vld [vmem:[%s0 + $0x7c] sm:$0xf]
  %v39 = vld [vmem:[%s0 + $0x84] sm:$0xf]
  %v40 = vld [vmem:[%s0 + $0x88] sm:$0xf]
  %v41 = vld [vmem:[%s0 + $0x90] sm:$0xf]
  %v42 = vld [vmem:[%s0 + $0x94] sm:$0xf]
  %v43 = vld [vmem:[%s0 + $0x9c] sm:$0xf]
  %v44 = vld [vmem:[%s0 + $0xa0] sm:$0xf]
  %v45 = vld [vmem:[%s0 + $0xa8] sm:$0xf]
  %v46 = vld [vmem:[%s0 + $0xac] sm:$0xf]
  %v47 = vld [vmem:[%s0 + $0xb4] sm:$0xf]
  %v48 = vld [vmem:[%s0 + $0xb8] sm:$0xf]
  %v49 = vld [vmem:[%s0 + $0xd8] sm:$0xf]
  %v50 = vld [vmem:[%s0 + $0xdc] sm:$0xf]
  %v51 = vld [vmem:[%s0 + $0xe4] sm:$0xf]
  %v52 = vld [vmem:[%s0 + $0xe8] sm:$0xf]
  %v53 = vld [vmem:[%s0 + $0xf0] sm:$0xf]
  %v54 = vld [vmem:[%s0 + $0xf4] sm:$0xf]
  %v55 = vld [vmem:[%s0 + $0xfc] sm:$0xf]
  %v56 = vld [vmem:[%s0 + $0x100] sm:$0xf]
  %v57 = vld [vmem:[%s0 + $0x108] sm:$0xf]
  %v58 = vld [vmem:[%s0 + $0x10c] sm:$0xf]
  %v59 = vld [vmem:[%s0 + $0x114] sm:$0xf]
  %v60 = vld [vmem:[%s0 + $0x118] sm:$0xf]
  %v61 = vld [vmem:[%s0 + $0x120] sm:$0xf]
  %v62 = vld [vmem:[%s0 + $0x124] sm:$0xf]
  %v63 = vld [vmem:[%s0 + $0x12c] sm:$0xf]
  %v64 = vld [vmem:[%s0 + $0x130] sm:$0xf]
  %v65 = vld [vmem:[%s0 + $0x138] sm:$0xf]
  %v66 = vld [vmem:[%s0 + $0x13c] sm:$0xf]
  %v67 = vld [vmem:[%s0 + $0x144] sm:$0xf]
  %v68 = vld [vmem:[%s0 + $0x148] sm:$0xf]
  %v69 = vld [vmem:[%s0 + $0x150] sm:$0xf]
  %v70 = vld [vmem:[%s0 + $0x154] sm:$0xf]
  %v71 = vld [vmem:[%s0 + $0x15c] sm:$0xf]
  %v72 = vld [vmem:[%s0 + $0x160] sm:$0xf]
  %v73 = vld [vmem:[%s0 + $0x168] sm:$0xf]
  %v74 = vld [vmem:[%s0 + $0x16c] sm:$0xf]
  %v75 = vld [vmem:[%s0 + $0x174] sm:$0xf]
  %v76 = vld [vmem:[%s0 + $0x178] sm:$0xf]
  %v77 = vld [vmem:[%s0 + $0x180] sm:$0xf]
  %v78 = vld [vmem:[%s0 + $0x184] sm:$0xf]
  %v79 = vld [vmem:[%s0 + $0x18c] sm:$0xf]
  %v80 = vld [vmem:[%s0 + $0x190] sm:$0xf]
  %81 = vst [vmem:[#allocation2] sm:$0xf] %v17
  %82 = vst [vmem:[#allocation2 + $0x24] sm:$0xf] %v18
  %83 = vst [vmem:[#allocation2 + $0x48] sm:$0xf] %v19
  %84 = vst [vmem:[#allocation2 + $0x6c] sm:$0xf] %v20
  %85 = vst [vmem:[#allocation2 + $0x90] sm:$0xf] %v21
  %86 = vst [vmem:[#allocation2 + $0xb4] sm:$0xf] %v22
  %87 = vst [vmem:[#allocation2 + $0xd8] sm:$0xf] %v23
  %88 = vst [vmem:[#allocation2 + $0xfc] sm:$0xf] %v24
  %89 = vst [vmem:[#allocation2 + $0x120] sm:$0xf] %v25
  %90 = vst [vmem:[#allocation2 + $0x144] sm:$0xf] %v26
  %91 = vst [vmem:[#allocation2 + $0x168] sm:$0xf] %v27
  %92 = vst [vmem:[#allocation2 + $0x18c] sm:$0xf] %v28
  %93 = vst [vmem:[#allocation2 + $0x1b0] sm:$0xf] %v29
  %94 = vst [vmem:[#allocation2 + $0x1d4] sm:$0xf] %v30
  %95 = vst [vmem:[#allocation2 + $0x1f8] sm:$0xf] %v31
  %96 = vst [vmem:[#allocation2 + $0x21c] sm:$0xf] %v32
  %97 = vst [vmem:[#allocation2 + $0x240] sm:$0xf] %v33
  %98 = vst [vmem:[#allocation2 + $0x264] sm:$0xf] %v34
  %99 = vst [vmem:[#allocation2 + $0x288] sm:$0xf] %v35
  %100 = vst [vmem:[#allocation2 + $0x2ac] sm:$0xf] %v36
  %101 = vst [vmem:[#allocation2 + $0x2d0] sm:$0xf] %v37
  %102 = vst [vmem:[#allocation2 + $0x2f4] sm:$0xf] %v38
  %103 = vst [vmem:[#allocation2 + $0x318] sm:$0xf] %v39
  %104 = vst [vmem:[#allocation2 + $0x33c] sm:$0xf] %v40
  %105 = vst [vmem:[#allocation2 + $0x360] sm:$0xf] %v41
  %106 = vst [vmem:[#allocation2 + $0x384] sm:$0xf] %v42
  %107 = vst [vmem:[#allocation2 + $0x3a8] sm:$0xf] %v43
  %108 = vst [vmem:[#allocation2 + $0x3cc] sm:$0xf] %v44
  %109 = vst [vmem:[#allocation2 + $0x3f0] sm:$0xf] %v45
  %110 = vst [vmem:[#allocation2 + $0x414] sm:$0xf] %v46
  %111 = vst [vmem:[#allocation2 + $0x438] sm:$0xf] %v47
  %112 = vst [vmem:[#allocation2 + $0x45c] sm:$0xf] %v48
  %113 = vst [vmem:[#allocation2 + $0x480] sm:$0xf] %v49
  %114 = vst [vmem:[#allocation2 + $0x4a4] sm:$0xf] %v50
  %115 = vst [vmem:[#allocation2 + $0x4c8] sm:$0xf] %v51
  %116 = vst [vmem:[#allocation2 + $0x4ec] sm:$0xf] %v52
  %117 = vst [vmem:[#allocation2 + $0x510] sm:$0xf] %v53
  %118 = vst [vmem:[#allocation2 + $0x534] sm:$0xf] %v54
  %119 = vst [vmem:[#allocation2 + $0x558] sm:$0xf] %v55
  %120 = vst [vmem:[#allocation2 + $0x57c] sm:$0xf] %v56
  %121 = vst [vmem:[#allocation2 + $0x5a0] sm:$0xf] %v57
  %122 = vst [vmem:[#allocation2 + $0x5c4] sm:$0xf] %v58
  %123 = vst [vmem:[#allocation2 + $0x5e8] sm:$0xf] %v59
  %124 = vst [vmem:[#allocation2 + $0x60c] sm:$0xf] %v60
  %125 = vst [vmem:[#allocation2 + $0x630] sm:$0xf] %v61
  %126 = vst [vmem:[#allocation2 + $0x654] sm:$0xf] %v62
  %127 = vst [vmem:[#allocation2 + $0x678] sm:$0xf] %v63
  %128 = vst [vmem:[#allocation2 + $0x69c] sm:$0xf] %v64
  %129 = vst [vmem:[#allocation2 + $0x6c0] sm:$0xf] %v65
  %130 = vst [vmem:[#allocation2 + $0x6e4] sm:$0xf] %v66
  %131 = vst [vmem:[#allocation2 + $0x708] sm:$0xf] %v67
  %132 = vst [vmem:[#allocation2 + $0x72c] sm:$0xf] %v68
  %133 = vst [vmem:[#allocation2 + $0x750] sm:$0xf] %v69
  %134 = vst [vmem:[#allocation2 + $0x774] sm:$0xf] %v70
  %135 = vst [vmem:[#allocation2 + $0x798] sm:$0xf] %v71
  %136 = vst [vmem:[#allocation2 + $0x7bc] sm:$0xf] %v72
  %137 = vst [vmem:[#allocation2 + $0x7e0] sm:$0xf] %v73
  %138 = vst [vmem:[#allocation2 + $0x804] sm:$0xf] %v74
  %139 = vst [vmem:[#allocation2 + $0x828] sm:$0xf] %v75
  %140 = vst [vmem:[#allocation2 + $0x84c] sm:$0xf] %v76
  %141 = vst [vmem:[#allocation2 + $0x870] sm:$0xf] %v77
  %142 = vst [vmem:[#allocation2 + $0x894] sm:$0xf] %v78
  %143 = vst [vmem:[#allocation2 + $0x8b8] sm:$0xf] %v79
  %144 = vst [vmem:[#allocation2 + $0x8dc] sm:$0xf] %v80
  %v145 = vld [vmem:[%s0] sm:$0xf]
  %v146 = vld [vmem:[%s0 + $0x4] sm:$0xf]
  %v147 = vld [vmem:[%s0 + $0x8] sm:$0x1]
  %v148 = vld [vmem:[%s0 + $0xc] sm:$0xf]
  %v149 = vld [vmem:[%s0 + $0x10] sm:$0xf]
  %v150 = vld [vmem:[%s0 + $0x14] sm:$0x1]
  %v151 = vld [vmem:[%s0 + $0x18] sm:$0xf]
  %v152 = vld [vmem:[%s0 + $0x1c] sm:$0xf]
  %v153 = vld [vmem:[%s0 + $0x20] sm:$0x1]
  %v154 = vld [vmem:[%s0 + $0x24] sm:$0xf]
  %v155 = vld [vmem:[%s0 + $0x28] sm:$0xf]
  %v156 = vld [vmem:[%s0 + $0x2c] sm:$0x1]
  %v157 = vld [vmem:[%s0 + $0x30] sm:$0xf]
  %v158 = vld [vmem:[%s0 + $0x34] sm:$0xf]
  %v159 = vld [vmem:[%s0 + $0x38] sm:$0x1]
  %v160 = vld [vmem:[%s0 + $0x3c] sm:$0xf]
  %v161 = vld [vmem:[%s0 + $0x40] sm:$0xf]
  %v162 = vld [vmem:[%s0 + $0x44] sm:$0x1]
  %v163 = vld [vmem:[%s0 + $0x48] sm:$0xf]
  %v164 = vld [vmem:[%s0 + $0x4c] sm:$0xf]
  %v165 = vld [vmem:[%s0 + $0x50] sm:$0x1]
  %v166 = vld [vmem:[%s0 + $0x54] sm:$0xf]
  %v167 = vld [vmem:[%s0 + $0x58] sm:$0xf]
  %v168 = vld [vmem:[%s0 + $0x5c] sm:$0x1]
  %v169 = vld [vmem:[%s0 + $0x60] sm:$0xf]
  %v170 = vld [vmem:[%s0 + $0x64] sm:$0xf]
  %v171 = vld [vmem:[%s0 + $0x68] sm:$0x1]
  %v172 = vld [vmem:[%s0 + $0x6c] sm:$0xf]
  %v173 = vld [vmem:[%s0 + $0x70] sm:$0xf]
  %v174 = vld [vmem:[%s0 + $0x74] sm:$0x1]
  %v175 = vld [vmem:[%s0 + $0x78] sm:$0xf]
  %v176 = vld [vmem:[%s0 + $0x7c] sm:$0xf]
  %v177 = vld [vmem:[%s0 + $0x80] sm:$0x1]
  %v178 = vld [vmem:[%s0 + $0x84] sm:$0xf]
  %v179 = vld [vmem:[%s0 + $0x88] sm:$0xf]
  %v180 = vld [vmem:[%s0 + $0x8c] sm:$0x1]
  %v181 = vld [vmem:[%s0 + $0x90] sm:$0xf]
  %v182 = vld [vmem:[%s0 + $0x94] sm:$0xf]
  %v183 = vld [vmem:[%s0 + $0x98] sm:$0x1]
  %v184 = vld [vmem:[%s0 + $0x9c] sm:$0xf]
  %v185 = vld [vmem:[%s0 + $0xa0] sm:$0xf]
  %v186 = vld [vmem:[%s0 + $0xa4] sm:$0x1]
  %v187 = vld [vmem:[%s0 + $0xa8] sm:$0xf]
  %v188 = vld [vmem:[%s0 + $0xac] sm:$0xf]
  %v189 = vld [vmem:[%s0 + $0xb0] sm:$0x1]
  %v190 = vld [vmem:[%s0 + $0xb4] sm:$0xf]
  %v191 = vld [vmem:[%s0 + $0xb8] sm:$0xf]
  %v192 = vld [vmem:[%s0 + $0xbc] sm:$0x1]
  %v193 = vld [vmem:[%s0 + $0xd8] sm:$0xf]
  %v194 = vld [vmem:[%s0 + $0xdc] sm:$0xf]
  %v195 = vld [vmem:[%s0 + $0xe0] sm:$0x1]
  %v196 = vld [vmem:[%s0 + $0xe4] sm:$0xf]
  %v197 = vld [vmem:[%s0 + $0xe8] sm:$0xf]
  %v198 = vld [vmem:[%s0 + $0xec] sm:$0x1]
  %v199 = vld [vmem:[%s0 + $0xf0] sm:$0xf]
  %v200 = vld [vmem:[%s0 + $0xf4] sm:$0xf]
  %v201 = vld [vmem:[%s0 + $0xf8] sm:$0x1]
  %v202 = vld [vmem:[%s0 + $0xfc] sm:$0xf]
  %v203 = vld [vmem:[%s0 + $0x100] sm:$0xf]
  %v204 = vld [vmem:[%s0 + $0x104] sm:$0x1]
  %v205 = vld [vmem:[%s0 + $0x108] sm:$0xf]
  %v206 = vld [vmem:[%s0 + $0x10c] sm:$0xf]
  %v207 = vld [vmem:[%s0 + $0x110] sm:$0x1]
  %v208 = vld [vmem:[%s0 + $0x114] sm:$0xf]
  %v209 = vld [vmem:[%s0 + $0x118] sm:$0xf]
  %v210 = vld [vmem:[%s0 + $0x11c] sm:$0x1]
  %v211 = vld [vmem:[%s0 + $0x120] sm:$0xf]
  %v212 = vld [vmem:[%s0 + $0x124] sm:$0xf]
  %v213 = vld [vmem:[%s0 + $0x128] sm:$0x1]
  %v214 = vld [vmem:[%s0 + $0x12c] sm:$0xf]
  %v215 = vld [vmem:[%s0 + $0x130] sm:$0xf]
  %v216 = vld [vmem:[%s0 + $0x134] sm:$0x1]
  %v217 = vld [vmem:[%s0 + $0x138] sm:$0xf]
  %v218 = vld [vmem:[%s0 + $0x13c] sm:$0xf]
  %v219 = vld [vmem:[%s0 + $0x140] sm:$0x1]
  %v220 = vld [vmem:[%s0 + $0x144] sm:$0xf]
  %v221 = vld [vmem:[%s0 + $0x148] sm:$0xf]
  %v222 = vld [vmem:[%s0 + $0x14c] sm:$0x1]
  %v223 = vld [vmem:[%s0 + $0x150] sm:$0xf]
  %v224 = vld [vmem:[%s0 + $0x154] sm:$0xf]
  %v225 = vld [vmem:[%s0 + $0x158] sm:$0x1]
  %v226 = vld [vmem:[%s0 + $0x15c] sm:$0xf]
  %v227 = vld [vmem:[%s0 + $0x160] sm:$0xf]
  %v228 = vld [vmem:[%s0 + $0x164] sm:$0x1]
  %v229 = vld [vmem:[%s0 + $0x168] sm:$0xf]
  %v230 = vld [vmem:[%s0 + $0x16c] sm:$0xf]
  %v231 = vld [vmem:[%s0 + $0x170] sm:$0x1]
  %v232 = vld [vmem:[%s0 + $0x174] sm:$0xf]
  %v233 = vld [vmem:[%s0 + $0x178] sm:$0xf]
  %v234 = vld [vmem:[%s0 + $0x17c] sm:$0x1]
  %v235 = vld [vmem:[%s0 + $0x180] sm:$0xf]
  %v236 = vld [vmem:[%s0 + $0x184] sm:$0xf]
  %v237 = vld [vmem:[%s0 + $0x188] sm:$0x1]
  %v238 = vld [vmem:[%s0 + $0x18c] sm:$0xf]
  %v239 = vld [vmem:[%s0 + $0x190] sm:$0xf]
  %v240 = vld [vmem:[%s0 + $0x194] sm:$0x1]
  %vm241 = vsmask.f32 3328
  %vm242 = vsmask.f32 7440
  %vm243 = vmor %vm241, %vm242
  %v245 = vshrl.u32 %v145, 16
  %v247 = vrot.slane %v245, 4
  %v248 = vshll.u32 %v145, 16
  %v250 = vrot.slane %v248, 5
  %v251 = vor.u32 %v247, %v250
  %v252 = vrot.slane %v251, 4
  %v254 = vshll.u32 %v146, 16
  %v256 = vrot.slane %v254, 5
  %v257 = vsel %vm243, %v252, %v256
  %v258 = vshrl.u32 %v146, 16
  %v260 = vrot.slane %v258, 4
  %v261 = vor.u32 %v260, %v256
  %v262 = vrot.slane %v261, 4
  %v264 = vshll.u32 %v147, 16
  %v266 = vrot.slane %v264, 5
  %v267 = vsel %vm243, %v262, %v266
  %v269 = vshrl.u32 %v148, 16
  %v271 = vrot.slane %v269, 4
  %v272 = vshll.u32 %v148, 16
  %v274 = vrot.slane %v272, 5
  %v275 = vor.u32 %v271, %v274
  %v276 = vrot.slane %v275, 4
  %v278 = vshll.u32 %v149, 16
  %v280 = vrot.slane %v278, 5
  %v281 = vsel %vm243, %v276, %v280
  %v282 = vshrl.u32 %v149, 16
  %v284 = vrot.slane %v282, 4
  %v285 = vor.u32 %v284, %v280
  %v286 = vrot.slane %v285, 4
  %v288 = vshll.u32 %v150, 16
  %v290 = vrot.slane %v288, 5
  %v291 = vsel %vm243, %v286, %v290
  %v293 = vshrl.u32 %v151, 16
  %v295 = vrot.slane %v293, 4
  %v296 = vshll.u32 %v151, 16
  %v298 = vrot.slane %v296, 5
  %v299 = vor.u32 %v295, %v298
  %v300 = vrot.slane %v299, 4
  %v302 = vshll.u32 %v152, 16
  %v304 = vrot.slane %v302, 5
  %v305 = vsel %vm243, %v300, %v304
  %v306 = vshrl.u32 %v152, 16
  %v308 = vrot.slane %v306, 4
  %v309 = vor.u32 %v308, %v304
  %v310 = vrot.slane %v309, 4
  %v312 = vshll.u32 %v153, 16
  %v314 = vrot.slane %v312, 5
  %v315 = vsel %vm243, %v310, %v314
  %v317 = vshrl.u32 %v154, 16
  %v319 = vrot.slane %v317, 4
  %v320 = vshll.u32 %v154, 16
  %v322 = vrot.slane %v320, 5
  %v323 = vor.u32 %v319, %v322
  %v324 = vrot.slane %v323, 4
  %v326 = vshll.u32 %v155, 16
  %v328 = vrot.slane %v326, 5
  %v329 = vsel %vm243, %v324, %v328
  %v330 = vshrl.u32 %v155, 16
  %v332 = vrot.slane %v330, 4
  %v333 = vor.u32 %v332, %v328
  %v334 = vrot.slane %v333, 4
  %v336 = vshll.u32 %v156, 16
  %v338 = vrot.slane %v336, 5
  %v339 = vsel %vm243, %v334, %v338
  %v341 = vshrl.u32 %v157, 16
  %v343 = vrot.slane %v341, 4
  %v344 = vshll.u32 %v157, 16
  %v346 = vrot.slane %v344, 5
  %v347 = vor.u32 %v343, %v346
  %v348 = vrot.slane %v347, 4
  %v350 = vshll.u32 %v158, 16
  %v352 = vrot.slane %v350, 5
  %v353 = vsel %vm243, %v348, %v352
  %v354 = vshrl.u32 %v158, 16
  %v356 = vrot.slane %v354, 4
  %v357 = vor.u32 %v356, %v352
  %v358 = vrot.slane %v357, 4
  %v360 = vshll.u32 %v159, 16
  %v362 = vrot.slane %v360, 5
  %v363 = vsel %vm243, %v358, %v362
  %v365 = vshrl.u32 %v160, 16
  %v367 = vrot.slane %v365, 4
  %v368 = vshll.u32 %v160, 16
  %v370 = vrot.slane %v368, 5
  %v371 = vor.u32 %v367, %v370
  %v372 = vrot.slane %v371, 4
  %v374 = vshll.u32 %v161, 16
  %v376 = vrot.slane %v374, 5
  %v377 = vsel %vm243, %v372, %v376
  %v378 = vshrl.u32 %v161, 16
  %v380 = vrot.slane %v378, 4
  %v381 = vor.u32 %v380, %v376
  %v382 = vrot.slane %v381, 4
  %v384 = vshll.u32 %v162, 16
  %v386 = vrot.slane %v384, 5
  %v387 = vsel %vm243, %v382, %v386
  %v389 = vshrl.u32 %v163, 16
  %v391 = vrot.slane %v389, 4
  %v392 = vshll.u32 %v163, 16
  %v394 = vrot.slane %v392, 5
  %v395 = vor.u32 %v391, %v394
  %v396 = vrot.slane %v395, 4
  %v398 = vshll.u32 %v164, 16
  %v400 = vrot.slane %v398, 5
  %v401 = vsel %vm243, %v396, %v400
  %v402 = vshrl.u32 %v164, 16
  %v404 = vrot.slane %v402, 4
  %v405 = vor.u32 %v404, %v400
  %v406 = vrot.slane %v405, 4
  %v408 = vshll.u32 %v165, 16
  %v410 = vrot.slane %v408, 5
  %v411 = vsel %vm243, %v406, %v410
  %v413 = vshrl.u32 %v166, 16
  %v415 = vrot.slane %v413, 4
  %v416 = vshll.u32 %v166, 16
  %v418 = vrot.slane %v416, 5
  %v419 = vor.u32 %v415, %v418
  %v420 = vrot.slane %v419, 4
  %v422 = vshll.u32 %v167, 16
  %v424 = vrot.slane %v422, 5
  %v425 = vsel %vm243, %v420, %v424
  %v426 = vshrl.u32 %v167, 16
  %v428 = vrot.slane %v426, 4
  %v429 = vor.u32 %v428, %v424
  %v430 = vrot.slane %v429, 4
  %v432 = vshll.u32 %v168, 16
  %v434 = vrot.slane %v432, 5
  %v435 = vsel %vm243, %v430, %v434
  %v437 = vshrl.u32 %v169, 16
  %v439 = vrot.slane %v437, 4
  %v440 = vshll.u32 %v169, 16
  %v442 = vrot.slane %v440, 5
  %v443 = vor.u32 %v439, %v442
  %v444 = vrot.slane %v443, 4
  %v446 = vshll.u32 %v170, 16
  %v448 = vrot.slane %v446, 5
  %v449 = vsel %vm243, %v444, %v448
  %v450 = vshrl.u32 %v170, 16
  %v452 = vrot.slane %v450, 4
  %v453 = vor.u32 %v452, %v448
  %v454 = vrot.slane %v453, 4
  %v456 = vshll.u32 %v171, 16
  %v458 = vrot.slane %v456, 5
  %v459 = vsel %vm243, %v454, %v458
  %v461 = vshrl.u32 %v172, 16
  %v463 = vrot.slane %v461, 4
  %v464 = vshll.u32 %v172, 16
  %v466 = vrot.slane %v464, 5
  %v467 = vor.u32 %v463, %v466
  %v468 = vrot.slane %v467, 4
  %v470 = vshll.u32 %v173, 16
  %v472 = vrot.slane %v470, 5
  %v473 = vsel %vm243, %v468, %v472
  %v474 = vshrl.u32 %v173, 16
  %v476 = vrot.slane %v474, 4
  %v477 = vor.u32 %v476, %v472
  %v478 = vrot.slane %v477, 4
  %v480 = vshll.u32 %v174, 16
  %v482 = vrot.slane %v480, 5
  %v483 = vsel %vm243, %v478, %v482
  %v485 = vshrl.u32 %v175, 16
  %v487 = vrot.slane %v485, 4
  %v488 = vshll.u32 %v175, 16
  %v490 = vrot.slane %v488, 5
  %v491 = vor.u32 %v487, %v490
  %v492 = vrot.slane %v491, 4
  %v494 = vshll.u32 %v176, 16
  %v496 = vrot.slane %v494, 5
  %v497 = vsel %vm243, %v492, %v496
  %v498 = vshrl.u32 %v176, 16
  %v500 = vrot.slane %v498, 4
  %v501 = vor.u32 %v500, %v496
  %v502 = vrot.slane %v501, 4
  %v504 = vshll.u32 %v177, 16
  %v506 = vrot.slane %v504, 5
  %v507 = vsel %vm243, %v502, %v506
  %v509 = vshrl.u32 %v178, 16
  %v511 = vrot.slane %v509, 4
  %v512 = vshll.u32 %v178, 16
  %v514 = vrot.slane %v512, 5
  %v515 = vor.u32 %v511, %v514
  %v516 = vrot.slane %v515, 4
  %v518 = vshll.u32 %v179, 16
  %v520 = vrot.slane %v518, 5
  %v521 = vsel %vm243, %v516, %v520
  %v522 = vshrl.u32 %v179, 16
  %v524 = vrot.slane %v522, 4
  %v525 = vor.u32 %v524, %v520
  %v526 = vrot.slane %v525, 4
  %v528 = vshll.u32 %v180, 16
  %v530 = vrot.slane %v528, 5
  %v531 = vsel %vm243, %v526, %v530
  %v533 = vshrl.u32 %v181, 16
  %v535 = vrot.slane %v533, 4
  %v536 = vshll.u32 %v181, 16
  %v538 = vrot.slane %v536, 5
  %v539 = vor.u32 %v535, %v538
  %v540 = vrot.slane %v539, 4
  %v542 = vshll.u32 %v182, 16
  %v544 = vrot.slane %v542, 5
  %v545 = vsel %vm243, %v540, %v544
  %v546 = vshrl.u32 %v182, 16
  %v548 = vrot.slane %v546, 4
  %v549 = vor.u32 %v548, %v544
  %v550 = vrot.slane %v549, 4
  %v552 = vshll.u32 %v183, 16
  %v554 = vrot.slane %v552, 5
  %v555 = vsel %vm243, %v550, %v554
  %v557 = vshrl.u32 %v184, 16
  %v559 = vrot.slane %v557, 4
  %v560 = vshll.u32 %v184, 16
  %v562 = vrot.slane %v560, 5
  %v563 = vor.u32 %v559, %v562
  %v564 = vrot.slane %v563, 4
  %v566 = vshll.u32 %v185, 16
  %v568 = vrot.slane %v566, 5
  %v569 = vsel %vm243, %v564, %v568
  %v570 = vshrl.u32 %v185, 16
  %v572 = vrot.slane %v570, 4
  %v573 = vor.u32 %v572, %v568
  %v574 = vrot.slane %v573, 4
  %v576 = vshll.u32 %v186, 16
  %v578 = vrot.slane %v576, 5
  %v579 = vsel %vm243, %v574, %v578
  %v581 = vshrl.u32 %v187, 16
  %v583 = vrot.slane %v581, 4
  %v584 = vshll.u32 %v187, 16
  %v586 = vrot.slane %v584, 5
  %v587 = vor.u32 %v583, %v586
  %v588 = vrot.slane %v587, 4
  %v590 = vshll.u32 %v188, 16
  %v592 = vrot.slane %v590, 5
  %v593 = vsel %vm243, %v588, %v592
  %v594 = vshrl.u32 %v188, 16
  %v596 = vrot.slane %v594, 4
  %v597 = vor.u32 %v596, %v592
  %v598 = vrot.slane %v597, 4
  %v600 = vshll.u32 %v189, 16
  %v602 = vrot.slane %v600, 5
  %v603 = vsel %vm243, %v598, %v602
  %v605 = vshrl.u32 %v190, 16
  %v607 = vrot.slane %v605, 4
  %v608 = vshll.u32 %v190, 16
  %v610 = vrot.slane %v608, 5
  %v611 = vor.u32 %v607, %v610
  %v612 = vrot.slane %v611, 4
  %v614 = vshll.u32 %v191, 16
  %v616 = vrot.slane %v614, 5
  %v617 = vsel %vm243, %v612, %v616
  %v618 = vshrl.u32 %v191, 16
  %v620 = vrot.slane %v618, 4
  %v621 = vor.u32 %v620, %v616
  %v622 = vrot.slane %v621, 4
  %v624 = vshll.u32 %v192, 16
  %v626 = vrot.slane %v624, 5
  %v627 = vsel %vm243, %v622, %v626
  %v629 = vshrl.u32 %v193, 16
  %v631 = vrot.slane %v629, 4
  %v632 = vshll.u32 %v193, 16
  %v634 = vrot.slane %v632, 5
  %v635 = vor.u32 %v631, %v634
  %v636 = vrot.slane %v635, 4
  %v638 = vshll.u32 %v194, 16
  %v640 = vrot.slane %v638, 5
  %v641 = vsel %vm243, %v636, %v640
  %v642 = vshrl.u32 %v194, 16
  %v644 = vrot.slane %v642, 4
  %v645 = vor.u32 %v644, %v640
  %v646 = vrot.slane %v645, 4
  %v648 = vshll.u32 %v195, 16
  %v650 = vrot.slane %v648, 5
  %v651 = vsel %vm243, %v646, %v650
  %v653 = vshrl.u32 %v196, 16
  %v655 = vrot.slane %v653, 4
  %v656 = vshll.u32 %v196, 16
  %v658 = vrot.slane %v656, 5
  %v659 = vor.u32 %v655, %v658
  %v660 = vrot.slane %v659, 4
  %v662 = vshll.u32 %v197, 16
  %v664 = vrot.slane %v662, 5
  %v665 = vsel %vm243, %v660, %v664
  %v666 = vshrl.u32 %v197, 16
  %v668 = vrot.slane %v666, 4
  %v669 = vor.u32 %v668, %v664
  %v670 = vrot.slane %v669, 4
  %v672 = vshll.u32 %v198, 16
  %v674 = vrot.slane %v672, 5
  %v675 = vsel %vm243, %v670, %v674
  %v677 = vshrl.u32 %v199, 16
  %v679 = vrot.slane %v677, 4
  %v680 = vshll.u32 %v199, 16
  %v682 = vrot.slane %v680, 5
  %v683 = vor.u32 %v679, %v682
  %v684 = vrot.slane %v683, 4
  %v686 = vshll.u32 %v200, 16
  %v688 = vrot.slane %v686, 5
  %v689 = vsel %vm243, %v684, %v688
  %v690 = vshrl.u32 %v200, 16
  %v692 = vrot.slane %v690, 4
  %v693 = vor.u32 %v692, %v688
  %v694 = vrot.slane %v693, 4
  %v696 = vshll.u32 %v201, 16
  %v698 = vrot.slane %v696, 5
  %v699 = vsel %vm243, %v694, %v698
  %v701 = vshrl.u32 %v202, 16
  %v703 = vrot.slane %v701, 4
  %v704 = vshll.u32 %v202, 16
  %v706 = vrot.slane %v704, 5
  %v707 = vor.u32 %v703, %v706
  %v708 = vrot.slane %v707, 4
  %v710 = vshll.u32 %v203, 16
  %v712 = vrot.slane %v710, 5
  %v713 = vsel %vm243, %v708, %v712
  %v714 = vshrl.u32 %v203, 16
  %v716 = vrot.slane %v714, 4
  %v717 = vor.u32 %v716, %v712
  %v718 = vrot.slane %v717, 4
  %v720 = vshll.u32 %v204, 16
  %v722 = vrot.slane %v720, 5
  %v723 = vsel %vm243, %v718, %v722
  %v725 = vshrl.u32 %v205, 16
  %v727 = vrot.slane %v725, 4
  %v728 = vshll.u32 %v205, 16
  %v730 = vrot.slane %v728, 5
  %v731 = vor.u32 %v727, %v730
  %v732 = vrot.slane %v731, 4
  %v734 = vshll.u32 %v206, 16
  %v736 = vrot.slane %v734, 5
  %v737 = vsel %vm243, %v732, %v736
  %v738 = vshrl.u32 %v206, 16
  %v740 = vrot.slane %v738, 4
  %v741 = vor.u32 %v740, %v736
  %v742 = vrot.slane %v741, 4
  %v744 = vshll.u32 %v207, 16
  %v746 = vrot.slane %v744, 5
  %v747 = vsel %vm243, %v742, %v746
  %v749 = vshrl.u32 %v208, 16
  %v751 = vrot.slane %v749, 4
  %v752 = vshll.u32 %v208, 16
  %v754 = vrot.slane %v752, 5
  %v755 = vor.u32 %v751, %v754
  %v756 = vrot.slane %v755, 4
  %v758 = vshll.u32 %v209, 16
  %v760 = vrot.slane %v758, 5
  %v761 = vsel %vm243, %v756, %v760
  %v762 = vshrl.u32 %v209, 16
  %v764 = vrot.slane %v762, 4
  %v765 = vor.u32 %v764, %v760
  %v766 = vrot.slane %v765, 4
  %v768 = vshll.u32 %v210, 16
  %v770 = vrot.slane %v768, 5
  %v771 = vsel %vm243, %v766, %v770
  %v773 = vshrl.u32 %v211, 16
  %v775 = vrot.slane %v773, 4
  %v776 = vshll.u32 %v211, 16
  %v778 = vrot.slane %v776, 5
  %v779 = vor.u32 %v775, %v778
  %v780 = vrot.slane %v779, 4
  %v782 = vshll.u32 %v212, 16
  %v784 = vrot.slane %v782, 5
  %v785 = vsel %vm243, %v780, %v784
  %v786 = vshrl.u32 %v212, 16
  %v788 = vrot.slane %v786, 4
  %v789 = vor.u32 %v788, %v784
  %v790 = vrot.slane %v789, 4
  %v792 = vshll.u32 %v213, 16
  %v794 = vrot.slane %v792, 5
  %v795 = vsel %vm243, %v790, %v794
  %v797 = vshrl.u32 %v214, 16
  %v799 = vrot.slane %v797, 4
  %v800 = vshll.u32 %v214, 16
  %v802 = vrot.slane %v800, 5
  %v803 = vor.u32 %v799, %v802
  %v804 = vrot.slane %v803, 4
  %v806 = vshll.u32 %v215, 16
  %v808 = vrot.slane %v806, 5
  %v809 = vsel %vm243, %v804, %v808
  %v810 = vshrl.u32 %v215, 16
  %v812 = vrot.slane %v810, 4
  %v813 = vor.u32 %v812, %v808
  %v814 = vrot.slane %v813, 4
  %v816 = vshll.u32 %v216, 16
  %v818 = vrot.slane %v816, 5
  %v819 = vsel %vm243, %v814, %v818
  %v821 = vshrl.u32 %v217, 16
  %v823 = vrot.slane %v821, 4
  %v824 = vshll.u32 %v217, 16
  %v826 = vrot.slane %v824, 5
  %v827 = vor.u32 %v823, %v826
  %v828 = vrot.slane %v827, 4
  %v830 = vshll.u32 %v218, 16
  %v832 = vrot.slane %v830, 5
  %v833 = vsel %vm243, %v828, %v832
  %v834 = vshrl.u32 %v218, 16
  %v836 = vrot.slane %v834, 4
  %v837 = vor.u32 %v836, %v832
  %v838 = vrot.slane %v837, 4
  %v840 = vshll.u32 %v219, 16
  %v842 = vrot.slane %v840, 5
  %v843 = vsel %vm243, %v838, %v842
  %v845 = vshrl.u32 %v220, 16
  %v847 = vrot.slane %v845, 4
  %v848 = vshll.u32 %v220, 16
  %v850 = vrot.slane %v848, 5
  %v851 = vor.u32 %v847, %v850
  %v852 = vrot.slane %v851, 4
  %v854 = vshll.u32 %v221, 16
  %v856 = vrot.slane %v854, 5
  %v857 = vsel %vm243, %v852, %v856
  %v858 = vshrl.u32 %v221, 16
  %v860 = vrot.slane %v858, 4
  %v861 = vor.u32 %v860, %v856
  %v862 = vrot.slane %v861, 4
  %v864 = vshll.u32 %v222, 16
  %v866 = vrot.slane %v864, 5
  %v867 = vsel %vm243, %v862, %v866
  %v869 = vshrl.u32 %v223, 16
  %v871 = vrot.slane %v869, 4
  %v872 = vshll.u32 %v223, 16
  %v874 = vrot.slane %v872, 5
  %v875 = vor.u32 %v871, %v874
  %v876 = vrot.slane %v875, 4
  %v878 = vshll.u32 %v224, 16
  %v880 = vrot.slane %v878, 5
  %v881 = vsel %vm243, %v876, %v880
  %v882 = vshrl.u32 %v224, 16
  %v884 = vrot.slane %v882, 4
  %v885 = vor.u32 %v884, %v880
  %v886 = vrot.slane %v885, 4
  %v888 = vshll.u32 %v225, 16
  %v890 = vrot.slane %v888, 5
  %v891 = vsel %vm243, %v886, %v890
  %v893 = vshrl.u32 %v226, 16
  %v895 = vrot.slane %v893, 4
  %v896 = vshll.u32 %v226, 16
  %v898 = vrot.slane %v896, 5
  %v899 = vor.u32 %v895, %v898
  %v900 = vrot.slane %v899, 4
  %v902 = vshll.u32 %v227, 16
  %v904 = vrot.slane %v902, 5
  %v905 = vsel %vm243, %v900, %v904
  %v906 = vshrl.u32 %v227, 16
  %v908 = vrot.slane %v906, 4
  %v909 = vor.u32 %v908, %v904
  %v910 = vrot.slane %v909, 4
  %v912 = vshll.u32 %v228, 16
  %v914 = vrot.slane %v912, 5
  %v915 = vsel %vm243, %v910, %v914
  %v917 = vshrl.u32 %v229, 16
  %v919 = vrot.slane %v917, 4
  %v920 = vshll.u32 %v229, 16
  %v922 = vrot.slane %v920, 5
  %v923 = vor.u32 %v919, %v922
  %v924 = vrot.slane %v923, 4
  %v926 = vshll.u32 %v230, 16
  %v928 = vrot.slane %v926, 5
  %v929 = vsel %vm243, %v924, %v928
  %v930 = vshrl.u32 %v230, 16
  %v932 = vrot.slane %v930, 4
  %v933 = vor.u32 %v932, %v928
  %v934 = vrot.slane %v933, 4
  %v936 = vshll.u32 %v231, 16
  %v938 = vrot.slane %v936, 5
  %v939 = vsel %vm243, %v934, %v938
  %v941 = vshrl.u32 %v232, 16
  %v943 = vrot.slane %v941, 4
  %v944 = vshll.u32 %v232, 16
  %v946 = vrot.slane %v944, 5
  %v947 = vor.u32 %v943, %v946
  %v948 = vrot.slane %v947, 4
  %v950 = vshll.u32 %v233, 16
  %v952 = vrot.slane %v950, 5
  %v953 = vsel %vm243, %v948, %v952
  %v954 = vshrl.u32 %v233, 16
  %v956 = vrot.slane %v954, 4
  %v957 = vor.u32 %v956, %v952
  %v958 = vrot.slane %v957, 4
  %v960 = vshll.u32 %v234, 16
  %v962 = vrot.slane %v960, 5
  %v963 = vsel %vm243, %v958, %v962
  %v965 = vshrl.u32 %v235, 16
  %v967 = vrot.slane %v965, 4
  %v968 = vshll.u32 %v235, 16
  %v970 = vrot.slane %v968, 5
  %v971 = vor.u32 %v967, %v970
  %v972 = vrot.slane %v971, 4
  %v974 = vshll.u32 %v236, 16
  %v976 = vrot.slane %v974, 5
  %v977 = vsel %vm243, %v972, %v976
  %v978 = vshrl.u32 %v236, 16
  %v980 = vrot.slane %v978, 4
  %v981 = vor.u32 %v980, %v976
  %v982 = vrot.slane %v981, 4
  %v984 = vshll.u32 %v237, 16
  %v986 = vrot.slane %v984, 5
  %v987 = vsel %vm243, %v982, %v986
  %v989 = vshrl.u32 %v238, 16
  %v991 = vrot.slane %v989, 4
  %v992 = vshll.u32 %v238, 16
  %v994 = vrot.slane %v992, 5
  %v995 = vor.u32 %v991, %v994
  %v996 = vrot.slane %v995, 4
  %v998 = vshll.u32 %v239, 16
  %v1000 = vrot.slane %v998, 5
  %v1001 = vsel %vm243, %v996, %v1000
  %v1002 = vshrl.u32 %v239, 16
  %v1004 = vrot.slane %v1002, 4
  %v1005 = vor.u32 %v1004, %v1000
  %v1006 = vrot.slane %v1005, 4
  %v1008 = vshll.u32 %v240, 16
  %v1010 = vrot.slane %v1008, 5
  %v1011 = vsel %vm243, %v1006, %v1010
  %1076 = vst [vmem:[#allocation2 + $0x4] sm:$0xf] %v257
  %1077 = vst [vmem:[#allocation2 + $0x28] sm:$0xf] %v267
  %1078 = vst [vmem:[#allocation2 + $0x4c] sm:$0xf] %v281
  %1079 = vst [vmem:[#allocation2 + $0x70] sm:$0xf] %v291
  %1080 = vst [vmem:[#allocation2 + $0x94] sm:$0xf] %v305
  %1081 = vst [vmem:[#allocation2 + $0xb8] sm:$0xf] %v315
  %1082 = vst [vmem:[#allocation2 + $0xdc] sm:$0xf] %v329
  %1083 = vst [vmem:[#allocation2 + $0x100] sm:$0xf] %v339
  %1084 = vst [vmem:[#allocation2 + $0x124] sm:$0xf] %v353
  %1085 = vst [vmem:[#allocation2 + $0x148] sm:$0xf] %v363
  %1086 = vst [vmem:[#allocation2 + $0x16c] sm:$0xf] %v377
  %1087 = vst [vmem:[#allocation2 + $0x190] sm:$0xf] %v387
  %1088 = vst [vmem:[#allocation2 + $0x1b4] sm:$0xf] %v401
  %1089 = vst [vmem:[#allocation2 + $0x1d8] sm:$0xf] %v411
  %1090 = vst [vmem:[#allocation2 + $0x1fc] sm:$0xf] %v425
  %1091 = vst [vmem:[#allocation2 + $0x220] sm:$0xf] %v435
  %1092 = vst [vmem:[#allocation2 + $0x244] sm:$0xf] %v449
  %1093 = vst [vmem:[#allocation2 + $0x268] sm:$0xf] %v459
  %1094 = vst [vmem:[#allocation2 + $0x28c] sm:$0xf] %v473
  %1095 = vst [vmem:[#allocation2 + $0x2b0] sm:$0xf] %v483
  %1096 = vst [vmem:[#allocation2 + $0x2d4] sm:$0xf] %v497
  %1097 = vst [vmem:[#allocation2 + $0x2f8] sm:$0xf] %v507
  %1098 = vst [vmem:[#allocation2 + $0x31c] sm:$0xf] %v521
  %1099 = vst [vmem:[#allocation2 + $0x340] sm:$0xf] %v531
  %1100 = vst [vmem:[#allocation2 + $0x364] sm:$0xf] %v545
  %1101 = vst [vmem:[#allocation2 + $0x388] sm:$0xf] %v555
  %1102 = vst [vmem:[#allocation2 + $0x3ac] sm:$0xf] %v569
  %1103 = vst [vmem:[#allocation2 + $0x3d0] sm:$0xf] %v579
  %1104 = vst [vmem:[#allocation2 + $0x3f4] sm:$0xf] %v593
  %1105 = vst [vmem:[#allocation2 + $0x418] sm:$0xf] %v603
  %1106 = vst [vmem:[#allocation2 + $0x43c] sm:$0xf] %v617
  %1107 = vst [vmem:[#allocation2 + $0x460] sm:$0xf] %v627
  %1108 = vst [vmem:[#allocation2 + $0x484] sm:$0xf] %v641
  %1109 = vst [vmem:[#allocation2 + $0x4a8] sm:$0xf] %v651
  %1110 = vst [vmem:[#allocation2 + $0x4cc] sm:$0xf] %v665
  %1111 = vst [vmem:[#allocation2 + $0x4f0] sm:$0xf] %v675
  %1112 = vst [vmem:[#allocation2 + $0x514] sm:$0xf] %v689
  %1113 = vst [vmem:[#allocation2 + $0x538] sm:$0xf] %v699
  %1114 = vst [vmem:[#allocation2 + $0x55c] sm:$0xf] %v713
  %1115 = vst [vmem:[#allocation2 + $0x580] sm:$0xf] %v723
  %1116 = vst [vmem:[#allocation2 + $0x5a4] sm:$0xf] %v737
  %1117 = vst [vmem:[#allocation2 + $0x5c8] sm:$0xf] %v747
  %1118 = vst [vmem:[#allocation2 + $0x5ec] sm:$0xf] %v761
  %1119 = vst [vmem:[#allocation2 + $0x610] sm:$0xf] %v771
  %1120 = vst [vmem:[#allocation2 + $0x634] sm:$0xf] %v785
  %1121 = vst [vmem:[#allocation2 + $0x658] sm:$0xf] %v795
  %1122 = vst [vmem:[#allocation2 + $0x67c] sm:$0xf] %v809
  %1123 = vst [vmem:[#allocation2 + $0x6a0] sm:$0xf] %v819
  %1124 = vst [vmem:[#allocation2 + $0x6c4] sm:$0xf] %v833
  %1125 = vst [vmem:[#allocation2 + $0x6e8] sm:$0xf] %v843
  %1126 = vst [vmem:[#allocation2 + $0x70c] sm:$0xf] %v857
  %1127 = vst [vmem:[#allocation2 + $0x730] sm:$0xf] %v867
  %1128 = vst [vmem:[#allocation2 + $0x754] sm:$0xf] %v881
  %1129 = vst [vmem:[#allocation2 + $0x778] sm:$0xf] %v891
  %1130 = vst [vmem:[#allocation2 + $0x79c] sm:$0xf] %v905
  %1131 = vst [vmem:[#allocation2 + $0x7c0] sm:$0xf] %v915
  %1132 = vst [vmem:[#allocation2 + $0x7e4] sm:$0xf] %v929
  %1133 = vst [vmem:[#allocation2 + $0x808] sm:$0xf] %v939
  %1134 = vst [vmem:[#allocation2 + $0x82c] sm:$0xf] %v953
  %1135 = vst [vmem:[#allocation2 + $0x850] sm:$0xf] %v963
  %1136 = vst [vmem:[#allocation2 + $0x874] sm:$0xf] %v977
  %1137 = vst [vmem:[#allocation2 + $0x898] sm:$0xf] %v987
  %1138 = vst [vmem:[#allocation2 + $0x8bc] sm:$0xf] %v1001
  %1139 = vst [vmem:[#allocation2 + $0x8e0] sm:$0xf] %v1011
  %v1140 = vld [vmem:[%s0] sm:$0xe]
  %v1141 = vld [vmem:[%s0 + $0x4] sm:$0xf]
  %v1142 = vld [vmem:[%s0 + $0x8] sm:$0x1]
  %v1143 = vld [vmem:[%s0 + $0xc] sm:$0xe]
  %v1144 = vld [vmem:[%s0 + $0x10] sm:$0xf]
  %v1145 = vld [vmem:[%s0 + $0x14] sm:$0x1]
  %v1146 = vld [vmem:[%s0 + $0x18] sm:$0xe]
  %v1147 = vld [vmem:[%s0 + $0x1c] sm:$0xf]
  %v1148 = vld [vmem:[%s0 + $0x20] sm:$0x1]
  %v1149 = vld [vmem:[%s0 + $0x24] sm:$0xe]
  %v1150 = vld [vmem:[%s0 + $0x28] sm:$0xf]
  %v1151 = vld [vmem:[%s0 + $0x2c] sm:$0x1]
  %v1152 = vld [vmem:[%s0 + $0x30] sm:$0xe]
  %v1153 = vld [vmem:[%s0 + $0x34] sm:$0xf]
  %v1154 = vld [vmem:[%s0 + $0x38] sm:$0x1]
  %v1155 = vld [vmem:[%s0 + $0x3c] sm:$0xe]
  %v1156 = vld [vmem:[%s0 + $0x40] sm:$0xf]
  %v1157 = vld [vmem:[%s0 + $0x44] sm:$0x1]
  %v1158 = vld [vmem:[%s0 + $0x48] sm:$0xe]
  %v1159 = vld [vmem:[%s0 + $0x4c] sm:$0xf]
  %v1160 = vld [vmem:[%s0 + $0x50] sm:$0x1]
  %v1161 = vld [vmem:[%s0 + $0x54] sm:$0xe]
  %v1162 = vld [vmem:[%s0 + $0x58] sm:$0xf]
  %v1163 = vld [vmem:[%s0 + $0x5c] sm:$0x1]
  %v1164 = vld [vmem:[%s0 + $0x60] sm:$0xe]
  %v1165 = vld [vmem:[%s0 + $0x64] sm:$0xf]
  %v1166 = vld [vmem:[%s0 + $0x68] sm:$0x1]
  %v1167 = vld [vmem:[%s0 + $0x6c] sm:$0xe]
  %v1168 = vld [vmem:[%s0 + $0x70] sm:$0xf]
  %v1169 = vld [vmem:[%s0 + $0x74] sm:$0x1]
  %v1170 = vld [vmem:[%s0 + $0x78] sm:$0xe]
  %v1171 = vld [vmem:[%s0 + $0x7c] sm:$0xf]
  %v1172 = vld [vmem:[%s0 + $0x80] sm:$0x1]
  %v1173 = vld [vmem:[%s0 + $0x84] sm:$0xe]
  %v1174 = vld [vmem:[%s0 + $0x88] sm:$0xf]
  %v1175 = vld [vmem:[%s0 + $0x8c] sm:$0x1]
  %v1176 = vld [vmem:[%s0 + $0x90] sm:$0xe]
  %v1177 = vld [vmem:[%s0 + $0x94] sm:$0xf]
  %v1178 = vld [vmem:[%s0 + $0x98] sm:$0x1]
  %v1179 = vld [vmem:[%s0 + $0x9c] sm:$0xe]
  %v1180 = vld [vmem:[%s0 + $0xa0] sm:$0xf]
  %v1181 = vld [vmem:[%s0 + $0xa4] sm:$0x1]
  %v1182 = vld [vmem:[%s0 + $0xa8] sm:$0xe]
  %v1183 = vld [vmem:[%s0 + $0xac] sm:$0xf]
  %v1184 = vld [vmem:[%s0 + $0xb0] sm:$0x1]
  %v1185 = vld [vmem:[%s0 + $0xb4] sm:$0xe]
  %v1186 = vld [vmem:[%s0 + $0xb8] sm:$0xf]
  %v1187 = vld [vmem:[%s0 + $0xbc] sm:$0x1]
  %v1188 = vld [vmem:[%s0 + $0xd8] sm:$0xe]
  %v1189 = vld [vmem:[%s0 + $0xdc] sm:$0xf]
  %v1190 = vld [vmem:[%s0 + $0xe0] sm:$0x1]
  %v1191 = vld [vmem:[%s0 + $0xe4] sm:$0xe]
  %v1192 = vld [vmem:[%s0 + $0xe8] sm:$0xf]
  %v1193 = vld [vmem:[%s0 + $0xec] sm:$0x1]
  %v1194 = vld [vmem:[%s0 + $0xf0] sm:$0xe]
  %v1195 = vld [vmem:[%s0 + $0xf4] sm:$0xf]
  %v1196 = vld [vmem:[%s0 + $0xf8] sm:$0x1]
  %v1197 = vld [vmem:[%s0 + $0xfc] sm:$0xe]
  %v1198 = vld [vmem:[%s0 + $0x100] sm:$0xf]
  %v1199 = vld [vmem:[%s0 + $0x104] sm:$0x1]
  %v1200 = vld [vmem:[%s0 + $0x108] sm:$0xe]
  %v1201 = vld [vmem:[%s0 + $0x10c] sm:$0xf]
  %v1202 = vld [vmem:[%s0 + $0x110] sm:$0x1]
  %v1203 = vld [vmem:[%s0 + $0x114] sm:$0xe]
  %v1204 = vld [vmem:[%s0 + $0x118] sm:$0xf]
  %v1205 = vld [vmem:[%s0 + $0x11c] sm:$0x1]
  %v1206 = vld [vmem:[%s0 + $0x120] sm:$0xe]
  %v1207 = vld [vmem:[%s0 + $0x124] sm:$0xf]
  %v1208 = vld [vmem:[%s0 + $0x128] sm:$0x1]
  %v1209 = vld [vmem:[%s0 + $0x12c] sm:$0xe]
  %v1210 = vld [vmem:[%s0 + $0x130] sm:$0xf]
  %v1211 = vld [vmem:[%s0 + $0x134] sm:$0x1]
  %v1212 = vld [vmem:[%s0 + $0x138] sm:$0xe]
  %v1213 = vld [vmem:[%s0 + $0x13c] sm:$0xf]
  %v1214 = vld [vmem:[%s0 + $0x140] sm:$0x1]
  %v1215 = vld [vmem:[%s0 + $0x144] sm:$0xe]
  %v1216 = vld [vmem:[%s0 + $0x148] sm:$0xf]
  %v1217 = vld [vmem:[%s0 + $0x14c] sm:$0x1]
  %v1218 = vld [vmem:[%s0 + $0x150] sm:$0xe]
  %v1219 = vld [vmem:[%s0 + $0x154] sm:$0xf]
  %v1220 = vld [vmem:[%s0 + $0x158] sm:$0x1]
  %v1221 = vld [vmem:[%s0 + $0x15c] sm:$0xe]
  %v1222 = vld [vmem:[%s0 + $0x160] sm:$0xf]
  %v1223 = vld [vmem:[%s0 + $0x164] sm:$0x1]
  %v1224 = vld [vmem:[%s0 + $0x168] sm:$0xe]
  %v1225 = vld [vmem:[%s0 + $0x16c] sm:$0xf]
  %v1226 = vld [vmem:[%s0 + $0x170] sm:$0x1]
  %v1227 = vld [vmem:[%s0 + $0x174] sm:$0xe]
  %v1228 = vld [vmem:[%s0 + $0x178] sm:$0xf]
  %v1229 = vld [vmem:[%s0 + $0x17c] sm:$0x1]
  %v1230 = vld [vmem:[%s0 + $0x180] sm:$0xe]
  %v1231 = vld [vmem:[%s0 + $0x184] sm:$0xf]
  %v1232 = vld [vmem:[%s0 + $0x188] sm:$0x1]
  %v1233 = vld [vmem:[%s0 + $0x18c] sm:$0xe]
  %v1234 = vld [vmem:[%s0 + $0x190] sm:$0xf]
  %v1235 = vld [vmem:[%s0 + $0x194] sm:$0x1]
  %vm1332 = vcmask 1042432
  %vm1333 = vcmask 1046532
  %vm1334 = vmor %vm1332, %vm1333
  %v1335 = vrot.slane %v1140, 5
  %v1336 = vrot.slane %v1335, 4
  %v1337 = vrot.slane %v1141, 5
  %v1338 = vsel %vm1334, %v1336, %v1337
  %v1339 = vrot.slane %v1337, 4
  %v1340 = vrot.slane %v1142, 5
  %v1341 = vsel %vm1334, %v1339, %v1340
  %v1342 = vrot.slane %v1143, 5
  %v1343 = vrot.slane %v1342, 4
  %v1344 = vrot.slane %v1144, 5
  %v1345 = vsel %vm1334, %v1343, %v1344
  %v1346 = vrot.slane %v1344, 4
  %v1347 = vrot.slane %v1145, 5
  %v1348 = vsel %vm1334, %v1346, %v1347
  %v1349 = vrot.slane %v1146, 5
  %v1350 = vrot.slane %v1349, 4
  %v1351 = vrot.slane %v1147, 5
  %v1352 = vsel %vm1334, %v1350, %v1351
  %v1353 = vrot.slane %v1351, 4
  %v1354 = vrot.slane %v1148, 5
  %v1355 = vsel %vm1334, %v1353, %v1354
  %v1356 = vrot.slane %v1149, 5
  %v1357 = vrot.slane %v1356, 4
  %v1358 = vrot.slane %v1150, 5
  %v1359 = vsel %vm1334, %v1357, %v1358
  %v1360 = vrot.slane %v1358, 4
  %v1361 = vrot.slane %v1151, 5
  %v1362 = vsel %vm1334, %v1360, %v1361
  %v1363 = vrot.slane %v1152, 5
  %v1364 = vrot.slane %v1363, 4
  %v1365 = vrot.slane %v1153, 5
  %v1366 = vsel %vm1334, %v1364, %v1365
  %v1367 = vrot.slane %v1365, 4
  %v1368 = vrot.slane %v1154, 5
  %v1369 = vsel %vm1334, %v1367, %v1368
  %v1370 = vrot.slane %v1155, 5
  %v1371 = vrot.slane %v1370, 4
  %v1372 = vrot.slane %v1156, 5
  %v1373 = vsel %vm1334, %v1371, %v1372
  %v1374 = vrot.slane %v1372, 4
  %v1375 = vrot.slane %v1157, 5
  %v1376 = vsel %vm1334, %v1374, %v1375
  %v1377 = vrot.slane %v1158, 5
  %v1378 = vrot.slane %v1377, 4
  %v1379 = vrot.slane %v1159, 5
  %v1380 = vsel %vm1334, %v1378, %v1379
  %v1381 = vrot.slane %v1379, 4
  %v1382 = vrot.slane %v1160, 5
  %v1383 = vsel %vm1334, %v1381, %v1382
  %v1384 = vrot.slane %v1161, 5
  %v1385 = vrot.slane %v1384, 4
  %v1386 = vrot.slane %v1162, 5
  %v1387 = vsel %vm1334, %v1385, %v1386
  %v1388 = vrot.slane %v1386, 4
  %v1389 = vrot.slane %v1163, 5
  %v1390 = vsel %vm1334, %v1388, %v1389
  %v1391 = vrot.slane %v1164, 5
  %v1392 = vrot.slane %v1391, 4
  %v1393 = vrot.slane %v1165, 5
  %v1394 = vsel %vm1334, %v1392, %v1393
  %v1395 = vrot.slane %v1393, 4
  %v1396 = vrot.slane %v1166, 5
  %v1397 = vsel %vm1334, %v1395, %v1396
  %v1398 = vrot.slane %v1167, 5
  %v1399 = vrot.slane %v1398, 4
  %v1400 = vrot.slane %v1168, 5
  %v1401 = vsel %vm1334, %v1399, %v1400
  %v1402 = vrot.slane %v1400, 4
  %v1403 = vrot.slane %v1169, 5
  %v1404 = vsel %vm1334, %v1402, %v1403
  %v1405 = vrot.slane %v1170, 5
  %v1406 = vrot.slane %v1405, 4
  %v1407 = vrot.slane %v1171, 5
  %v1408 = vsel %vm1334, %v1406, %v1407
  %v1409 = vrot.slane %v1407, 4
  %v1410 = vrot.slane %v1172, 5
  %v1411 = vsel %vm1334, %v1409, %v1410
  %v1412 = vrot.slane %v1173, 5
  %v1413 = vrot.slane %v1412, 4
  %v1414 = vrot.slane %v1174, 5
  %v1415 = vsel %vm1334, %v1413, %v1414
  %v1416 = vrot.slane %v1414, 4
  %v1417 = vrot.slane %v1175, 5
  %v1418 = vsel %vm1334, %v1416, %v1417
  %v1419 = vrot.slane %v1176, 5
  %v1420 = vrot.slane %v1419, 4
  %v1421 = vrot.slane %v1177, 5
  %v1422 = vsel %vm1334, %v1420, %v1421
  %v1423 = vrot.slane %v1421, 4
  %v1424 = vrot.slane %v1178, 5
  %v1425 = vsel %vm1334, %v1423, %v1424
  %v1426 = vrot.slane %v1179, 5
  %v1427 = vrot.slane %v1426, 4
  %v1428 = vrot.slane %v1180, 5
  %v1429 = vsel %vm1334, %v1427, %v1428
  %v1430 = vrot.slane %v1428, 4
  %v1431 = vrot.slane %v1181, 5
  %v1432 = vsel %vm1334, %v1430, %v1431
  %v1433 = vrot.slane %v1182, 5
  %v1434 = vrot.slane %v1433, 4
  %v1435 = vrot.slane %v1183, 5
  %v1436 = vsel %vm1334, %v1434, %v1435
  %v1437 = vrot.slane %v1435, 4
  %v1438 = vrot.slane %v1184, 5
  %v1439 = vsel %vm1334, %v1437, %v1438
  %v1440 = vrot.slane %v1185, 5
  %v1441 = vrot.slane %v1440, 4
  %v1442 = vrot.slane %v1186, 5
  %v1443 = vsel %vm1334, %v1441, %v1442
  %v1444 = vrot.slane %v1442, 4
  %v1445 = vrot.slane %v1187, 5
  %v1446 = vsel %vm1334, %v1444, %v1445
  %v1447 = vrot.slane %v1188, 5
  %v1448 = vrot.slane %v1447, 4
  %v1449 = vrot.slane %v1189, 5
  %v1450 = vsel %vm1334, %v1448, %v1449
  %v1451 = vrot.slane %v1449, 4
  %v1452 = vrot.slane %v1190, 5
  %v1453 = vsel %vm1334, %v1451, %v1452
  %v1454 = vrot.slane %v1191, 5
  %v1455 = vrot.slane %v1454, 4
  %v1456 = vrot.slane %v1192, 5
  %v1457 = vsel %vm1334, %v1455, %v1456
  %v1458 = vrot.slane %v1456, 4
  %v1459 = vrot.slane %v1193, 5
  %v1460 = vsel %vm1334, %v1458, %v1459
  %v1461 = vrot.slane %v1194, 5
  %v1462 = vrot.slane %v1461, 4
  %v1463 = vrot.slane %v1195, 5
  %v1464 = vsel %vm1334, %v1462, %v1463
  %v1465 = vrot.slane %v1463, 4
  %v1466 = vrot.slane %v1196, 5
  %v1467 = vsel %vm1334, %v1465, %v1466
  %v1468 = vrot.slane %v1197, 5
  %v1469 = vrot.slane %v1468, 4
  %v1470 = vrot.slane %v1198, 5
  %v1471 = vsel %vm1334, %v1469, %v1470
  %v1472 = vrot.slane %v1470, 4
  %v1473 = vrot.slane %v1199, 5
  %v1474 = vsel %vm1334, %v1472, %v1473
  %v1475 = vrot.slane %v1200, 5
  %v1476 = vrot.slane %v1475, 4
  %v1477 = vrot.slane %v1201, 5
  %v1478 = vsel %vm1334, %v1476, %v1477
  %v1479 = vrot.slane %v1477, 4
  %v1480 = vrot.slane %v1202, 5
  %v1481 = vsel %vm1334, %v1479, %v1480
  %v1482 = vrot.slane %v1203, 5
  %v1483 = vrot.slane %v1482, 4
  %v1484 = vrot.slane %v1204, 5
  %v1485 = vsel %vm1334, %v1483, %v1484
  %v1486 = vrot.slane %v1484, 4
  %v1487 = vrot.slane %v1205, 5
  %v1488 = vsel %vm1334, %v1486, %v1487
  %v1489 = vrot.slane %v1206, 5
  %v1490 = vrot.slane %v1489, 4
  %v1491 = vrot.slane %v1207, 5
  %v1492 = vsel %vm1334, %v1490, %v1491
  %v1493 = vrot.slane %v1491, 4
  %v1494 = vrot.slane %v1208, 5
  %v1495 = vsel %vm1334, %v1493, %v1494
  %v1496 = vrot.slane %v1209, 5
  %v1497 = vrot.slane %v1496, 4
  %v1498 = vrot.slane %v1210, 5
  %v1499 = vsel %vm1334, %v1497, %v1498
  %v1500 = vrot.slane %v1498, 4
  %v1501 = vrot.slane %v1211, 5
  %v1502 = vsel %vm1334, %v1500, %v1501
  %v1503 = vrot.slane %v1212, 5
  %v1504 = vrot.slane %v1503, 4
  %v1505 = vrot.slane %v1213, 5
  %v1506 = vsel %vm1334, %v1504, %v1505
  %v1507 = vrot.slane %v1505, 4
  %v1508 = vrot.slane %v1214, 5
  %v1509 = vsel %vm1334, %v1507, %v1508
  %v1510 = vrot.slane %v1215, 5
  %v1511 = vrot.slane %v1510, 4
  %v1512 = vrot.slane %v1216, 5
  %v1513 = vsel %vm1334, %v1511, %v1512
  %v1514 = vrot.slane %v1512, 4
  %v1515 = vrot.slane %v1217, 5
  %v1516 = vsel %vm1334, %v1514, %v1515
  %v1517 = vrot.slane %v1218, 5
  %v1518 = vrot.slane %v1517, 4
  %v1519 = vrot.slane %v1219, 5
  %v1520 = vsel %vm1334, %v1518, %v1519
  %v1521 = vrot.slane %v1519, 4
  %v1522 = vrot.slane %v1220, 5
  %v1523 = vsel %vm1334, %v1521, %v1522
  %v1524 = vrot.slane %v1221, 5
  %v1525 = vrot.slane %v1524, 4
  %v1526 = vrot.slane %v1222, 5
  %v1527 = vsel %vm1334, %v1525, %v1526
  %v1528 = vrot.slane %v1526, 4
  %v1529 = vrot.slane %v1223, 5
  %v1530 = vsel %vm1334, %v1528, %v1529
  %v1531 = vrot.slane %v1224, 5
  %v1532 = vrot.slane %v1531, 4
  %v1533 = vrot.slane %v1225, 5
  %v1534 = vsel %vm1334, %v1532, %v1533
  %v1535 = vrot.slane %v1533, 4
  %v1536 = vrot.slane %v1226, 5
  %v1537 = vsel %vm1334, %v1535, %v1536
  %v1538 = vrot.slane %v1227, 5
  %v1539 = vrot.slane %v1538, 4
  %v1540 = vrot.slane %v1228, 5
  %v1541 = vsel %vm1334, %v1539, %v1540
  %v1542 = vrot.slane %v1540, 4
  %v1543 = vrot.slane %v1229, 5
  %v1544 = vsel %vm1334, %v1542, %v1543
  %v1545 = vrot.slane %v1230, 5
  %v1546 = vrot.slane %v1545, 4
  %v1547 = vrot.slane %v1231, 5
  %v1548 = vsel %vm1334, %v1546, %v1547
  %v1549 = vrot.slane %v1547, 4
  %v1550 = vrot.slane %v1232, 5
  %v1551 = vsel %vm1334, %v1549, %v1550
  %v1552 = vrot.slane %v1233, 5
  %v1553 = vrot.slane %v1552, 4
  %v1554 = vrot.slane %v1234, 5
  %v1555 = vsel %vm1334, %v1553, %v1554
  %v1556 = vrot.slane %v1554, 4
  %v1557 = vrot.slane %v1235, 5
  %v1558 = vsel %vm1334, %v1556, %v1557
  %1623 = vst [vmem:[#allocation2 + $0x8] sm:$0xf] %v1338
  %1624 = vst [vmem:[#allocation2 + $0x2c] sm:$0xf] %v1341
  %1625 = vst [vmem:[#allocation2 + $0x50] sm:$0xf] %v1345
  %1626 = vst [vmem:[#allocation2 + $0x74] sm:$0xf] %v1348
  %1627 = vst [vmem:[#allocation2 + $0x98] sm:$0xf] %v1352
  %1628 = vst [vmem:[#allocation2 + $0xbc] sm:$0xf] %v1355
  %1629 = vst [vmem:[#allocation2 + $0xe0] sm:$0xf] %v1359
  %1630 = vst [vmem:[#allocation2 + $0x104] sm:$0xf] %v1362
  %1631 = vst [vmem:[#allocation2 + $0x128] sm:$0xf] %v1366
  %1632 = vst [vmem:[#allocation2 + $0x14c] sm:$0xf] %v1369
  %1633 = vst [vmem:[#allocation2 + $0x170] sm:$0xf] %v1373
  %1634 = vst [vmem:[#allocation2 + $0x194] sm:$0xf] %v1376
  %1635 = vst [vmem:[#allocation2 + $0x1b8] sm:$0xf] %v1380
  %1636 = vst [vmem:[#allocation2 + $0x1dc] sm:$0xf] %v1383
  %1637 = vst [vmem:[#allocation2 + $0x200] sm:$0xf] %v1387
  %1638 = vst [vmem:[#allocation2 + $0x224] sm:$0xf] %v1390
  %1639 = vst [vmem:[#allocation2 + $0x248] sm:$0xf] %v1394
  %1640 = vst [vmem:[#allocation2 + $0x26c] sm:$0xf] %v1397
  %1641 = vst [vmem:[#allocation2 + $0x290] sm:$0xf] %v1401
  %1642 = vst [vmem:[#allocation2 + $0x2b4] sm:$0xf] %v1404
  %1643 = vst [vmem:[#allocation2 + $0x2d8] sm:$0xf] %v1408
  %1644 = vst [vmem:[#allocation2 + $0x2fc] sm:$0xf] %v1411
  %1645 = vst [vmem:[#allocation2 + $0x320] sm:$0xf] %v1415
  %1646 = vst [vmem:[#allocation2 + $0x344] sm:$0xf] %v1418
  %1647 = vst [vmem:[#allocation2 + $0x368] sm:$0xf] %v1422
  %1648 = vst [vmem:[#allocation2 + $0x38c] sm:$0xf] %v1425
  %1649 = vst [vmem:[#allocation2 + $0x3b0] sm:$0xf] %v1429
  %1650 = vst [vmem:[#allocation2 + $0x3d4] sm:$0xf] %v1432
  %1651 = vst [vmem:[#allocation2 + $0x3f8] sm:$0xf] %v1436
  %1652 = vst [vmem:[#allocation2 + $0x41c] sm:$0xf] %v1439
  %1653 = vst [vmem:[#allocation2 + $0x440] sm:$0xf] %v1443
  %1654 = vst [vmem:[#allocation2 + $0x464] sm:$0xf] %v1446
  %1655 = vst [vmem:[#allocation2 + $0x488] sm:$0xf] %v1450
  %1656 = vst [vmem:[#allocation2 + $0x4ac] sm:$0xf] %v1453
  %1657 = vst [vmem:[#allocation2 + $0x4d0] sm:$0xf] %v1457
  %1658 = vst [vmem:[#allocation2 + $0x4f4] sm:$0xf] %v1460
  %1659 = vst [vmem:[#allocation2 + $0x518] sm:$0xf] %v1464
  %1660 = vst [vmem:[#allocation2 + $0x53c] sm:$0xf] %v1467
  %1661 = vst [vmem:[#allocation2 + $0x560] sm:$0xf] %v1471
  %1662 = vst [vmem:[#allocation2 + $0x584] sm:$0xf] %v1474
  %1663 = vst [vmem:[#allocation2 + $0x5a8] sm:$0xf] %v1478
  %1664 = vst [vmem:[#allocation2 + $0x5cc] sm:$0xf] %v1481
  %1665 = vst [vmem:[#allocation2 + $0x5f0] sm:$0xf] %v1485
  %1666 = vst [vmem:[#allocation2 + $0x614] sm:$0xf] %v1488
  %1667 = vst [vmem:[#allocation2 + $0x638] sm:$0xf] %v1492
  %1668 = vst [vmem:[#allocation2 + $0x65c] sm:$0xf] %v1495
  %1669 = vst [vmem:[#allocation2 + $0x680] sm:$0xf] %v1499
  %1670 = vst [vmem:[#allocation2 + $0x6a4] sm:$0xf] %v1502
  %1671 = vst [vmem:[#allocation2 + $0x6c8] sm:$0xf] %v1506
  %1672 = vst [vmem:[#allocation2 + $0x6ec] sm:$0xf] %v1509
  %1673 = vst [vmem:[#allocation2 + $0x710] sm:$0xf] %v1513
  %1674 = vst [vmem:[#allocation2 + $0x734] sm:$0xf] %v1516
  %1675 = vst [vmem:[#allocation2 + $0x758] sm:$0xf] %v1520
  %1676 = vst [vmem:[#allocation2 + $0x77c] sm:$0xf] %v1523
  %1677 = vst [vmem:[#allocation2 + $0x7a0] sm:$0xf] %v1527
  %1678 = vst [vmem:[#allocation2 + $0x7c4] sm:$0xf] %v1530
  %1679 = vst [vmem:[#allocation2 + $0x7e8] sm:$0xf] %v1534
  %1680 = vst [vmem:[#allocation2 + $0x80c] sm:$0xf] %v1537
  %1681 = vst [vmem:[#allocation2 + $0x830] sm:$0xf] %v1541
  %1682 = vst [vmem:[#allocation2 + $0x854] sm:$0xf] %v1544
  %1683 = vst [vmem:[#allocation2 + $0x878] sm:$0xf] %v1548
  %1684 = vst [vmem:[#allocation2 + $0x89c] sm:$0xf] %v1551
  %1685 = vst [vmem:[#allocation2 + $0x8c0] sm:$0xf] %v1555
  %1686 = vst [vmem:[#allocation2 + $0x8e4] sm:$0xf] %v1558
  %s1687 = scalar_lea.vmem %s0, 12
  %v1688 = vld [vmem:[%s1687] sm:$0xf]
  %v1689 = vld [vmem:[%s1687 + $0x4] sm:$0xf]
  %v1690 = vld [vmem:[%s1687 + $0xc] sm:$0xf]
  %v1691 = vld [vmem:[%s1687 + $0x10] sm:$0xf]
  %v1692 = vld [vmem:[%s1687 + $0x18] sm:$0xf]
  %v1693 = vld [vmem:[%s1687 + $0x1c] sm:$0xf]
  %v1694 = vld [vmem:[%s1687 + $0x24] sm:$0xf]
  %v1695 = vld [vmem:[%s1687 + $0x28] sm:$0xf]
  %v1696 = vld [vmem:[%s1687 + $0x30] sm:$0xf]
  %v1697 = vld [vmem:[%s1687 + $0x34] sm:$0xf]
  %v1698 = vld [vmem:[%s1687 + $0x3c] sm:$0xf]
  %v1699 = vld [vmem:[%s1687 + $0x40] sm:$0xf]
  %v1700 = vld [vmem:[%s1687 + $0x48] sm:$0xf]
  %v1701 = vld [vmem:[%s1687 + $0x4c] sm:$0xf]
  %v1702 = vld [vmem:[%s1687 + $0x54] sm:$0xf]
  %v1703 = vld [vmem:[%s1687 + $0x58] sm:$0xf]
  %v1704 = vld [vmem:[%s1687 + $0x60] sm:$0xf]
  %v1705 = vld [vmem:[%s1687 + $0x64] sm:$0xf]
  %v1706 = vld [vmem:[%s1687 + $0x6c] sm:$0xf]
  %v1707 = vld [vmem:[%s1687 + $0x70] sm:$0xf]
  %v1708 = vld [vmem:[%s1687 + $0x78] sm:$0xf]
  %v1709 = vld [vmem:[%s1687 + $0x7c] sm:$0xf]
  %v1710 = vld [vmem:[%s1687 + $0x84] sm:$0xf]
  %v1711 = vld [vmem:[%s1687 + $0x88] sm:$0xf]
  %v1712 = vld [vmem:[%s1687 + $0x90] sm:$0xf]
  %v1713 = vld [vmem:[%s1687 + $0x94] sm:$0xf]
  %v1714 = vld [vmem:[%s1687 + $0x9c] sm:$0xf]
  %v1715 = vld [vmem:[%s1687 + $0xa0] sm:$0xf]
  %v1716 = vld [vmem:[%s1687 + $0xa8] sm:$0xf]
  %v1717 = vld [vmem:[%s1687 + $0xac] sm:$0xf]
  %v1718 = vld [vmem:[%s1687 + $0xb4] sm:$0xf]
  %v1719 = vld [vmem:[%s1687 + $0xb8] sm:$0xf]
  %v1720 = vld [vmem:[%s1687 + $0xd8] sm:$0xf]
  %v1721 = vld [vmem:[%s1687 + $0xdc] sm:$0xf]
  %v1722 = vld [vmem:[%s1687 + $0xe4] sm:$0xf]
  %v1723 = vld [vmem:[%s1687 + $0xe8] sm:$0xf]
  %v1724 = vld [vmem:[%s1687 + $0xf0] sm:$0xf]
  %v1725 = vld [vmem:[%s1687 + $0xf4] sm:$0xf]
  %v1726 = vld [vmem:[%s1687 + $0xfc] sm:$0xf]
  %v1727 = vld [vmem:[%s1687 + $0x100] sm:$0xf]
  %v1728 = vld [vmem:[%s1687 + $0x108] sm:$0xf]
  %v1729 = vld [vmem:[%s1687 + $0x10c] sm:$0xf]
  %v1730 = vld [vmem:[%s1687 + $0x114] sm:$0xf]
  %v1731 = vld [vmem:[%s1687 + $0x118] sm:$0xf]
  %v1732 = vld [vmem:[%s1687 + $0x120] sm:$0xf]
  %v1733 = vld [vmem:[%s1687 + $0x124] sm:$0xf]
  %v1734 = vld [vmem:[%s1687 + $0x12c] sm:$0xf]
  %v1735 = vld [vmem:[%s1687 + $0x130] sm:$0xf]
  %v1736 = vld [vmem:[%s1687 + $0x138] sm:$0xf]
  %v1737 = vld [vmem:[%s1687 + $0x13c] sm:$0xf]
  %v1738 = vld [vmem:[%s1687 + $0x144] sm:$0xf]
  %v1739 = vld [vmem:[%s1687 + $0x148] sm:$0xf]
  %v1740 = vld [vmem:[%s1687 + $0x150] sm:$0xf]
  %v1741 = vld [vmem:[%s1687 + $0x154] sm:$0xf]
  %v1742 = vld [vmem:[%s1687 + $0x15c] sm:$0xf]
  %v1743 = vld [vmem:[%s1687 + $0x160] sm:$0xf]
  %v1744 = vld [vmem:[%s1687 + $0x168] sm:$0xf]
  %v1745 = vld [vmem:[%s1687 + $0x16c] sm:$0xf]
  %v1746 = vld [vmem:[%s1687 + $0x174] sm:$0xf]
  %v1747 = vld [vmem:[%s1687 + $0x178] sm:$0xf]
  %v1748 = vld [vmem:[%s1687 + $0x180] sm:$0xf]
  %v1749 = vld [vmem:[%s1687 + $0x184] sm:$0xf]
  %v1750 = vld [vmem:[%s1687 + $0x18c] sm:$0xf]
  %v1751 = vld [vmem:[%s1687 + $0x190] sm:$0xf]
  %1752 = vst [vmem:[#allocation2 + $0xc] sm:$0xf] %v1688
  %1753 = vst [vmem:[#allocation2 + $0x30] sm:$0xf] %v1689
  %1754 = vst [vmem:[#allocation2 + $0x54] sm:$0xf] %v1690
  %1755 = vst [vmem:[#allocation2 + $0x78] sm:$0xf] %v1691
  %1756 = vst [vmem:[#allocation2 + $0x9c] sm:$0xf] %v1692
  %1757 = vst [vmem:[#allocation2 + $0xc0] sm:$0xf] %v1693
  %1758 = vst [vmem:[#allocation2 + $0xe4] sm:$0xf] %v1694
  %1759 = vst [vmem:[#allocation2 + $0x108] sm:$0xf] %v1695
  %1760 = vst [vmem:[#allocation2 + $0x12c] sm:$0xf] %v1696
  %1761 = vst [vmem:[#allocation2 + $0x150] sm:$0xf] %v1697
  %1762 = vst [vmem:[#allocation2 + $0x174] sm:$0xf] %v1698
  %1763 = vst [vmem:[#allocation2 + $0x198] sm:$0xf] %v1699
  %1764 = vst [vmem:[#allocation2 + $0x1bc] sm:$0xf] %v1700
  %1765 = vst [vmem:[#allocation2 + $0x1e0] sm:$0xf] %v1701
  %1766 = vst [vmem:[#allocation2 + $0x204] sm:$0xf] %v1702
  %1767 = vst [vmem:[#allocation2 + $0x228] sm:$0xf] %v1703
  %1768 = vst [vmem:[#allocation2 + $0x24c] sm:$0xf] %v1704
  %1769 = vst [vmem:[#allocation2 + $0x270] sm:$0xf] %v1705
  %1770 = vst [vmem:[#allocation2 + $0x294] sm:$0xf] %v1706
  %1771 = vst [vmem:[#allocation2 + $0x2b8] sm:$0xf] %v1707
  %1772 = vst [vmem:[#allocation2 + $0x2dc] sm:$0xf] %v1708
  %1773 = vst [vmem:[#allocation2 + $0x300] sm:$0xf] %v1709
  %1774 = vst [vmem:[#allocation2 + $0x324] sm:$0xf] %v1710
  %1775 = vst [vmem:[#allocation2 + $0x348] sm:$0xf] %v1711
  %1776 = vst [vmem:[#allocation2 + $0x36c] sm:$0xf] %v1712
  %1777 = vst [vmem:[#allocation2 + $0x390] sm:$0xf] %v1713
  %1778 = vst [vmem:[#allocation2 + $0x3b4] sm:$0xf] %v1714
  %1779 = vst [vmem:[#allocation2 + $0x3d8] sm:$0xf] %v1715
  %1780 = vst [vmem:[#allocation2 + $0x3fc] sm:$0xf] %v1716
  %1781 = vst [vmem:[#allocation2 + $0x420] sm:$0xf] %v1717
  %1782 = vst [vmem:[#allocation2 + $0x444] sm:$0xf] %v1718
  %1783 = vst [vmem:[#allocation2 + $0x468] sm:$0xf] %v1719
  %1784 = vst [vmem:[#allocation2 + $0x48c] sm:$0xf] %v1720
  %1785 = vst [vmem:[#allocation2 + $0x4b0] sm:$0xf] %v1721
  %1786 = vst [vmem:[#allocation2 + $0x4d4] sm:$0xf] %v1722
  %1787 = vst [vmem:[#allocation2 + $0x4f8] sm:$0xf] %v1723
  %1788 = vst [vmem:[#allocation2 + $0x51c] sm:$0xf] %v1724
  %1789 = vst [vmem:[#allocation2 + $0x540] sm:$0xf] %v1725
  %1790 = vst [vmem:[#allocation2 + $0x564] sm:$0xf] %v1726
  %1791 = vst [vmem:[#allocation2 + $0x588] sm:$0xf] %v1727
  %1792 = vst [vmem:[#allocation2 + $0x5ac] sm:$0xf] %v1728
  %1793 = vst [vmem:[#allocation2 + $0x5d0] sm:$0xf] %v1729
  %1794 = vst [vmem:[#allocation2 + $0x5f4] sm:$0xf] %v1730
  %1795 = vst [vmem:[#allocation2 + $0x618] sm:$0xf] %v1731
  %1796 = vst [vmem:[#allocation2 + $0x63c] sm:$0xf] %v1732
  %1797 = vst [vmem:[#allocation2 + $0x660] sm:$0xf] %v1733
  %1798 = vst [vmem:[#allocation2 + $0x684] sm:$0xf] %v1734
  %1799 = vst [vmem:[#allocation2 + $0x6a8] sm:$0xf] %v1735
  %1800 = vst [vmem:[#allocation2 + $0x6cc] sm:$0xf] %v1736
  %1801 = vst [vmem:[#allocation2 + $0x6f0] sm:$0xf] %v1737
  %1802 = vst [vmem:[#allocation2 + $0x714] sm:$0xf] %v1738
  %1803 = vst [vmem:[#allocation2 + $0x738] sm:$0xf] %v1739
  %1804 = vst [vmem:[#allocation2 + $0x75c] sm:$0xf] %v1740
  %1805 = vst [vmem:[#allocation2 + $0x780] sm:$0xf] %v1741
  %1806 = vst [vmem:[#allocation2 + $0x7a4] sm:$0xf] %v1742
  %1807 = vst [vmem:[#allocation2 + $0x7c8] sm:$0xf] %v1743
  %1808 = vst [vmem:[#allocation2 + $0x7ec] sm:$0xf] %v1744
  %1809 = vst [vmem:[#allocation2 + $0x810] sm:$0xf] %v1745
  %1810 = vst [vmem:[#allocation2 + $0x834] sm:$0xf] %v1746
  %1811 = vst [vmem:[#allocation2 + $0x858] sm:$0xf] %v1747
  %1812 = vst [vmem:[#allocation2 + $0x87c] sm:$0xf] %v1748
  %1813 = vst [vmem:[#allocation2 + $0x8a0] sm:$0xf] %v1749
  %1814 = vst [vmem:[#allocation2 + $0x8c4] sm:$0xf] %v1750
  %1815 = vst [vmem:[#allocation2 + $0x8e8] sm:$0xf] %v1751
  %v1816 = vld [vmem:[%s1687] sm:$0xf]
  %v1817 = vld [vmem:[%s1687 + $0x4] sm:$0xf]
  %v1818 = vld [vmem:[%s1687 + $0x8] sm:$0x1]
  %v1819 = vld [vmem:[%s1687 + $0xc] sm:$0xf]
  %v1820 = vld [vmem:[%s1687 + $0x10] sm:$0xf]
  %v1821 = vld [vmem:[%s1687 + $0x14] sm:$0x1]
  %v1822 = vld [vmem:[%s1687 + $0x18] sm:$0xf]
  %v1823 = vld [vmem:[%s1687 + $0x1c] sm:$0xf]
  %v1824 = vld [vmem:[%s1687 + $0x20] sm:$0x1]
  %v1825 = vld [vmem:[%s1687 + $0x24] sm:$0xf]
  %v1826 = vld [vmem:[%s1687 + $0x28] sm:$0xf]
  %v1827 = vld [vmem:[%s1687 + $0x2c] sm:$0x1]
  %v1828 = vld [vmem:[%s1687 + $0x30] sm:$0xf]
  %v1829 = vld [vmem:[%s1687 + $0x34] sm:$0xf]
  %v1830 = vld [vmem:[%s1687 + $0x38] sm:$0x1]
  %v1831 = vld [vmem:[%s1687 + $0x3c] sm:$0xf]
  %v1832 = vld [vmem:[%s1687 + $0x40] sm:$0xf]
  %v1833 = vld [vmem:[%s1687 + $0x44] sm:$0x1]
  %v1834 = vld [vmem:[%s1687 + $0x48] sm:$0xf]
  %v1835 = vld [vmem:[%s1687 + $0x4c] sm:$0xf]
  %v1836 = vld [vmem:[%s1687 + $0x50] sm:$0x1]
  %v1837 = vld [vmem:[%s1687 + $0x54] sm:$0xf]
  %v1838 = vld [vmem:[%s1687 + $0x58] sm:$0xf]
  %v1839 = vld [vmem:[%s1687 + $0x5c] sm:$0x1]
  %v1840 = vld [vmem:[%s1687 + $0x60] sm:$0xf]
  %v1841 = vld [vmem:[%s1687 + $0x64] sm:$0xf]
  %v1842 = vld [vmem:[%s1687 + $0x68] sm:$0x1]
  %v1843 = vld [vmem:[%s1687 + $0x6c] sm:$0xf]
  %v1844 = vld [vmem:[%s1687 + $0x70] sm:$0xf]
  %v1845 = vld [vmem:[%s1687 + $0x74] sm:$0x1]
  %v1846 = vld [vmem:[%s1687 + $0x78] sm:$0xf]
  %v1847 = vld [vmem:[%s1687 + $0x7c] sm:$0xf]
  %v1848 = vld [vmem:[%s1687 + $0x80] sm:$0x1]
  %v1849 = vld [vmem:[%s1687 + $0x84] sm:$0xf]
  %v1850 = vld [vmem:[%s1687 + $0x88] sm:$0xf]
  %v1851 = vld [vmem:[%s1687 + $0x8c] sm:$0x1]
  %v1852 = vld [vmem:[%s1687 + $0x90] sm:$0xf]
  %v1853 = vld [vmem:[%s1687 + $0x94] sm:$0xf]
  %v1854 = vld [vmem:[%s1687 + $0x98] sm:$0x1]
  %v1855 = vld [vmem:[%s1687 + $0x9c] sm:$0xf]
  %v1856 = vld [vmem:[%s1687 + $0xa0] sm:$0xf]
  %v1857 = vld [vmem:[%s1687 + $0xa4] sm:$0x1]
  %v1858 = vld [vmem:[%s1687 + $0xa8] sm:$0xf]
  %v1859 = vld [vmem:[%s1687 + $0xac] sm:$0xf]
  %v1860 = vld [vmem:[%s1687 + $0xb0] sm:$0x1]
  %v1861 = vld [vmem:[%s1687 + $0xb4] sm:$0xf]
  %v1862 = vld [vmem:[%s1687 + $0xb8] sm:$0xf]
  %v1863 = vld [vmem:[%s1687 + $0xbc] sm:$0x1]
  %v1864 = vld [vmem:[%s1687 + $0xd8] sm:$0xf]
  %v1865 = vld [vmem:[%s1687 + $0xdc] sm:$0xf]
  %v1866 = vld [vmem:[%s1687 + $0xe0] sm:$0x1]
  %v1867 = vld [vmem:[%s1687 + $0xe4] sm:$0xf]
  %v1868 = vld [vmem:[%s1687 + $0xe8] sm:$0xf]
  %v1869 = vld [vmem:[%s1687 + $0xec] sm:$0x1]
  %v1870 = vld [vmem:[%s1687 + $0xf0] sm:$0xf]
  %v1871 = vld [vmem:[%s1687 + $0xf4] sm:$0xf]
  %v1872 = vld [vmem:[%s1687 + $0xf8] sm:$0x1]
  %v1873 = vld [vmem:[%s1687 + $0xfc] sm:$0xf]
  %v1874 = vld [vmem:[%s1687 + $0x100] sm:$0xf]
  %v1875 = vld [vmem:[%s1687 + $0x104] sm:$0x1]
  %v1876 = vld [vmem:[%s1687 + $0x108] sm:$0xf]
  %v1877 = vld [vmem:[%s1687 + $0x10c] sm:$0xf]
  %v1878 = vld [vmem:[%s1687 + $0x110] sm:$0x1]
  %v1879 = vld [vmem:[%s1687 + $0x114] sm:$0xf]
  %v1880 = vld [vmem:[%s1687 + $0x118] sm:$0xf]
  %v1881 = vld [vmem:[%s1687 + $0x11c] sm:$0x1]
  %v1882 = vld [vmem:[%s1687 + $0x120] sm:$0xf]
  %v1883 = vld [vmem:[%s1687 + $0x124] sm:$0xf]
  %v1884 = vld [vmem:[%s1687 + $0x128] sm:$0x1]
  %v1885 = vld [vmem:[%s1687 + $0x12c] sm:$0xf]
  %v1886 = vld [vmem:[%s1687 + $0x130] sm:$0xf]
  %v1887 = vld [vmem:[%s1687 + $0x134] sm:$0x1]
  %v1888 = vld [vmem:[%s1687 + $0x138] sm:$0xf]
  %v1889 = vld [vmem:[%s1687 + $0x13c] sm:$0xf]
  %v1890 = vld [vmem:[%s1687 + $0x140] sm:$0x1]
  %v1891 = vld [vmem:[%s1687 + $0x144] sm:$0xf]
  %v1892 = vld [vmem:[%s1687 + $0x148] sm:$0xf]
  %v1893 = vld [vmem:[%s1687 + $0x14c] sm:$0x1]
  %v1894 = vld [vmem:[%s1687 + $0x150] sm:$0xf]
  %v1895 = vld [vmem:[%s1687 + $0x154] sm:$0xf]
  %v1896 = vld [vmem:[%s1687 + $0x158] sm:$0x1]
  %v1897 = vld [vmem:[%s1687 + $0x15c] sm:$0xf]
  %v1898 = vld [vmem:[%s1687 + $0x160] sm:$0xf]
  %v1899 = vld [vmem:[%s1687 + $0x164] sm:$0x1]
  %v1900 = vld [vmem:[%s1687 + $0x168] sm:$0xf]
  %v1901 = vld [vmem:[%s1687 + $0x16c] sm:$0xf]
  %v1902 = vld [vmem:[%s1687 + $0x170] sm:$0x1]
  %v1903 = vld [vmem:[%s1687 + $0x174] sm:$0xf]
  %v1904 = vld [vmem:[%s1687 + $0x178] sm:$0xf]
  %v1905 = vld [vmem:[%s1687 + $0x17c] sm:$0x1]
  %v1906 = vld [vmem:[%s1687 + $0x180] sm:$0xf]
  %v1907 = vld [vmem:[%s1687 + $0x184] sm:$0xf]
  %v1908 = vld [vmem:[%s1687 + $0x188] sm:$0x1]
  %v1909 = vld [vmem:[%s1687 + $0x18c] sm:$0xf]
  %v1910 = vld [vmem:[%s1687 + $0x190] sm:$0xf]
  %v1911 = vld [vmem:[%s1687 + $0x194] sm:$0x1]
  %v1913 = vshrl.u32 %v1816, 16
  %v1915 = vrot.slane %v1913, 4
  %v1916 = vshll.u32 %v1816, 16
  %v1918 = vrot.slane %v1916, 5
  %v1919 = vor.u32 %v1915, %v1918
  %v1920 = vrot.slane %v1919, 4
  %v1922 = vshll.u32 %v1817, 16
  %v1924 = vrot.slane %v1922, 5
  %v1925 = vsel %vm243, %v1920, %v1924
  %v1926 = vshrl.u32 %v1817, 16
  %v1928 = vrot.slane %v1926, 4
  %v1929 = vor.u32 %v1928, %v1924
  %v1930 = vrot.slane %v1929, 4
  %v1932 = vshll.u32 %v1818, 16
  %v1934 = vrot.slane %v1932, 5
  %v1935 = vsel %vm243, %v1930, %v1934
  %v1937 = vshrl.u32 %v1819, 16
  %v1939 = vrot.slane %v1937, 4
  %v1940 = vshll.u32 %v1819, 16
  %v1942 = vrot.slane %v1940, 5
  %v1943 = vor.u32 %v1939, %v1942
  %v1944 = vrot.slane %v1943, 4
  %v1946 = vshll.u32 %v1820, 16
  %v1948 = vrot.slane %v1946, 5
  %v1949 = vsel %vm243, %v1944, %v1948
  %v1950 = vshrl.u32 %v1820, 16
  %v1952 = vrot.slane %v1950, 4
  %v1953 = vor.u32 %v1952, %v1948
  %v1954 = vrot.slane %v1953, 4
  %v1956 = vshll.u32 %v1821, 16
  %v1958 = vrot.slane %v1956, 5
  %v1959 = vsel %vm243, %v1954, %v1958
  %v1961 = vshrl.u32 %v1822, 16
  %v1963 = vrot.slane %v1961, 4
  %v1964 = vshll.u32 %v1822, 16
  %v1966 = vrot.slane %v1964, 5
  %v1967 = vor.u32 %v1963, %v1966
  %v1968 = vrot.slane %v1967, 4
  %v1970 = vshll.u32 %v1823, 16
  %v1972 = vrot.slane %v1970, 5
  %v1973 = vsel %vm243, %v1968, %v1972
  %v1974 = vshrl.u32 %v1823, 16
  %v1976 = vrot.slane %v1974, 4
  %v1977 = vor.u32 %v1976, %v1972
  %v1978 = vrot.slane %v1977, 4
  %v1980 = vshll.u32 %v1824, 16
  %v1982 = vrot.slane %v1980, 5
  %v1983 = vsel %vm243, %v1978, %v1982
  %v1985 = vshrl.u32 %v1825, 16
  %v1987 = vrot.slane %v1985, 4
  %v1988 = vshll.u32 %v1825, 16
  %v1990 = vrot.slane %v1988, 5
  %v1991 = vor.u32 %v1987, %v1990
  %v1992 = vrot.slane %v1991, 4
  %v1994 = vshll.u32 %v1826, 16
  %v1996 = vrot.slane %v1994, 5
  %v1997 = vsel %vm243, %v1992, %v1996
  %v1998 = vshrl.u32 %v1826, 16
  %v2000 = vrot.slane %v1998, 4
  %v2001 = vor.u32 %v2000, %v1996
  %v2002 = vrot.slane %v2001, 4
  %v2004 = vshll.u32 %v1827, 16
  %v2006 = vrot.slane %v2004, 5
  %v2007 = vsel %vm243, %v2002, %v2006
  %v2009 = vshrl.u32 %v1828, 16
  %v2011 = vrot.slane %v2009, 4
  %v2012 = vshll.u32 %v1828, 16
  %v2014 = vrot.slane %v2012, 5
  %v2015 = vor.u32 %v2011, %v2014
  %v2016 = vrot.slane %v2015, 4
  %v2018 = vshll.u32 %v1829, 16
  %v2020 = vrot.slane %v2018, 5
  %v2021 = vsel %vm243, %v2016, %v2020
  %v2022 = vshrl.u32 %v1829, 16
  %v2024 = vrot.slane %v2022, 4
  %v2025 = vor.u32 %v2024, %v2020
  %v2026 = vrot.slane %v2025, 4
  %v2028 = vshll.u32 %v1830, 16
  %v2030 = vrot.slane %v2028, 5
  %v2031 = vsel %vm243, %v2026, %v2030
  %v2033 = vshrl.u32 %v1831, 16
  %v2035 = vrot.slane %v2033, 4
  %v2036 = vshll.u32 %v1831, 16
  %v2038 = vrot.slane %v2036, 5
  %v2039 = vor.u32 %v2035, %v2038
  %v2040 = vrot.slane %v2039, 4
  %v2042 = vshll.u32 %v1832, 16
  %v2044 = vrot.slane %v2042, 5
  %v2045 = vsel %vm243, %v2040, %v2044
  %v2046 = vshrl.u32 %v1832, 16
  %v2048 = vrot.slane %v2046, 4
  %v2049 = vor.u32 %v2048, %v2044
  %v2050 = vrot.slane %v2049, 4
  %v2052 = vshll.u32 %v1833, 16
  %v2054 = vrot.slane %v2052, 5
  %v2055 = vsel %vm243, %v2050, %v2054
  %v2057 = vshrl.u32 %v1834, 16
  %v2059 = vrot.slane %v2057, 4
  %v2060 = vshll.u32 %v1834, 16
  %v2062 = vrot.slane %v2060, 5
  %v2063 = vor.u32 %v2059, %v2062
  %v2064 = vrot.slane %v2063, 4
  %v2066 = vshll.u32 %v1835, 16
  %v2068 = vrot.slane %v2066, 5
  %v2069 = vsel %vm243, %v2064, %v2068
  %v2070 = vshrl.u32 %v1835, 16
  %v2072 = vrot.slane %v2070, 4
  %v2073 = vor.u32 %v2072, %v2068
  %v2074 = vrot.slane %v2073, 4
  %v2076 = vshll.u32 %v1836, 16
  %v2078 = vrot.slane %v2076, 5
  %v2079 = vsel %vm243, %v2074, %v2078
  %v2081 = vshrl.u32 %v1837, 16
  %v2083 = vrot.slane %v2081, 4
  %v2084 = vshll.u32 %v1837, 16
  %v2086 = vrot.slane %v2084, 5
  %v2087 = vor.u32 %v2083, %v2086
  %v2088 = vrot.slane %v2087, 4
  %v2090 = vshll.u32 %v1838, 16
  %v2092 = vrot.slane %v2090, 5
  %v2093 = vsel %vm243, %v2088, %v2092
  %v2094 = vshrl.u32 %v1838, 16
  %v2096 = vrot.slane %v2094, 4
  %v2097 = vor.u32 %v2096, %v2092
  %v2098 = vrot.slane %v2097, 4
  %v2100 = vshll.u32 %v1839, 16
  %v2102 = vrot.slane %v2100, 5
  %v2103 = vsel %vm243, %v2098, %v2102
  %v2105 = vshrl.u32 %v1840, 16
  %v2107 = vrot.slane %v2105, 4
  %v2108 = vshll.u32 %v1840, 16
  %v2110 = vrot.slane %v2108, 5
  %v2111 = vor.u32 %v2107, %v2110
  %v2112 = vrot.slane %v2111, 4
  %v2114 = vshll.u32 %v1841, 16
  %v2116 = vrot.slane %v2114, 5
  %v2117 = vsel %vm243, %v2112, %v2116
  %v2118 = vshrl.u32 %v1841, 16
  %v2120 = vrot.slane %v2118, 4
  %v2121 = vor.u32 %v2120, %v2116
  %v2122 = vrot.slane %v2121, 4
  %v2124 = vshll.u32 %v1842, 16
  %v2126 = vrot.slane %v2124, 5
  %v2127 = vsel %vm243, %v2122, %v2126
  %v2129 = vshrl.u32 %v1843, 16
  %v2131 = vrot.slane %v2129, 4
  %v2132 = vshll.u32 %v1843, 16
  %v2134 = vrot.slane %v2132, 5
  %v2135 = vor.u32 %v2131, %v2134
  %v2136 = vrot.slane %v2135, 4
  %v2138 = vshll.u32 %v1844, 16
  %v2140 = vrot.slane %v2138, 5
  %v2141 = vsel %vm243, %v2136, %v2140
  %v2142 = vshrl.u32 %v1844, 16
  %v2144 = vrot.slane %v2142, 4
  %v2145 = vor.u32 %v2144, %v2140
  %v2146 = vrot.slane %v2145, 4
  %v2148 = vshll.u32 %v1845, 16
  %v2150 = vrot.slane %v2148, 5
  %v2151 = vsel %vm243, %v2146, %v2150
  %v2153 = vshrl.u32 %v1846, 16
  %v2155 = vrot.slane %v2153, 4
  %v2156 = vshll.u32 %v1846, 16
  %v2158 = vrot.slane %v2156, 5
  %v2159 = vor.u32 %v2155, %v2158
  %v2160 = vrot.slane %v2159, 4
  %v2162 = vshll.u32 %v1847, 16
  %v2164 = vrot.slane %v2162, 5
  %v2165 = vsel %vm243, %v2160, %v2164
  %v2166 = vshrl.u32 %v1847, 16
  %v2168 = vrot.slane %v2166, 4
  %v2169 = vor.u32 %v2168, %v2164
  %v2170 = vrot.slane %v2169, 4
  %v2172 = vshll.u32 %v1848, 16
  %v2174 = vrot.slane %v2172, 5
  %v2175 = vsel %vm243, %v2170, %v2174
  %v2177 = vshrl.u32 %v1849, 16
  %v2179 = vrot.slane %v2177, 4
  %v2180 = vshll.u32 %v1849, 16
  %v2182 = vrot.slane %v2180, 5
  %v2183 = vor.u32 %v2179, %v2182
  %v2184 = vrot.slane %v2183, 4
  %v2186 = vshll.u32 %v1850, 16
  %v2188 = vrot.slane %v2186, 5
  %v2189 = vsel %vm243, %v2184, %v2188
  %v2190 = vshrl.u32 %v1850, 16
  %v2192 = vrot.slane %v2190, 4
  %v2193 = vor.u32 %v2192, %v2188
  %v2194 = vrot.slane %v2193, 4
  %v2196 = vshll.u32 %v1851, 16
  %v2198 = vrot.slane %v2196, 5
  %v2199 = vsel %vm243, %v2194, %v2198
  %v2201 = vshrl.u32 %v1852, 16
  %v2203 = vrot.slane %v2201, 4
  %v2204 = vshll.u32 %v1852, 16
  %v2206 = vrot.slane %v2204, 5
  %v2207 = vor.u32 %v2203, %v2206
  %v2208 = vrot.slane %v2207, 4
  %v2210 = vshll.u32 %v1853, 16
  %v2212 = vrot.slane %v2210, 5
  %v2213 = vsel %vm243, %v2208, %v2212
  %v2214 = vshrl.u32 %v1853, 16
  %v2216 = vrot.slane %v2214, 4
  %v2217 = vor.u32 %v2216, %v2212
  %v2218 = vrot.slane %v2217, 4
  %v2220 = vshll.u32 %v1854, 16
  %v2222 = vrot.slane %v2220, 5
  %v2223 = vsel %vm243, %v2218, %v2222
  %v2225 = vshrl.u32 %v1855, 16
  %v2227 = vrot.slane %v2225, 4
  %v2228 = vshll.u32 %v1855, 16
  %v2230 = vrot.slane %v2228, 5
  %v2231 = vor.u32 %v2227, %v2230
  %v2232 = vrot.slane %v2231, 4
  %v2234 = vshll.u32 %v1856, 16
  %v2236 = vrot.slane %v2234, 5
  %v2237 = vsel %vm243, %v2232, %v2236
  %v2238 = vshrl.u32 %v1856, 16
  %v2240 = vrot.slane %v2238, 4
  %v2241 = vor.u32 %v2240, %v2236
  %v2242 = vrot.slane %v2241, 4
  %v2244 = vshll.u32 %v1857, 16
  %v2246 = vrot.slane %v2244, 5
  %v2247 = vsel %vm243, %v2242, %v2246
  %v2249 = vshrl.u32 %v1858, 16
  %v2251 = vrot.slane %v2249, 4
  %v2252 = vshll.u32 %v1858, 16
  %v2254 = vrot.slane %v2252, 5
  %v2255 = vor.u32 %v2251, %v2254
  %v2256 = vrot.slane %v2255, 4
  %v2258 = vshll.u32 %v1859, 16
  %v2260 = vrot.slane %v2258, 5
  %v2261 = vsel %vm243, %v2256, %v2260
  %v2262 = vshrl.u32 %v1859, 16
  %v2264 = vrot.slane %v2262, 4
  %v2265 = vor.u32 %v2264, %v2260
  %v2266 = vrot.slane %v2265, 4
  %v2268 = vshll.u32 %v1860, 16
  %v2270 = vrot.slane %v2268, 5
  %v2271 = vsel %vm243, %v2266, %v2270
  %v2273 = vshrl.u32 %v1861, 16
  %v2275 = vrot.slane %v2273, 4
  %v2276 = vshll.u32 %v1861, 16
  %v2278 = vrot.slane %v2276, 5
  %v2279 = vor.u32 %v2275, %v2278
  %v2280 = vrot.slane %v2279, 4
  %v2282 = vshll.u32 %v1862, 16
  %v2284 = vrot.slane %v2282, 5
  %v2285 = vsel %vm243, %v2280, %v2284
  %v2286 = vshrl.u32 %v1862, 16
  %v2288 = vrot.slane %v2286, 4
  %v2289 = vor.u32 %v2288, %v2284
  %v2290 = vrot.slane %v2289, 4
  %v2292 = vshll.u32 %v1863, 16
  %v2294 = vrot.slane %v2292, 5
  %v2295 = vsel %vm243, %v2290, %v2294
  %v2297 = vshrl.u32 %v1864, 16
  %v2299 = vrot.slane %v2297, 4
  %v2300 = vshll.u32 %v1864, 16
  %v2302 = vrot.slane %v2300, 5
  %v2303 = vor.u32 %v2299, %v2302
  %v2304 = vrot.slane %v2303, 4
  %v2306 = vshll.u32 %v1865, 16
  %v2308 = vrot.slane %v2306, 5
  %v2309 = vsel %vm243, %v2304, %v2308
  %v2310 = vshrl.u32 %v1865, 16
  %v2312 = vrot.slane %v2310, 4
  %v2313 = vor.u32 %v2312, %v2308
  %v2314 = vrot.slane %v2313, 4
  %v2316 = vshll.u32 %v1866, 16
  %v2318 = vrot.slane %v2316, 5
  %v2319 = vsel %vm243, %v2314, %v2318
  %v2321 = vshrl.u32 %v1867, 16
  %v2323 = vrot.slane %v2321, 4
  %v2324 = vshll.u32 %v1867, 16
  %v2326 = vrot.slane %v2324, 5
  %v2327 = vor.u32 %v2323, %v2326
  %v2328 = vrot.slane %v2327, 4
  %v2330 = vshll.u32 %v1868, 16
  %v2332 = vrot.slane %v2330, 5
  %v2333 = vsel %vm243, %v2328, %v2332
  %v2334 = vshrl.u32 %v1868, 16
  %v2336 = vrot.slane %v2334, 4
  %v2337 = vor.u32 %v2336, %v2332
  %v2338 = vrot.slane %v2337, 4
  %v2340 = vshll.u32 %v1869, 16
  %v2342 = vrot.slane %v2340, 5
  %v2343 = vsel %vm243, %v2338, %v2342
  %v2345 = vshrl.u32 %v1870, 16
  %v2347 = vrot.slane %v2345, 4
  %v2348 = vshll.u32 %v1870, 16
  %v2350 = vrot.slane %v2348, 5
  %v2351 = vor.u32 %v2347, %v2350
  %v2352 = vrot.slane %v2351, 4
  %v2354 = vshll.u32 %v1871, 16
  %v2356 = vrot.slane %v2354, 5
  %v2357 = vsel %vm243, %v2352, %v2356
  %v2358 = vshrl.u32 %v1871, 16
  %v2360 = vrot.slane %v2358, 4
  %v2361 = vor.u32 %v2360, %v2356
  %v2362 = vrot.slane %v2361, 4
  %v2364 = vshll.u32 %v1872, 16
  %v2366 = vrot.slane %v2364, 5
  %v2367 = vsel %vm243, %v2362, %v2366
  %v2369 = vshrl.u32 %v1873, 16
  %v2371 = vrot.slane %v2369, 4
  %v2372 = vshll.u32 %v1873, 16
  %v2374 = vrot.slane %v2372, 5
  %v2375 = vor.u32 %v2371, %v2374
  %v2376 = vrot.slane %v2375, 4
  %v2378 = vshll.u32 %v1874, 16
  %v2380 = vrot.slane %v2378, 5
  %v2381 = vsel %vm243, %v2376, %v2380
  %v2382 = vshrl.u32 %v1874, 16
  %v2384 = vrot.slane %v2382, 4
  %v2385 = vor.u32 %v2384, %v2380
  %v2386 = vrot.slane %v2385, 4
  %v2388 = vshll.u32 %v1875, 16
  %v2390 = vrot.slane %v2388, 5
  %v2391 = vsel %vm243, %v2386, %v2390
  %v2393 = vshrl.u32 %v1876, 16
  %v2395 = vrot.slane %v2393, 4
  %v2396 = vshll.u32 %v1876, 16
  %v2398 = vrot.slane %v2396, 5
  %v2399 = vor.u32 %v2395, %v2398
  %v2400 = vrot.slane %v2399, 4
  %v2402 = vshll.u32 %v1877, 16
  %v2404 = vrot.slane %v2402, 5
  %v2405 = vsel %vm243, %v2400, %v2404
  %v2406 = vshrl.u32 %v1877, 16
  %v2408 = vrot.slane %v2406, 4
  %v2409 = vor.u32 %v2408, %v2404
  %v2410 = vrot.slane %v2409, 4
  %v2412 = vshll.u32 %v1878, 16
  %v2414 = vrot.slane %v2412, 5
  %v2415 = vsel %vm243, %v2410, %v2414
  %v2417 = vshrl.u32 %v1879, 16
  %v2419 = vrot.slane %v2417, 4
  %v2420 = vshll.u32 %v1879, 16
  %v2422 = vrot.slane %v2420, 5
  %v2423 = vor.u32 %v2419, %v2422
  %v2424 = vrot.slane %v2423, 4
  %v2426 = vshll.u32 %v1880, 16
  %v2428 = vrot.slane %v2426, 5
  %v2429 = vsel %vm243, %v2424, %v2428
  %v2430 = vshrl.u32 %v1880, 16
  %v2432 = vrot.slane %v2430, 4
  %v2433 = vor.u32 %v2432, %v2428
  %v2434 = vrot.slane %v2433, 4
  %v2436 = vshll.u32 %v1881, 16
  %v2438 = vrot.slane %v2436, 5
  %v2439 = vsel %vm243, %v2434, %v2438
  %v2441 = vshrl.u32 %v1882, 16
  %v2443 = vrot.slane %v2441, 4
  %v2444 = vshll.u32 %v1882, 16
  %v2446 = vrot.slane %v2444, 5
  %v2447 = vor.u32 %v2443, %v2446
  %v2448 = vrot.slane %v2447, 4
  %v2450 = vshll.u32 %v1883, 16
  %v2452 = vrot.slane %v2450, 5
  %v2453 = vsel %vm243, %v2448, %v2452
  %v2454 = vshrl.u32 %v1883, 16
  %v2456 = vrot.slane %v2454, 4
  %v2457 = vor.u32 %v2456, %v2452
  %v2458 = vrot.slane %v2457, 4
  %v2460 = vshll.u32 %v1884, 16
  %v2462 = vrot.slane %v2460, 5
  %v2463 = vsel %vm243, %v2458, %v2462
  %v2465 = vshrl.u32 %v1885, 16
  %v2467 = vrot.slane %v2465, 4
  %v2468 = vshll.u32 %v1885, 16
  %v2470 = vrot.slane %v2468, 5
  %v2471 = vor.u32 %v2467, %v2470
  %v2472 = vrot.slane %v2471, 4
  %v2474 = vshll.u32 %v1886, 16
  %v2476 = vrot.slane %v2474, 5
  %v2477 = vsel %vm243, %v2472, %v2476
  %v2478 = vshrl.u32 %v1886, 16
  %v2480 = vrot.slane %v2478, 4
  %v2481 = vor.u32 %v2480, %v2476
  %v2482 = vrot.slane %v2481, 4
  %v2484 = vshll.u32 %v1887, 16
  %v2486 = vrot.slane %v2484, 5
  %v2487 = vsel %vm243, %v2482, %v2486
  %v2489 = vshrl.u32 %v1888, 16
  %v2491 = vrot.slane %v2489, 4
  %v2492 = vshll.u32 %v1888, 16
  %v2494 = vrot.slane %v2492, 5
  %v2495 = vor.u32 %v2491, %v2494
  %v2496 = vrot.slane %v2495, 4
  %v2498 = vshll.u32 %v1889, 16
  %v2500 = vrot.slane %v2498, 5
  %v2501 = vsel %vm243, %v2496, %v2500
  %v2502 = vshrl.u32 %v1889, 16
  %v2504 = vrot.slane %v2502, 4
  %v2505 = vor.u32 %v2504, %v2500
  %v2506 = vrot.slane %v2505, 4
  %v2508 = vshll.u32 %v1890, 16
  %v2510 = vrot.slane %v2508, 5
  %v2511 = vsel %vm243, %v2506, %v2510
  %v2513 = vshrl.u32 %v1891, 16
  %v2515 = vrot.slane %v2513, 4
  %v2516 = vshll.u32 %v1891, 16
  %v2518 = vrot.slane %v2516, 5
  %v2519 = vor.u32 %v2515, %v2518
  %v2520 = vrot.slane %v2519, 4
  %v2522 = vshll.u32 %v1892, 16
  %v2524 = vrot.slane %v2522, 5
  %v2525 = vsel %vm243, %v2520, %v2524
  %v2526 = vshrl.u32 %v1892, 16
  %v2528 = vrot.slane %v2526, 4
  %v2529 = vor.u32 %v2528, %v2524
  %v2530 = vrot.slane %v2529, 4
  %v2532 = vshll.u32 %v1893, 16
  %v2534 = vrot.slane %v2532, 5
  %v2535 = vsel %vm243, %v2530, %v2534
  %v2537 = vshrl.u32 %v1894, 16
  %v2539 = vrot.slane %v2537, 4
  %v2540 = vshll.u32 %v1894, 16
  %v2542 = vrot.slane %v2540, 5
  %v2543 = vor.u32 %v2539, %v2542
  %v2544 = vrot.slane %v2543, 4
  %v2546 = vshll.u32 %v1895, 16
  %v2548 = vrot.slane %v2546, 5
  %v2549 = vsel %vm243, %v2544, %v2548
  %v2550 = vshrl.u32 %v1895, 16
  %v2552 = vrot.slane %v2550, 4
  %v2553 = vor.u32 %v2552, %v2548
  %v2554 = vrot.slane %v2553, 4
  %v2556 = vshll.u32 %v1896, 16
  %v2558 = vrot.slane %v2556, 5
  %v2559 = vsel %vm243, %v2554, %v2558
  %v2561 = vshrl.u32 %v1897, 16
  %v2563 = vrot.slane %v2561, 4
  %v2564 = vshll.u32 %v1897, 16
  %v2566 = vrot.slane %v2564, 5
  %v2567 = vor.u32 %v2563, %v2566
  %v2568 = vrot.slane %v2567, 4
  %v2570 = vshll.u32 %v1898, 16
  %v2572 = vrot.slane %v2570, 5
  %v2573 = vsel %vm243, %v2568, %v2572
  %v2574 = vshrl.u32 %v1898, 16
  %v2576 = vrot.slane %v2574, 4
  %v2577 = vor.u32 %v2576, %v2572
  %v2578 = vrot.slane %v2577, 4
  %v2580 = vshll.u32 %v1899, 16
  %v2582 = vrot.slane %v2580, 5
  %v2583 = vsel %vm243, %v2578, %v2582
  %v2585 = vshrl.u32 %v1900, 16
  %v2587 = vrot.slane %v2585, 4
  %v2588 = vshll.u32 %v1900, 16
  %v2590 = vrot.slane %v2588, 5
  %v2591 = vor.u32 %v2587, %v2590
  %v2592 = vrot.slane %v2591, 4
  %v2594 = vshll.u32 %v1901, 16
  %v2596 = vrot.slane %v2594, 5
  %v2597 = vsel %vm243, %v2592, %v2596
  %v2598 = vshrl.u32 %v1901, 16
  %v2600 = vrot.slane %v2598, 4
  %v2601 = vor.u32 %v2600, %v2596
  %v2602 = vrot.slane %v2601, 4
  %v2604 = vshll.u32 %v1902, 16
  %v2606 = vrot.slane %v2604, 5
  %v2607 = vsel %vm243, %v2602, %v2606
  %v2609 = vshrl.u32 %v1903, 16
  %v2611 = vrot.slane %v2609, 4
  %v2612 = vshll.u32 %v1903, 16
  %v2614 = vrot.slane %v2612, 5
  %v2615 = vor.u32 %v2611, %v2614
  %v2616 = vrot.slane %v2615, 4
  %v2618 = vshll.u32 %v1904, 16
  %v2620 = vrot.slane %v2618, 5
  %v2621 = vsel %vm243, %v2616, %v2620
  %v2622 = vshrl.u32 %v1904, 16
  %v2624 = vrot.slane %v2622, 4
  %v2625 = vor.u32 %v2624, %v2620
  %v2626 = vrot.slane %v2625, 4
  %v2628 = vshll.u32 %v1905, 16
  %v2630 = vrot.slane %v2628, 5
  %v2631 = vsel %vm243, %v2626, %v2630
  %v2633 = vshrl.u32 %v1906, 16
  %v2635 = vrot.slane %v2633, 4
  %v2636 = vshll.u32 %v1906, 16
  %v2638 = vrot.slane %v2636, 5
  %v2639 = vor.u32 %v2635, %v2638
  %v2640 = vrot.slane %v2639, 4
  %v2642 = vshll.u32 %v1907, 16
  %v2644 = vrot.slane %v2642, 5
  %v2645 = vsel %vm243, %v2640, %v2644
  %v2646 = vshrl.u32 %v1907, 16
  %v2648 = vrot.slane %v2646, 4
  %v2649 = vor.u32 %v2648, %v2644
  %v2650 = vrot.slane %v2649, 4
  %v2652 = vshll.u32 %v1908, 16
  %v2654 = vrot.slane %v2652, 5
  %v2655 = vsel %vm243, %v2650, %v2654
  %v2657 = vshrl.u32 %v1909, 16
  %v2659 = vrot.slane %v2657, 4
  %v2660 = vshll.u32 %v1909, 16
  %v2662 = vrot.slane %v2660, 5
  %v2663 = vor.u32 %v2659, %v2662
  %v2664 = vrot.slane %v2663, 4
  %v2666 = vshll.u32 %v1910, 16
  %v2668 = vrot.slane %v2666, 5
  %v2669 = vsel %vm243, %v2664, %v2668
  %v2670 = vshrl.u32 %v1910, 16
  %v2672 = vrot.slane %v2670, 4
  %v2673 = vor.u32 %v2672, %v2668
  %v2674 = vrot.slane %v2673, 4
  %v2676 = vshll.u32 %v1911, 16
  %v2678 = vrot.slane %v2676, 5
  %v2679 = vsel %vm243, %v2674, %v2678
  %2744 = vst [vmem:[#allocation2 + $0x10] sm:$0xf] %v1925
  %2745 = vst [vmem:[#allocation2 + $0x34] sm:$0xf] %v1935
  %2746 = vst [vmem:[#allocation2 + $0x58] sm:$0xf] %v1949
  %2747 = vst [vmem:[#allocation2 + $0x7c] sm:$0xf] %v1959
  %2748 = vst [vmem:[#allocation2 + $0xa0] sm:$0xf] %v1973
  %2749 = vst [vmem:[#allocation2 + $0xc4] sm:$0xf] %v1983
  %2750 = vst [vmem:[#allocation2 + $0xe8] sm:$0xf] %v1997
  %2751 = vst [vmem:[#allocation2 + $0x10c] sm:$0xf] %v2007
  %2752 = vst [vmem:[#allocation2 + $0x130] sm:$0xf] %v2021
  %2753 = vst [vmem:[#allocation2 + $0x154] sm:$0xf] %v2031
  %2754 = vst [vmem:[#allocation2 + $0x178] sm:$0xf] %v2045
  %2755 = vst [vmem:[#allocation2 + $0x19c] sm:$0xf] %v2055
  %2756 = vst [vmem:[#allocation2 + $0x1c0] sm:$0xf] %v2069
  %2757 = vst [vmem:[#allocation2 + $0x1e4] sm:$0xf] %v2079
  %2758 = vst [vmem:[#allocation2 + $0x208] sm:$0xf] %v2093
  %2759 = vst [vmem:[#allocation2 + $0x22c] sm:$0xf] %v2103
  %2760 = vst [vmem:[#allocation2 + $0x250] sm:$0xf] %v2117
  %2761 = vst [vmem:[#allocation2 + $0x274] sm:$0xf] %v2127
  %2762 = vst [vmem:[#allocation2 + $0x298] sm:$0xf] %v2141
  %2763 = vst [vmem:[#allocation2 + $0x2bc] sm:$0xf] %v2151
  %2764 = vst [vmem:[#allocation2 + $0x2e0] sm:$0xf] %v2165
  %2765 = vst [vmem:[#allocation2 + $0x304] sm:$0xf] %v2175
  %2766 = vst [vmem:[#allocation2 + $0x328] sm:$0xf] %v2189
  %2767 = vst [vmem:[#allocation2 + $0x34c] sm:$0xf] %v2199
  %2768 = vst [vmem:[#allocation2 + $0x370] sm:$0xf] %v2213
  %2769 = vst [vmem:[#allocation2 + $0x394] sm:$0xf] %v2223
  %2770 = vst [vmem:[#allocation2 + $0x3b8] sm:$0xf] %v2237
  %2771 = vst [vmem:[#allocation2 + $0x3dc] sm:$0xf] %v2247
  %2772 = vst [vmem:[#allocation2 + $0x400] sm:$0xf] %v2261
  %2773 = vst [vmem:[#allocation2 + $0x424] sm:$0xf] %v2271
  %2774 = vst [vmem:[#allocation2 + $0x448] sm:$0xf] %v2285
  %2775 = vst [vmem:[#allocation2 + $0x46c] sm:$0xf] %v2295
  %2776 = vst [vmem:[#allocation2 + $0x490] sm:$0xf] %v2309
  %2777 = vst [vmem:[#allocation2 + $0x4b4] sm:$0xf] %v2319
  %2778 = vst [vmem:[#allocation2 + $0x4d8] sm:$0xf] %v2333
  %2779 = vst [vmem:[#allocation2 + $0x4fc] sm:$0xf] %v2343
  %2780 = vst [vmem:[#allocation2 + $0x520] sm:$0xf] %v2357
  %2781 = vst [vmem:[#allocation2 + $0x544] sm:$0xf] %v2367
  %2782 = vst [vmem:[#allocation2 + $0x568] sm:$0xf] %v2381
  %2783 = vst [vmem:[#allocation2 + $0x58c] sm:$0xf] %v2391
  %2784 = vst [vmem:[#allocation2 + $0x5b0] sm:$0xf] %v2405
  %2785 = vst [vmem:[#allocation2 + $0x5d4] sm:$0xf] %v2415
  %2786 = vst [vmem:[#allocation2 + $0x5f8] sm:$0xf] %v2429
  %2787 = vst [vmem:[#allocation2 + $0x61c] sm:$0xf] %v2439
  %2788 = vst [vmem:[#allocation2 + $0x640] sm:$0xf] %v2453
  %2789 = vst [vmem:[#allocation2 + $0x664] sm:$0xf] %v2463
  %2790 = vst [vmem:[#allocation2 + $0x688] sm:$0xf] %v2477
  %2791 = vst [vmem:[#allocation2 + $0x6ac] sm:$0xf] %v2487
  %2792 = vst [vmem:[#allocation2 + $0x6d0] sm:$0xf] %v2501
  %2793 = vst [vmem:[#allocation2 + $0x6f4] sm:$0xf] %v2511
  %2794 = vst [vmem:[#allocation2 + $0x718] sm:$0xf] %v2525
  %2795 = vst [vmem:[#allocation2 + $0x73c] sm:$0xf] %v2535
  %2796 = vst [vmem:[#allocation2 + $0x760] sm:$0xf] %v2549
  %2797 = vst [vmem:[#allocation2 + $0x784] sm:$0xf] %v2559
  %2798 = vst [vmem:[#allocation2 + $0x7a8] sm:$0xf] %v2573
  %2799 = vst [vmem:[#allocation2 + $0x7cc] sm:$0xf] %v2583
  %2800 = vst [vmem:[#allocation2 + $0x7f0] sm:$0xf] %v2597
  %2801 = vst [vmem:[#allocation2 + $0x814] sm:$0xf] %v2607
  %2802 = vst [vmem:[#allocation2 + $0x838] sm:$0xf] %v2621
  %2803 = vst [vmem:[#allocation2 + $0x85c] sm:$0xf] %v2631
  %2804 = vst [vmem:[#allocation2 + $0x880] sm:$0xf] %v2645
  %2805 = vst [vmem:[#allocation2 + $0x8a4] sm:$0xf] %v2655
  %2806 = vst [vmem:[#allocation2 + $0x8c8] sm:$0xf] %v2669
  %2807 = vst [vmem:[#allocation2 + $0x8ec] sm:$0xf] %v2679
  %v2808 = vld [vmem:[%s1687] sm:$0xe]
  %v2809 = vld [vmem:[%s1687 + $0x4] sm:$0xf]
  %v2810 = vld [vmem:[%s1687 + $0x8] sm:$0x1]
  %v2811 = vld [vmem:[%s1687 + $0xc] sm:$0xe]
  %v2812 = vld [vmem:[%s1687 + $0x10] sm:$0xf]
  %v2813 = vld [vmem:[%s1687 + $0x14] sm:$0x1]
  %v2814 = vld [vmem:[%s1687 + $0x18] sm:$0xe]
  %v2815 = vld [vmem:[%s1687 + $0x1c] sm:$0xf]
  %v2816 = vld [vmem:[%s1687 + $0x20] sm:$0x1]
  %v2817 = vld [vmem:[%s1687 + $0x24] sm:$0xe]
  %v2818 = vld [vmem:[%s1687 + $0x28] sm:$0xf]
  %v2819 = vld [vmem:[%s1687 + $0x2c] sm:$0x1]
  %v2820 = vld [vmem:[%s1687 + $0x30] sm:$0xe]
  %v2821 = vld [vmem:[%s1687 + $0x34] sm:$0xf]
  %v2822 = vld [vmem:[%s1687 + $0x38] sm:$0x1]
  %v2823 = vld [vmem:[%s1687 + $0x3c] sm:$0xe]
  %v2824 = vld [vmem:[%s1687 + $0x40] sm:$0xf]
  %v2825 = vld [vmem:[%s1687 + $0x44] sm:$0x1]
  %v2826 = vld [vmem:[%s1687 + $0x48] sm:$0xe]
  %v2827 = vld [vmem:[%s1687 + $0x4c] sm:$0xf]
  %v2828 = vld [vmem:[%s1687 + $0x50] sm:$0x1]
  %v2829 = vld [vmem:[%s1687 + $0x54] sm:$0xe]
  %v2830 = vld [vmem:[%s1687 + $0x58] sm:$0xf]
  %v2831 = vld [vmem:[%s1687 + $0x5c] sm:$0x1]
  %v2832 = vld [vmem:[%s1687 + $0x60] sm:$0xe]
  %v2833 = vld [vmem:[%s1687 + $0x64] sm:$0xf]
  %v2834 = vld [vmem:[%s1687 + $0x68] sm:$0x1]
  %v2835 = vld [vmem:[%s1687 + $0x6c] sm:$0xe]
  %v2836 = vld [vmem:[%s1687 + $0x70] sm:$0xf]
  %v2837 = vld [vmem:[%s1687 + $0x74] sm:$0x1]
  %v2838 = vld [vmem:[%s1687 + $0x78] sm:$0xe]
  %v2839 = vld [vmem:[%s1687 + $0x7c] sm:$0xf]
  %v2840 = vld [vmem:[%s1687 + $0x80] sm:$0x1]
  %v2841 = vld [vmem:[%s1687 + $0x84] sm:$0xe]
  %v2842 = vld [vmem:[%s1687 + $0x88] sm:$0xf]
  %v2843 = vld [vmem:[%s1687 + $0x8c] sm:$0x1]
  %v2844 = vld [vmem:[%s1687 + $0x90] sm:$0xe]
  %v2845 = vld [vmem:[%s1687 + $0x94] sm:$0xf]
  %v2846 = vld [vmem:[%s1687 + $0x98] sm:$0x1]
  %v2847 = vld [vmem:[%s1687 + $0x9c] sm:$0xe]
  %v2848 = vld [vmem:[%s1687 + $0xa0] sm:$0xf]
  %v2849 = vld [vmem:[%s1687 + $0xa4] sm:$0x1]
  %v2850 = vld [vmem:[%s1687 + $0xa8] sm:$0xe]
  %v2851 = vld [vmem:[%s1687 + $0xac] sm:$0xf]
  %v2852 = vld [vmem:[%s1687 + $0xb0] sm:$0x1]
  %v2853 = vld [vmem:[%s1687 + $0xb4] sm:$0xe]
  %v2854 = vld [vmem:[%s1687 + $0xb8] sm:$0xf]
  %v2855 = vld [vmem:[%s1687 + $0xbc] sm:$0x1]
  %v2856 = vld [vmem:[%s1687 + $0xd8] sm:$0xe]
  %v2857 = vld [vmem:[%s1687 + $0xdc] sm:$0xf]
  %v2858 = vld [vmem:[%s1687 + $0xe0] sm:$0x1]
  %v2859 = vld [vmem:[%s1687 + $0xe4] sm:$0xe]
  %v2860 = vld [vmem:[%s1687 + $0xe8] sm:$0xf]
  %v2861 = vld [vmem:[%s1687 + $0xec] sm:$0x1]
  %v2862 = vld [vmem:[%s1687 + $0xf0] sm:$0xe]
  %v2863 = vld [vmem:[%s1687 + $0xf4] sm:$0xf]
  %v2864 = vld [vmem:[%s1687 + $0xf8] sm:$0x1]
  %v2865 = vld [vmem:[%s1687 + $0xfc] sm:$0xe]
  %v2866 = vld [vmem:[%s1687 + $0x100] sm:$0xf]
  %v2867 = vld [vmem:[%s1687 + $0x104] sm:$0x1]
  %v2868 = vld [vmem:[%s1687 + $0x108] sm:$0xe]
  %v2869 = vld [vmem:[%s1687 + $0x10c] sm:$0xf]
  %v2870 = vld [vmem:[%s1687 + $0x110] sm:$0x1]
  %v2871 = vld [vmem:[%s1687 + $0x114] sm:$0xe]
  %v2872 = vld [vmem:[%s1687 + $0x118] sm:$0xf]
  %v2873 = vld [vmem:[%s1687 + $0x11c] sm:$0x1]
  %v2874 = vld [vmem:[%s1687 + $0x120] sm:$0xe]
  %v2875 = vld [vmem:[%s1687 + $0x124] sm:$0xf]
  %v2876 = vld [vmem:[%s1687 + $0x128] sm:$0x1]
  %v2877 = vld [vmem:[%s1687 + $0x12c] sm:$0xe]
  %v2878 = vld [vmem:[%s1687 + $0x130] sm:$0xf]
  %v2879 = vld [vmem:[%s1687 + $0x134] sm:$0x1]
  %v2880 = vld [vmem:[%s1687 + $0x138] sm:$0xe]
  %v2881 = vld [vmem:[%s1687 + $0x13c] sm:$0xf]
  %v2882 = vld [vmem:[%s1687 + $0x140] sm:$0x1]
  %v2883 = vld [vmem:[%s1687 + $0x144] sm:$0xe]
  %v2884 = vld [vmem:[%s1687 + $0x148] sm:$0xf]
  %v2885 = vld [vmem:[%s1687 + $0x14c] sm:$0x1]
  %v2886 = vld [vmem:[%s1687 + $0x150] sm:$0xe]
  %v2887 = vld [vmem:[%s1687 + $0x154] sm:$0xf]
  %v2888 = vld [vmem:[%s1687 + $0x158] sm:$0x1]
  %v2889 = vld [vmem:[%s1687 + $0x15c] sm:$0xe]
  %v2890 = vld [vmem:[%s1687 + $0x160] sm:$0xf]
  %v2891 = vld [vmem:[%s1687 + $0x164] sm:$0x1]
  %v2892 = vld [vmem:[%s1687 + $0x168] sm:$0xe]
  %v2893 = vld [vmem:[%s1687 + $0x16c] sm:$0xf]
  %v2894 = vld [vmem:[%s1687 + $0x170] sm:$0x1]
  %v2895 = vld [vmem:[%s1687 + $0x174] sm:$0xe]
  %v2896 = vld [vmem:[%s1687 + $0x178] sm:$0xf]
  %v2897 = vld [vmem:[%s1687 + $0x17c] sm:$0x1]
  %v2898 = vld [vmem:[%s1687 + $0x180] sm:$0xe]
  %v2899 = vld [vmem:[%s1687 + $0x184] sm:$0xf]
  %v2900 = vld [vmem:[%s1687 + $0x188] sm:$0x1]
  %v2901 = vld [vmem:[%s1687 + $0x18c] sm:$0xe]
  %v2902 = vld [vmem:[%s1687 + $0x190] sm:$0xf]
  %v2903 = vld [vmem:[%s1687 + $0x194] sm:$0x1]
  %v3000 = vrot.slane %v2808, 5
  %v3001 = vrot.slane %v3000, 4
  %v3002 = vrot.slane %v2809, 5
  %v3003 = vsel %vm1334, %v3001, %v3002
  %v3004 = vrot.slane %v3002, 4
  %v3005 = vrot.slane %v2810, 5
  %v3006 = vsel %vm1334, %v3004, %v3005
  %v3007 = vrot.slane %v2811, 5
  %v3008 = vrot.slane %v3007, 4
  %v3009 = vrot.slane %v2812, 5
  %v3010 = vsel %vm1334, %v3008, %v3009
  %v3011 = vrot.slane %v3009, 4
  %v3012 = vrot.slane %v2813, 5
  %v3013 = vsel %vm1334, %v3011, %v3012
  %v3014 = vrot.slane %v2814, 5
  %v3015 = vrot.slane %v3014, 4
  %v3016 = vrot.slane %v2815, 5
  %v3017 = vsel %vm1334, %v3015, %v3016
  %v3018 = vrot.slane %v3016, 4
  %v3019 = vrot.slane %v2816, 5
  %v3020 = vsel %vm1334, %v3018, %v3019
  %v3021 = vrot.slane %v2817, 5
  %v3022 = vrot.slane %v3021, 4
  %v3023 = vrot.slane %v2818, 5
  %v3024 = vsel %vm1334, %v3022, %v3023
  %v3025 = vrot.slane %v3023, 4
  %v3026 = vrot.slane %v2819, 5
  %v3027 = vsel %vm1334, %v3025, %v3026
  %v3028 = vrot.slane %v2820, 5
  %v3029 = vrot.slane %v3028, 4
  %v3030 = vrot.slane %v2821, 5
  %v3031 = vsel %vm1334, %v3029, %v3030
  %v3032 = vrot.slane %v3030, 4
  %v3033 = vrot.slane %v2822, 5
  %v3034 = vsel %vm1334, %v3032, %v3033
  %v3035 = vrot.slane %v2823, 5
  %v3036 = vrot.slane %v3035, 4
  %v3037 = vrot.slane %v2824, 5
  %v3038 = vsel %vm1334, %v3036, %v3037
  %v3039 = vrot.slane %v3037, 4
  %v3040 = vrot.slane %v2825, 5
  %v3041 = vsel %vm1334, %v3039, %v3040
  %v3042 = vrot.slane %v2826, 5
  %v3043 = vrot.slane %v3042, 4
  %v3044 = vrot.slane %v2827, 5
  %v3045 = vsel %vm1334, %v3043, %v3044
  %v3046 = vrot.slane %v3044, 4
  %v3047 = vrot.slane %v2828, 5
  %v3048 = vsel %vm1334, %v3046, %v3047
  %v3049 = vrot.slane %v2829, 5
  %v3050 = vrot.slane %v3049, 4
  %v3051 = vrot.slane %v2830, 5
  %v3052 = vsel %vm1334, %v3050, %v3051
  %v3053 = vrot.slane %v3051, 4
  %v3054 = vrot.slane %v2831, 5
  %v3055 = vsel %vm1334, %v3053, %v3054
  %v3056 = vrot.slane %v2832, 5
  %v3057 = vrot.slane %v3056, 4
  %v3058 = vrot.slane %v2833, 5
  %v3059 = vsel %vm1334, %v3057, %v3058
  %v3060 = vrot.slane %v3058, 4
  %v3061 = vrot.slane %v2834, 5
  %v3062 = vsel %vm1334, %v3060, %v3061
  %v3063 = vrot.slane %v2835, 5
  %v3064 = vrot.slane %v3063, 4
  %v3065 = vrot.slane %v2836, 5
  %v3066 = vsel %vm1334, %v3064, %v3065
  %v3067 = vrot.slane %v3065, 4
  %v3068 = vrot.slane %v2837, 5
  %v3069 = vsel %vm1334, %v3067, %v3068
  %v3070 = vrot.slane %v2838, 5
  %v3071 = vrot.slane %v3070, 4
  %v3072 = vrot.slane %v2839, 5
  %v3073 = vsel %vm1334, %v3071, %v3072
  %v3074 = vrot.slane %v3072, 4
  %v3075 = vrot.slane %v2840, 5
  %v3076 = vsel %vm1334, %v3074, %v3075
  %v3077 = vrot.slane %v2841, 5
  %v3078 = vrot.slane %v3077, 4
  %v3079 = vrot.slane %v2842, 5
  %v3080 = vsel %vm1334, %v3078, %v3079
  %v3081 = vrot.slane %v3079, 4
  %v3082 = vrot.slane %v2843, 5
  %v3083 = vsel %vm1334, %v3081, %v3082
  %v3084 = vrot.slane %v2844, 5
  %v3085 = vrot.slane %v3084, 4
  %v3086 = vrot.slane %v2845, 5
  %v3087 = vsel %vm1334, %v3085, %v3086
  %v3088 = vrot.slane %v3086, 4
  %v3089 = vrot.slane %v2846, 5
  %v3090 = vsel %vm1334, %v3088, %v3089
  %v3091 = vrot.slane %v2847, 5
  %v3092 = vrot.slane %v3091, 4
  %v3093 = vrot.slane %v2848, 5
  %v3094 = vsel %vm1334, %v3092, %v3093
  %v3095 = vrot.slane %v3093, 4
  %v3096 = vrot.slane %v2849, 5
  %v3097 = vsel %vm1334, %v3095, %v3096
  %v3098 = vrot.slane %v2850, 5
  %v3099 = vrot.slane %v3098, 4
  %v3100 = vrot.slane %v2851, 5
  %v3101 = vsel %vm1334, %v3099, %v3100
  %v3102 = vrot.slane %v3100, 4
  %v3103 = vrot.slane %v2852, 5
  %v3104 = vsel %vm1334, %v3102, %v3103
  %v3105 = vrot.slane %v2853, 5
  %v3106 = vrot.slane %v3105, 4
  %v3107 = vrot.slane %v2854, 5
  %v3108 = vsel %vm1334, %v3106, %v3107
  %v3109 = vrot.slane %v3107, 4
  %v3110 = vrot.slane %v2855, 5
  %v3111 = vsel %vm1334, %v3109, %v3110
  %v3112 = vrot.slane %v2856, 5
  %v3113 = vrot.slane %v3112, 4
  %v3114 = vrot.slane %v2857, 5
  %v3115 = vsel %vm1334, %v3113, %v3114
  %v3116 = vrot.slane %v3114, 4
  %v3117 = vrot.slane %v2858, 5
  %v3118 = vsel %vm1334, %v3116, %v3117
  %v3119 = vrot.slane %v2859, 5
  %v3120 = vrot.slane %v3119, 4
  %v3121 = vrot.slane %v2860, 5
  %v3122 = vsel %vm1334, %v3120, %v3121
  %v3123 = vrot.slane %v3121, 4
  %v3124 = vrot.slane %v2861, 5
  %v3125 = vsel %vm1334, %v3123, %v3124
  %v3126 = vrot.slane %v2862, 5
  %v3127 = vrot.slane %v3126, 4
  %v3128 = vrot.slane %v2863, 5
  %v3129 = vsel %vm1334, %v3127, %v3128
  %v3130 = vrot.slane %v3128, 4
  %v3131 = vrot.slane %v2864, 5
  %v3132 = vsel %vm1334, %v3130, %v3131
  %v3133 = vrot.slane %v2865, 5
  %v3134 = vrot.slane %v3133, 4
  %v3135 = vrot.slane %v2866, 5
  %v3136 = vsel %vm1334, %v3134, %v3135
  %v3137 = vrot.slane %v3135, 4
  %v3138 = vrot.slane %v2867, 5
  %v3139 = vsel %vm1334, %v3137, %v3138
  %v3140 = vrot.slane %v2868, 5
  %v3141 = vrot.slane %v3140, 4
  %v3142 = vrot.slane %v2869, 5
  %v3143 = vsel %vm1334, %v3141, %v3142
  %v3144 = vrot.slane %v3142, 4
  %v3145 = vrot.slane %v2870, 5
  %v3146 = vsel %vm1334, %v3144, %v3145
  %v3147 = vrot.slane %v2871, 5
  %v3148 = vrot.slane %v3147, 4
  %v3149 = vrot.slane %v2872, 5
  %v3150 = vsel %vm1334, %v3148, %v3149
  %v3151 = vrot.slane %v3149, 4
  %v3152 = vrot.slane %v2873, 5
  %v3153 = vsel %vm1334, %v3151, %v3152
  %v3154 = vrot.slane %v2874, 5
  %v3155 = vrot.slane %v3154, 4
  %v3156 = vrot.slane %v2875, 5
  %v3157 = vsel %vm1334, %v3155, %v3156
  %v3158 = vrot.slane %v3156, 4
  %v3159 = vrot.slane %v2876, 5
  %v3160 = vsel %vm1334, %v3158, %v3159
  %v3161 = vrot.slane %v2877, 5
  %v3162 = vrot.slane %v3161, 4
  %v3163 = vrot.slane %v2878, 5
  %v3164 = vsel %vm1334, %v3162, %v3163
  %v3165 = vrot.slane %v3163, 4
  %v3166 = vrot.slane %v2879, 5
  %v3167 = vsel %vm1334, %v3165, %v3166
  %v3168 = vrot.slane %v2880, 5
  %v3169 = vrot.slane %v3168, 4
  %v3170 = vrot.slane %v2881, 5
  %v3171 = vsel %vm1334, %v3169, %v3170
  %v3172 = vrot.slane %v3170, 4
  %v3173 = vrot.slane %v2882, 5
  %v3174 = vsel %vm1334, %v3172, %v3173
  %v3175 = vrot.slane %v2883, 5
  %v3176 = vrot.slane %v3175, 4
  %v3177 = vrot.slane %v2884, 5
  %v3178 = vsel %vm1334, %v3176, %v3177
  %v3179 = vrot.slane %v3177, 4
  %v3180 = vrot.slane %v2885, 5
  %v3181 = vsel %vm1334, %v3179, %v3180
  %v3182 = vrot.slane %v2886, 5
  %v3183 = vrot.slane %v3182, 4
  %v3184 = vrot.slane %v2887, 5
  %v3185 = vsel %vm1334, %v3183, %v3184
  %v3186 = vrot.slane %v3184, 4
  %v3187 = vrot.slane %v2888, 5
  %v3188 = vsel %vm1334, %v3186, %v3187
  %v3189 = vrot.slane %v2889, 5
  %v3190 = vrot.slane %v3189, 4
  %v3191 = vrot.slane %v2890, 5
  %v3192 = vsel %vm1334, %v3190, %v3191
  %v3193 = vrot.slane %v3191, 4
  %v3194 = vrot.slane %v2891, 5
  %v3195 = vsel %vm1334, %v3193, %v3194
  %v3196 = vrot.slane %v2892, 5
  %v3197 = vrot.slane %v3196, 4
  %v3198 = vrot.slane %v2893, 5
  %v3199 = vsel %vm1334, %v3197, %v3198
  %v3200 = vrot.slane %v3198, 4
  %v3201 = vrot.slane %v2894, 5
  %v3202 = vsel %vm1334, %v3200, %v3201
  %v3203 = vrot.slane %v2895, 5
  %v3204 = vrot.slane %v3203, 4
  %v3205 = vrot.slane %v2896, 5
  %v3206 = vsel %vm1334, %v3204, %v3205
  %v3207 = vrot.slane %v3205, 4
  %v3208 = vrot.slane %v2897, 5
  %v3209 = vsel %vm1334, %v3207, %v3208
  %v3210 = vrot.slane %v2898, 5
  %v3211 = vrot.slane %v3210, 4
  %v3212 = vrot.slane %v2899, 5
  %v3213 = vsel %vm1334, %v3211, %v3212
  %v3214 = vrot.slane %v3212, 4
  %v3215 = vrot.slane %v2900, 5
  %v3216 = vsel %vm1334, %v3214, %v3215
  %v3217 = vrot.slane %v2901, 5
  %v3218 = vrot.slane %v3217, 4
  %v3219 = vrot.slane %v2902, 5
  %v3220 = vsel %vm1334, %v3218, %v3219
  %v3221 = vrot.slane %v3219, 4
  %v3222 = vrot.slane %v2903, 5
  %v3223 = vsel %vm1334, %v3221, %v3222
  %3288 = vst [vmem:[#allocation2 + $0x14] sm:$0xf] %v3003
  %3289 = vst [vmem:[#allocation2 + $0x38] sm:$0xf] %v3006
  %3290 = vst [vmem:[#allocation2 + $0x5c] sm:$0xf] %v3010
  %3291 = vst [vmem:[#allocation2 + $0x80] sm:$0xf] %v3013
  %3292 = vst [vmem:[#allocation2 + $0xa4] sm:$0xf] %v3017
  %3293 = vst [vmem:[#allocation2 + $0xc8] sm:$0xf] %v3020
  %3294 = vst [vmem:[#allocation2 + $0xec] sm:$0xf] %v3024
  %3295 = vst [vmem:[#allocation2 + $0x110] sm:$0xf] %v3027
  %3296 = vst [vmem:[#allocation2 + $0x134] sm:$0xf] %v3031
  %3297 = vst [vmem:[#allocation2 + $0x158] sm:$0xf] %v3034
  %3298 = vst [vmem:[#allocation2 + $0x17c] sm:$0xf] %v3038
  %3299 = vst [vmem:[#allocation2 + $0x1a0] sm:$0xf] %v3041
  %3300 = vst [vmem:[#allocation2 + $0x1c4] sm:$0xf] %v3045
  %3301 = vst [vmem:[#allocation2 + $0x1e8] sm:$0xf] %v3048
  %3302 = vst [vmem:[#allocation2 + $0x20c] sm:$0xf] %v3052
  %3303 = vst [vmem:[#allocation2 + $0x230] sm:$0xf] %v3055
  %3304 = vst [vmem:[#allocation2 + $0x254] sm:$0xf] %v3059
  %3305 = vst [vmem:[#allocation2 + $0x278] sm:$0xf] %v3062
  %3306 = vst [vmem:[#allocation2 + $0x29c] sm:$0xf] %v3066
  %3307 = vst [vmem:[#allocation2 + $0x2c0] sm:$0xf] %v3069
  %3308 = vst [vmem:[#allocation2 + $0x2e4] sm:$0xf] %v3073
  %3309 = vst [vmem:[#allocation2 + $0x308] sm:$0xf] %v3076
  %3310 = vst [vmem:[#allocation2 + $0x32c] sm:$0xf] %v3080
  %3311 = vst [vmem:[#allocation2 + $0x350] sm:$0xf] %v3083
  %3312 = vst [vmem:[#allocation2 + $0x374] sm:$0xf] %v3087
  %3313 = vst [vmem:[#allocation2 + $0x398] sm:$0xf] %v3090
  %3314 = vst [vmem:[#allocation2 + $0x3bc] sm:$0xf] %v3094
  %3315 = vst [vmem:[#allocation2 + $0x3e0] sm:$0xf] %v3097
  %3316 = vst [vmem:[#allocation2 + $0x404] sm:$0xf] %v3101
  %3317 = vst [vmem:[#allocation2 + $0x428] sm:$0xf] %v3104
  %3318 = vst [vmem:[#allocation2 + $0x44c] sm:$0xf] %v3108
  %3319 = vst [vmem:[#allocation2 + $0x470] sm:$0xf] %v3111
  %3320 = vst [vmem:[#allocation2 + $0x494] sm:$0xf] %v3115
  %3321 = vst [vmem:[#allocation2 + $0x4b8] sm:$0xf] %v3118
  %3322 = vst [vmem:[#allocation2 + $0x4dc] sm:$0xf] %v3122
  %3323 = vst [vmem:[#allocation2 + $0x500] sm:$0xf] %v3125
  %3324 = vst [vmem:[#allocation2 + $0x524] sm:$0xf] %v3129
  %3325 = vst [vmem:[#allocation2 + $0x548] sm:$0xf] %v3132
  %3326 = vst [vmem:[#allocation2 + $0x56c] sm:$0xf] %v3136
  %3327 = vst [vmem:[#allocation2 + $0x590] sm:$0xf] %v3139
  %3328 = vst [vmem:[#allocation2 + $0x5b4] sm:$0xf] %v3143
  %3329 = vst [vmem:[#allocation2 + $0x5d8] sm:$0xf] %v3146
  %3330 = vst [vmem:[#allocation2 + $0x5fc] sm:$0xf] %v3150
  %3331 = vst [vmem:[#allocation2 + $0x620] sm:$0xf] %v3153
  %3332 = vst [vmem:[#allocation2 + $0x644] sm:$0xf] %v3157
  %3333 = vst [vmem:[#allocation2 + $0x668] sm:$0xf] %v3160
  %3334 = vst [vmem:[#allocation2 + $0x68c] sm:$0xf] %v3164
  %3335 = vst [vmem:[#allocation2 + $0x6b0] sm:$0xf] %v3167
  %3336 = vst [vmem:[#allocation2 + $0x6d4] sm:$0xf] %v3171
  %3337 = vst [vmem:[#allocation2 + $0x6f8] sm:$0xf] %v3174
  %3338 = vst [vmem:[#allocation2 + $0x71c] sm:$0xf] %v3178
  %3339 = vst [vmem:[#allocation2 + $0x740] sm:$0xf] %v3181
  %3340 = vst [vmem:[#allocation2 + $0x764] sm:$0xf] %v3185
  %3341 = vst [vmem:[#allocation2 + $0x788] sm:$0xf] %v3188
  %3342 = vst [vmem:[#allocation2 + $0x7ac] sm:$0xf] %v3192
  %3343 = vst [vmem:[#allocation2 + $0x7d0] sm:$0xf] %v3195
  %3344 = vst [vmem:[#allocation2 + $0x7f4] sm:$0xf] %v3199
  %3345 = vst [vmem:[#allocation2 + $0x818] sm:$0xf] %v3202
  %3346 = vst [vmem:[#allocation2 + $0x83c] sm:$0xf] %v3206
  %3347 = vst [vmem:[#allocation2 + $0x860] sm:$0xf] %v3209
  %3348 = vst [vmem:[#allocation2 + $0x884] sm:$0xf] %v3213
  %3349 = vst [vmem:[#allocation2 + $0x8a8] sm:$0xf] %v3216
  %3350 = vst [vmem:[#allocation2 + $0x8cc] sm:$0xf] %v3220
  %3351 = vst [vmem:[#allocation2 + $0x8f0] sm:$0xf] %v3223
  %s3352 = scalar_lea.vmem %s0, 24
  %v3353 = vld [vmem:[%s3352] sm:$0xf]
  %v3354 = vld [vmem:[%s3352 + $0x4] sm:$0xf]
  %v3355 = vld [vmem:[%s3352 + $0xc] sm:$0xf]
  %v3356 = vld [vmem:[%s3352 + $0x10] sm:$0xf]
  %v3357 = vld [vmem:[%s3352 + $0x18] sm:$0xf]
  %v3358 = vld [vmem:[%s3352 + $0x1c] sm:$0xf]
  %v3359 = vld [vmem:[%s3352 + $0x24] sm:$0xf]
  %v3360 = vld [vmem:[%s3352 + $0x28] sm:$0xf]
  %v3361 = vld [vmem:[%s3352 + $0x30] sm:$0xf]
  %v3362 = vld [vmem:[%s3352 + $0x34] sm:$0xf]
  %v3363 = vld [vmem:[%s3352 + $0x3c] sm:$0xf]
  %v3364 = vld [vmem:[%s3352 + $0x40] sm:$0xf]
  %v3365 = vld [vmem:[%s3352 + $0x48] sm:$0xf]
  %v3366 = vld [vmem:[%s3352 + $0x4c] sm:$0xf]
  %v3367 = vld [vmem:[%s3352 + $0x54] sm:$0xf]
  %v3368 = vld [vmem:[%s3352 + $0x58] sm:$0xf]
  %v3369 = vld [vmem:[%s3352 + $0x60] sm:$0xf]
  %v3370 = vld [vmem:[%s3352 + $0x64] sm:$0xf]
  %v3371 = vld [vmem:[%s3352 + $0x6c] sm:$0xf]
  %v3372 = vld [vmem:[%s3352 + $0x70] sm:$0xf]
  %v3373 = vld [vmem:[%s3352 + $0x78] sm:$0xf]
  %v3374 = vld [vmem:[%s3352 + $0x7c] sm:$0xf]
  %v3375 = vld [vmem:[%s3352 + $0x84] sm:$0xf]
  %v3376 = vld [vmem:[%s3352 + $0x88] sm:$0xf]
  %v3377 = vld [vmem:[%s3352 + $0x90] sm:$0xf]
  %v3378 = vld [vmem:[%s3352 + $0x94] sm:$0xf]
  %v3379 = vld [vmem:[%s3352 + $0x9c] sm:$0xf]
  %v3380 = vld [vmem:[%s3352 + $0xa0] sm:$0xf]
  %v3381 = vld [vmem:[%s3352 + $0xa8] sm:$0xf]
  %v3382 = vld [vmem:[%s3352 + $0xac] sm:$0xf]
  %v3383 = vld [vmem:[%s3352 + $0xb4] sm:$0xf]
  %v3384 = vld [vmem:[%s3352 + $0xb8] sm:$0xf]
  %v3385 = vld [vmem:[%s3352 + $0xd8] sm:$0xf]
  %v3386 = vld [vmem:[%s3352 + $0xdc] sm:$0xf]
  %v3387 = vld [vmem:[%s3352 + $0xe4] sm:$0xf]
  %v3388 = vld [vmem:[%s3352 + $0xe8] sm:$0xf]
  %v3389 = vld [vmem:[%s3352 + $0xf0] sm:$0xf]
  %v3390 = vld [vmem:[%s3352 + $0xf4] sm:$0xf]
  %v3391 = vld [vmem:[%s3352 + $0xfc] sm:$0xf]
  %v3392 = vld [vmem:[%s3352 + $0x100] sm:$0xf]
  %v3393 = vld [vmem:[%s3352 + $0x108] sm:$0xf]
  %v3394 = vld [vmem:[%s3352 + $0x10c] sm:$0xf]
  %v3395 = vld [vmem:[%s3352 + $0x114] sm:$0xf]
  %v3396 = vld [vmem:[%s3352 + $0x118] sm:$0xf]
  %v3397 = vld [vmem:[%s3352 + $0x120] sm:$0xf]
  %v3398 = vld [vmem:[%s3352 + $0x124] sm:$0xf]
  %v3399 = vld [vmem:[%s3352 + $0x12c] sm:$0xf]
  %v3400 = vld [vmem:[%s3352 + $0x130] sm:$0xf]
  %v3401 = vld [vmem:[%s3352 + $0x138] sm:$0xf]
  %v3402 = vld [vmem:[%s3352 + $0x13c] sm:$0xf]
  %v3403 = vld [vmem:[%s3352 + $0x144] sm:$0xf]
  %v3404 = vld [vmem:[%s3352 + $0x148] sm:$0xf]
  %v3405 = vld [vmem:[%s3352 + $0x150] sm:$0xf]
  %v3406 = vld [vmem:[%s3352 + $0x154] sm:$0xf]
  %v3407 = vld [vmem:[%s3352 + $0x15c] sm:$0xf]
  %v3408 = vld [vmem:[%s3352 + $0x160] sm:$0xf]
  %v3409 = vld [vmem:[%s3352 + $0x168] sm:$0xf]
  %v3410 = vld [vmem:[%s3352 + $0x16c] sm:$0xf]
  %v3411 = vld [vmem:[%s3352 + $0x174] sm:$0xf]
  %v3412 = vld [vmem:[%s3352 + $0x178] sm:$0xf]
  %v3413 = vld [vmem:[%s3352 + $0x180] sm:$0xf]
  %v3414 = vld [vmem:[%s3352 + $0x184] sm:$0xf]
  %v3415 = vld [vmem:[%s3352 + $0x18c] sm:$0xf]
  %v3416 = vld [vmem:[%s3352 + $0x190] sm:$0xf]
  %3417 = vst [vmem:[#allocation2 + $0x18] sm:$0xf] %v3353
  %3418 = vst [vmem:[#allocation2 + $0x3c] sm:$0xf] %v3354
  %3419 = vst [vmem:[#allocation2 + $0x60] sm:$0xf] %v3355
  %3420 = vst [vmem:[#allocation2 + $0x84] sm:$0xf] %v3356
  %3421 = vst [vmem:[#allocation2 + $0xa8] sm:$0xf] %v3357
  %3422 = vst [vmem:[#allocation2 + $0xcc] sm:$0xf] %v3358
  %3423 = vst [vmem:[#allocation2 + $0xf0] sm:$0xf] %v3359
  %3424 = vst [vmem:[#allocation2 + $0x114] sm:$0xf] %v3360
  %3425 = vst [vmem:[#allocation2 + $0x138] sm:$0xf] %v3361
  %3426 = vst [vmem:[#allocation2 + $0x15c] sm:$0xf] %v3362
  %3427 = vst [vmem:[#allocation2 + $0x180] sm:$0xf] %v3363
  %3428 = vst [vmem:[#allocation2 + $0x1a4] sm:$0xf] %v3364
  %3429 = vst [vmem:[#allocation2 + $0x1c8] sm:$0xf] %v3365
  %3430 = vst [vmem:[#allocation2 + $0x1ec] sm:$0xf] %v3366
  %3431 = vst [vmem:[#allocation2 + $0x210] sm:$0xf] %v3367
  %3432 = vst [vmem:[#allocation2 + $0x234] sm:$0xf] %v3368
  %3433 = vst [vmem:[#allocation2 + $0x258] sm:$0xf] %v3369
  %3434 = vst [vmem:[#allocation2 + $0x27c] sm:$0xf] %v3370
  %3435 = vst [vmem:[#allocation2 + $0x2a0] sm:$0xf] %v3371
  %3436 = vst [vmem:[#allocation2 + $0x2c4] sm:$0xf] %v3372
  %3437 = vst [vmem:[#allocation2 + $0x2e8] sm:$0xf] %v3373
  %3438 = vst [vmem:[#allocation2 + $0x30c] sm:$0xf] %v3374
  %3439 = vst [vmem:[#allocation2 + $0x330] sm:$0xf] %v3375
  %3440 = vst [vmem:[#allocation2 + $0x354] sm:$0xf] %v3376
  %3441 = vst [vmem:[#allocation2 + $0x378] sm:$0xf] %v3377
  %3442 = vst [vmem:[#allocation2 + $0x39c] sm:$0xf] %v3378
  %3443 = vst [vmem:[#allocation2 + $0x3c0] sm:$0xf] %v3379
  %3444 = vst [vmem:[#allocation2 + $0x3e4] sm:$0xf] %v3380
  %3445 = vst [vmem:[#allocation2 + $0x408] sm:$0xf] %v3381
  %3446 = vst [vmem:[#allocation2 + $0x42c] sm:$0xf] %v3382
  %3447 = vst [vmem:[#allocation2 + $0x450] sm:$0xf] %v3383
  %3448 = vst [vmem:[#allocation2 + $0x474] sm:$0xf] %v3384
  %3449 = vst [vmem:[#allocation2 + $0x498] sm:$0xf] %v3385
  %3450 = vst [vmem:[#allocation2 + $0x4bc] sm:$0xf] %v3386
  %3451 = vst [vmem:[#allocation2 + $0x4e0] sm:$0xf] %v3387
  %3452 = vst [vmem:[#allocation2 + $0x504] sm:$0xf] %v3388
  %3453 = vst [vmem:[#allocation2 + $0x528] sm:$0xf] %v3389
  %3454 = vst [vmem:[#allocation2 + $0x54c] sm:$0xf] %v3390
  %3455 = vst [vmem:[#allocation2 + $0x570] sm:$0xf] %v3391
  %3456 = vst [vmem:[#allocation2 + $0x594] sm:$0xf] %v3392
  %3457 = vst [vmem:[#allocation2 + $0x5b8] sm:$0xf] %v3393
  %3458 = vst [vmem:[#allocation2 + $0x5dc] sm:$0xf] %v3394
  %3459 = vst [vmem:[#allocation2 + $0x600] sm:$0xf] %v3395
  %3460 = vst [vmem:[#allocation2 + $0x624] sm:$0xf] %v3396
  %3461 = vst [vmem:[#allocation2 + $0x648] sm:$0xf] %v3397
  %3462 = vst [vmem:[#allocation2 + $0x66c] sm:$0xf] %v3398
  %3463 = vst [vmem:[#allocation2 + $0x690] sm:$0xf] %v3399
  %3464 = vst [vmem:[#allocation2 + $0x6b4] sm:$0xf] %v3400
  %3465 = vst [vmem:[#allocation2 + $0x6d8] sm:$0xf] %v3401
  %3466 = vst [vmem:[#allocation2 + $0x6fc] sm:$0xf] %v3402
  %3467 = vst [vmem:[#allocation2 + $0x720] sm:$0xf] %v3403
  %3468 = vst [vmem:[#allocation2 + $0x744] sm:$0xf] %v3404
  %3469 = vst [vmem:[#allocation2 + $0x768] sm:$0xf] %v3405
  %3470 = vst [vmem:[#allocation2 + $0x78c] sm:$0xf] %v3406
  %3471 = vst [vmem:[#allocation2 + $0x7b0] sm:$0xf] %v3407
  %3472 = vst [vmem:[#allocation2 + $0x7d4] sm:$0xf] %v3408
  %3473 = vst [vmem:[#allocation2 + $0x7f8] sm:$0xf] %v3409
  %3474 = vst [vmem:[#allocation2 + $0x81c] sm:$0xf] %v3410
  %3475 = vst [vmem:[#allocation2 + $0x840] sm:$0xf] %v3411
  %3476 = vst [vmem:[#allocation2 + $0x864] sm:$0xf] %v3412
  %3477 = vst [vmem:[#allocation2 + $0x888] sm:$0xf] %v3413
  %3478 = vst [vmem:[#allocation2 + $0x8ac] sm:$0xf] %v3414
  %3479 = vst [vmem:[#allocation2 + $0x8d0] sm:$0xf] %v3415
  %3480 = vst [vmem:[#allocation2 + $0x8f4] sm:$0xf] %v3416
  %v3481 = vld [vmem:[%s3352] sm:$0xf]
  %v3482 = vld [vmem:[%s3352 + $0x4] sm:$0xf]
  %v3483 = vld [vmem:[%s3352 + $0x8] sm:$0x1]
  %v3484 = vld [vmem:[%s3352 + $0xc] sm:$0xf]
  %v3485 = vld [vmem:[%s3352 + $0x10] sm:$0xf]
  %v3486 = vld [vmem:[%s3352 + $0x14] sm:$0x1]
  %v3487 = vld [vmem:[%s3352 + $0x18] sm:$0xf]
  %v3488 = vld [vmem:[%s3352 + $0x1c] sm:$0xf]
  %v3489 = vld [vmem:[%s3352 + $0x20] sm:$0x1]
  %v3490 = vld [vmem:[%s3352 + $0x24] sm:$0xf]
  %v3491 = vld [vmem:[%s3352 + $0x28] sm:$0xf]
  %v3492 = vld [vmem:[%s3352 + $0x2c] sm:$0x1]
  %v3493 = vld [vmem:[%s3352 + $0x30] sm:$0xf]
  %v3494 = vld [vmem:[%s3352 + $0x34] sm:$0xf]
  %v3495 = vld [vmem:[%s3352 + $0x38] sm:$0x1]
  %v3496 = vld [vmem:[%s3352 + $0x3c] sm:$0xf]
  %v3497 = vld [vmem:[%s3352 + $0x40] sm:$0xf]
  %v3498 = vld [vmem:[%s3352 + $0x44] sm:$0x1]
  %v3499 = vld [vmem:[%s3352 + $0x48] sm:$0xf]
  %v3500 = vld [vmem:[%s3352 + $0x4c] sm:$0xf]
  %v3501 = vld [vmem:[%s3352 + $0x50] sm:$0x1]
  %v3502 = vld [vmem:[%s3352 + $0x54] sm:$0xf]
  %v3503 = vld [vmem:[%s3352 + $0x58] sm:$0xf]
  %v3504 = vld [vmem:[%s3352 + $0x5c] sm:$0x1]
  %v3505 = vld [vmem:[%s3352 + $0x60] sm:$0xf]
  %v3506 = vld [vmem:[%s3352 + $0x64] sm:$0xf]
  %v3507 = vld [vmem:[%s3352 + $0x68] sm:$0x1]
  %v3508 = vld [vmem:[%s3352 + $0x6c] sm:$0xf]
  %v3509 = vld [vmem:[%s3352 + $0x70] sm:$0xf]
  %v3510 = vld [vmem:[%s3352 + $0x74] sm:$0x1]
  %v3511 = vld [vmem:[%s3352 + $0x78] sm:$0xf]
  %v3512 = vld [vmem:[%s3352 + $0x7c] sm:$0xf]
  %v3513 = vld [vmem:[%s3352 + $0x80] sm:$0x1]
  %v3514 = vld [vmem:[%s3352 + $0x84] sm:$0xf]
  %v3515 = vld [vmem:[%s3352 + $0x88] sm:$0xf]
  %v3516 = vld [vmem:[%s3352 + $0x8c] sm:$0x1]
  %v3517 = vld [vmem:[%s3352 + $0x90] sm:$0xf]
  %v3518 = vld [vmem:[%s3352 + $0x94] sm:$0xf]
  %v3519 = vld [vmem:[%s3352 + $0x98] sm:$0x1]
  %v3520 = vld [vmem:[%s3352 + $0x9c] sm:$0xf]
  %v3521 = vld [vmem:[%s3352 + $0xa0] sm:$0xf]
  %v3522 = vld [vmem:[%s3352 + $0xa4] sm:$0x1]
  %v3523 = vld [vmem:[%s3352 + $0xa8] sm:$0xf]
  %v3524 = vld [vmem:[%s3352 + $0xac] sm:$0xf]
  %v3525 = vld [vmem:[%s3352 + $0xb0] sm:$0x1]
  %v3526 = vld [vmem:[%s3352 + $0xb4] sm:$0xf]
  %v3527 = vld [vmem:[%s3352 + $0xb8] sm:$0xf]
  %v3528 = vld [vmem:[%s3352 + $0xbc] sm:$0x1]
  %v3529 = vld [vmem:[%s3352 + $0xd8] sm:$0xf]
  %v3530 = vld [vmem:[%s3352 + $0xdc] sm:$0xf]
  %v3531 = vld [vmem:[%s3352 + $0xe0] sm:$0x1]
  %v3532 = vld [vmem:[%s3352 + $0xe4] sm:$0xf]
  %v3533 = vld [vmem:[%s3352 + $0xe8] sm:$0xf]
  %v3534 = vld [vmem:[%s3352 + $0xec] sm:$0x1]
  %v3535 = vld [vmem:[%s3352 + $0xf0] sm:$0xf]
  %v3536 = vld [vmem:[%s3352 + $0xf4] sm:$0xf]
  %v3537 = vld [vmem:[%s3352 + $0xf8] sm:$0x1]
  %v3538 = vld [vmem:[%s3352 + $0xfc] sm:$0xf]
  %v3539 = vld [vmem:[%s3352 + $0x100] sm:$0xf]
  %v3540 = vld [vmem:[%s3352 + $0x104] sm:$0x1]
  %v3541 = vld [vmem:[%s3352 + $0x108] sm:$0xf]
  %v3542 = vld [vmem:[%s3352 + $0x10c] sm:$0xf]
  %v3543 = vld [vmem:[%s3352 + $0x110] sm:$0x1]
  %v3544 = vld [vmem:[%s3352 + $0x114] sm:$0xf]
  %v3545 = vld [vmem:[%s3352 + $0x118] sm:$0xf]
  %v3546 = vld [vmem:[%s3352 + $0x11c] sm:$0x1]
  %v3547 = vld [vmem:[%s3352 + $0x120] sm:$0xf]
  %v3548 = vld [vmem:[%s3352 + $0x124] sm:$0xf]
  %v3549 = vld [vmem:[%s3352 + $0x128] sm:$0x1]
  %v3550 = vld [vmem:[%s3352 + $0x12c] sm:$0xf]
  %v3551 = vld [vmem:[%s3352 + $0x130] sm:$0xf]
  %v3552 = vld [vmem:[%s3352 + $0x134] sm:$0x1]
  %v3553 = vld [vmem:[%s3352 + $0x138] sm:$0xf]
  %v3554 = vld [vmem:[%s3352 + $0x13c] sm:$0xf]
  %v3555 = vld [vmem:[%s3352 + $0x140] sm:$0x1]
  %v3556 = vld [vmem:[%s3352 + $0x144] sm:$0xf]
  %v3557 = vld [vmem:[%s3352 + $0x148] sm:$0xf]
  %v3558 = vld [vmem:[%s3352 + $0x14c] sm:$0x1]
  %v3559 = vld [vmem:[%s3352 + $0x150] sm:$0xf]
  %v3560 = vld [vmem:[%s3352 + $0x154] sm:$0xf]
  %v3561 = vld [vmem:[%s3352 + $0x158] sm:$0x1]
  %v3562 = vld [vmem:[%s3352 + $0x15c] sm:$0xf]
  %v3563 = vld [vmem:[%s3352 + $0x160] sm:$0xf]
  %v3564 = vld [vmem:[%s3352 + $0x164] sm:$0x1]
  %v3565 = vld [vmem:[%s3352 + $0x168] sm:$0xf]
  %v3566 = vld [vmem:[%s3352 + $0x16c] sm:$0xf]
  %v3567 = vld [vmem:[%s3352 + $0x170] sm:$0x1]
  %v3568 = vld [vmem:[%s3352 + $0x174] sm:$0xf]
  %v3569 = vld [vmem:[%s3352 + $0x178] sm:$0xf]
  %v3570 = vld [vmem:[%s3352 + $0x17c] sm:$0x1]
  %v3571 = vld [vmem:[%s3352 + $0x180] sm:$0xf]
  %v3572 = vld [vmem:[%s3352 + $0x184] sm:$0xf]
  %v3573 = vld [vmem:[%s3352 + $0x188] sm:$0x1]
  %v3574 = vld [vmem:[%s3352 + $0x18c] sm:$0xf]
  %v3575 = vld [vmem:[%s3352 + $0x190] sm:$0xf]
  %v3576 = vld [vmem:[%s3352 + $0x194] sm:$0x1]
  %v3578 = vshrl.u32 %v3481, 16
  %v3580 = vrot.slane %v3578, 4
  %v3581 = vshll.u32 %v3481, 16
  %v3583 = vrot.slane %v3581, 5
  %v3584 = vor.u32 %v3580, %v3583
  %v3585 = vrot.slane %v3584, 4
  %v3587 = vshll.u32 %v3482, 16
  %v3589 = vrot.slane %v3587, 5
  %v3590 = vsel %vm243, %v3585, %v3589
  %v3591 = vshrl.u32 %v3482, 16
  %v3593 = vrot.slane %v3591, 4
  %v3594 = vor.u32 %v3593, %v3589
  %v3595 = vrot.slane %v3594, 4
  %v3597 = vshll.u32 %v3483, 16
  %v3599 = vrot.slane %v3597, 5
  %v3600 = vsel %vm243, %v3595, %v3599
  %v3602 = vshrl.u32 %v3484, 16
  %v3604 = vrot.slane %v3602, 4
  %v3605 = vshll.u32 %v3484, 16
  %v3607 = vrot.slane %v3605, 5
  %v3608 = vor.u32 %v3604, %v3607
  %v3609 = vrot.slane %v3608, 4
  %v3611 = vshll.u32 %v3485, 16
  %v3613 = vrot.slane %v3611, 5
  %v3614 = vsel %vm243, %v3609, %v3613
  %v3615 = vshrl.u32 %v3485, 16
  %v3617 = vrot.slane %v3615, 4
  %v3618 = vor.u32 %v3617, %v3613
  %v3619 = vrot.slane %v3618, 4
  %v3621 = vshll.u32 %v3486, 16
  %v3623 = vrot.slane %v3621, 5
  %v3624 = vsel %vm243, %v3619, %v3623
  %v3626 = vshrl.u32 %v3487, 16
  %v3628 = vrot.slane %v3626, 4
  %v3629 = vshll.u32 %v3487, 16
  %v3631 = vrot.slane %v3629, 5
  %v3632 = vor.u32 %v3628, %v3631
  %v3633 = vrot.slane %v3632, 4
  %v3635 = vshll.u32 %v3488, 16
  %v3637 = vrot.slane %v3635, 5
  %v3638 = vsel %vm243, %v3633, %v3637
  %v3639 = vshrl.u32 %v3488, 16
  %v3641 = vrot.slane %v3639, 4
  %v3642 = vor.u32 %v3641, %v3637
  %v3643 = vrot.slane %v3642, 4
  %v3645 = vshll.u32 %v3489, 16
  %v3647 = vrot.slane %v3645, 5
  %v3648 = vsel %vm243, %v3643, %v3647
  %v3650 = vshrl.u32 %v3490, 16
  %v3652 = vrot.slane %v3650, 4
  %v3653 = vshll.u32 %v3490, 16
  %v3655 = vrot.slane %v3653, 5
  %v3656 = vor.u32 %v3652, %v3655
  %v3657 = vrot.slane %v3656, 4
  %v3659 = vshll.u32 %v3491, 16
  %v3661 = vrot.slane %v3659, 5
  %v3662 = vsel %vm243, %v3657, %v3661
  %v3663 = vshrl.u32 %v3491, 16
  %v3665 = vrot.slane %v3663, 4
  %v3666 = vor.u32 %v3665, %v3661
  %v3667 = vrot.slane %v3666, 4
  %v3669 = vshll.u32 %v3492, 16
  %v3671 = vrot.slane %v3669, 5
  %v3672 = vsel %vm243, %v3667, %v3671
  %v3674 = vshrl.u32 %v3493, 16
  %v3676 = vrot.slane %v3674, 4
  %v3677 = vshll.u32 %v3493, 16
  %v3679 = vrot.slane %v3677, 5
  %v3680 = vor.u32 %v3676, %v3679
  %v3681 = vrot.slane %v3680, 4
  %v3683 = vshll.u32 %v3494, 16
  %v3685 = vrot.slane %v3683, 5
  %v3686 = vsel %vm243, %v3681, %v3685
  %v3687 = vshrl.u32 %v3494, 16
  %v3689 = vrot.slane %v3687, 4
  %v3690 = vor.u32 %v3689, %v3685
  %v3691 = vrot.slane %v3690, 4
  %v3693 = vshll.u32 %v3495, 16
  %v3695 = vrot.slane %v3693, 5
  %v3696 = vsel %vm243, %v3691, %v3695
  %v3698 = vshrl.u32 %v3496, 16
  %v3700 = vrot.slane %v3698, 4
  %v3701 = vshll.u32 %v3496, 16
  %v3703 = vrot.slane %v3701, 5
  %v3704 = vor.u32 %v3700, %v3703
  %v3705 = vrot.slane %v3704, 4
  %v3707 = vshll.u32 %v3497, 16
  %v3709 = vrot.slane %v3707, 5
  %v3710 = vsel %vm243, %v3705, %v3709
  %v3711 = vshrl.u32 %v3497, 16
  %v3713 = vrot.slane %v3711, 4
  %v3714 = vor.u32 %v3713, %v3709
  %v3715 = vrot.slane %v3714, 4
  %v3717 = vshll.u32 %v3498, 16
  %v3719 = vrot.slane %v3717, 5
  %v3720 = vsel %vm243, %v3715, %v3719
  %v3722 = vshrl.u32 %v3499, 16
  %v3724 = vrot.slane %v3722, 4
  %v3725 = vshll.u32 %v3499, 16
  %v3727 = vrot.slane %v3725, 5
  %v3728 = vor.u32 %v3724, %v3727
  %v3729 = vrot.slane %v3728, 4
  %v3731 = vshll.u32 %v3500, 16
  %v3733 = vrot.slane %v3731, 5
  %v3734 = vsel %vm243, %v3729, %v3733
  %v3735 = vshrl.u32 %v3500, 16
  %v3737 = vrot.slane %v3735, 4
  %v3738 = vor.u32 %v3737, %v3733
  %v3739 = vrot.slane %v3738, 4
  %v3741 = vshll.u32 %v3501, 16
  %v3743 = vrot.slane %v3741, 5
  %v3744 = vsel %vm243, %v3739, %v3743
  %v3746 = vshrl.u32 %v3502, 16
  %v3748 = vrot.slane %v3746, 4
  %v3749 = vshll.u32 %v3502, 16
  %v3751 = vrot.slane %v3749, 5
  %v3752 = vor.u32 %v3748, %v3751
  %v3753 = vrot.slane %v3752, 4
  %v3755 = vshll.u32 %v3503, 16
  %v3757 = vrot.slane %v3755, 5
  %v3758 = vsel %vm243, %v3753, %v3757
  %v3759 = vshrl.u32 %v3503, 16
  %v3761 = vrot.slane %v3759, 4
  %v3762 = vor.u32 %v3761, %v3757
  %v3763 = vrot.slane %v3762, 4
  %v3765 = vshll.u32 %v3504, 16
  %v3767 = vrot.slane %v3765, 5
  %v3768 = vsel %vm243, %v3763, %v3767
  %v3770 = vshrl.u32 %v3505, 16
  %v3772 = vrot.slane %v3770, 4
  %v3773 = vshll.u32 %v3505, 16
  %v3775 = vrot.slane %v3773, 5
  %v3776 = vor.u32 %v3772, %v3775
  %v3777 = vrot.slane %v3776, 4
  %v3779 = vshll.u32 %v3506, 16
  %v3781 = vrot.slane %v3779, 5
  %v3782 = vsel %vm243, %v3777, %v3781
  %v3783 = vshrl.u32 %v3506, 16
  %v3785 = vrot.slane %v3783, 4
  %v3786 = vor.u32 %v3785, %v3781
  %v3787 = vrot.slane %v3786, 4
  %v3789 = vshll.u32 %v3507, 16
  %v3791 = vrot.slane %v3789, 5
  %v3792 = vsel %vm243, %v3787, %v3791
  %v3794 = vshrl.u32 %v3508, 16
  %v3796 = vrot.slane %v3794, 4
  %v3797 = vshll.u32 %v3508, 16
  %v3799 = vrot.slane %v3797, 5
  %v3800 = vor.u32 %v3796, %v3799
  %v3801 = vrot.slane %v3800, 4
  %v3803 = vshll.u32 %v3509, 16
  %v3805 = vrot.slane %v3803, 5
  %v3806 = vsel %vm243, %v3801, %v3805
  %v3807 = vshrl.u32 %v3509, 16
  %v3809 = vrot.slane %v3807, 4
  %v3810 = vor.u32 %v3809, %v3805
  %v3811 = vrot.slane %v3810, 4
  %v3813 = vshll.u32 %v3510, 16
  %v3815 = vrot.slane %v3813, 5
  %v3816 = vsel %vm243, %v3811, %v3815
  %v3818 = vshrl.u32 %v3511, 16
  %v3820 = vrot.slane %v3818, 4
  %v3821 = vshll.u32 %v3511, 16
  %v3823 = vrot.slane %v3821, 5
  %v3824 = vor.u32 %v3820, %v3823
  %v3825 = vrot.slane %v3824, 4
  %v3827 = vshll.u32 %v3512, 16
  %v3829 = vrot.slane %v3827, 5
  %v3830 = vsel %vm243, %v3825, %v3829
  %v3831 = vshrl.u32 %v3512, 16
  %v3833 = vrot.slane %v3831, 4
  %v3834 = vor.u32 %v3833, %v3829
  %v3835 = vrot.slane %v3834, 4
  %v3837 = vshll.u32 %v3513, 16
  %v3839 = vrot.slane %v3837, 5
  %v3840 = vsel %vm243, %v3835, %v3839
  %v3842 = vshrl.u32 %v3514, 16
  %v3844 = vrot.slane %v3842, 4
  %v3845 = vshll.u32 %v3514, 16
  %v3847 = vrot.slane %v3845, 5
  %v3848 = vor.u32 %v3844, %v3847
  %v3849 = vrot.slane %v3848, 4
  %v3851 = vshll.u32 %v3515, 16
  %v3853 = vrot.slane %v3851, 5
  %v3854 = vsel %vm243, %v3849, %v3853
  %v3855 = vshrl.u32 %v3515, 16
  %v3857 = vrot.slane %v3855, 4
  %v3858 = vor.u32 %v3857, %v3853
  %v3859 = vrot.slane %v3858, 4
  %v3861 = vshll.u32 %v3516, 16
  %v3863 = vrot.slane %v3861, 5
  %v3864 = vsel %vm243, %v3859, %v3863
  %v3866 = vshrl.u32 %v3517, 16
  %v3868 = vrot.slane %v3866, 4
  %v3869 = vshll.u32 %v3517, 16
  %v3871 = vrot.slane %v3869, 5
  %v3872 = vor.u32 %v3868, %v3871
  %v3873 = vrot.slane %v3872, 4
  %v3875 = vshll.u32 %v3518, 16
  %v3877 = vrot.slane %v3875, 5
  %v3878 = vsel %vm243, %v3873, %v3877
  %v3879 = vshrl.u32 %v3518, 16
  %v3881 = vrot.slane %v3879, 4
  %v3882 = vor.u32 %v3881, %v3877
  %v3883 = vrot.slane %v3882, 4
  %v3885 = vshll.u32 %v3519, 16
  %v3887 = vrot.slane %v3885, 5
  %v3888 = vsel %vm243, %v3883, %v3887
  %v3890 = vshrl.u32 %v3520, 16
  %v3892 = vrot.slane %v3890, 4
  %v3893 = vshll.u32 %v3520, 16
  %v3895 = vrot.slane %v3893, 5
  %v3896 = vor.u32 %v3892, %v3895
  %v3897 = vrot.slane %v3896, 4
  %v3899 = vshll.u32 %v3521, 16
  %v3901 = vrot.slane %v3899, 5
  %v3902 = vsel %vm243, %v3897, %v3901
  %v3903 = vshrl.u32 %v3521, 16
  %v3905 = vrot.slane %v3903, 4
  %v3906 = vor.u32 %v3905, %v3901
  %v3907 = vrot.slane %v3906, 4
  %v3909 = vshll.u32 %v3522, 16
  %v3911 = vrot.slane %v3909, 5
  %v3912 = vsel %vm243, %v3907, %v3911
  %v3914 = vshrl.u32 %v3523, 16
  %v3916 = vrot.slane %v3914, 4
  %v3917 = vshll.u32 %v3523, 16
  %v3919 = vrot.slane %v3917, 5
  %v3920 = vor.u32 %v3916, %v3919
  %v3921 = vrot.slane %v3920, 4
  %v3923 = vshll.u32 %v3524, 16
  %v3925 = vrot.slane %v3923, 5
  %v3926 = vsel %vm243, %v3921, %v3925
  %v3927 = vshrl.u32 %v3524, 16
  %v3929 = vrot.slane %v3927, 4
  %v3930 = vor.u32 %v3929, %v3925
  %v3931 = vrot.slane %v3930, 4
  %v3933 = vshll.u32 %v3525, 16
  %v3935 = vrot.slane %v3933, 5
  %v3936 = vsel %vm243, %v3931, %v3935
  %v3938 = vshrl.u32 %v3526, 16
  %v3940 = vrot.slane %v3938, 4
  %v3941 = vshll.u32 %v3526, 16
  %v3943 = vrot.slane %v3941, 5
  %v3944 = vor.u32 %v3940, %v3943
  %v3945 = vrot.slane %v3944, 4
  %v3947 = vshll.u32 %v3527, 16
  %v3949 = vrot.slane %v3947, 5
  %v3950 = vsel %vm243, %v3945, %v3949
  %v3951 = vshrl.u32 %v3527, 16
  %v3953 = vrot.slane %v3951, 4
  %v3954 = vor.u32 %v3953, %v3949
  %v3955 = vrot.slane %v3954, 4
  %v3957 = vshll.u32 %v3528, 16
  %v3959 = vrot.slane %v3957, 5
  %v3960 = vsel %vm243, %v3955, %v3959
  %v3962 = vshrl.u32 %v3529, 16
  %v3964 = vrot.slane %v3962, 4
  %v3965 = vshll.u32 %v3529, 16
  %v3967 = vrot.slane %v3965, 5
  %v3968 = vor.u32 %v3964, %v3967
  %v3969 = vrot.slane %v3968, 4
  %v3971 = vshll.u32 %v3530, 16
  %v3973 = vrot.slane %v3971, 5
  %v3974 = vsel %vm243, %v3969, %v3973
  %v3975 = vshrl.u32 %v3530, 16
  %v3977 = vrot.slane %v3975, 4
  %v3978 = vor.u32 %v3977, %v3973
  %v3979 = vrot.slane %v3978, 4
  %v3981 = vshll.u32 %v3531, 16
  %v3983 = vrot.slane %v3981, 5
  %v3984 = vsel %vm243, %v3979, %v3983
  %v3986 = vshrl.u32 %v3532, 16
  %v3988 = vrot.slane %v3986, 4
  %v3989 = vshll.u32 %v3532, 16
  %v3991 = vrot.slane %v3989, 5
  %v3992 = vor.u32 %v3988, %v3991
  %v3993 = vrot.slane %v3992, 4
  %v3995 = vshll.u32 %v3533, 16
  %v3997 = vrot.slane %v3995, 5
  %v3998 = vsel %vm243, %v3993, %v3997
  %v3999 = vshrl.u32 %v3533, 16
  %v4001 = vrot.slane %v3999, 4
  %v4002 = vor.u32 %v4001, %v3997
  %v4003 = vrot.slane %v4002, 4
  %v4005 = vshll.u32 %v3534, 16
  %v4007 = vrot.slane %v4005, 5
  %v4008 = vsel %vm243, %v4003, %v4007
  %v4010 = vshrl.u32 %v3535, 16
  %v4012 = vrot.slane %v4010, 4
  %v4013 = vshll.u32 %v3535, 16
  %v4015 = vrot.slane %v4013, 5
  %v4016 = vor.u32 %v4012, %v4015
  %v4017 = vrot.slane %v4016, 4
  %v4019 = vshll.u32 %v3536, 16
  %v4021 = vrot.slane %v4019, 5
  %v4022 = vsel %vm243, %v4017, %v4021
  %v4023 = vshrl.u32 %v3536, 16
  %v4025 = vrot.slane %v4023, 4
  %v4026 = vor.u32 %v4025, %v4021
  %v4027 = vrot.slane %v4026, 4
  %v4029 = vshll.u32 %v3537, 16
  %v4031 = vrot.slane %v4029, 5
  %v4032 = vsel %vm243, %v4027, %v4031
  %v4034 = vshrl.u32 %v3538, 16
  %v4036 = vrot.slane %v4034, 4
  %v4037 = vshll.u32 %v3538, 16
  %v4039 = vrot.slane %v4037, 5
  %v4040 = vor.u32 %v4036, %v4039
  %v4041 = vrot.slane %v4040, 4
  %v4043 = vshll.u32 %v3539, 16
  %v4045 = vrot.slane %v4043, 5
  %v4046 = vsel %vm243, %v4041, %v4045
  %v4047 = vshrl.u32 %v3539, 16
  %v4049 = vrot.slane %v4047, 4
  %v4050 = vor.u32 %v4049, %v4045
  %v4051 = vrot.slane %v4050, 4
  %v4053 = vshll.u32 %v3540, 16
  %v4055 = vrot.slane %v4053, 5
  %v4056 = vsel %vm243, %v4051, %v4055
  %v4058 = vshrl.u32 %v3541, 16
  %v4060 = vrot.slane %v4058, 4
  %v4061 = vshll.u32 %v3541, 16
  %v4063 = vrot.slane %v4061, 5
  %v4064 = vor.u32 %v4060, %v4063
  %v4065 = vrot.slane %v4064, 4
  %v4067 = vshll.u32 %v3542, 16
  %v4069 = vrot.slane %v4067, 5
  %v4070 = vsel %vm243, %v4065, %v4069
  %v4071 = vshrl.u32 %v3542, 16
  %v4073 = vrot.slane %v4071, 4
  %v4074 = vor.u32 %v4073, %v4069
  %v4075 = vrot.slane %v4074, 4
  %v4077 = vshll.u32 %v3543, 16
  %v4079 = vrot.slane %v4077, 5
  %v4080 = vsel %vm243, %v4075, %v4079
  %v4082 = vshrl.u32 %v3544, 16
  %v4084 = vrot.slane %v4082, 4
  %v4085 = vshll.u32 %v3544, 16
  %v4087 = vrot.slane %v4085, 5
  %v4088 = vor.u32 %v4084, %v4087
  %v4089 = vrot.slane %v4088, 4
  %v4091 = vshll.u32 %v3545, 16
  %v4093 = vrot.slane %v4091, 5
  %v4094 = vsel %vm243, %v4089, %v4093
  %v4095 = vshrl.u32 %v3545, 16
  %v4097 = vrot.slane %v4095, 4
  %v4098 = vor.u32 %v4097, %v4093
  %v4099 = vrot.slane %v4098, 4
  %v4101 = vshll.u32 %v3546, 16
  %v4103 = vrot.slane %v4101, 5
  %v4104 = vsel %vm243, %v4099, %v4103
  %v4106 = vshrl.u32 %v3547, 16
  %v4108 = vrot.slane %v4106, 4
  %v4109 = vshll.u32 %v3547, 16
  %v4111 = vrot.slane %v4109, 5
  %v4112 = vor.u32 %v4108, %v4111
  %v4113 = vrot.slane %v4112, 4
  %v4115 = vshll.u32 %v3548, 16
  %v4117 = vrot.slane %v4115, 5
  %v4118 = vsel %vm243, %v4113, %v4117
  %v4119 = vshrl.u32 %v3548, 16
  %v4121 = vrot.slane %v4119, 4
  %v4122 = vor.u32 %v4121, %v4117
  %v4123 = vrot.slane %v4122, 4
  %v4125 = vshll.u32 %v3549, 16
  %v4127 = vrot.slane %v4125, 5
  %v4128 = vsel %vm243, %v4123, %v4127
  %v4130 = vshrl.u32 %v3550, 16
  %v4132 = vrot.slane %v4130, 4
  %v4133 = vshll.u32 %v3550, 16
  %v4135 = vrot.slane %v4133, 5
  %v4136 = vor.u32 %v4132, %v4135
  %v4137 = vrot.slane %v4136, 4
  %v4139 = vshll.u32 %v3551, 16
  %v4141 = vrot.slane %v4139, 5
  %v4142 = vsel %vm243, %v4137, %v4141
  %v4143 = vshrl.u32 %v3551, 16
  %v4145 = vrot.slane %v4143, 4
  %v4146 = vor.u32 %v4145, %v4141
  %v4147 = vrot.slane %v4146, 4
  %v4149 = vshll.u32 %v3552, 16
  %v4151 = vrot.slane %v4149, 5
  %v4152 = vsel %vm243, %v4147, %v4151
  %v4154 = vshrl.u32 %v3553, 16
  %v4156 = vrot.slane %v4154, 4
  %v4157 = vshll.u32 %v3553, 16
  %v4159 = vrot.slane %v4157, 5
  %v4160 = vor.u32 %v4156, %v4159
  %v4161 = vrot.slane %v4160, 4
  %v4163 = vshll.u32 %v3554, 16
  %v4165 = vrot.slane %v4163, 5
  %v4166 = vsel %vm243, %v4161, %v4165
  %v4167 = vshrl.u32 %v3554, 16
  %v4169 = vrot.slane %v4167, 4
  %v4170 = vor.u32 %v4169, %v4165
  %v4171 = vrot.slane %v4170, 4
  %v4173 = vshll.u32 %v3555, 16
  %v4175 = vrot.slane %v4173, 5
  %v4176 = vsel %vm243, %v4171, %v4175
  %v4178 = vshrl.u32 %v3556, 16
  %v4180 = vrot.slane %v4178, 4
  %v4181 = vshll.u32 %v3556, 16
  %v4183 = vrot.slane %v4181, 5
  %v4184 = vor.u32 %v4180, %v4183
  %v4185 = vrot.slane %v4184, 4
  %v4187 = vshll.u32 %v3557, 16
  %v4189 = vrot.slane %v4187, 5
  %v4190 = vsel %vm243, %v4185, %v4189
  %v4191 = vshrl.u32 %v3557, 16
  %v4193 = vrot.slane %v4191, 4
  %v4194 = vor.u32 %v4193, %v4189
  %v4195 = vrot.slane %v4194, 4
  %v4197 = vshll.u32 %v3558, 16
  %v4199 = vrot.slane %v4197, 5
  %v4200 = vsel %vm243, %v4195, %v4199
  %v4202 = vshrl.u32 %v3559, 16
  %v4204 = vrot.slane %v4202, 4
  %v4205 = vshll.u32 %v3559, 16
  %v4207 = vrot.slane %v4205, 5
  %v4208 = vor.u32 %v4204, %v4207
  %v4209 = vrot.slane %v4208, 4
  %v4211 = vshll.u32 %v3560, 16
  %v4213 = vrot.slane %v4211, 5
  %v4214 = vsel %vm243, %v4209, %v4213
  %v4215 = vshrl.u32 %v3560, 16
  %v4217 = vrot.slane %v4215, 4
  %v4218 = vor.u32 %v4217, %v4213
  %v4219 = vrot.slane %v4218, 4
  %v4221 = vshll.u32 %v3561, 16
  %v4223 = vrot.slane %v4221, 5
  %v4224 = vsel %vm243, %v4219, %v4223
  %v4226 = vshrl.u32 %v3562, 16
  %v4228 = vrot.slane %v4226, 4
  %v4229 = vshll.u32 %v3562, 16
  %v4231 = vrot.slane %v4229, 5
  %v4232 = vor.u32 %v4228, %v4231
  %v4233 = vrot.slane %v4232, 4
  %v4235 = vshll.u32 %v3563, 16
  %v4237 = vrot.slane %v4235, 5
  %v4238 = vsel %vm243, %v4233, %v4237
  %v4239 = vshrl.u32 %v3563, 16
  %v4241 = vrot.slane %v4239, 4
  %v4242 = vor.u32 %v4241, %v4237
  %v4243 = vrot.slane %v4242, 4
  %v4245 = vshll.u32 %v3564, 16
  %v4247 = vrot.slane %v4245, 5
  %v4248 = vsel %vm243, %v4243, %v4247
  %v4250 = vshrl.u32 %v3565, 16
  %v4252 = vrot.slane %v4250, 4
  %v4253 = vshll.u32 %v3565, 16
  %v4255 = vrot.slane %v4253, 5
  %v4256 = vor.u32 %v4252, %v4255
  %v4257 = vrot.slane %v4256, 4
  %v4259 = vshll.u32 %v3566, 16
  %v4261 = vrot.slane %v4259, 5
  %v4262 = vsel %vm243, %v4257, %v4261
  %v4263 = vshrl.u32 %v3566, 16
  %v4265 = vrot.slane %v4263, 4
  %v4266 = vor.u32 %v4265, %v4261
  %v4267 = vrot.slane %v4266, 4
  %v4269 = vshll.u32 %v3567, 16
  %v4271 = vrot.slane %v4269, 5
  %v4272 = vsel %vm243, %v4267, %v4271
  %v4274 = vshrl.u32 %v3568, 16
  %v4276 = vrot.slane %v4274, 4
  %v4277 = vshll.u32 %v3568, 16
  %v4279 = vrot.slane %v4277, 5
  %v4280 = vor.u32 %v4276, %v4279
  %v4281 = vrot.slane %v4280, 4
  %v4283 = vshll.u32 %v3569, 16
  %v4285 = vrot.slane %v4283, 5
  %v4286 = vsel %vm243, %v4281, %v4285
  %v4287 = vshrl.u32 %v3569, 16
  %v4289 = vrot.slane %v4287, 4
  %v4290 = vor.u32 %v4289, %v4285
  %v4291 = vrot.slane %v4290, 4
  %v4293 = vshll.u32 %v3570, 16
  %v4295 = vrot.slane %v4293, 5
  %v4296 = vsel %vm243, %v4291, %v4295
  %v4298 = vshrl.u32 %v3571, 16
  %v4300 = vrot.slane %v4298, 4
  %v4301 = vshll.u32 %v3571, 16
  %v4303 = vrot.slane %v4301, 5
  %v4304 = vor.u32 %v4300, %v4303
  %v4305 = vrot.slane %v4304, 4
  %v4307 = vshll.u32 %v3572, 16
  %v4309 = vrot.slane %v4307, 5
  %v4310 = vsel %vm243, %v4305, %v4309
  %v4311 = vshrl.u32 %v3572, 16
  %v4313 = vrot.slane %v4311, 4
  %v4314 = vor.u32 %v4313, %v4309
  %v4315 = vrot.slane %v4314, 4
  %v4317 = vshll.u32 %v3573, 16
  %v4319 = vrot.slane %v4317, 5
  %v4320 = vsel %vm243, %v4315, %v4319
  %v4322 = vshrl.u32 %v3574, 16
  %v4324 = vrot.slane %v4322, 4
  %v4325 = vshll.u32 %v3574, 16
  %v4327 = vrot.slane %v4325, 5
  %v4328 = vor.u32 %v4324, %v4327
  %v4329 = vrot.slane %v4328, 4
  %v4331 = vshll.u32 %v3575, 16
  %v4333 = vrot.slane %v4331, 5
  %v4334 = vsel %vm243, %v4329, %v4333
  %v4335 = vshrl.u32 %v3575, 16
  %v4337 = vrot.slane %v4335, 4
  %v4338 = vor.u32 %v4337, %v4333
  %v4339 = vrot.slane %v4338, 4
  %v4341 = vshll.u32 %v3576, 16
  %v4343 = vrot.slane %v4341, 5
  %v4344 = vsel %vm243, %v4339, %v4343
  %4409 = vst [vmem:[#allocation2 + $0x1c] sm:$0xf] %v3590
  %4410 = vst [vmem:[#allocation2 + $0x40] sm:$0xf] %v3600
  %4411 = vst [vmem:[#allocation2 + $0x64] sm:$0xf] %v3614
  %4412 = vst [vmem:[#allocation2 + $0x88] sm:$0xf] %v3624
  %4413 = vst [vmem:[#allocation2 + $0xac] sm:$0xf] %v3638
  %4414 = vst [vmem:[#allocation2 + $0xd0] sm:$0xf] %v3648
  %4415 = vst [vmem:[#allocation2 + $0xf4] sm:$0xf] %v3662
  %4416 = vst [vmem:[#allocation2 + $0x118] sm:$0xf] %v3672
  %4417 = vst [vmem:[#allocation2 + $0x13c] sm:$0xf] %v3686
  %4418 = vst [vmem:[#allocation2 + $0x160] sm:$0xf] %v3696
  %4419 = vst [vmem:[#allocation2 + $0x184] sm:$0xf] %v3710
  %4420 = vst [vmem:[#allocation2 + $0x1a8] sm:$0xf] %v3720
  %4421 = vst [vmem:[#allocation2 + $0x1cc] sm:$0xf] %v3734
  %4422 = vst [vmem:[#allocation2 + $0x1f0] sm:$0xf] %v3744
  %4423 = vst [vmem:[#allocation2 + $0x214] sm:$0xf] %v3758
  %4424 = vst [vmem:[#allocation2 + $0x238] sm:$0xf] %v3768
  %4425 = vst [vmem:[#allocation2 + $0x25c] sm:$0xf] %v3782
  %4426 = vst [vmem:[#allocation2 + $0x280] sm:$0xf] %v3792
  %4427 = vst [vmem:[#allocation2 + $0x2a4] sm:$0xf] %v3806
  %4428 = vst [vmem:[#allocation2 + $0x2c8] sm:$0xf] %v3816
  %4429 = vst [vmem:[#allocation2 + $0x2ec] sm:$0xf] %v3830
  %4430 = vst [vmem:[#allocation2 + $0x310] sm:$0xf] %v3840
  %4431 = vst [vmem:[#allocation2 + $0x334] sm:$0xf] %v3854
  %4432 = vst [vmem:[#allocation2 + $0x358] sm:$0xf] %v3864
  %4433 = vst [vmem:[#allocation2 + $0x37c] sm:$0xf] %v3878
  %4434 = vst [vmem:[#allocation2 + $0x3a0] sm:$0xf] %v3888
  %4435 = vst [vmem:[#allocation2 + $0x3c4] sm:$0xf] %v3902
  %4436 = vst [vmem:[#allocation2 + $0x3e8] sm:$0xf] %v3912
  %4437 = vst [vmem:[#allocation2 + $0x40c] sm:$0xf] %v3926
  %4438 = vst [vmem:[#allocation2 + $0x430] sm:$0xf] %v3936
  %4439 = vst [vmem:[#allocation2 + $0x454] sm:$0xf] %v3950
  %4440 = vst [vmem:[#allocation2 + $0x478] sm:$0xf] %v3960
  %4441 = vst [vmem:[#allocation2 + $0x49c] sm:$0xf] %v3974
  %4442 = vst [vmem:[#allocation2 + $0x4c0] sm:$0xf] %v3984
  %4443 = vst [vmem:[#allocation2 + $0x4e4] sm:$0xf] %v3998
  %4444 = vst [vmem:[#allocation2 + $0x508] sm:$0xf] %v4008
  %4445 = vst [vmem:[#allocation2 + $0x52c] sm:$0xf] %v4022
  %4446 = vst [vmem:[#allocation2 + $0x550] sm:$0xf] %v4032
  %4447 = vst [vmem:[#allocation2 + $0x574] sm:$0xf] %v4046
  %4448 = vst [vmem:[#allocation2 + $0x598] sm:$0xf] %v4056
  %4449 = vst [vmem:[#allocation2 + $0x5bc] sm:$0xf] %v4070
  %4450 = vst [vmem:[#allocation2 + $0x5e0] sm:$0xf] %v4080
  %4451 = vst [vmem:[#allocation2 + $0x604] sm:$0xf] %v4094
  %4452 = vst [vmem:[#allocation2 + $0x628] sm:$0xf] %v4104
  %4453 = vst [vmem:[#allocation2 + $0x64c] sm:$0xf] %v4118
  %4454 = vst [vmem:[#allocation2 + $0x670] sm:$0xf] %v4128
  %4455 = vst [vmem:[#allocation2 + $0x694] sm:$0xf] %v4142
  %4456 = vst [vmem:[#allocation2 + $0x6b8] sm:$0xf] %v4152
  %4457 = vst [vmem:[#allocation2 + $0x6dc] sm:$0xf] %v4166
  %4458 = vst [vmem:[#allocation2 + $0x700] sm:$0xf] %v4176
  %4459 = vst [vmem:[#allocation2 + $0x724] sm:$0xf] %v4190
  %4460 = vst [vmem:[#allocation2 + $0x748] sm:$0xf] %v4200
  %4461 = vst [vmem:[#allocation2 + $0x76c] sm:$0xf] %v4214
  %4462 = vst [vmem:[#allocation2 + $0x790] sm:$0xf] %v4224
  %4463 = vst [vmem:[#allocation2 + $0x7b4] sm:$0xf] %v4238
  %4464 = vst [vmem:[#allocation2 + $0x7d8] sm:$0xf] %v4248
  %4465 = vst [vmem:[#allocation2 + $0x7fc] sm:$0xf] %v4262
  %4466 = vst [vmem:[#allocation2 + $0x820] sm:$0xf] %v4272
  %4467 = vst [vmem:[#allocation2 + $0x844] sm:$0xf] %v4286
  %4468 = vst [vmem:[#allocation2 + $0x868] sm:$0xf] %v4296
  %4469 = vst [vmem:[#allocation2 + $0x88c] sm:$0xf] %v4310
  %4470 = vst [vmem:[#allocation2 + $0x8b0] sm:$0xf] %v4320
  %4471 = vst [vmem:[#allocation2 + $0x8d4] sm:$0xf] %v4334
  %4472 = vst [vmem:[#allocation2 + $0x8f8] sm:$0xf] %v4344
  %v4473 = vld [vmem:[%s3352] sm:$0xe]
  %v4474 = vld [vmem:[%s3352 + $0x4] sm:$0xf]
  %v4475 = vld [vmem:[%s3352 + $0x8] sm:$0x1]
  %v4476 = vld [vmem:[%s3352 + $0xc] sm:$0xe]
  %v4477 = vld [vmem:[%s3352 + $0x10] sm:$0xf]
  %v4478 = vld [vmem:[%s3352 + $0x14] sm:$0x1]
  %v4479 = vld [vmem:[%s3352 + $0x18] sm:$0xe]
  %v4480 = vld [vmem:[%s3352 + $0x1c] sm:$0xf]
  %v4481 = vld [vmem:[%s3352 + $0x20] sm:$0x1]
  %v4482 = vld [vmem:[%s3352 + $0x24] sm:$0xe]
  %v4483 = vld [vmem:[%s3352 + $0x28] sm:$0xf]
  %v4484 = vld [vmem:[%s3352 + $0x2c] sm:$0x1]
  %v4485 = vld [vmem:[%s3352 + $0x30] sm:$0xe]
  %v4486 = vld [vmem:[%s3352 + $0x34] sm:$0xf]
  %v4487 = vld [vmem:[%s3352 + $0x38] sm:$0x1]
  %v4488 = vld [vmem:[%s3352 + $0x3c] sm:$0xe]
  %v4489 = vld [vmem:[%s3352 + $0x40] sm:$0xf]
  %v4490 = vld [vmem:[%s3352 + $0x44] sm:$0x1]
  %v4491 = vld [vmem:[%s3352 + $0x48] sm:$0xe]
  %v4492 = vld [vmem:[%s3352 + $0x4c] sm:$0xf]
  %v4493 = vld [vmem:[%s3352 + $0x50] sm:$0x1]
  %v4494 = vld [vmem:[%s3352 + $0x54] sm:$0xe]
  %v4495 = vld [vmem:[%s3352 + $0x58] sm:$0xf]
  %v4496 = vld [vmem:[%s3352 + $0x5c] sm:$0x1]
  %v4497 = vld [vmem:[%s3352 + $0x60] sm:$0xe]
  %v4498 = vld [vmem:[%s3352 + $0x64] sm:$0xf]
  %v4499 = vld [vmem:[%s3352 + $0x68] sm:$0x1]
  %v4500 = vld [vmem:[%s3352 + $0x6c] sm:$0xe]
  %v4501 = vld [vmem:[%s3352 + $0x70] sm:$0xf]
  %v4502 = vld [vmem:[%s3352 + $0x74] sm:$0x1]
  %v4503 = vld [vmem:[%s3352 + $0x78] sm:$0xe]
  %v4504 = vld [vmem:[%s3352 + $0x7c] sm:$0xf]
  %v4505 = vld [vmem:[%s3352 + $0x80] sm:$0x1]
  %v4506 = vld [vmem:[%s3352 + $0x84] sm:$0xe]
  %v4507 = vld [vmem:[%s3352 + $0x88] sm:$0xf]
  %v4508 = vld [vmem:[%s3352 + $0x8c] sm:$0x1]
  %v4509 = vld [vmem:[%s3352 + $0x90] sm:$0xe]
  %v4510 = vld [vmem:[%s3352 + $0x94] sm:$0xf]
  %v4511 = vld [vmem:[%s3352 + $0x98] sm:$0x1]
  %v4512 = vld [vmem:[%s3352 + $0x9c] sm:$0xe]
  %v4513 = vld [vmem:[%s3352 + $0xa0] sm:$0xf]
  %v4514 = vld [vmem:[%s3352 + $0xa4] sm:$0x1]
  %v4515 = vld [vmem:[%s3352 + $0xa8] sm:$0xe]
  %v4516 = vld [vmem:[%s3352 + $0xac] sm:$0xf]
  %v4517 = vld [vmem:[%s3352 + $0xb0] sm:$0x1]
  %v4518 = vld [vmem:[%s3352 + $0xb4] sm:$0xe]
  %v4519 = vld [vmem:[%s3352 + $0xb8] sm:$0xf]
  %v4520 = vld [vmem:[%s3352 + $0xbc] sm:$0x1]
  %v4521 = vld [vmem:[%s3352 + $0xd8] sm:$0xe]
  %v4522 = vld [vmem:[%s3352 + $0xdc] sm:$0xf]
  %v4523 = vld [vmem:[%s3352 + $0xe0] sm:$0x1]
  %v4524 = vld [vmem:[%s3352 + $0xe4] sm:$0xe]
  %v4525 = vld [vmem:[%s3352 + $0xe8] sm:$0xf]
  %v4526 = vld [vmem:[%s3352 + $0xec] sm:$0x1]
  %v4527 = vld [vmem:[%s3352 + $0xf0] sm:$0xe]
  %v4528 = vld [vmem:[%s3352 + $0xf4] sm:$0xf]
  %v4529 = vld [vmem:[%s3352 + $0xf8] sm:$0x1]
  %v4530 = vld [vmem:[%s3352 + $0xfc] sm:$0xe]
  %v4531 = vld [vmem:[%s3352 + $0x100] sm:$0xf]
  %v4532 = vld [vmem:[%s3352 + $0x104] sm:$0x1]
  %v4533 = vld [vmem:[%s3352 + $0x108] sm:$0xe]
  %v4534 = vld [vmem:[%s3352 + $0x10c] sm:$0xf]
  %v4535 = vld [vmem:[%s3352 + $0x110] sm:$0x1]
  %v4536 = vld [vmem:[%s3352 + $0x114] sm:$0xe]
  %v4537 = vld [vmem:[%s3352 + $0x118] sm:$0xf]
  %v4538 = vld [vmem:[%s3352 + $0x11c] sm:$0x1]
  %v4539 = vld [vmem:[%s3352 + $0x120] sm:$0xe]
  %v4540 = vld [vmem:[%s3352 + $0x124] sm:$0xf]
  %v4541 = vld [vmem:[%s3352 + $0x128] sm:$0x1]
  %v4542 = vld [vmem:[%s3352 + $0x12c] sm:$0xe]
  %v4543 = vld [vmem:[%s3352 + $0x130] sm:$0xf]
  %v4544 = vld [vmem:[%s3352 + $0x134] sm:$0x1]
  %v4545 = vld [vmem:[%s3352 + $0x138] sm:$0xe]
  %v4546 = vld [vmem:[%s3352 + $0x13c] sm:$0xf]
  %v4547 = vld [vmem:[%s3352 + $0x140] sm:$0x1]
  %v4548 = vld [vmem:[%s3352 + $0x144] sm:$0xe]
  %v4549 = vld [vmem:[%s3352 + $0x148] sm:$0xf]
  %v4550 = vld [vmem:[%s3352 + $0x14c] sm:$0x1]
  %v4551 = vld [vmem:[%s3352 + $0x150] sm:$0xe]
  %v4552 = vld [vmem:[%s3352 + $0x154] sm:$0xf]
  %v4553 = vld [vmem:[%s3352 + $0x158] sm:$0x1]
  %v4554 = vld [vmem:[%s3352 + $0x15c] sm:$0xe]
  %v4555 = vld [vmem:[%s3352 + $0x160] sm:$0xf]
  %v4556 = vld [vmem:[%s3352 + $0x164] sm:$0x1]
  %v4557 = vld [vmem:[%s3352 + $0x168] sm:$0xe]
  %v4558 = vld [vmem:[%s3352 + $0x16c] sm:$0xf]
  %v4559 = vld [vmem:[%s3352 + $0x170] sm:$0x1]
  %v4560 = vld [vmem:[%s3352 + $0x174] sm:$0xe]
  %v4561 = vld [vmem:[%s3352 + $0x178] sm:$0xf]
  %v4562 = vld [vmem:[%s3352 + $0x17c] sm:$0x1]
  %v4563 = vld [vmem:[%s3352 + $0x180] sm:$0xe]
  %v4564 = vld [vmem:[%s3352 + $0x184] sm:$0xf]
  %v4565 = vld [vmem:[%s3352 + $0x188] sm:$0x1]
  %v4566 = vld [vmem:[%s3352 + $0x18c] sm:$0xe]
  %v4567 = vld [vmem:[%s3352 + $0x190] sm:$0xf]
  %v4568 = vld [vmem:[%s3352 + $0x194] sm:$0x1]
  %v4665 = vrot.slane %v4473, 5
  %v4666 = vrot.slane %v4665, 4
  %v4667 = vrot.slane %v4474, 5
  %v4668 = vsel %vm1334, %v4666, %v4667
  %v4669 = vrot.slane %v4667, 4
  %v4670 = vrot.slane %v4475, 5
  %v4671 = vsel %vm1334, %v4669, %v4670
  %v4672 = vrot.slane %v4476, 5
  %v4673 = vrot.slane %v4672, 4
  %v4674 = vrot.slane %v4477, 5
  %v4675 = vsel %vm1334, %v4673, %v4674
  %v4676 = vrot.slane %v4674, 4
  %v4677 = vrot.slane %v4478, 5
  %v4678 = vsel %vm1334, %v4676, %v4677
  %v4679 = vrot.slane %v4479, 5
  %v4680 = vrot.slane %v4679, 4
  %v4681 = vrot.slane %v4480, 5
  %v4682 = vsel %vm1334, %v4680, %v4681
  %v4683 = vrot.slane %v4681, 4
  %v4684 = vrot.slane %v4481, 5
  %v4685 = vsel %vm1334, %v4683, %v4684
  %v4686 = vrot.slane %v4482, 5
  %v4687 = vrot.slane %v4686, 4
  %v4688 = vrot.slane %v4483, 5
  %v4689 = vsel %vm1334, %v4687, %v4688
  %v4690 = vrot.slane %v4688, 4
  %v4691 = vrot.slane %v4484, 5
  %v4692 = vsel %vm1334, %v4690, %v4691
  %v4693 = vrot.slane %v4485, 5
  %v4694 = vrot.slane %v4693, 4
  %v4695 = vrot.slane %v4486, 5
  %v4696 = vsel %vm1334, %v4694, %v4695
  %v4697 = vrot.slane %v4695, 4
  %v4698 = vrot.slane %v4487, 5
  %v4699 = vsel %vm1334, %v4697, %v4698
  %v4700 = vrot.slane %v4488, 5
  %v4701 = vrot.slane %v4700, 4
  %v4702 = vrot.slane %v4489, 5
  %v4703 = vsel %vm1334, %v4701, %v4702
  %v4704 = vrot.slane %v4702, 4
  %v4705 = vrot.slane %v4490, 5
  %v4706 = vsel %vm1334, %v4704, %v4705
  %v4707 = vrot.slane %v4491, 5
  %v4708 = vrot.slane %v4707, 4
  %v4709 = vrot.slane %v4492, 5
  %v4710 = vsel %vm1334, %v4708, %v4709
  %v4711 = vrot.slane %v4709, 4
  %v4712 = vrot.slane %v4493, 5
  %v4713 = vsel %vm1334, %v4711, %v4712
  %v4714 = vrot.slane %v4494, 5
  %v4715 = vrot.slane %v4714, 4
  %v4716 = vrot.slane %v4495, 5
  %v4717 = vsel %vm1334, %v4715, %v4716
  %v4718 = vrot.slane %v4716, 4
  %v4719 = vrot.slane %v4496, 5
  %v4720 = vsel %vm1334, %v4718, %v4719
  %v4721 = vrot.slane %v4497, 5
  %v4722 = vrot.slane %v4721, 4
  %v4723 = vrot.slane %v4498, 5
  %v4724 = vsel %vm1334, %v4722, %v4723
  %v4725 = vrot.slane %v4723, 4
  %v4726 = vrot.slane %v4499, 5
  %v4727 = vsel %vm1334, %v4725, %v4726
  %v4728 = vrot.slane %v4500, 5
  %v4729 = vrot.slane %v4728, 4
  %v4730 = vrot.slane %v4501, 5
  %v4731 = vsel %vm1334, %v4729, %v4730
  %v4732 = vrot.slane %v4730, 4
  %v4733 = vrot.slane %v4502, 5
  %v4734 = vsel %vm1334, %v4732, %v4733
  %v4735 = vrot.slane %v4503, 5
  %v4736 = vrot.slane %v4735, 4
  %v4737 = vrot.slane %v4504, 5
  %v4738 = vsel %vm1334, %v4736, %v4737
  %v4739 = vrot.slane %v4737, 4
  %v4740 = vrot.slane %v4505, 5
  %v4741 = vsel %vm1334, %v4739, %v4740
  %v4742 = vrot.slane %v4506, 5
  %v4743 = vrot.slane %v4742, 4
  %v4744 = vrot.slane %v4507, 5
  %v4745 = vsel %vm1334, %v4743, %v4744
  %v4746 = vrot.slane %v4744, 4
  %v4747 = vrot.slane %v4508, 5
  %v4748 = vsel %vm1334, %v4746, %v4747
  %v4749 = vrot.slane %v4509, 5
  %v4750 = vrot.slane %v4749, 4
  %v4751 = vrot.slane %v4510, 5
  %v4752 = vsel %vm1334, %v4750, %v4751
  %v4753 = vrot.slane %v4751, 4
  %v4754 = vrot.slane %v4511, 5
  %v4755 = vsel %vm1334, %v4753, %v4754
  %v4756 = vrot.slane %v4512, 5
  %v4757 = vrot.slane %v4756, 4
  %v4758 = vrot.slane %v4513, 5
  %v4759 = vsel %vm1334, %v4757, %v4758
  %v4760 = vrot.slane %v4758, 4
  %v4761 = vrot.slane %v4514, 5
  %v4762 = vsel %vm1334, %v4760, %v4761
  %v4763 = vrot.slane %v4515, 5
  %v4764 = vrot.slane %v4763, 4
  %v4765 = vrot.slane %v4516, 5
  %v4766 = vsel %vm1334, %v4764, %v4765
  %v4767 = vrot.slane %v4765, 4
  %v4768 = vrot.slane %v4517, 5
  %v4769 = vsel %vm1334, %v4767, %v4768
  %v4770 = vrot.slane %v4518, 5
  %v4771 = vrot.slane %v4770, 4
  %v4772 = vrot.slane %v4519, 5
  %v4773 = vsel %vm1334, %v4771, %v4772
  %v4774 = vrot.slane %v4772, 4
  %v4775 = vrot.slane %v4520, 5
  %v4776 = vsel %vm1334, %v4774, %v4775
  %v4777 = vrot.slane %v4521, 5
  %v4778 = vrot.slane %v4777, 4
  %v4779 = vrot.slane %v4522, 5
  %v4780 = vsel %vm1334, %v4778, %v4779
  %v4781 = vrot.slane %v4779, 4
  %v4782 = vrot.slane %v4523, 5
  %v4783 = vsel %vm1334, %v4781, %v4782
  %v4784 = vrot.slane %v4524, 5
  %v4785 = vrot.slane %v4784, 4
  %v4786 = vrot.slane %v4525, 5
  %v4787 = vsel %vm1334, %v4785, %v4786
  %v4788 = vrot.slane %v4786, 4
  %v4789 = vrot.slane %v4526, 5
  %v4790 = vsel %vm1334, %v4788, %v4789
  %v4791 = vrot.slane %v4527, 5
  %v4792 = vrot.slane %v4791, 4
  %v4793 = vrot.slane %v4528, 5
  %v4794 = vsel %vm1334, %v4792, %v4793
  %v4795 = vrot.slane %v4793, 4
  %v4796 = vrot.slane %v4529, 5
  %v4797 = vsel %vm1334, %v4795, %v4796
  %v4798 = vrot.slane %v4530, 5
  %v4799 = vrot.slane %v4798, 4
  %v4800 = vrot.slane %v4531, 5
  %v4801 = vsel %vm1334, %v4799, %v4800
  %v4802 = vrot.slane %v4800, 4
  %v4803 = vrot.slane %v4532, 5
  %v4804 = vsel %vm1334, %v4802, %v4803
  %v4805 = vrot.slane %v4533, 5
  %v4806 = vrot.slane %v4805, 4
  %v4807 = vrot.slane %v4534, 5
  %v4808 = vsel %vm1334, %v4806, %v4807
  %v4809 = vrot.slane %v4807, 4
  %v4810 = vrot.slane %v4535, 5
  %v4811 = vsel %vm1334, %v4809, %v4810
  %v4812 = vrot.slane %v4536, 5
  %v4813 = vrot.slane %v4812, 4
  %v4814 = vrot.slane %v4537, 5
  %v4815 = vsel %vm1334, %v4813, %v4814
  %v4816 = vrot.slane %v4814, 4
  %v4817 = vrot.slane %v4538, 5
  %v4818 = vsel %vm1334, %v4816, %v4817
  %v4819 = vrot.slane %v4539, 5
  %v4820 = vrot.slane %v4819, 4
  %v4821 = vrot.slane %v4540, 5
  %v4822 = vsel %vm1334, %v4820, %v4821
  %v4823 = vrot.slane %v4821, 4
  %v4824 = vrot.slane %v4541, 5
  %v4825 = vsel %vm1334, %v4823, %v4824
  %v4826 = vrot.slane %v4542, 5
  %v4827 = vrot.slane %v4826, 4
  %v4828 = vrot.slane %v4543, 5
  %v4829 = vsel %vm1334, %v4827, %v4828
  %v4830 = vrot.slane %v4828, 4
  %v4831 = vrot.slane %v4544, 5
  %v4832 = vsel %vm1334, %v4830, %v4831
  %v4833 = vrot.slane %v4545, 5
  %v4834 = vrot.slane %v4833, 4
  %v4835 = vrot.slane %v4546, 5
  %v4836 = vsel %vm1334, %v4834, %v4835
  %v4837 = vrot.slane %v4835, 4
  %v4838 = vrot.slane %v4547, 5
  %v4839 = vsel %vm1334, %v4837, %v4838
  %v4840 = vrot.slane %v4548, 5
  %v4841 = vrot.slane %v4840, 4
  %v4842 = vrot.slane %v4549, 5
  %v4843 = vsel %vm1334, %v4841, %v4842
  %v4844 = vrot.slane %v4842, 4
  %v4845 = vrot.slane %v4550, 5
  %v4846 = vsel %vm1334, %v4844, %v4845
  %v4847 = vrot.slane %v4551, 5
  %v4848 = vrot.slane %v4847, 4
  %v4849 = vrot.slane %v4552, 5
  %v4850 = vsel %vm1334, %v4848, %v4849
  %v4851 = vrot.slane %v4849, 4
  %v4852 = vrot.slane %v4553, 5
  %v4853 = vsel %vm1334, %v4851, %v4852
  %v4854 = vrot.slane %v4554, 5
  %v4855 = vrot.slane %v4854, 4
  %v4856 = vrot.slane %v4555, 5
  %v4857 = vsel %vm1334, %v4855, %v4856
  %v4858 = vrot.slane %v4856, 4
  %v4859 = vrot.slane %v4556, 5
  %v4860 = vsel %vm1334, %v4858, %v4859
  %v4861 = vrot.slane %v4557, 5
  %v4862 = vrot.slane %v4861, 4
  %v4863 = vrot.slane %v4558, 5
  %v4864 = vsel %vm1334, %v4862, %v4863
  %v4865 = vrot.slane %v4863, 4
  %v4866 = vrot.slane %v4559, 5
  %v4867 = vsel %vm1334, %v4865, %v4866
  %v4868 = vrot.slane %v4560, 5
  %v4869 = vrot.slane %v4868, 4
  %v4870 = vrot.slane %v4561, 5
  %v4871 = vsel %vm1334, %v4869, %v4870
  %v4872 = vrot.slane %v4870, 4
  %v4873 = vrot.slane %v4562, 5
  %v4874 = vsel %vm1334, %v4872, %v4873
  %v4875 = vrot.slane %v4563, 5
  %v4876 = vrot.slane %v4875, 4
  %v4877 = vrot.slane %v4564, 5
  %v4878 = vsel %vm1334, %v4876, %v4877
  %v4879 = vrot.slane %v4877, 4
  %v4880 = vrot.slane %v4565, 5
  %v4881 = vsel %vm1334, %v4879, %v4880
  %v4882 = vrot.slane %v4566, 5
  %v4883 = vrot.slane %v4882, 4
  %v4884 = vrot.slane %v4567, 5
  %v4885 = vsel %vm1334, %v4883, %v4884
  %v4886 = vrot.slane %v4884, 4
  %v4887 = vrot.slane %v4568, 5
  %v4888 = vsel %vm1334, %v4886, %v4887
  %4953 = vst [vmem:[#allocation2 + $0x20] sm:$0xf] %v4668
  %4954 = vst [vmem:[#allocation2 + $0x44] sm:$0xf] %v4671
  %4955 = vst [vmem:[#allocation2 + $0x68] sm:$0xf] %v4675
  %4956 = vst [vmem:[#allocation2 + $0x8c] sm:$0xf] %v4678
  %4957 = vst [vmem:[#allocation2 + $0xb0] sm:$0xf] %v4682
  %4958 = vst [vmem:[#allocation2 + $0xd4] sm:$0xf] %v4685
  %4959 = vst [vmem:[#allocation2 + $0xf8] sm:$0xf] %v4689
  %4960 = vst [vmem:[#allocation2 + $0x11c] sm:$0xf] %v4692
  %4961 = vst [vmem:[#allocation2 + $0x140] sm:$0xf] %v4696
  %4962 = vst [vmem:[#allocation2 + $0x164] sm:$0xf] %v4699
  %4963 = vst [vmem:[#allocation2 + $0x188] sm:$0xf] %v4703
  %4964 = vst [vmem:[#allocation2 + $0x1ac] sm:$0xf] %v4706
  %4965 = vst [vmem:[#allocation2 + $0x1d0] sm:$0xf] %v4710
  %4966 = vst [vmem:[#allocation2 + $0x1f4] sm:$0xf] %v4713
  %4967 = vst [vmem:[#allocation2 + $0x218] sm:$0xf] %v4717
  %4968 = vst [vmem:[#allocation2 + $0x23c] sm:$0xf] %v4720
  %4969 = vst [vmem:[#allocation2 + $0x260] sm:$0xf] %v4724
  %4970 = vst [vmem:[#allocation2 + $0x284] sm:$0xf] %v4727
  %4971 = vst [vmem:[#allocation2 + $0x2a8] sm:$0xf] %v4731
  %4972 = vst [vmem:[#allocation2 + $0x2cc] sm:$0xf] %v4734
  %4973 = vst [vmem:[#allocation2 + $0x2f0] sm:$0xf] %v4738
  %4974 = vst [vmem:[#allocation2 + $0x314] sm:$0xf] %v4741
  %4975 = vst [vmem:[#allocation2 + $0x338] sm:$0xf] %v4745
  %4976 = vst [vmem:[#allocation2 + $0x35c] sm:$0xf] %v4748
  %4977 = vst [vmem:[#allocation2 + $0x380] sm:$0xf] %v4752
  %4978 = vst [vmem:[#allocation2 + $0x3a4] sm:$0xf] %v4755
  %4979 = vst [vmem:[#allocation2 + $0x3c8] sm:$0xf] %v4759
  %4980 = vst [vmem:[#allocation2 + $0x3ec] sm:$0xf] %v4762
  %4981 = vst [vmem:[#allocation2 + $0x410] sm:$0xf] %v4766
  %4982 = vst [vmem:[#allocation2 + $0x434] sm:$0xf] %v4769
  %4983 = vst [vmem:[#allocation2 + $0x458] sm:$0xf] %v4773
  %4984 = vst [vmem:[#allocation2 + $0x47c] sm:$0xf] %v4776
  %4985 = vst [vmem:[#allocation2 + $0x4a0] sm:$0xf] %v4780
  %4986 = vst [vmem:[#allocation2 + $0x4c4] sm:$0xf] %v4783
  %4987 = vst [vmem:[#allocation2 + $0x4e8] sm:$0xf] %v4787
  %4988 = vst [vmem:[#allocation2 + $0x50c] sm:$0xf] %v4790
  %4989 = vst [vmem:[#allocation2 + $0x530] sm:$0xf] %v4794
  %4990 = vst [vmem:[#allocation2 + $0x554] sm:$0xf] %v4797
  %4991 = vst [vmem:[#allocation2 + $0x578] sm:$0xf] %v4801
  %4992 = vst [vmem:[#allocation2 + $0x59c] sm:$0xf] %v4804
  %4993 = vst [vmem:[#allocation2 + $0x5c0] sm:$0xf] %v4808
  %4994 = vst [vmem:[#allocation2 + $0x5e4] sm:$0xf] %v4811
  %4995 = vst [vmem:[#allocation2 + $0x608] sm:$0xf] %v4815
  %4996 = vst [vmem:[#allocation2 + $0x62c] sm:$0xf] %v4818
  %4997 = vst [vmem:[#allocation2 + $0x650] sm:$0xf] %v4822
  %4998 = vst [vmem:[#allocation2 + $0x674] sm:$0xf] %v4825
  %4999 = vst [vmem:[#allocation2 + $0x698] sm:$0xf] %v4829
  %5000 = vst [vmem:[#allocation2 + $0x6bc] sm:$0xf] %v4832
  %5001 = vst [vmem:[#allocation2 + $0x6e0] sm:$0xf] %v4836
  %5002 = vst [vmem:[#allocation2 + $0x704] sm:$0xf] %v4839
  %5003 = vst [vmem:[#allocation2 + $0x728] sm:$0xf] %v4843
  %5004 = vst [vmem:[#allocation2 + $0x74c] sm:$0xf] %v4846
  %5005 = vst [vmem:[#allocation2 + $0x770] sm:$0xf] %v4850
  %5006 = vst [vmem:[#allocation2 + $0x794] sm:$0xf] %v4853
  %5007 = vst [vmem:[#allocation2 + $0x7b8] sm:$0xf] %v4857
  %5008 = vst [vmem:[#allocation2 + $0x7dc] sm:$0xf] %v4860
  %5009 = vst [vmem:[#allocation2 + $0x800] sm:$0xf] %v4864
  %5010 = vst [vmem:[#allocation2 + $0x824] sm:$0xf] %v4867
  %5011 = vst [vmem:[#allocation2 + $0x848] sm:$0xf] %v4871
  %5012 = vst [vmem:[#allocation2 + $0x86c] sm:$0xf] %v4874
  %5013 = vst [vmem:[#allocation2 + $0x890] sm:$0xf] %v4878
  %5014 = vst [vmem:[#allocation2 + $0x8b4] sm:$0xf] %v4881
  %5015 = vst [vmem:[#allocation2 + $0x8d8] sm:$0xf] %v4885
  %5016 = vst [vmem:[#allocation2 + $0x8fc] sm:$0xf] %v4888
  %v5017 = vld [vmem:[#allocation2] sm:$0xff]
  %v5018 = vld [vmem:[#allocation2 + $0x8] sm:$0xff]
  %v5019 = vld [vmem:[#allocation2 + $0x10] sm:$0xff]
  %v5020 = vld [vmem:[#allocation2 + $0x18] sm:$0xff]
  %v5021 = vld [vmem:[#allocation2 + $0x20] sm:$0xf]
  %v5022 = vld [vmem:[#allocation2 + $0x24] sm:$0xff]
  %v5023 = vld [vmem:[#allocation2 + $0x2c] sm:$0xff]
  %v5024 = vld [vmem:[#allocation2 + $0x34] sm:$0xff]
  %v5025 = vld [vmem:[#allocation2 + $0x3c] sm:$0xff]
  %v5026 = vld [vmem:[#allocation2 + $0x44] sm:$0xf]
  %v5027 = vld [vmem:[#allocation2 + $0x48] sm:$0xff]
  %v5028 = vld [vmem:[#allocation2 + $0x50] sm:$0xff]
  %v5029 = vld [vmem:[#allocation2 + $0x58] sm:$0xff]
  %v5030 = vld [vmem:[#allocation2 + $0x60] sm:$0xff]
  %v5031 = vld [vmem:[#allocation2 + $0x68] sm:$0xf]
  %v5032 = vld [vmem:[#allocation2 + $0x6c] sm:$0xff]
  %v5033 = vld [vmem:[#allocation2 + $0x74] sm:$0xff]
  %v5034 = vld [vmem:[#allocation2 + $0x7c] sm:$0xff]
  %v5035 = vld [vmem:[#allocation2 + $0x84] sm:$0xff]
  %v5036 = vld [vmem:[#allocation2 + $0x8c] sm:$0xf]
  %v5037 = vld [vmem:[#allocation2 + $0x90] sm:$0xff]
  %v5038 = vld [vmem:[#allocation2 + $0x98] sm:$0xff]
  %v5039 = vld [vmem:[#allocation2 + $0xa0] sm:$0xff]
  %v5040 = vld [vmem:[#allocation2 + $0xa8] sm:$0xff]
  %v5041 = vld [vmem:[#allocation2 + $0xb0] sm:$0xf]
  %v5042 = vld [vmem:[#allocation2 + $0xb4] sm:$0xff]
  %v5043 = vld [vmem:[#allocation2 + $0xbc] sm:$0xff]
  %v5044 = vld [vmem:[#allocation2 + $0xc4] sm:$0xff]
  %v5045 = vld [vmem:[#allocation2 + $0xcc] sm:$0xff]
  %v5046 = vld [vmem:[#allocation2 + $0xd4] sm:$0xf]
  %v5047 = vld [vmem:[#allocation2 + $0xd8] sm:$0xff]
  %v5048 = vld [vmem:[#allocation2 + $0xe0] sm:$0xff]
  %v5049 = vld [vmem:[#allocation2 + $0xe8] sm:$0xff]
  %v5050 = vld [vmem:[#allocation2 + $0xf0] sm:$0xff]
  %v5051 = vld [vmem:[#allocation2 + $0xf8] sm:$0xf]
  %v5052 = vld [vmem:[#allocation2 + $0xfc] sm:$0xff]
  %v5053 = vld [vmem:[#allocation2 + $0x104] sm:$0xff]
  %v5054 = vld [vmem:[#allocation2 + $0x10c] sm:$0xff]
  %v5055 = vld [vmem:[#allocation2 + $0x114] sm:$0xff]
  %v5056 = vld [vmem:[#allocation2 + $0x11c] sm:$0xf]
  %v5057 = vld [vmem:[#allocation2 + $0x120] sm:$0xff]
  %v5058 = vld [vmem:[#allocation2 + $0x128] sm:$0xff]
  %v5059 = vld [vmem:[#allocation2 + $0x130] sm:$0xff]
  %v5060 = vld [vmem:[#allocation2 + $0x138] sm:$0xff]
  %v5061 = vld [vmem:[#allocation2 + $0x140] sm:$0xf]
  %v5062 = vld [vmem:[#allocation2 + $0x144] sm:$0xff]
  %v5063 = vld [vmem:[#allocation2 + $0x14c] sm:$0xff]
  %v5064 = vld [vmem:[#allocation2 + $0x154] sm:$0xff]
  %v5065 = vld [vmem:[#allocation2 + $0x15c] sm:$0xff]
  %v5066 = vld [vmem:[#allocation2 + $0x164] sm:$0xf]
  %v5067 = vld [vmem:[#allocation2 + $0x168] sm:$0xff]
  %v5068 = vld [vmem:[#allocation2 + $0x170] sm:$0xff]
  %v5069 = vld [vmem:[#allocation2 + $0x178] sm:$0xff]
  %v5070 = vld [vmem:[#allocation2 + $0x180] sm:$0xff]
  %v5071 = vld [vmem:[#allocation2 + $0x188] sm:$0xf]
  %v5072 = vld [vmem:[#allocation2 + $0x18c] sm:$0xff]
  %v5073 = vld [vmem:[#allocation2 + $0x194] sm:$0xff]
  %v5074 = vld [vmem:[#allocation2 + $0x19c] sm:$0xff]
  %v5075 = vld [vmem:[#allocation2 + $0x1a4] sm:$0xff]
  %v5076 = vld [vmem:[#allocation2 + $0x1ac] sm:$0xf]
  %v5077 = vld [vmem:[#allocation2 + $0x1b0] sm:$0xff]
  %v5078 = vld [vmem:[#allocation2 + $0x1b8] sm:$0xff]
  %v5079 = vld [vmem:[#allocation2 + $0x1c0] sm:$0xff]
  %v5080 = vld [vmem:[#allocation2 + $0x1c8] sm:$0xff]
  %v5081 = vld [vmem:[#allocation2 + $0x1d0] sm:$0xf]
  %v5082 = vld [vmem:[#allocation2 + $0x1d4] sm:$0xff]
  %v5083 = vld [vmem:[#allocation2 + $0x1dc] sm:$0xff]
  %v5084 = vld [vmem:[#allocation2 + $0x1e4] sm:$0xff]
  %v5085 = vld [vmem:[#allocation2 + $0x1ec] sm:$0xff]
  %v5086 = vld [vmem:[#allocation2 + $0x1f4] sm:$0xf]
  %v5087 = vld [vmem:[#allocation2 + $0x1f8] sm:$0xff]
  %v5088 = vld [vmem:[#allocation2 + $0x200] sm:$0xff]
  %v5089 = vld [vmem:[#allocation2 + $0x208] sm:$0xff]
  %v5090 = vld [vmem:[#allocation2 + $0x210] sm:$0xff]
  %v5091 = vld [vmem:[#allocation2 + $0x218] sm:$0xf]
  %v5092 = vld [vmem:[#allocation2 + $0x21c] sm:$0xff]
  %v5093 = vld [vmem:[#allocation2 + $0x224] sm:$0xff]
  %v5094 = vld [vmem:[#allocation2 + $0x22c] sm:$0xff]
  %v5095 = vld [vmem:[#allocation2 + $0x234] sm:$0xff]
  %v5096 = vld [vmem:[#allocation2 + $0x23c] sm:$0xf]
  %v5097 = vld [vmem:[#allocation2 + $0x240] sm:$0xff]
  %v5098 = vld [vmem:[#allocation2 + $0x248] sm:$0xff]
  %v5099 = vld [vmem:[#allocation2 + $0x250] sm:$0xff]
  %v5100 = vld [vmem:[#allocation2 + $0x258] sm:$0xff]
  %v5101 = vld [vmem:[#allocation2 + $0x260] sm:$0xf]
  %v5102 = vld [vmem:[#allocation2 + $0x264] sm:$0xff]
  %v5103 = vld [vmem:[#allocation2 + $0x26c] sm:$0xff]
  %v5104 = vld [vmem:[#allocation2 + $0x274] sm:$0xff]
  %v5105 = vld [vmem:[#allocation2 + $0x27c] sm:$0xff]
  %v5106 = vld [vmem:[#allocation2 + $0x284] sm:$0xf]
  %v5107 = vld [vmem:[#allocation2 + $0x288] sm:$0xff]
  %v5108 = vld [vmem:[#allocation2 + $0x290] sm:$0xff]
  %v5109 = vld [vmem:[#allocation2 + $0x298] sm:$0xff]
  %v5110 = vld [vmem:[#allocation2 + $0x2a0] sm:$0xff]
  %v5111 = vld [vmem:[#allocation2 + $0x2a8] sm:$0xf]
  %v5112 = vld [vmem:[#allocation2 + $0x2ac] sm:$0xff]
  %v5113 = vld [vmem:[#allocation2 + $0x2b4] sm:$0xff]
  %v5114 = vld [vmem:[#allocation2 + $0x2bc] sm:$0xff]
  %v5115 = vld [vmem:[#allocation2 + $0x2c4] sm:$0xff]
  %v5116 = vld [vmem:[#allocation2 + $0x2cc] sm:$0xf]
  %v5117 = vld [vmem:[#allocation2 + $0x2d0] sm:$0xff]
  %v5118 = vld [vmem:[#allocation2 + $0x2d8] sm:$0xff]
  %v5119 = vld [vmem:[#allocation2 + $0x2e0] sm:$0xff]
  %v5120 = vld [vmem:[#allocation2 + $0x2e8] sm:$0xff]
  %v5121 = vld [vmem:[#allocation2 + $0x2f0] sm:$0xf]
  %v5122 = vld [vmem:[#allocation2 + $0x2f4] sm:$0xff]
  %v5123 = vld [vmem:[#allocation2 + $0x2fc] sm:$0xff]
  %v5124 = vld [vmem:[#allocation2 + $0x304] sm:$0xff]
  %v5125 = vld [vmem:[#allocation2 + $0x30c] sm:$0xff]
  %v5126 = vld [vmem:[#allocation2 + $0x314] sm:$0xf]
  %v5127 = vld [vmem:[#allocation2 + $0x318] sm:$0xff]
  %v5128 = vld [vmem:[#allocation2 + $0x320] sm:$0xff]
  %v5129 = vld [vmem:[#allocation2 + $0x328] sm:$0xff]
  %v5130 = vld [vmem:[#allocation2 + $0x330] sm:$0xff]
  %v5131 = vld [vmem:[#allocation2 + $0x338] sm:$0xf]
  %v5132 = vld [vmem:[#allocation2 + $0x33c] sm:$0xff]
  %v5133 = vld [vmem:[#allocation2 + $0x344] sm:$0xff]
  %v5134 = vld [vmem:[#allocation2 + $0x34c] sm:$0xff]
  %v5135 = vld [vmem:[#allocation2 + $0x354] sm:$0xff]
  %v5136 = vld [vmem:[#allocation2 + $0x35c] sm:$0xf]
  %v5137 = vld [vmem:[#allocation2 + $0x360] sm:$0xff]
  %v5138 = vld [vmem:[#allocation2 + $0x368] sm:$0xff]
  %v5139 = vld [vmem:[#allocation2 + $0x370] sm:$0xff]
  %v5140 = vld [vmem:[#allocation2 + $0x378] sm:$0xff]
  %v5141 = vld [vmem:[#allocation2 + $0x380] sm:$0xf]
  %v5142 = vld [vmem:[#allocation2 + $0x384] sm:$0xff]
  %v5143 = vld [vmem:[#allocation2 + $0x38c] sm:$0xff]
  %v5144 = vld [vmem:[#allocation2 + $0x394] sm:$0xff]
  %v5145 = vld [vmem:[#allocation2 + $0x39c] sm:$0xff]
  %v5146 = vld [vmem:[#allocation2 + $0x3a4] sm:$0xf]
  %v5147 = vld [vmem:[#allocation2 + $0x3a8] sm:$0xff]
  %v5148 = vld [vmem:[#allocation2 + $0x3b0] sm:$0xff]
  %v5149 = vld [vmem:[#allocation2 + $0x3b8] sm:$0xff]
  %v5150 = vld [vmem:[#allocation2 + $0x3c0] sm:$0xff]
  %v5151 = vld [vmem:[#allocation2 + $0x3c8] sm:$0xf]
  %v5152 = vld [vmem:[#allocation2 + $0x3cc] sm:$0xff]
  %v5153 = vld [vmem:[#allocation2 + $0x3d4] sm:$0xff]
  %v5154 = vld [vmem:[#allocation2 + $0x3dc] sm:$0xff]
  %v5155 = vld [vmem:[#allocation2 + $0x3e4] sm:$0xff]
  %v5156 = vld [vmem:[#allocation2 + $0x3ec] sm:$0xf]
  %v5157 = vld [vmem:[#allocation2 + $0x3f0] sm:$0xff]
  %v5158 = vld [vmem:[#allocation2 + $0x3f8] sm:$0xff]
  %v5159 = vld [vmem:[#allocation2 + $0x400] sm:$0xff]
  %v5160 = vld [vmem:[#allocation2 + $0x408] sm:$0xff]
  %v5161 = vld [vmem:[#allocation2 + $0x410] sm:$0xf]
  %v5162 = vld [vmem:[#allocation2 + $0x414] sm:$0xff]
  %v5163 = vld [vmem:[#allocation2 + $0x41c] sm:$0xff]
  %v5164 = vld [vmem:[#allocation2 + $0x424] sm:$0xff]
  %v5165 = vld [vmem:[#allocation2 + $0x42c] sm:$0xff]
  %v5166 = vld [vmem:[#allocation2 + $0x434] sm:$0xf]
  %v5167 = vld [vmem:[#allocation2 + $0x438] sm:$0xff]
  %v5168 = vld [vmem:[#allocation2 + $0x440] sm:$0xff]
  %v5169 = vld [vmem:[#allocation2 + $0x448] sm:$0xff]
  %v5170 = vld [vmem:[#allocation2 + $0x450] sm:$0xff]
  %v5171 = vld [vmem:[#allocation2 + $0x458] sm:$0xf]
  %v5172 = vld [vmem:[#allocation2 + $0x45c] sm:$0xff]
  %v5173 = vld [vmem:[#allocation2 + $0x464] sm:$0xff]
  %v5174 = vld [vmem:[#allocation2 + $0x46c] sm:$0xff]
  %v5175 = vld [vmem:[#allocation2 + $0x474] sm:$0xff]
  %v5176 = vld [vmem:[#allocation2 + $0x47c] sm:$0xf]
  %v5177 = vld [vmem:[#allocation2 + $0x480] sm:$0xff]
  %v5178 = vld [vmem:[#allocation2 + $0x488] sm:$0xff]
  %v5179 = vld [vmem:[#allocation2 + $0x490] sm:$0xff]
  %v5180 = vld [vmem:[#allocation2 + $0x498] sm:$0xff]
  %v5181 = vld [vmem:[#allocation2 + $0x4a0] sm:$0xf]
  %v5182 = vld [vmem:[#allocation2 + $0x4a4] sm:$0xff]
  %v5183 = vld [vmem:[#allocation2 + $0x4ac] sm:$0xff]
  %v5184 = vld [vmem:[#allocation2 + $0x4b4] sm:$0xff]
  %v5185 = vld [vmem:[#allocation2 + $0x4bc] sm:$0xff]
  %v5186 = vld [vmem:[#allocation2 + $0x4c4] sm:$0xf]
  %v5187 = vld [vmem:[#allocation2 + $0x4c8] sm:$0xff]
  %v5188 = vld [vmem:[#allocation2 + $0x4d0] sm:$0xff]
  %v5189 = vld [vmem:[#allocation2 + $0x4d8] sm:$0xff]
  %v5190 = vld [vmem:[#allocation2 + $0x4e0] sm:$0xff]
  %v5191 = vld [vmem:[#allocation2 + $0x4e8] sm:$0xf]
  %v5192 = vld [vmem:[#allocation2 + $0x4ec] sm:$0xff]
  %v5193 = vld [vmem:[#allocation2 + $0x4f4] sm:$0xff]
  %v5194 = vld [vmem:[#allocation2 + $0x4fc] sm:$0xff]
  %v5195 = vld [vmem:[#allocation2 + $0x504] sm:$0xff]
  %v5196 = vld [vmem:[#allocation2 + $0x50c] sm:$0xf]
  %v5197 = vld [vmem:[#allocation2 + $0x510] sm:$0xff]
  %v5198 = vld [vmem:[#allocation2 + $0x518] sm:$0xff]
  %v5199 = vld [vmem:[#allocation2 + $0x520] sm:$0xff]
  %v5200 = vld [vmem:[#allocation2 + $0x528] sm:$0xff]
  %v5201 = vld [vmem:[#allocation2 + $0x530] sm:$0xf]
  %v5202 = vld [vmem:[#allocation2 + $0x534] sm:$0xff]
  %v5203 = vld [vmem:[#allocation2 + $0x53c] sm:$0xff]
  %v5204 = vld [vmem:[#allocation2 + $0x544] sm:$0xff]
  %v5205 = vld [vmem:[#allocation2 + $0x54c] sm:$0xff]
  %v5206 = vld [vmem:[#allocation2 + $0x554] sm:$0xf]
  %v5207 = vld [vmem:[#allocation2 + $0x558] sm:$0xff]
  %v5208 = vld [vmem:[#allocation2 + $0x560] sm:$0xff]
  %v5209 = vld [vmem:[#allocation2 + $0x568] sm:$0xff]
  %v5210 = vld [vmem:[#allocation2 + $0x570] sm:$0xff]
  %v5211 = vld [vmem:[#allocation2 + $0x578] sm:$0xf]
  %v5212 = vld [vmem:[#allocation2 + $0x57c] sm:$0xff]
  %v5213 = vld [vmem:[#allocation2 + $0x584] sm:$0xff]
  %v5214 = vld [vmem:[#allocation2 + $0x58c] sm:$0xff]
  %v5215 = vld [vmem:[#allocation2 + $0x594] sm:$0xff]
  %v5216 = vld [vmem:[#allocation2 + $0x59c] sm:$0xf]
  %v5217 = vld [vmem:[#allocation2 + $0x5a0] sm:$0xff]
  %v5218 = vld [vmem:[#allocation2 + $0x5a8] sm:$0xff]
  %v5219 = vld [vmem:[#allocation2 + $0x5b0] sm:$0xff]
  %v5220 = vld [vmem:[#allocation2 + $0x5b8] sm:$0xff]
  %v5221 = vld [vmem:[#allocation2 + $0x5c0] sm:$0xf]
  %v5222 = vld [vmem:[#allocation2 + $0x5c4] sm:$0xff]
  %v5223 = vld [vmem:[#allocation2 + $0x5cc] sm:$0xff]
  %v5224 = vld [vmem:[#allocation2 + $0x5d4] sm:$0xff]
  %v5225 = vld [vmem:[#allocation2 + $0x5dc] sm:$0xff]
  %v5226 = vld [vmem:[#allocation2 + $0x5e4] sm:$0xf]
  %v5227 = vld [vmem:[#allocation2 + $0x5e8] sm:$0xff]
  %v5228 = vld [vmem:[#allocation2 + $0x5f0] sm:$0xff]
  %v5229 = vld [vmem:[#allocation2 + $0x5f8] sm:$0xff]
  %v5230 = vld [vmem:[#allocation2 + $0x600] sm:$0xff]
  %v5231 = vld [vmem:[#allocation2 + $0x608] sm:$0xf]
  %v5232 = vld [vmem:[#allocation2 + $0x60c] sm:$0xff]
  %v5233 = vld [vmem:[#allocation2 + $0x614] sm:$0xff]
  %v5234 = vld [vmem:[#allocation2 + $0x61c] sm:$0xff]
  %v5235 = vld [vmem:[#allocation2 + $0x624] sm:$0xff]
  %v5236 = vld [vmem:[#allocation2 + $0x62c] sm:$0xf]
  %v5237 = vld [vmem:[#allocation2 + $0x630] sm:$0xff]
  %v5238 = vld [vmem:[#allocation2 + $0x638] sm:$0xff]
  %v5239 = vld [vmem:[#allocation2 + $0x640] sm:$0xff]
  %v5240 = vld [vmem:[#allocation2 + $0x648] sm:$0xff]
  %v5241 = vld [vmem:[#allocation2 + $0x650] sm:$0xf]
  %v5242 = vld [vmem:[#allocation2 + $0x654] sm:$0xff]
  %v5243 = vld [vmem:[#allocation2 + $0x65c] sm:$0xff]
  %v5244 = vld [vmem:[#allocation2 + $0x664] sm:$0xff]
  %v5245 = vld [vmem:[#allocation2 + $0x66c] sm:$0xff]
  %v5246 = vld [vmem:[#allocation2 + $0x674] sm:$0xf]
  %v5247 = vld [vmem:[#allocation2 + $0x678] sm:$0xff]
  %v5248 = vld [vmem:[#allocation2 + $0x680] sm:$0xff]
  %v5249 = vld [vmem:[#allocation2 + $0x688] sm:$0xff]
  %v5250 = vld [vmem:[#allocation2 + $0x690] sm:$0xff]
  %v5251 = vld [vmem:[#allocation2 + $0x698] sm:$0xf]
  %v5252 = vld [vmem:[#allocation2 + $0x69c] sm:$0xff]
  %v5253 = vld [vmem:[#allocation2 + $0x6a4] sm:$0xff]
  %v5254 = vld [vmem:[#allocation2 + $0x6ac] sm:$0xff]
  %v5255 = vld [vmem:[#allocation2 + $0x6b4] sm:$0xff]
  %v5256 = vld [vmem:[#allocation2 + $0x6bc] sm:$0xf]
  %v5257 = vld [vmem:[#allocation2 + $0x6c0] sm:$0xff]
  %v5258 = vld [vmem:[#allocation2 + $0x6c8] sm:$0xff]
  %v5259 = vld [vmem:[#allocation2 + $0x6d0] sm:$0xff]
  %v5260 = vld [vmem:[#allocation2 + $0x6d8] sm:$0xff]
  %v5261 = vld [vmem:[#allocation2 + $0x6e0] sm:$0xf]
  %v5262 = vld [vmem:[#allocation2 + $0x6e4] sm:$0xff]
  %v5263 = vld [vmem:[#allocation2 + $0x6ec] sm:$0xff]
  %v5264 = vld [vmem:[#allocation2 + $0x6f4] sm:$0xff]
  %v5265 = vld [vmem:[#allocation2 + $0x6fc] sm:$0xff]
  %v5266 = vld [vmem:[#allocation2 + $0x704] sm:$0xf]
  %v5267 = vld [vmem:[#allocation2 + $0x708] sm:$0xff]
  %v5268 = vld [vmem:[#allocation2 + $0x710] sm:$0xff]
  %v5269 = vld [vmem:[#allocation2 + $0x718] sm:$0xff]
  %v5270 = vld [vmem:[#allocation2 + $0x720] sm:$0xff]
  %v5271 = vld [vmem:[#allocation2 + $0x728] sm:$0xf]
  %v5272 = vld [vmem:[#allocation2 + $0x72c] sm:$0xff]
  %v5273 = vld [vmem:[#allocation2 + $0x734] sm:$0xff]
  %v5274 = vld [vmem:[#allocation2 + $0x73c] sm:$0xff]
  %v5275 = vld [vmem:[#allocation2 + $0x744] sm:$0xff]
  %v5276 = vld [vmem:[#allocation2 + $0x74c] sm:$0xf]
  %v5277 = vld [vmem:[#allocation2 + $0x750] sm:$0xff]
  %v5278 = vld [vmem:[#allocation2 + $0x758] sm:$0xff]
  %v5279 = vld [vmem:[#allocation2 + $0x760] sm:$0xff]
  %v5280 = vld [vmem:[#allocation2 + $0x768] sm:$0xff]
  %v5281 = vld [vmem:[#allocation2 + $0x770] sm:$0xf]
  %v5282 = vld [vmem:[#allocation2 + $0x774] sm:$0xff]
  %v5283 = vld [vmem:[#allocation2 + $0x77c] sm:$0xff]
  %v5284 = vld [vmem:[#allocation2 + $0x784] sm:$0xff]
  %v5285 = vld [vmem:[#allocation2 + $0x78c] sm:$0xff]
  %v5286 = vld [vmem:[#allocation2 + $0x794] sm:$0xf]
  %v5287 = vld [vmem:[#allocation2 + $0x798] sm:$0xff]
  %v5288 = vld [vmem:[#allocation2 + $0x7a0] sm:$0xff]
  %v5289 = vld [vmem:[#allocation2 + $0x7a8] sm:$0xff]
  %v5290 = vld [vmem:[#allocation2 + $0x7b0] sm:$0xff]
  %v5291 = vld [vmem:[#allocation2 + $0x7b8] sm:$0xf]
  %v5292 = vld [vmem:[#allocation2 + $0x7bc] sm:$0xff]
  %v5293 = vld [vmem:[#allocation2 + $0x7c4] sm:$0xff]
  %v5294 = vld [vmem:[#allocation2 + $0x7cc] sm:$0xff]
  %v5295 = vld [vmem:[#allocation2 + $0x7d4] sm:$0xff]
  %v5296 = vld [vmem:[#allocation2 + $0x7dc] sm:$0xf]
  %v5297 = vld [vmem:[#allocation2 + $0x7e0] sm:$0xff]
  %v5298 = vld [vmem:[#allocation2 + $0x7e8] sm:$0xff]
  %v5299 = vld [vmem:[#allocation2 + $0x7f0] sm:$0xff]
  %v5300 = vld [vmem:[#allocation2 + $0x7f8] sm:$0xff]
  %v5301 = vld [vmem:[#allocation2 + $0x800] sm:$0xf]
  %v5302 = vld [vmem:[#allocation2 + $0x804] sm:$0xff]
  %v5303 = vld [vmem:[#allocation2 + $0x80c] sm:$0xff]
  %v5304 = vld [vmem:[#allocation2 + $0x814] sm:$0xff]
  %v5305 = vld [vmem:[#allocation2 + $0x81c] sm:$0xff]
  %v5306 = vld [vmem:[#allocation2 + $0x824] sm:$0xf]
  %v5307 = vld [vmem:[#allocation2 + $0x828] sm:$0xff]
  %v5308 = vld [vmem:[#allocation2 + $0x830] sm:$0xff]
  %v5309 = vld [vmem:[#allocation2 + $0x838] sm:$0xff]
  %v5310 = vld [vmem:[#allocation2 + $0x840] sm:$0xff]
  %v5311 = vld [vmem:[#allocation2 + $0x848] sm:$0xf]
  %v5312 = vld [vmem:[#allocation2 + $0x84c] sm:$0xff]
  %v5313 = vld [vmem:[#allocation2 + $0x854] sm:$0xff]
  %v5314 = vld [vmem:[#allocation2 + $0x85c] sm:$0xff]
  %v5315 = vld [vmem:[#allocation2 + $0x864] sm:$0xff]
  %v5316 = vld [vmem:[#allocation2 + $0x86c] sm:$0xf]
  %v5317 = vld [vmem:[#allocation2 + $0x870] sm:$0xff]
  %v5318 = vld [vmem:[#allocation2 + $0x878] sm:$0xff]
  %v5319 = vld [vmem:[#allocation2 + $0x880] sm:$0xff]
  %v5320 = vld [vmem:[#allocation2 + $0x888] sm:$0xff]
  %v5321 = vld [vmem:[#allocation2 + $0x890] sm:$0xf]
  %v5322 = vld [vmem:[#allocation2 + $0x894] sm:$0xff]
  %v5323 = vld [vmem:[#allocation2 + $0x89c] sm:$0xff]
  %v5324 = vld [vmem:[#allocation2 + $0x8a4] sm:$0xff]
  %v5325 = vld [vmem:[#allocation2 + $0x8ac] sm:$0xff]
  %v5326 = vld [vmem:[#allocation2 + $0x8b4] sm:$0xf]
  %v5327 = vld [vmem:[#allocation2 + $0x8b8] sm:$0xff]
  %v5328 = vld [vmem:[#allocation2 + $0x8c0] sm:$0xff]
  %v5329 = vld [vmem:[#allocation2 + $0x8c8] sm:$0xff]
  %v5330 = vld [vmem:[#allocation2 + $0x8d0] sm:$0xff]
  %v5331 = vld [vmem:[#allocation2 + $0x8d8] sm:$0xf]
  %v5332 = vld [vmem:[#allocation2 + $0x8dc] sm:$0xff]
  %v5333 = vld [vmem:[#allocation2 + $0x8e4] sm:$0xff]
  %v5334 = vld [vmem:[#allocation2 + $0x8ec] sm:$0xff]
  %v5335 = vld [vmem:[#allocation2 + $0x8f4] sm:$0xff]
  %v5336 = vld [vmem:[#allocation2 + $0x8fc] sm:$0xf]
  %v5337 = vld [vmem:[%s1] sm:$0xf]
  %v5338 = vld [vmem:[%s1 + $0x4] sm:$0xf]
  %v5339 = vld [vmem:[%s1 + $0x8] sm:$0xf]
  %v5340 = vld [vmem:[%s1 + $0xc] sm:$0xf]
  %v5341 = vld [vmem:[%s1 + $0x10] sm:$0xf]
  %v5342 = vld [vmem:[%s1 + $0x14] sm:$0xf]
  %v5343 = vld [vmem:[%s1 + $0x18] sm:$0xf]
  %v5344 = vld [vmem:[%s1 + $0x1c] sm:$0xf]
  %v5345 = vld [vmem:[%s1 + $0x20] sm:$0xf]
  %v5346 = vld [vmem:[%s1 + $0x24] sm:$0xf]
  %v5347 = vld [vmem:[%s1 + $0x28] sm:$0xf]
  %v5348 = vld [vmem:[%s1 + $0x2c] sm:$0xf]
  %v5349 = vld [vmem:[%s1 + $0x30] sm:$0xf]
  %v5350 = vld [vmem:[%s1 + $0x34] sm:$0xf]
  %v5351 = vld [vmem:[%s1 + $0x38] sm:$0xf]
  %v5352 = vld [vmem:[%s1 + $0x3c] sm:$0xf]
  %v5353 = vld [vmem:[%s1 + $0x40] sm:$0xf]
  %v5354 = vld [vmem:[%s1 + $0x44] sm:$0xf]
  %v5355 = vld [vmem:[%s1 + $0x48] sm:$0xf]
  %v5356 = vld [vmem:[%s1 + $0x4c] sm:$0xf]
  %v5357 = vld [vmem:[%s1 + $0x50] sm:$0xf]
  %v5358 = vld [vmem:[%s1 + $0x54] sm:$0xf]
  %v5359 = vld [vmem:[%s1 + $0x58] sm:$0xf]
  %v5360 = vld [vmem:[%s1 + $0x5c] sm:$0xf]
  %v5361 = vld [vmem:[%s1 + $0x60] sm:$0xf]
  %v5362 = vld [vmem:[%s1 + $0x64] sm:$0xf]
  %v5363 = vld [vmem:[%s1 + $0x68] sm:$0xf]
  %v5364 = vld [vmem:[%s1 + $0x6c] sm:$0xf]
  %v5365 = vld [vmem:[%s1 + $0x70] sm:$0xf]
  %v5366 = vld [vmem:[%s1 + $0x74] sm:$0xf]
  %v5367 = vld [vmem:[%s1 + $0x78] sm:$0xf]
  %v5368 = vld [vmem:[%s1 + $0x7c] sm:$0xf]
  %v5369 = vld [vmem:[%s1 + $0x80] sm:$0xf]
  %v5370 = vld [vmem:[%s1 + $0x84] sm:$0xf]
  %v5371 = vld [vmem:[%s1 + $0x88] sm:$0xf]
  %v5372 = vld [vmem:[%s1 + $0x8c] sm:$0xf]
  %v5373 = vld [vmem:[%s1 + $0x90] sm:$0xf]
  %v5374 = vld [vmem:[%s1 + $0x94] sm:$0xf]
  %v5375 = vld [vmem:[%s1 + $0x98] sm:$0xf]
  %v5376 = vld [vmem:[%s1 + $0x9c] sm:$0xf]
  %v5377 = vld [vmem:[%s1 + $0xa0] sm:$0xf]
  %v5378 = vld [vmem:[%s1 + $0xa4] sm:$0xf]
  %v5379 = vld [vmem:[%s1 + $0xa8] sm:$0xf]
  %v5380 = vld [vmem:[%s1 + $0xac] sm:$0xf]
  %v5381 = vld [vmem:[%s1 + $0xb0] sm:$0xf]
  %v5382 = vld [vmem:[%s1 + $0xb4] sm:$0xf]
  %v5383 = vld [vmem:[%s1 + $0xb8] sm:$0xf]
  %v5384 = vld [vmem:[%s1 + $0xbc] sm:$0xf]
  %v5385 = vld [vmem:[%s1 + $0xc0] sm:$0xf]
  %v5386 = vld [vmem:[%s1 + $0xc4] sm:$0xf]
  %v5387 = vld [vmem:[%s1 + $0xc8] sm:$0xf]
  %v5388 = vld [vmem:[%s1 + $0xcc] sm:$0xf]
  %v5389 = vld [vmem:[%s1 + $0xd0] sm:$0xf]
  %v5390 = vld [vmem:[%s1 + $0xd4] sm:$0xf]
  %v5391 = vld [vmem:[%s1 + $0xd8] sm:$0xf]
  %v5392 = vld [vmem:[%s1 + $0xdc] sm:$0xf]
  %v5393 = vld [vmem:[%s1 + $0xe0] sm:$0xf]
  %v5394 = vld [vmem:[%s1 + $0xe4] sm:$0xf]
  %v5395 = vld [vmem:[%s1 + $0xe8] sm:$0xf]
  %v5396 = vld [vmem:[%s1 + $0xec] sm:$0xf]
  %v5397 = vld [vmem:[%s1 + $0xf0] sm:$0xf]
  %v5398 = vld [vmem:[%s1 + $0xf4] sm:$0xf]
  %v5399 = vld [vmem:[%s1 + $0xf8] sm:$0xf]
  %v5400 = vld [vmem:[%s1 + $0xfc] sm:$0xf]
  %v5401 = vld [vmem:[%s1 + $0x100] sm:$0xf]
  %v5402 = vld [vmem:[%s1 + $0x104] sm:$0xf]
  %v5403 = vld [vmem:[%s1 + $0x108] sm:$0xf]
  %v5404 = vld [vmem:[%s1 + $0x10c] sm:$0xf]
  %v5405 = vld [vmem:[%s1 + $0x110] sm:$0xf]
  %v5406 = vld [vmem:[%s1 + $0x114] sm:$0xf]
  %v5407 = vld [vmem:[%s1 + $0x118] sm:$0xf]
  %v5408 = vld [vmem:[%s1 + $0x11c] sm:$0xf]
  %v5409 = vld [vmem:[%s1 + $0x120] sm:$0xf]
  %v5410 = vld [vmem:[%s1 + $0x124] sm:$0xf]
  %v5411 = vld [vmem:[%s1 + $0x128] sm:$0xf]
  %v5412 = vld [vmem:[%s1 + $0x12c] sm:$0xf]
  %v5413 = vld [vmem:[%s1 + $0x130] sm:$0xf]
  %v5414 = vld [vmem:[%s1 + $0x134] sm:$0xf]
  %v5415 = vld [vmem:[%s1 + $0x138] sm:$0xf]
  %v5416 = vld [vmem:[%s1 + $0x13c] sm:$0xf]
  %v5417 = vld [vmem:[%s1 + $0x140] sm:$0xf]
  %v5418 = vld [vmem:[%s1 + $0x144] sm:$0xf]
  %v5419 = vld [vmem:[%s1 + $0x148] sm:$0xf]
  %v5420 = vld [vmem:[%s1 + $0x14c] sm:$0xf]
  %v5421 = vld [vmem:[%s1 + $0x150] sm:$0xf]
  %v5422 = vld [vmem:[%s1 + $0x154] sm:$0xf]
  %v5423 = vld [vmem:[%s1 + $0x158] sm:$0xf]
  %v5424 = vld [vmem:[%s1 + $0x15c] sm:$0xf]
  %v5425 = vld [vmem:[%s1 + $0x160] sm:$0xf]
  %v5426 = vld [vmem:[%s1 + $0x164] sm:$0xf]
  %v5427 = vld [vmem:[%s1 + $0x168] sm:$0xf]
  %v5428 = vld [vmem:[%s1 + $0x16c] sm:$0xf]
  %v5429 = vld [vmem:[%s1 + $0x170] sm:$0xf]
  %v5430 = vld [vmem:[%s1 + $0x174] sm:$0xf]
  %v5431 = vld [vmem:[%s1 + $0x178] sm:$0xf]
  %v5432 = vld [vmem:[%s1 + $0x17c] sm:$0xf]
  %v5433 = vld [vmem:[%s1 + $0x180] sm:$0xf]
  %v5434 = vld [vmem:[%s1 + $0x184] sm:$0xf]
  %v5435 = vld [vmem:[%s1 + $0x188] sm:$0xf]
  %v5436 = vld [vmem:[%s1 + $0x18c] sm:$0xf]
  %v5437 = vld [vmem:[%s1 + $0x190] sm:$0xf]
  %v5438 = vld [vmem:[%s1 + $0x194] sm:$0xf]
  %v5439 = vld [vmem:[%s1 + $0x198] sm:$0xf]
  %v5440 = vld [vmem:[%s1 + $0x19c] sm:$0xf]
  %v5441 = vld [vmem:[%s1 + $0x1a0] sm:$0xf]
  %v5442 = vld [vmem:[%s1 + $0x1a4] sm:$0xf]
  %v5443 = vld [vmem:[%s1 + $0x1a8] sm:$0xf]
  %v5444 = vld [vmem:[%s1 + $0x1ac] sm:$0xf]
  %v5445 = vld [vmem:[%s1 + $0x1b0] sm:$0xf]
  %v5446 = vld [vmem:[%s1 + $0x1b4] sm:$0xf]
  %v5447 = vld [vmem:[%s1 + $0x1b8] sm:$0xf]
  %v5448 = vld [vmem:[%s1 + $0x1bc] sm:$0xf]
  %v5449 = vld [vmem:[%s1 + $0x1c0] sm:$0xf]
  %v5450 = vld [vmem:[%s1 + $0x1c4] sm:$0xf]
  %v5451 = vld [vmem:[%s1 + $0x1c8] sm:$0xf]
  %v5452 = vld [vmem:[%s1 + $0x1cc] sm:$0xf]
  %v5453 = vld [vmem:[%s1 + $0x1d0] sm:$0xf]
  %v5454 = vld [vmem:[%s1 + $0x1d4] sm:$0xf]
  %v5455 = vld [vmem:[%s1 + $0x1d8] sm:$0xf]
  %v5456 = vld [vmem:[%s1 + $0x1dc] sm:$0xf]
  %v5457 = vld [vmem:[%s1 + $0x1e0] sm:$0xf]
  %v5458 = vld [vmem:[%s1 + $0x1e4] sm:$0xf]
  %v5459 = vld [vmem:[%s1 + $0x1e8] sm:$0xf]
  %v5460 = vld [vmem:[%s1 + $0x1ec] sm:$0xf]
  %v5461 = vld [vmem:[%s1 + $0x1f0] sm:$0xf]
  %v5462 = vld [vmem:[%s1 + $0x1f4] sm:$0xf]
  %v5463 = vld [vmem:[%s1 + $0x1f8] sm:$0xf]
  %v5464 = vld [vmem:[%s1 + $0x1fc] sm:$0xf]
  %v5465 = vld [vmem:[%s1 + $0x200] sm:$0xf]
  %v5466 = vld [vmem:[%s1 + $0x204] sm:$0xf]
  %v5467 = vld [vmem:[%s1 + $0x208] sm:$0xf]
  %v5468 = vld [vmem:[%s1 + $0x20c] sm:$0xf]
  %v5469 = vld [vmem:[%s1 + $0x210] sm:$0xf]
  %v5470 = vld [vmem:[%s1 + $0x214] sm:$0xf]
  %v5471 = vld [vmem:[%s1 + $0x218] sm:$0xf]
  %v5472 = vld [vmem:[%s1 + $0x21c] sm:$0xf]
  %v5473 = vld [vmem:[%s1 + $0x220] sm:$0xf]
  %v5474 = vld [vmem:[%s1 + $0x224] sm:$0xf]
  %v5475 = vld [vmem:[%s1 + $0x228] sm:$0xf]
  %v5476 = vld [vmem:[%s1 + $0x22c] sm:$0xf]
  %v5477 = vld [vmem:[%s1 + $0x230] sm:$0xf]
  %v5478 = vld [vmem:[%s1 + $0x234] sm:$0xf]
  %v5479 = vld [vmem:[%s1 + $0x238] sm:$0xf]
  %v5480 = vld [vmem:[%s1 + $0x23c] sm:$0xf]
  %v5801 = vunpack.c.l.b16 %v5017
  %v5802 = vunpack.c.h.b16 %v5017
  %v5803 = vunpack.c.l.b16 %v5018
  %v5804 = vunpack.c.h.b16 %v5018
  %v5805 = vunpack.c.l.b16 %v5019
  %v5806 = vunpack.c.h.b16 %v5019
  %v5807 = vunpack.c.l.b16 %v5020
  %v5808 = vunpack.c.h.b16 %v5020
  %v5809 = vunpack.c.l.b16 %v5021
  %v5810 = vunpack.c.l.b16 %v5022
  %v5811 = vunpack.c.h.b16 %v5022
  %v5812 = vunpack.c.l.b16 %v5023
  %v5813 = vunpack.c.h.b16 %v5023
  %v5814 = vunpack.c.l.b16 %v5024
  %v5815 = vunpack.c.h.b16 %v5024
  %v5816 = vunpack.c.l.b16 %v5025
  %v5817 = vunpack.c.h.b16 %v5025
  %v5818 = vunpack.c.l.b16 %v5026
  %v5819 = vunpack.c.l.b16 %v5027
  %v5820 = vunpack.c.h.b16 %v5027
  %v5821 = vunpack.c.l.b16 %v5028
  %v5822 = vunpack.c.h.b16 %v5028
  %v5823 = vunpack.c.l.b16 %v5029
  %v5824 = vunpack.c.h.b16 %v5029
  %v5825 = vunpack.c.l.b16 %v5030
  %v5826 = vunpack.c.h.b16 %v5030
  %v5827 = vunpack.c.l.b16 %v5031
  %v5828 = vunpack.c.l.b16 %v5032
  %v5829 = vunpack.c.h.b16 %v5032
  %v5830 = vunpack.c.l.b16 %v5033
  %v5831 = vunpack.c.h.b16 %v5033
  %v5832 = vunpack.c.l.b16 %v5034
  %v5833 = vunpack.c.h.b16 %v5034
  %v5834 = vunpack.c.l.b16 %v5035
  %v5835 = vunpack.c.h.b16 %v5035
  %v5836 = vunpack.c.l.b16 %v5036
  %v5837 = vunpack.c.l.b16 %v5037
  %v5838 = vunpack.c.h.b16 %v5037
  %v5839 = vunpack.c.l.b16 %v5038
  %v5840 = vunpack.c.h.b16 %v5038
  %v5841 = vunpack.c.l.b16 %v5039
  %v5842 = vunpack.c.h.b16 %v5039
  %v5843 = vunpack.c.l.b16 %v5040
  %v5844 = vunpack.c.h.b16 %v5040
  %v5845 = vunpack.c.l.b16 %v5041
  %v5846 = vunpack.c.l.b16 %v5042
  %v5847 = vunpack.c.h.b16 %v5042
  %v5848 = vunpack.c.l.b16 %v5043
  %v5849 = vunpack.c.h.b16 %v5043
  %v5850 = vunpack.c.l.b16 %v5044
  %v5851 = vunpack.c.h.b16 %v5044
  %v5852 = vunpack.c.l.b16 %v5045
  %v5853 = vunpack.c.h.b16 %v5045
  %v5854 = vunpack.c.l.b16 %v5046
  %v5855 = vunpack.c.l.b16 %v5047
  %v5856 = vunpack.c.h.b16 %v5047
  %v5857 = vunpack.c.l.b16 %v5048
  %v5858 = vunpack.c.h.b16 %v5048
  %v5859 = vunpack.c.l.b16 %v5049
  %v5860 = vunpack.c.h.b16 %v5049
  %v5861 = vunpack.c.l.b16 %v5050
  %v5862 = vunpack.c.h.b16 %v5050
  %v5863 = vunpack.c.l.b16 %v5051
  %v5864 = vunpack.c.l.b16 %v5052
  %v5865 = vunpack.c.h.b16 %v5052
  %v5866 = vunpack.c.l.b16 %v5053
  %v5867 = vunpack.c.h.b16 %v5053
  %v5868 = vunpack.c.l.b16 %v5054
  %v5869 = vunpack.c.h.b16 %v5054
  %v5870 = vunpack.c.l.b16 %v5055
  %v5871 = vunpack.c.h.b16 %v5055
  %v5872 = vunpack.c.l.b16 %v5056
  %v5873 = vunpack.c.l.b16 %v5057
  %v5874 = vunpack.c.h.b16 %v5057
  %v5875 = vunpack.c.l.b16 %v5058
  %v5876 = vunpack.c.h.b16 %v5058
  %v5877 = vunpack.c.l.b16 %v5059
  %v5878 = vunpack.c.h.b16 %v5059
  %v5879 = vunpack.c.l.b16 %v5060
  %v5880 = vunpack.c.h.b16 %v5060
  %v5881 = vunpack.c.l.b16 %v5061
  %v5882 = vunpack.c.l.b16 %v5062
  %v5883 = vunpack.c.h.b16 %v5062
  %v5884 = vunpack.c.l.b16 %v5063
  %v5885 = vunpack.c.h.b16 %v5063
  %v5886 = vunpack.c.l.b16 %v5064
  %v5887 = vunpack.c.h.b16 %v5064
  %v5888 = vunpack.c.l.b16 %v5065
  %v5889 = vunpack.c.h.b16 %v5065
  %v5890 = vunpack.c.l.b16 %v5066
  %v5891 = vunpack.c.l.b16 %v5067
  %v5892 = vunpack.c.h.b16 %v5067
  %v5893 = vunpack.c.l.b16 %v5068
  %v5894 = vunpack.c.h.b16 %v5068
  %v5895 = vunpack.c.l.b16 %v5069
  %v5896 = vunpack.c.h.b16 %v5069
  %v5897 = vunpack.c.l.b16 %v5070
  %v5898 = vunpack.c.h.b16 %v5070
  %v5899 = vunpack.c.l.b16 %v5071
  %v5900 = vunpack.c.l.b16 %v5072
  %v5901 = vunpack.c.h.b16 %v5072
  %v5902 = vunpack.c.l.b16 %v5073
  %v5903 = vunpack.c.h.b16 %v5073
  %v5904 = vunpack.c.l.b16 %v5074
  %v5905 = vunpack.c.h.b16 %v5074
  %v5906 = vunpack.c.l.b16 %v5075
  %v5907 = vunpack.c.h.b16 %v5075
  %v5908 = vunpack.c.l.b16 %v5076
  %v5909 = vunpack.c.l.b16 %v5077
  %v5910 = vunpack.c.h.b16 %v5077
  %v5911 = vunpack.c.l.b16 %v5078
  %v5912 = vunpack.c.h.b16 %v5078
  %v5913 = vunpack.c.l.b16 %v5079
  %v5914 = vunpack.c.h.b16 %v5079
  %v5915 = vunpack.c.l.b16 %v5080
  %v5916 = vunpack.c.h.b16 %v5080
  %v5917 = vunpack.c.l.b16 %v5081
  %v5918 = vunpack.c.l.b16 %v5082
  %v5919 = vunpack.c.h.b16 %v5082
  %v5920 = vunpack.c.l.b16 %v5083
  %v5921 = vunpack.c.h.b16 %v5083
  %v5922 = vunpack.c.l.b16 %v5084
  %v5923 = vunpack.c.h.b16 %v5084
  %v5924 = vunpack.c.l.b16 %v5085
  %v5925 = vunpack.c.h.b16 %v5085
  %v5926 = vunpack.c.l.b16 %v5086
  %v5927 = vunpack.c.l.b16 %v5087
  %v5928 = vunpack.c.h.b16 %v5087
  %v5929 = vunpack.c.l.b16 %v5088
  %v5930 = vunpack.c.h.b16 %v5088
  %v5931 = vunpack.c.l.b16 %v5089
  %v5932 = vunpack.c.h.b16 %v5089
  %v5933 = vunpack.c.l.b16 %v5090
  %v5934 = vunpack.c.h.b16 %v5090
  %v5935 = vunpack.c.l.b16 %v5091
  %v5936 = vunpack.c.l.b16 %v5092
  %v5937 = vunpack.c.h.b16 %v5092
  %v5938 = vunpack.c.l.b16 %v5093
  %v5939 = vunpack.c.h.b16 %v5093
  %v5940 = vunpack.c.l.b16 %v5094
  %v5941 = vunpack.c.h.b16 %v5094
  %v5942 = vunpack.c.l.b16 %v5095
  %v5943 = vunpack.c.h.b16 %v5095
  %v5944 = vunpack.c.l.b16 %v5096
  %v5945 = vunpack.c.l.b16 %v5097
  %v5946 = vunpack.c.h.b16 %v5097
  %v5947 = vunpack.c.l.b16 %v5098
  %v5948 = vunpack.c.h.b16 %v5098
  %v5949 = vunpack.c.l.b16 %v5099
  %v5950 = vunpack.c.h.b16 %v5099
  %v5951 = vunpack.c.l.b16 %v5100
  %v5952 = vunpack.c.h.b16 %v5100
  %v5953 = vunpack.c.l.b16 %v5101
  %v5954 = vunpack.c.l.b16 %v5102
  %v5955 = vunpack.c.h.b16 %v5102
  %v5956 = vunpack.c.l.b16 %v5103
  %v5957 = vunpack.c.h.b16 %v5103
  %v5958 = vunpack.c.l.b16 %v5104
  %v5959 = vunpack.c.h.b16 %v5104
  %v5960 = vunpack.c.l.b16 %v5105
  %v5961 = vunpack.c.h.b16 %v5105
  %v5962 = vunpack.c.l.b16 %v5106
  %v5963 = vunpack.c.l.b16 %v5107
  %v5964 = vunpack.c.h.b16 %v5107
  %v5965 = vunpack.c.l.b16 %v5108
  %v5966 = vunpack.c.h.b16 %v5108
  %v5967 = vunpack.c.l.b16 %v5109
  %v5968 = vunpack.c.h.b16 %v5109
  %v5969 = vunpack.c.l.b16 %v5110
  %v5970 = vunpack.c.h.b16 %v5110
  %v5971 = vunpack.c.l.b16 %v5111
  %v5972 = vunpack.c.l.b16 %v5112
  %v5973 = vunpack.c.h.b16 %v5112
  %v5974 = vunpack.c.l.b16 %v5113
  %v5975 = vunpack.c.h.b16 %v5113
  %v5976 = vunpack.c.l.b16 %v5114
  %v5977 = vunpack.c.h.b16 %v5114
  %v5978 = vunpack.c.l.b16 %v5115
  %v5979 = vunpack.c.h.b16 %v5115
  %v5980 = vunpack.c.l.b16 %v5116
  %v5981 = vunpack.c.l.b16 %v5117
  %v5982 = vunpack.c.h.b16 %v5117
  %v5983 = vunpack.c.l.b16 %v5118
  %v5984 = vunpack.c.h.b16 %v5118
  %v5985 = vunpack.c.l.b16 %v5119
  %v5986 = vunpack.c.h.b16 %v5119
  %v5987 = vunpack.c.l.b16 %v5120
  %v5988 = vunpack.c.h.b16 %v5120
  %v5989 = vunpack.c.l.b16 %v5121
  %v5990 = vunpack.c.l.b16 %v5122
  %v5991 = vunpack.c.h.b16 %v5122
  %v5992 = vunpack.c.l.b16 %v5123
  %v5993 = vunpack.c.h.b16 %v5123
  %v5994 = vunpack.c.l.b16 %v5124
  %v5995 = vunpack.c.h.b16 %v5124
  %v5996 = vunpack.c.l.b16 %v5125
  %v5997 = vunpack.c.h.b16 %v5125
  %v5998 = vunpack.c.l.b16 %v5126
  %v5999 = vunpack.c.l.b16 %v5127
  %v6000 = vunpack.c.h.b16 %v5127
  %v6001 = vunpack.c.l.b16 %v5128
  %v6002 = vunpack.c.h.b16 %v5128
  %v6003 = vunpack.c.l.b16 %v5129
  %v6004 = vunpack.c.h.b16 %v5129
  %v6005 = vunpack.c.l.b16 %v5130
  %v6006 = vunpack.c.h.b16 %v5130
  %v6007 = vunpack.c.l.b16 %v5131
  %v6008 = vunpack.c.l.b16 %v5132
  %v6009 = vunpack.c.h.b16 %v5132
  %v6010 = vunpack.c.l.b16 %v5133
  %v6011 = vunpack.c.h.b16 %v5133
  %v6012 = vunpack.c.l.b16 %v5134
  %v6013 = vunpack.c.h.b16 %v5134
  %v6014 = vunpack.c.l.b16 %v5135
  %v6015 = vunpack.c.h.b16 %v5135
  %v6016 = vunpack.c.l.b16 %v5136
  %v6017 = vunpack.c.l.b16 %v5137
  %v6018 = vunpack.c.h.b16 %v5137
  %v6019 = vunpack.c.l.b16 %v5138
  %v6020 = vunpack.c.h.b16 %v5138
  %v6021 = vunpack.c.l.b16 %v5139
  %v6022 = vunpack.c.h.b16 %v5139
  %v6023 = vunpack.c.l.b16 %v5140
  %v6024 = vunpack.c.h.b16 %v5140
  %v6025 = vunpack.c.l.b16 %v5141
  %v6026 = vunpack.c.l.b16 %v5142
  %v6027 = vunpack.c.h.b16 %v5142
  %v6028 = vunpack.c.l.b16 %v5143
  %v6029 = vunpack.c.h.b16 %v5143
  %v6030 = vunpack.c.l.b16 %v5144
  %v6031 = vunpack.c.h.b16 %v5144
  %v6032 = vunpack.c.l.b16 %v5145
  %v6033 = vunpack.c.h.b16 %v5145
  %v6034 = vunpack.c.l.b16 %v5146
  %v6035 = vunpack.c.l.b16 %v5147
  %v6036 = vunpack.c.h.b16 %v5147
  %v6037 = vunpack.c.l.b16 %v5148
  %v6038 = vunpack.c.h.b16 %v5148
  %v6039 = vunpack.c.l.b16 %v5149
  %v6040 = vunpack.c.h.b16 %v5149
  %v6041 = vunpack.c.l.b16 %v5150
  %v6042 = vunpack.c.h.b16 %v5150
  %v6043 = vunpack.c.l.b16 %v5151
  %v6044 = vunpack.c.l.b16 %v5152
  %v6045 = vunpack.c.h.b16 %v5152
  %v6046 = vunpack.c.l.b16 %v5153
  %v6047 = vunpack.c.h.b16 %v5153
  %v6048 = vunpack.c.l.b16 %v5154
  %v6049 = vunpack.c.h.b16 %v5154
  %v6050 = vunpack.c.l.b16 %v5155
  %v6051 = vunpack.c.h.b16 %v5155
  %v6052 = vunpack.c.l.b16 %v5156
  %v6053 = vunpack.c.l.b16 %v5157
  %v6054 = vunpack.c.h.b16 %v5157
  %v6055 = vunpack.c.l.b16 %v5158
  %v6056 = vunpack.c.h.b16 %v5158
  %v6057 = vunpack.c.l.b16 %v5159
  %v6058 = vunpack.c.h.b16 %v5159
  %v6059 = vunpack.c.l.b16 %v5160
  %v6060 = vunpack.c.h.b16 %v5160
  %v6061 = vunpack.c.l.b16 %v5161
  %v6062 = vunpack.c.l.b16 %v5162
  %v6063 = vunpack.c.h.b16 %v5162
  %v6064 = vunpack.c.l.b16 %v5163
  %v6065 = vunpack.c.h.b16 %v5163
  %v6066 = vunpack.c.l.b16 %v5164
  %v6067 = vunpack.c.h.b16 %v5164
  %v6068 = vunpack.c.l.b16 %v5165
  %v6069 = vunpack.c.h.b16 %v5165
  %v6070 = vunpack.c.l.b16 %v5166
  %v6071 = vunpack.c.l.b16 %v5167
  %v6072 = vunpack.c.h.b16 %v5167
  %v6073 = vunpack.c.l.b16 %v5168
  %v6074 = vunpack.c.h.b16 %v5168
  %v6075 = vunpack.c.l.b16 %v5169
  %v6076 = vunpack.c.h.b16 %v5169
  %v6077 = vunpack.c.l.b16 %v5170
  %v6078 = vunpack.c.h.b16 %v5170
  %v6079 = vunpack.c.l.b16 %v5171
  %v6080 = vunpack.c.l.b16 %v5172
  %v6081 = vunpack.c.h.b16 %v5172
  %v6082 = vunpack.c.l.b16 %v5173
  %v6083 = vunpack.c.h.b16 %v5173
  %v6084 = vunpack.c.l.b16 %v5174
  %v6085 = vunpack.c.h.b16 %v5174
  %v6086 = vunpack.c.l.b16 %v5175
  %v6087 = vunpack.c.h.b16 %v5175
  %v6088 = vunpack.c.l.b16 %v5176
  %v6089 = vunpack.c.l.b16 %v5177
  %v6090 = vunpack.c.h.b16 %v5177
  %v6091 = vunpack.c.l.b16 %v5178
  %v6092 = vunpack.c.h.b16 %v5178
  %v6093 = vunpack.c.l.b16 %v5179
  %v6094 = vunpack.c.h.b16 %v5179
  %v6095 = vunpack.c.l.b16 %v5180
  %v6096 = vunpack.c.h.b16 %v5180
  %v6097 = vunpack.c.l.b16 %v5181
  %v6098 = vunpack.c.l.b16 %v5182
  %v6099 = vunpack.c.h.b16 %v5182
  %v6100 = vunpack.c.l.b16 %v5183
  %v6101 = vunpack.c.h.b16 %v5183
  %v6102 = vunpack.c.l.b16 %v5184
  %v6103 = vunpack.c.h.b16 %v5184
  %v6104 = vunpack.c.l.b16 %v5185
  %v6105 = vunpack.c.h.b16 %v5185
  %v6106 = vunpack.c.l.b16 %v5186
  %v6107 = vunpack.c.l.b16 %v5187
  %v6108 = vunpack.c.h.b16 %v5187
  %v6109 = vunpack.c.l.b16 %v5188
  %v6110 = vunpack.c.h.b16 %v5188
  %v6111 = vunpack.c.l.b16 %v5189
  %v6112 = vunpack.c.h.b16 %v5189
  %v6113 = vunpack.c.l.b16 %v5190
  %v6114 = vunpack.c.h.b16 %v5190
  %v6115 = vunpack.c.l.b16 %v5191
  %v6116 = vunpack.c.l.b16 %v5192
  %v6117 = vunpack.c.h.b16 %v5192
  %v6118 = vunpack.c.l.b16 %v5193
  %v6119 = vunpack.c.h.b16 %v5193
  %v6120 = vunpack.c.l.b16 %v5194
  %v6121 = vunpack.c.h.b16 %v5194
  %v6122 = vunpack.c.l.b16 %v5195
  %v6123 = vunpack.c.h.b16 %v5195
  %v6124 = vunpack.c.l.b16 %v5196
  %v6125 = vunpack.c.l.b16 %v5197
  %v6126 = vunpack.c.h.b16 %v5197
  %v6127 = vunpack.c.l.b16 %v5198
  %v6128 = vunpack.c.h.b16 %v5198
  %v6129 = vunpack.c.l.b16 %v5199
  %v6130 = vunpack.c.h.b16 %v5199
  %v6131 = vunpack.c.l.b16 %v5200
  %v6132 = vunpack.c.h.b16 %v5200
  %v6133 = vunpack.c.l.b16 %v5201
  %v6134 = vunpack.c.l.b16 %v5202
  %v6135 = vunpack.c.h.b16 %v5202
  %v6136 = vunpack.c.l.b16 %v5203
  %v6137 = vunpack.c.h.b16 %v5203
  %v6138 = vunpack.c.l.b16 %v5204
  %v6139 = vunpack.c.h.b16 %v5204
  %v6140 = vunpack.c.l.b16 %v5205
  %v6141 = vunpack.c.h.b16 %v5205
  %v6142 = vunpack.c.l.b16 %v5206
  %v6143 = vunpack.c.l.b16 %v5207
  %v6144 = vunpack.c.h.b16 %v5207
  %v6145 = vunpack.c.l.b16 %v5208
  %v6146 = vunpack.c.h.b16 %v5208
  %v6147 = vunpack.c.l.b16 %v5209
  %v6148 = vunpack.c.h.b16 %v5209
  %v6149 = vunpack.c.l.b16 %v5210
  %v6150 = vunpack.c.h.b16 %v5210
  %v6151 = vunpack.c.l.b16 %v5211
  %v6152 = vunpack.c.l.b16 %v5212
  %v6153 = vunpack.c.h.b16 %v5212
  %v6154 = vunpack.c.l.b16 %v5213
  %v6155 = vunpack.c.h.b16 %v5213
  %v6156 = vunpack.c.l.b16 %v5214
  %v6157 = vunpack.c.h.b16 %v5214
  %v6158 = vunpack.c.l.b16 %v5215
  %v6159 = vunpack.c.h.b16 %v5215
  %v6160 = vunpack.c.l.b16 %v5216
  %v6161 = vunpack.c.l.b16 %v5217
  %v6162 = vunpack.c.h.b16 %v5217
  %v6163 = vunpack.c.l.b16 %v5218
  %v6164 = vunpack.c.h.b16 %v5218
  %v6165 = vunpack.c.l.b16 %v5219
  %v6166 = vunpack.c.h.b16 %v5219
  %v6167 = vunpack.c.l.b16 %v5220
  %v6168 = vunpack.c.h.b16 %v5220
  %v6169 = vunpack.c.l.b16 %v5221
  %v6170 = vunpack.c.l.b16 %v5222
  %v6171 = vunpack.c.h.b16 %v5222
  %v6172 = vunpack.c.l.b16 %v5223
  %v6173 = vunpack.c.h.b16 %v5223
  %v6174 = vunpack.c.l.b16 %v5224
  %v6175 = vunpack.c.h.b16 %v5224
  %v6176 = vunpack.c.l.b16 %v5225
  %v6177 = vunpack.c.h.b16 %v5225
  %v6178 = vunpack.c.l.b16 %v5226
  %v6179 = vunpack.c.l.b16 %v5227
  %v6180 = vunpack.c.h.b16 %v5227
  %v6181 = vunpack.c.l.b16 %v5228
  %v6182 = vunpack.c.h.b16 %v5228
  %v6183 = vunpack.c.l.b16 %v5229
  %v6184 = vunpack.c.h.b16 %v5229
  %v6185 = vunpack.c.l.b16 %v5230
  %v6186 = vunpack.c.h.b16 %v5230
  %v6187 = vunpack.c.l.b16 %v5231
  %v6188 = vunpack.c.l.b16 %v5232
  %v6189 = vunpack.c.h.b16 %v5232
  %v6190 = vunpack.c.l.b16 %v5233
  %v6191 = vunpack.c.h.b16 %v5233
  %v6192 = vunpack.c.l.b16 %v5234
  %v6193 = vunpack.c.h.b16 %v5234
  %v6194 = vunpack.c.l.b16 %v5235
  %v6195 = vunpack.c.h.b16 %v5235
  %v6196 = vunpack.c.l.b16 %v5236
  %v6197 = vunpack.c.l.b16 %v5237
  %v6198 = vunpack.c.h.b16 %v5237
  %v6199 = vunpack.c.l.b16 %v5238
  %v6200 = vunpack.c.h.b16 %v5238
  %v6201 = vunpack.c.l.b16 %v5239
  %v6202 = vunpack.c.h.b16 %v5239
  %v6203 = vunpack.c.l.b16 %v5240
  %v6204 = vunpack.c.h.b16 %v5240
  %v6205 = vunpack.c.l.b16 %v5241
  %v6206 = vunpack.c.l.b16 %v5242
  %v6207 = vunpack.c.h.b16 %v5242
  %v6208 = vunpack.c.l.b16 %v5243
  %v6209 = vunpack.c.h.b16 %v5243
  %v6210 = vunpack.c.l.b16 %v5244
  %v6211 = vunpack.c.h.b16 %v5244
  %v6212 = vunpack.c.l.b16 %v5245
  %v6213 = vunpack.c.h.b16 %v5245
  %v6214 = vunpack.c.l.b16 %v5246
  %v6215 = vunpack.c.l.b16 %v5247
  %v6216 = vunpack.c.h.b16 %v5247
  %v6217 = vunpack.c.l.b16 %v5248
  %v6218 = vunpack.c.h.b16 %v5248
  %v6219 = vunpack.c.l.b16 %v5249
  %v6220 = vunpack.c.h.b16 %v5249
  %v6221 = vunpack.c.l.b16 %v5250
  %v6222 = vunpack.c.h.b16 %v5250
  %v6223 = vunpack.c.l.b16 %v5251
  %v6224 = vunpack.c.l.b16 %v5252
  %v6225 = vunpack.c.h.b16 %v5252
  %v6226 = vunpack.c.l.b16 %v5253
  %v6227 = vunpack.c.h.b16 %v5253
  %v6228 = vunpack.c.l.b16 %v5254
  %v6229 = vunpack.c.h.b16 %v5254
  %v6230 = vunpack.c.l.b16 %v5255
  %v6231 = vunpack.c.h.b16 %v5255
  %v6232 = vunpack.c.l.b16 %v5256
  %v6233 = vunpack.c.l.b16 %v5257
  %v6234 = vunpack.c.h.b16 %v5257
  %v6235 = vunpack.c.l.b16 %v5258
  %v6236 = vunpack.c.h.b16 %v5258
  %v6237 = vunpack.c.l.b16 %v5259
  %v6238 = vunpack.c.h.b16 %v5259
  %v6239 = vunpack.c.l.b16 %v5260
  %v6240 = vunpack.c.h.b16 %v5260
  %v6241 = vunpack.c.l.b16 %v5261
  %v6242 = vunpack.c.l.b16 %v5262
  %v6243 = vunpack.c.h.b16 %v5262
  %v6244 = vunpack.c.l.b16 %v5263
  %v6245 = vunpack.c.h.b16 %v5263
  %v6246 = vunpack.c.l.b16 %v5264
  %v6247 = vunpack.c.h.b16 %v5264
  %v6248 = vunpack.c.l.b16 %v5265
  %v6249 = vunpack.c.h.b16 %v5265
  %v6250 = vunpack.c.l.b16 %v5266
  %v6251 = vunpack.c.l.b16 %v5267
  %v6252 = vunpack.c.h.b16 %v5267
  %v6253 = vunpack.c.l.b16 %v5268
  %v6254 = vunpack.c.h.b16 %v5268
  %v6255 = vunpack.c.l.b16 %v5269
  %v6256 = vunpack.c.h.b16 %v5269
  %v6257 = vunpack.c.l.b16 %v5270
  %v6258 = vunpack.c.h.b16 %v5270
  %v6259 = vunpack.c.l.b16 %v5271
  %v6260 = vunpack.c.l.b16 %v5272
  %v6261 = vunpack.c.h.b16 %v5272
  %v6262 = vunpack.c.l.b16 %v5273
  %v6263 = vunpack.c.h.b16 %v5273
  %v6264 = vunpack.c.l.b16 %v5274
  %v6265 = vunpack.c.h.b16 %v5274
  %v6266 = vunpack.c.l.b16 %v5275
  %v6267 = vunpack.c.h.b16 %v5275
  %v6268 = vunpack.c.l.b16 %v5276
  %v6269 = vunpack.c.l.b16 %v5277
  %v6270 = vunpack.c.h.b16 %v5277
  %v6271 = vunpack.c.l.b16 %v5278
  %v6272 = vunpack.c.h.b16 %v5278
  %v6273 = vunpack.c.l.b16 %v5279
  %v6274 = vunpack.c.h.b16 %v5279
  %v6275 = vunpack.c.l.b16 %v5280
  %v6276 = vunpack.c.h.b16 %v5280
  %v6277 = vunpack.c.l.b16 %v5281
  %v6278 = vunpack.c.l.b16 %v5282
  %v6279 = vunpack.c.h.b16 %v5282
  %v6280 = vunpack.c.l.b16 %v5283
  %v6281 = vunpack.c.h.b16 %v5283
  %v6282 = vunpack.c.l.b16 %v5284
  %v6283 = vunpack.c.h.b16 %v5284
  %v6284 = vunpack.c.l.b16 %v5285
  %v6285 = vunpack.c.h.b16 %v5285
  %v6286 = vunpack.c.l.b16 %v5286
  %v6287 = vunpack.c.l.b16 %v5287
  %v6288 = vunpack.c.h.b16 %v5287
  %v6289 = vunpack.c.l.b16 %v5288
  %v6290 = vunpack.c.h.b16 %v5288
  %v6291 = vunpack.c.l.b16 %v5289
  %v6292 = vunpack.c.h.b16 %v5289
  %v6293 = vunpack.c.l.b16 %v5290
  %v6294 = vunpack.c.h.b16 %v5290
  %v6295 = vunpack.c.l.b16 %v5291
  %v6296 = vunpack.c.l.b16 %v5292
  %v6297 = vunpack.c.h.b16 %v5292
  %v6298 = vunpack.c.l.b16 %v5293
  %v6299 = vunpack.c.h.b16 %v5293
  %v6300 = vunpack.c.l.b16 %v5294
  %v6301 = vunpack.c.h.b16 %v5294
  %v6302 = vunpack.c.l.b16 %v5295
  %v6303 = vunpack.c.h.b16 %v5295
  %v6304 = vunpack.c.l.b16 %v5296
  %v6305 = vunpack.c.l.b16 %v5297
  %v6306 = vunpack.c.h.b16 %v5297
  %v6307 = vunpack.c.l.b16 %v5298
  %v6308 = vunpack.c.h.b16 %v5298
  %v6309 = vunpack.c.l.b16 %v5299
  %v6310 = vunpack.c.h.b16 %v5299
  %v6311 = vunpack.c.l.b16 %v5300
  %v6312 = vunpack.c.h.b16 %v5300
  %v6313 = vunpack.c.l.b16 %v5301
  %v6314 = vunpack.c.l.b16 %v5302
  %v6315 = vunpack.c.h.b16 %v5302
  %v6316 = vunpack.c.l.b16 %v5303
  %v6317 = vunpack.c.h.b16 %v5303
  %v6318 = vunpack.c.l.b16 %v5304
  %v6319 = vunpack.c.h.b16 %v5304
  %v6320 = vunpack.c.l.b16 %v5305
  %v6321 = vunpack.c.h.b16 %v5305
  %v6322 = vunpack.c.l.b16 %v5306
  %v6323 = vunpack.c.l.b16 %v5307
  %v6324 = vunpack.c.h.b16 %v5307
  %v6325 = vunpack.c.l.b16 %v5308
  %v6326 = vunpack.c.h.b16 %v5308
  %v6327 = vunpack.c.l.b16 %v5309
  %v6328 = vunpack.c.h.b16 %v5309
  %v6329 = vunpack.c.l.b16 %v5310
  %v6330 = vunpack.c.h.b16 %v5310
  %v6331 = vunpack.c.l.b16 %v5311
  %v6332 = vunpack.c.l.b16 %v5312
  %v6333 = vunpack.c.h.b16 %v5312
  %v6334 = vunpack.c.l.b16 %v5313
  %v6335 = vunpack.c.h.b16 %v5313
  %v6336 = vunpack.c.l.b16 %v5314
  %v6337 = vunpack.c.h.b16 %v5314
  %v6338 = vunpack.c.l.b16 %v5315
  %v6339 = vunpack.c.h.b16 %v5315
  %v6340 = vunpack.c.l.b16 %v5316
  %v6341 = vunpack.c.l.b16 %v5317
  %v6342 = vunpack.c.h.b16 %v5317
  %v6343 = vunpack.c.l.b16 %v5318
  %v6344 = vunpack.c.h.b16 %v5318
  %v6345 = vunpack.c.l.b16 %v5319
  %v6346 = vunpack.c.h.b16 %v5319
  %v6347 = vunpack.c.l.b16 %v5320
  %v6348 = vunpack.c.h.b16 %v5320
  %v6349 = vunpack.c.l.b16 %v5321
  %v6350 = vunpack.c.l.b16 %v5322
  %v6351 = vunpack.c.h.b16 %v5322
  %v6352 = vunpack.c.l.b16 %v5323
  %v6353 = vunpack.c.h.b16 %v5323
  %v6354 = vunpack.c.l.b16 %v5324
  %v6355 = vunpack.c.h.b16 %v5324
  %v6356 = vunpack.c.l.b16 %v5325
  %v6357 = vunpack.c.h.b16 %v5325
  %v6358 = vunpack.c.l.b16 %v5326
  %v6359 = vunpack.c.l.b16 %v5327
  %v6360 = vunpack.c.h.b16 %v5327
  %v6361 = vunpack.c.l.b16 %v5328
  %v6362 = vunpack.c.h.b16 %v5328
  %v6363 = vunpack.c.l.b16 %v5329
  %v6364 = vunpack.c.h.b16 %v5329
  %v6365 = vunpack.c.l.b16 %v5330
  %v6366 = vunpack.c.h.b16 %v5330
  %v6367 = vunpack.c.l.b16 %v5331
  %v6368 = vunpack.c.l.b16 %v5332
  %v6369 = vunpack.c.h.b16 %v5332
  %v6370 = vunpack.c.l.b16 %v5333
  %v6371 = vunpack.c.h.b16 %v5333
  %v6372 = vunpack.c.l.b16 %v5334
  %v6373 = vunpack.c.h.b16 %v5334
  %v6374 = vunpack.c.l.b16 %v5335
  %v6375 = vunpack.c.h.b16 %v5335
  %v6376 = vunpack.c.l.b16 %v5336
  %v6377 = vpack.c.b16 %v5810, %v5801
  %v6378 = vpack.c.b16 %v5811, %v5802
  %v6379 = vpack.c.b16 %v5812, %v5803
  %v6380 = vpack.c.b16 %v5813, %v5804
  %v6381 = vpack.c.b16 %v5814, %v5805
  %v6382 = vpack.c.b16 %v5815, %v5806
  %v6383 = vpack.c.b16 %v5816, %v5807
  %v6384 = vpack.c.b16 %v5817, %v5808
  %v6385 = vpack.c.b16 %v5818, %v5809
  %v6386 = vpack.c.b16 %v5828, %v5819
  %v6387 = vpack.c.b16 %v5829, %v5820
  %v6388 = vpack.c.b16 %v5830, %v5821
  %v6389 = vpack.c.b16 %v5831, %v5822
  %v6390 = vpack.c.b16 %v5832, %v5823
  %v6391 = vpack.c.b16 %v5833, %v5824
  %v6392 = vpack.c.b16 %v5834, %v5825
  %v6393 = vpack.c.b16 %v5835, %v5826
  %v6394 = vpack.c.b16 %v5836, %v5827
  %v6395 = vpack.c.b16 %v5846, %v5837
  %v6396 = vpack.c.b16 %v5847, %v5838
  %v6397 = vpack.c.b16 %v5848, %v5839
  %v6398 = vpack.c.b16 %v5849, %v5840
  %v6399 = vpack.c.b16 %v5850, %v5841
  %v6400 = vpack.c.b16 %v5851, %v5842
  %v6401 = vpack.c.b16 %v5852, %v5843
  %v6402 = vpack.c.b16 %v5853, %v5844
  %v6403 = vpack.c.b16 %v5854, %v5845
  %v6404 = vpack.c.b16 %v5864, %v5855
  %v6405 = vpack.c.b16 %v5865, %v5856
  %v6406 = vpack.c.b16 %v5866, %v5857
  %v6407 = vpack.c.b16 %v5867, %v5858
  %v6408 = vpack.c.b16 %v5868, %v5859
  %v6409 = vpack.c.b16 %v5869, %v5860
  %v6410 = vpack.c.b16 %v5870, %v5861
  %v6411 = vpack.c.b16 %v5871, %v5862
  %v6412 = vpack.c.b16 %v5872, %v5863
  %v6413 = vpack.c.b16 %v5882, %v5873
  %v6414 = vpack.c.b16 %v5883, %v5874
  %v6415 = vpack.c.b16 %v5884, %v5875
  %v6416 = vpack.c.b16 %v5885, %v5876
  %v6417 = vpack.c.b16 %v5886, %v5877
  %v6418 = vpack.c.b16 %v5887, %v5878
  %v6419 = vpack.c.b16 %v5888, %v5879
  %v6420 = vpack.c.b16 %v5889, %v5880
  %v6421 = vpack.c.b16 %v5890, %v5881
  %v6422 = vpack.c.b16 %v5900, %v5891
  %v6423 = vpack.c.b16 %v5901, %v5892
  %v6424 = vpack.c.b16 %v5902, %v5893
  %v6425 = vpack.c.b16 %v5903, %v5894
  %v6426 = vpack.c.b16 %v5904, %v5895
  %v6427 = vpack.c.b16 %v5905, %v5896
  %v6428 = vpack.c.b16 %v5906, %v5897
  %v6429 = vpack.c.b16 %v5907, %v5898
  %v6430 = vpack.c.b16 %v5908, %v5899
  %v6431 = vpack.c.b16 %v5918, %v5909
  %v6432 = vpack.c.b16 %v5919, %v5910
  %v6433 = vpack.c.b16 %v5920, %v5911
  %v6434 = vpack.c.b16 %v5921, %v5912
  %v6435 = vpack.c.b16 %v5922, %v5913
  %v6436 = vpack.c.b16 %v5923, %v5914
  %v6437 = vpack.c.b16 %v5924, %v5915
  %v6438 = vpack.c.b16 %v5925, %v5916
  %v6439 = vpack.c.b16 %v5926, %v5917
  %v6440 = vpack.c.b16 %v5936, %v5927
  %v6441 = vpack.c.b16 %v5937, %v5928
  %v6442 = vpack.c.b16 %v5938, %v5929
  %v6443 = vpack.c.b16 %v5939, %v5930
  %v6444 = vpack.c.b16 %v5940, %v5931
  %v6445 = vpack.c.b16 %v5941, %v5932
  %v6446 = vpack.c.b16 %v5942, %v5933
  %v6447 = vpack.c.b16 %v5943, %v5934
  %v6448 = vpack.c.b16 %v5944, %v5935
  %v6449 = vpack.c.b16 %v5954, %v5945
  %v6450 = vpack.c.b16 %v5955, %v5946
  %v6451 = vpack.c.b16 %v5956, %v5947
  %v6452 = vpack.c.b16 %v5957, %v5948
  %v6453 = vpack.c.b16 %v5958, %v5949
  %v6454 = vpack.c.b16 %v5959, %v5950
  %v6455 = vpack.c.b16 %v5960, %v5951
  %v6456 = vpack.c.b16 %v5961, %v5952
  %v6457 = vpack.c.b16 %v5962, %v5953
  %v6458 = vpack.c.b16 %v5972, %v5963
  %v6459 = vpack.c.b16 %v5973, %v5964
  %v6460 = vpack.c.b16 %v5974, %v5965
  %v6461 = vpack.c.b16 %v5975, %v5966
  %v6462 = vpack.c.b16 %v5976, %v5967
  %v6463 = vpack.c.b16 %v5977, %v5968
  %v6464 = vpack.c.b16 %v5978, %v5969
  %v6465 = vpack.c.b16 %v5979, %v5970
  %v6466 = vpack.c.b16 %v5980, %v5971
  %v6467 = vpack.c.b16 %v5990, %v5981
  %v6468 = vpack.c.b16 %v5991, %v5982
  %v6469 = vpack.c.b16 %v5992, %v5983
  %v6470 = vpack.c.b16 %v5993, %v5984
  %v6471 = vpack.c.b16 %v5994, %v5985
  %v6472 = vpack.c.b16 %v5995, %v5986
  %v6473 = vpack.c.b16 %v5996, %v5987
  %v6474 = vpack.c.b16 %v5997, %v5988
  %v6475 = vpack.c.b16 %v5998, %v5989
  %v6476 = vpack.c.b16 %v6008, %v5999
  %v6477 = vpack.c.b16 %v6009, %v6000
  %v6478 = vpack.c.b16 %v6010, %v6001
  %v6479 = vpack.c.b16 %v6011, %v6002
  %v6480 = vpack.c.b16 %v6012, %v6003
  %v6481 = vpack.c.b16 %v6013, %v6004
  %v6482 = vpack.c.b16 %v6014, %v6005
  %v6483 = vpack.c.b16 %v6015, %v6006
  %v6484 = vpack.c.b16 %v6016, %v6007
  %v6485 = vpack.c.b16 %v6026, %v6017
  %v6486 = vpack.c.b16 %v6027, %v6018
  %v6487 = vpack.c.b16 %v6028, %v6019
  %v6488 = vpack.c.b16 %v6029, %v6020
  %v6489 = vpack.c.b16 %v6030, %v6021
  %v6490 = vpack.c.b16 %v6031, %v6022
  %v6491 = vpack.c.b16 %v6032, %v6023
  %v6492 = vpack.c.b16 %v6033, %v6024
  %v6493 = vpack.c.b16 %v6034, %v6025
  %v6494 = vpack.c.b16 %v6044, %v6035
  %v6495 = vpack.c.b16 %v6045, %v6036
  %v6496 = vpack.c.b16 %v6046, %v6037
  %v6497 = vpack.c.b16 %v6047, %v6038
  %v6498 = vpack.c.b16 %v6048, %v6039
  %v6499 = vpack.c.b16 %v6049, %v6040
  %v6500 = vpack.c.b16 %v6050, %v6041
  %v6501 = vpack.c.b16 %v6051, %v6042
  %v6502 = vpack.c.b16 %v6052, %v6043
  %v6503 = vpack.c.b16 %v6062, %v6053
  %v6504 = vpack.c.b16 %v6063, %v6054
  %v6505 = vpack.c.b16 %v6064, %v6055
  %v6506 = vpack.c.b16 %v6065, %v6056
  %v6507 = vpack.c.b16 %v6066, %v6057
  %v6508 = vpack.c.b16 %v6067, %v6058
  %v6509 = vpack.c.b16 %v6068, %v6059
  %v6510 = vpack.c.b16 %v6069, %v6060
  %v6511 = vpack.c.b16 %v6070, %v6061
  %v6512 = vpack.c.b16 %v6080, %v6071
  %v6513 = vpack.c.b16 %v6081, %v6072
  %v6514 = vpack.c.b16 %v6082, %v6073
  %v6515 = vpack.c.b16 %v6083, %v6074
  %v6516 = vpack.c.b16 %v6084, %v6075
  %v6517 = vpack.c.b16 %v6085, %v6076
  %v6518 = vpack.c.b16 %v6086, %v6077
  %v6519 = vpack.c.b16 %v6087, %v6078
  %v6520 = vpack.c.b16 %v6088, %v6079
  %v6521 = vpack.c.b16 %v6098, %v6089
  %v6522 = vpack.c.b16 %v6099, %v6090
  %v6523 = vpack.c.b16 %v6100, %v6091
  %v6524 = vpack.c.b16 %v6101, %v6092
  %v6525 = vpack.c.b16 %v6102, %v6093
  %v6526 = vpack.c.b16 %v6103, %v6094
  %v6527 = vpack.c.b16 %v6104, %v6095
  %v6528 = vpack.c.b16 %v6105, %v6096
  %v6529 = vpack.c.b16 %v6106, %v6097
  %v6530 = vpack.c.b16 %v6116, %v6107
  %v6531 = vpack.c.b16 %v6117, %v6108
  %v6532 = vpack.c.b16 %v6118, %v6109
  %v6533 = vpack.c.b16 %v6119, %v6110
  %v6534 = vpack.c.b16 %v6120, %v6111
  %v6535 = vpack.c.b16 %v6121, %v6112
  %v6536 = vpack.c.b16 %v6122, %v6113
  %v6537 = vpack.c.b16 %v6123, %v6114
  %v6538 = vpack.c.b16 %v6124, %v6115
  %v6539 = vpack.c.b16 %v6134, %v6125
  %v6540 = vpack.c.b16 %v6135, %v6126
  %v6541 = vpack.c.b16 %v6136, %v6127
  %v6542 = vpack.c.b16 %v6137, %v6128
  %v6543 = vpack.c.b16 %v6138, %v6129
  %v6544 = vpack.c.b16 %v6139, %v6130
  %v6545 = vpack.c.b16 %v6140, %v6131
  %v6546 = vpack.c.b16 %v6141, %v6132
  %v6547 = vpack.c.b16 %v6142, %v6133
  %v6548 = vpack.c.b16 %v6152, %v6143
  %v6549 = vpack.c.b16 %v6153, %v6144
  %v6550 = vpack.c.b16 %v6154, %v6145
  %v6551 = vpack.c.b16 %v6155, %v6146
  %v6552 = vpack.c.b16 %v6156, %v6147
  %v6553 = vpack.c.b16 %v6157, %v6148
  %v6554 = vpack.c.b16 %v6158, %v6149
  %v6555 = vpack.c.b16 %v6159, %v6150
  %v6556 = vpack.c.b16 %v6160, %v6151
  %v6557 = vpack.c.b16 %v6170, %v6161
  %v6558 = vpack.c.b16 %v6171, %v6162
  %v6559 = vpack.c.b16 %v6172, %v6163
  %v6560 = vpack.c.b16 %v6173, %v6164
  %v6561 = vpack.c.b16 %v6174, %v6165
  %v6562 = vpack.c.b16 %v6175, %v6166
  %v6563 = vpack.c.b16 %v6176, %v6167
  %v6564 = vpack.c.b16 %v6177, %v6168
  %v6565 = vpack.c.b16 %v6178, %v6169
  %v6566 = vpack.c.b16 %v6188, %v6179
  %v6567 = vpack.c.b16 %v6189, %v6180
  %v6568 = vpack.c.b16 %v6190, %v6181
  %v6569 = vpack.c.b16 %v6191, %v6182
  %v6570 = vpack.c.b16 %v6192, %v6183
  %v6571 = vpack.c.b16 %v6193, %v6184
  %v6572 = vpack.c.b16 %v6194, %v6185
  %v6573 = vpack.c.b16 %v6195, %v6186
  %v6574 = vpack.c.b16 %v6196, %v6187
  %v6575 = vpack.c.b16 %v6206, %v6197
  %v6576 = vpack.c.b16 %v6207, %v6198
  %v6577 = vpack.c.b16 %v6208, %v6199
  %v6578 = vpack.c.b16 %v6209, %v6200
  %v6579 = vpack.c.b16 %v6210, %v6201
  %v6580 = vpack.c.b16 %v6211, %v6202
  %v6581 = vpack.c.b16 %v6212, %v6203
  %v6582 = vpack.c.b16 %v6213, %v6204
  %v6583 = vpack.c.b16 %v6214, %v6205
  %v6584 = vpack.c.b16 %v6224, %v6215
  %v6585 = vpack.c.b16 %v6225, %v6216
  %v6586 = vpack.c.b16 %v6226, %v6217
  %v6587 = vpack.c.b16 %v6227, %v6218
  %v6588 = vpack.c.b16 %v6228, %v6219
  %v6589 = vpack.c.b16 %v6229, %v6220
  %v6590 = vpack.c.b16 %v6230, %v6221
  %v6591 = vpack.c.b16 %v6231, %v6222
  %v6592 = vpack.c.b16 %v6232, %v6223
  %v6593 = vpack.c.b16 %v6242, %v6233
  %v6594 = vpack.c.b16 %v6243, %v6234
  %v6595 = vpack.c.b16 %v6244, %v6235
  %v6596 = vpack.c.b16 %v6245, %v6236
  %v6597 = vpack.c.b16 %v6246, %v6237
  %v6598 = vpack.c.b16 %v6247, %v6238
  %v6599 = vpack.c.b16 %v6248, %v6239
  %v6600 = vpack.c.b16 %v6249, %v6240
  %v6601 = vpack.c.b16 %v6250, %v6241
  %v6602 = vpack.c.b16 %v6260, %v6251
  %v6603 = vpack.c.b16 %v6261, %v6252
  %v6604 = vpack.c.b16 %v6262, %v6253
  %v6605 = vpack.c.b16 %v6263, %v6254
  %v6606 = vpack.c.b16 %v6264, %v6255
  %v6607 = vpack.c.b16 %v6265, %v6256
  %v6608 = vpack.c.b16 %v6266, %v6257
  %v6609 = vpack.c.b16 %v6267, %v6258
  %v6610 = vpack.c.b16 %v6268, %v6259
  %v6611 = vpack.c.b16 %v6278, %v6269
  %v6612 = vpack.c.b16 %v6279, %v6270
  %v6613 = vpack.c.b16 %v6280, %v6271
  %v6614 = vpack.c.b16 %v6281, %v6272
  %v6615 = vpack.c.b16 %v6282, %v6273
  %v6616 = vpack.c.b16 %v6283, %v6274
  %v6617 = vpack.c.b16 %v6284, %v6275
  %v6618 = vpack.c.b16 %v6285, %v6276
  %v6619 = vpack.c.b16 %v6286, %v6277
  %v6620 = vpack.c.b16 %v6296, %v6287
  %v6621 = vpack.c.b16 %v6297, %v6288
  %v6622 = vpack.c.b16 %v6298, %v6289
  %v6623 = vpack.c.b16 %v6299, %v6290
  %v6624 = vpack.c.b16 %v6300, %v6291
  %v6625 = vpack.c.b16 %v6301, %v6292
  %v6626 = vpack.c.b16 %v6302, %v6293
  %v6627 = vpack.c.b16 %v6303, %v6294
  %v6628 = vpack.c.b16 %v6304, %v6295
  %v6629 = vpack.c.b16 %v6314, %v6305
  %v6630 = vpack.c.b16 %v6315, %v6306
  %v6631 = vpack.c.b16 %v6316, %v6307
  %v6632 = vpack.c.b16 %v6317, %v6308
  %v6633 = vpack.c.b16 %v6318, %v6309
  %v6634 = vpack.c.b16 %v6319, %v6310
  %v6635 = vpack.c.b16 %v6320, %v6311
  %v6636 = vpack.c.b16 %v6321, %v6312
  %v6637 = vpack.c.b16 %v6322, %v6313
  %v6638 = vpack.c.b16 %v6332, %v6323
  %v6639 = vpack.c.b16 %v6333, %v6324
  %v6640 = vpack.c.b16 %v6334, %v6325
  %v6641 = vpack.c.b16 %v6335, %v6326
  %v6642 = vpack.c.b16 %v6336, %v6327
  %v6643 = vpack.c.b16 %v6337, %v6328
  %v6644 = vpack.c.b16 %v6338, %v6329
  %v6645 = vpack.c.b16 %v6339, %v6330
  %v6646 = vpack.c.b16 %v6340, %v6331
  %v6647 = vpack.c.b16 %v6350, %v6341
  %v6648 = vpack.c.b16 %v6351, %v6342
  %v6649 = vpack.c.b16 %v6352, %v6343
  %v6650 = vpack.c.b16 %v6353, %v6344
  %v6651 = vpack.c.b16 %v6354, %v6345
  %v6652 = vpack.c.b16 %v6355, %v6346
  %v6653 = vpack.c.b16 %v6356, %v6347
  %v6654 = vpack.c.b16 %v6357, %v6348
  %v6655 = vpack.c.b16 %v6358, %v6349
  %v6656 = vpack.c.b16 %v6368, %v6359
  %v6657 = vpack.c.b16 %v6369, %v6360
  %v6658 = vpack.c.b16 %v6370, %v6361
  %v6659 = vpack.c.b16 %v6371, %v6362
  %v6660 = vpack.c.b16 %v6372, %v6363
  %v6661 = vpack.c.b16 %v6373, %v6364
  %v6662 = vpack.c.b16 %v6374, %v6365
  %v6663 = vpack.c.b16 %v6375, %v6366
  %v6664 = vpack.c.b16 %v6376, %v6367
  %v7097 = vunpack.c.l.b16 %v5337
  %v7098 = vunpack.c.l.b16 %v5338
  %v7099 = vunpack.c.l.b16 %v5339
  %v7100 = vunpack.c.l.b16 %v5340
  %v7101 = vunpack.c.l.b16 %v5341
  %v7102 = vunpack.c.l.b16 %v5342
  %v7103 = vunpack.c.l.b16 %v5343
  %v7104 = vunpack.c.l.b16 %v5344
  %v7105 = vunpack.c.l.b16 %v5345
  %v7106 = vunpack.c.l.b16 %v5346
  %v7107 = vunpack.c.l.b16 %v5347
  %v7108 = vunpack.c.l.b16 %v5348
  %v7109 = vunpack.c.l.b16 %v5349
  %v7110 = vunpack.c.l.b16 %v5350
  %v7111 = vunpack.c.l.b16 %v5351
  %v7112 = vunpack.c.l.b16 %v5352
  %v7113 = vunpack.c.l.b16 %v5353
  %v7114 = vunpack.c.l.b16 %v5354
  %v7115 = vunpack.c.l.b16 %v5355
  %v7116 = vunpack.c.l.b16 %v5356
  %v7117 = vunpack.c.l.b16 %v5357
  %v7118 = vunpack.c.l.b16 %v5358
  %v7119 = vunpack.c.l.b16 %v5359
  %v7120 = vunpack.c.l.b16 %v5360
  %v7121 = vunpack.c.l.b16 %v5361
  %v7122 = vunpack.c.l.b16 %v5362
  %v7123 = vunpack.c.l.b16 %v5363
  %v7124 = vunpack.c.l.b16 %v5364
  %v7125 = vunpack.c.l.b16 %v5365
  %v7126 = vunpack.c.l.b16 %v5366
  %v7127 = vunpack.c.l.b16 %v5367
  %v7128 = vunpack.c.l.b16 %v5368
  %v7129 = vunpack.c.l.b16 %v5369
  %v7130 = vunpack.c.l.b16 %v5370
  %v7131 = vunpack.c.l.b16 %v5371
  %v7132 = vunpack.c.l.b16 %v5372
  %v7133 = vunpack.c.l.b16 %v5373
  %v7134 = vunpack.c.l.b16 %v5374
  %v7135 = vunpack.c.l.b16 %v5375
  %v7136 = vunpack.c.l.b16 %v5376
  %v7137 = vunpack.c.l.b16 %v5377
  %v7138 = vunpack.c.l.b16 %v5378
  %v7139 = vunpack.c.l.b16 %v5379
  %v7140 = vunpack.c.l.b16 %v5380
  %v7141 = vunpack.c.l.b16 %v5381
  %v7142 = vunpack.c.l.b16 %v5382
  %v7143 = vunpack.c.l.b16 %v5383
  %v7144 = vunpack.c.l.b16 %v5384
  %v7145 = vunpack.c.l.b16 %v5385
  %v7146 = vunpack.c.l.b16 %v5386
  %v7147 = vunpack.c.l.b16 %v5387
  %v7148 = vunpack.c.l.b16 %v5388
  %v7149 = vunpack.c.l.b16 %v5389
  %v7150 = vunpack.c.l.b16 %v5390
  %v7151 = vunpack.c.l.b16 %v5391
  %v7152 = vunpack.c.l.b16 %v5392
  %v7153 = vunpack.c.l.b16 %v5393
  %v7154 = vunpack.c.l.b16 %v5394
  %v7155 = vunpack.c.l.b16 %v5395
  %v7156 = vunpack.c.l.b16 %v5396
  %v7157 = vunpack.c.l.b16 %v5397
  %v7158 = vunpack.c.l.b16 %v5398
  %v7159 = vunpack.c.l.b16 %v5399
  %v7160 = vunpack.c.l.b16 %v5400
  %v7161 = vunpack.c.l.b16 %v5401
  %v7162 = vunpack.c.l.b16 %v5402
  %v7163 = vunpack.c.l.b16 %v5403
  %v7164 = vunpack.c.l.b16 %v5404
  %v7165 = vunpack.c.l.b16 %v5405
  %v7166 = vunpack.c.l.b16 %v5406
  %v7167 = vunpack.c.l.b16 %v5407
  %v7168 = vunpack.c.l.b16 %v5408
  %v7169 = vunpack.c.l.b16 %v5409
  %v7170 = vunpack.c.l.b16 %v5410
  %v7171 = vunpack.c.l.b16 %v5411
  %v7172 = vunpack.c.l.b16 %v5412
  %v7173 = vunpack.c.l.b16 %v5413
  %v7174 = vunpack.c.l.b16 %v5414
  %v7175 = vunpack.c.l.b16 %v5415
  %v7176 = vunpack.c.l.b16 %v5416
  %v7177 = vunpack.c.l.b16 %v5417
  %v7178 = vunpack.c.l.b16 %v5418
  %v7179 = vunpack.c.l.b16 %v5419
  %v7180 = vunpack.c.l.b16 %v5420
  %v7181 = vunpack.c.l.b16 %v5421
  %v7182 = vunpack.c.l.b16 %v5422
  %v7183 = vunpack.c.l.b16 %v5423
  %v7184 = vunpack.c.l.b16 %v5424
  %v7185 = vunpack.c.l.b16 %v5425
  %v7186 = vunpack.c.l.b16 %v5426
  %v7187 = vunpack.c.l.b16 %v5427
  %v7188 = vunpack.c.l.b16 %v5428
  %v7189 = vunpack.c.l.b16 %v5429
  %v7190 = vunpack.c.l.b16 %v5430
  %v7191 = vunpack.c.l.b16 %v5431
  %v7192 = vunpack.c.l.b16 %v5432
  %v7193 = vunpack.c.l.b16 %v5433
  %v7194 = vunpack.c.l.b16 %v5434
  %v7195 = vunpack.c.l.b16 %v5435
  %v7196 = vunpack.c.l.b16 %v5436
  %v7197 = vunpack.c.l.b16 %v5437
  %v7198 = vunpack.c.l.b16 %v5438
  %v7199 = vunpack.c.l.b16 %v5439
  %v7200 = vunpack.c.l.b16 %v5440
  %v7201 = vunpack.c.l.b16 %v5441
  %v7202 = vunpack.c.l.b16 %v5442
  %v7203 = vunpack.c.l.b16 %v5443
  %v7204 = vunpack.c.l.b16 %v5444
  %v7205 = vunpack.c.l.b16 %v5445
  %v7206 = vunpack.c.l.b16 %v5446
  %v7207 = vunpack.c.l.b16 %v5447
  %v7208 = vunpack.c.l.b16 %v5448
  %v7209 = vunpack.c.l.b16 %v5449
  %v7210 = vunpack.c.l.b16 %v5450
  %v7211 = vunpack.c.l.b16 %v5451
  %v7212 = vunpack.c.l.b16 %v5452
  %v7213 = vunpack.c.l.b16 %v5453
  %v7214 = vunpack.c.l.b16 %v5454
  %v7215 = vunpack.c.l.b16 %v5455
  %v7216 = vunpack.c.l.b16 %v5456
  %v7217 = vunpack.c.l.b16 %v5457
  %v7218 = vunpack.c.l.b16 %v5458
  %v7219 = vunpack.c.l.b16 %v5459
  %v7220 = vunpack.c.l.b16 %v5460
  %v7221 = vunpack.c.l.b16 %v5461
  %v7222 = vunpack.c.l.b16 %v5462
  %v7223 = vunpack.c.l.b16 %v5463
  %v7224 = vunpack.c.l.b16 %v5464
  %v7225 = vunpack.c.l.b16 %v5465
  %v7226 = vunpack.c.l.b16 %v5466
  %v7227 = vunpack.c.l.b16 %v5467
  %v7228 = vunpack.c.l.b16 %v5468
  %v7229 = vunpack.c.l.b16 %v5469
  %v7230 = vunpack.c.l.b16 %v5470
  %v7231 = vunpack.c.l.b16 %v5471
  %v7232 = vunpack.c.l.b16 %v5472
  %v7233 = vunpack.c.l.b16 %v5473
  %v7234 = vunpack.c.l.b16 %v5474
  %v7235 = vunpack.c.l.b16 %v5475
  %v7236 = vunpack.c.l.b16 %v5476
  %v7237 = vunpack.c.l.b16 %v5477
  %v7238 = vunpack.c.l.b16 %v5478
  %v7239 = vunpack.c.l.b16 %v5479
  %v7240 = vunpack.c.l.b16 %v5480
  %v7241 = vpack.c.b16 %v7098, %v7097
  %v7242 = vpack.c.b16 %v7100, %v7099
  %v7243 = vpack.c.b16 %v7102, %v7101
  %v7244 = vpack.c.b16 %v7104, %v7103
  %v7245 = vpack.c.b16 %v7106, %v7105
  %v7246 = vpack.c.b16 %v7108, %v7107
  %v7247 = vpack.c.b16 %v7110, %v7109
  %v7248 = vpack.c.b16 %v7112, %v7111
  %v7249 = vpack.c.b16 %v7114, %v7113
  %v7250 = vpack.c.b16 %v7116, %v7115
  %v7251 = vpack.c.b16 %v7118, %v7117
  %v7252 = vpack.c.b16 %v7120, %v7119
  %v7253 = vpack.c.b16 %v7122, %v7121
  %v7254 = vpack.c.b16 %v7124, %v7123
  %v7255 = vpack.c.b16 %v7126, %v7125
  %v7256 = vpack.c.b16 %v7128, %v7127
  %v7257 = vpack.c.b16 %v7130, %v7129
  %v7258 = vpack.c.b16 %v7132, %v7131
  %v7259 = vpack.c.b16 %v7134, %v7133
  %v7260 = vpack.c.b16 %v7136, %v7135
  %v7261 = vpack.c.b16 %v7138, %v7137
  %v7262 = vpack.c.b16 %v7140, %v7139
  %v7263 = vpack.c.b16 %v7142, %v7141
  %v7264 = vpack.c.b16 %v7144, %v7143
  %v7265 = vpack.c.b16 %v7146, %v7145
  %v7266 = vpack.c.b16 %v7148, %v7147
  %v7267 = vpack.c.b16 %v7150, %v7149
  %v7268 = vpack.c.b16 %v7152, %v7151
  %v7269 = vpack.c.b16 %v7154, %v7153
  %v7270 = vpack.c.b16 %v7156, %v7155
  %v7271 = vpack.c.b16 %v7158, %v7157
  %v7272 = vpack.c.b16 %v7160, %v7159
  %v7273 = vpack.c.b16 %v7162, %v7161
  %v7274 = vpack.c.b16 %v7164, %v7163
  %v7275 = vpack.c.b16 %v7166, %v7165
  %v7276 = vpack.c.b16 %v7168, %v7167
  %v7277 = vpack.c.b16 %v7170, %v7169
  %v7278 = vpack.c.b16 %v7172, %v7171
  %v7279 = vpack.c.b16 %v7174, %v7173
  %v7280 = vpack.c.b16 %v7176, %v7175
  %v7281 = vpack.c.b16 %v7178, %v7177
  %v7282 = vpack.c.b16 %v7180, %v7179
  %v7283 = vpack.c.b16 %v7182, %v7181
  %v7284 = vpack.c.b16 %v7184, %v7183
  %v7285 = vpack.c.b16 %v7186, %v7185
  %v7286 = vpack.c.b16 %v7188, %v7187
  %v7287 = vpack.c.b16 %v7190, %v7189
  %v7288 = vpack.c.b16 %v7192, %v7191
  %v7289 = vpack.c.b16 %v7194, %v7193
  %v7290 = vpack.c.b16 %v7196, %v7195
  %v7291 = vpack.c.b16 %v7198, %v7197
  %v7292 = vpack.c.b16 %v7200, %v7199
  %v7293 = vpack.c.b16 %v7202, %v7201
  %v7294 = vpack.c.b16 %v7204, %v7203
  %v7295 = vpack.c.b16 %v7206, %v7205
  %v7296 = vpack.c.b16 %v7208, %v7207
  %v7297 = vpack.c.b16 %v7210, %v7209
  %v7298 = vpack.c.b16 %v7212, %v7211
  %v7299 = vpack.c.b16 %v7214, %v7213
  %v7300 = vpack.c.b16 %v7216, %v7215
  %v7301 = vpack.c.b16 %v7218, %v7217
  %v7302 = vpack.c.b16 %v7220, %v7219
  %v7303 = vpack.c.b16 %v7222, %v7221
  %v7304 = vpack.c.b16 %v7224, %v7223
  %v7305 = vpack.c.b16 %v7226, %v7225
  %v7306 = vpack.c.b16 %v7228, %v7227
  %v7307 = vpack.c.b16 %v7230, %v7229
  %v7308 = vpack.c.b16 %v7232, %v7231
  %v7309 = vpack.c.b16 %v7234, %v7233
  %v7310 = vpack.c.b16 %v7236, %v7235
  %v7311 = vpack.c.b16 %v7238, %v7237
  %v7312 = vpack.c.b16 %v7240, %v7239
  %7385 = vmatprep.subr.bf16.mxu0 0
  %7386 = vmatpush1.bf16.msra.mxu0 %v7248
  %7387 = vmatprep.subr.bf16.mxu0 0
  %7388 = vmatpush1.bf16.msra.mxu0 %v7247
  %7389 = vmatprep.subr.bf16.mxu0 0
  %7390 = vmatpush1.bf16.msra.mxu0 %v7246
  %7391 = vmatprep.subr.bf16.mxu0 0
  %7392 = vmatpush1.bf16.msra.mxu0 %v7245
  %7393 = vmatprep.subr.bf16.mxu0 0
  %7394 = vmatpush1.bf16.msra.mxu0 %v7244
  %7395 = vmatprep.subr.bf16.mxu0 0
  %7396 = vmatpush1.bf16.msra.mxu0 %v7243
  %7397 = vmatprep.subr.bf16.mxu0 0
  %7398 = vmatpush1.bf16.msra.mxu0 %v7242
  %7399 = vmatprep.subr.bf16.mxu0 0
  %7400 = vmatpush1.bf16.msra.mxu0 %v7241
  %7401 = vmatprep.subr.bf16.mxu0 0
  %7402 = vmatpush2.bf16.msra.mxu0 %v7256
  %7403 = vmatprep.subr.bf16.mxu0 0
  %7404 = vmatpush2.bf16.msra.mxu0 %v7255
  %7405 = vmatprep.subr.bf16.mxu0 0
  %7406 = vmatpush2.bf16.msra.mxu0 %v7254
  %7407 = vmatprep.subr.bf16.mxu0 0
  %7408 = vmatpush2.bf16.msra.mxu0 %v7253
  %7409 = vmatprep.subr.bf16.mxu0 0
  %7410 = vmatpush2.bf16.msra.mxu0 %v7252
  %7411 = vmatprep.subr.bf16.mxu0 0
  %7412 = vmatpush2.bf16.msra.mxu0 %v7251
  %7413 = vmatprep.subr.bf16.mxu0 0
  %7414 = vmatpush2.bf16.msra.mxu0 %v7250
  %7415 = vmatprep.subr.bf16.mxu0 0
  %7416 = vmatpush2.bf16.msra.mxu0 %v7249
  %7417 = vmatprep.mubr.bf16.mxu0 %v6378
  %7418 = vmatmul.mubr.bf16.gmra.mxu0 %v6377
  %v7419 = vpop.f32.mrf.mxu0
  %v7420 = vadd.f32 0.0, %v7419
  %v7421 = vpop.f32.mrf.mxu0
  %v7422 = vpop.f32.mrf.mxu0
  %v7423 = vadd.f32 0.0, %v7422
  %v7424 = vpop.f32.mrf.mxu0
  %7425 = vmatprep.mubr.bf16.mxu0 %v6387
  %7426 = vmatmul.mubr.bf16.gmra.mxu0 %v6386
  %v7427 = vpop.f32.mrf.mxu0
  %v7428 = vadd.f32 0.0, %v7427
  %v7429 = vpop.f32.mrf.mxu0
  %v7430 = vpop.f32.mrf.mxu0
  %v7431 = vadd.f32 0.0, %v7430
  %v7432 = vpop.f32.mrf.mxu0
  %7433 = vmatprep.mubr.bf16.mxu0 %v6396
  %7434 = vmatmul.mubr.bf16.gmra.mxu0 %v6395
  %v7435 = vpop.f32.mrf.mxu0
  %v7436 = vadd.f32 0.0, %v7435
  %v7437 = vpop.f32.mrf.mxu0
  %v7438 = vpop.f32.mrf.mxu0
  %v7439 = vadd.f32 0.0, %v7438
  %v7440 = vpop.f32.mrf.mxu0
  %7441 = vmatprep.mubr.bf16.mxu0 %v6405
  %7442 = vmatmul.mubr.bf16.gmra.mxu0 %v6404
  %v7443 = vpop.f32.mrf.mxu0
  %v7444 = vadd.f32 0.0, %v7443
  %v7445 = vpop.f32.mrf.mxu0
  %v7446 = vpop.f32.mrf.mxu0
  %v7447 = vadd.f32 0.0, %v7446
  %v7448 = vpop.f32.mrf.mxu0
  %7449 = vmatprep.mubr.bf16.mxu0 %v6414
  %7450 = vmatmul.mubr.bf16.gmra.mxu0 %v6413
  %v7451 = vpop.f32.mrf.mxu0
  %v7452 = vadd.f32 0.0, %v7451
  %v7453 = vpop.f32.mrf.mxu0
  %v7454 = vpop.f32.mrf.mxu0
  %v7455 = vadd.f32 0.0, %v7454
  %v7456 = vpop.f32.mrf.mxu0
  %7457 = vmatprep.mubr.bf16.mxu0 %v6423
  %7458 = vmatmul.mubr.bf16.gmra.mxu0 %v6422
  %v7459 = vpop.f32.mrf.mxu0
  %v7460 = vadd.f32 0.0, %v7459
  %v7461 = vpop.f32.mrf.mxu0
  %v7462 = vpop.f32.mrf.mxu0
  %v7463 = vadd.f32 0.0, %v7462
  %v7464 = vpop.f32.mrf.mxu0
  %7465 = vmatprep.mubr.bf16.mxu0 %v6432
  %7466 = vmatmul.mubr.bf16.gmra.mxu0 %v6431
  %v7467 = vpop.f32.mrf.mxu0
  %v7468 = vadd.f32 0.0, %v7467
  %v7469 = vpop.f32.mrf.mxu0
  %v7470 = vpop.f32.mrf.mxu0
  %v7471 = vadd.f32 0.0, %v7470
  %v7472 = vpop.f32.mrf.mxu0
  %7473 = vmatprep.mubr.bf16.mxu0 %v6441
  %7474 = vmatmul.mubr.bf16.gmra.mxu0 %v6440
  %v7475 = vpop.f32.mrf.mxu0
  %v7476 = vadd.f32 0.0, %v7475
  %v7477 = vpop.f32.mrf.mxu0
  %v7478 = vpop.f32.mrf.mxu0
  %v7479 = vadd.f32 0.0, %v7478
  %v7480 = vpop.f32.mrf.mxu0
  %7481 = vmatprep.mubr.bf16.mxu0 %v6450
  %7482 = vmatmul.mubr.bf16.gmra.mxu0 %v6449
  %v7483 = vpop.f32.mrf.mxu0
  %v7484 = vadd.f32 0.0, %v7483
  %v7485 = vpop.f32.mrf.mxu0
  %v7486 = vpop.f32.mrf.mxu0
  %v7487 = vadd.f32 0.0, %v7486
  %v7488 = vpop.f32.mrf.mxu0
  %7489 = vmatprep.mubr.bf16.mxu0 %v6459
  %7490 = vmatmul.mubr.bf16.gmra.mxu0 %v6458
  %v7491 = vpop.f32.mrf.mxu0
  %v7492 = vadd.f32 0.0, %v7491
  %v7493 = vpop.f32.mrf.mxu0
  %v7494 = vpop.f32.mrf.mxu0
  %v7495 = vadd.f32 0.0, %v7494
  %v7496 = vpop.f32.mrf.mxu0
  %7497 = vmatprep.mubr.bf16.mxu0 %v6468
  %7498 = vmatmul.mubr.bf16.gmra.mxu0 %v6467
  %v7499 = vpop.f32.mrf.mxu0
  %v7500 = vadd.f32 0.0, %v7499
  %v7501 = vpop.f32.mrf.mxu0
  %v7502 = vpop.f32.mrf.mxu0
  %v7503 = vadd.f32 0.0, %v7502
  %v7504 = vpop.f32.mrf.mxu0
  %7505 = vmatprep.mubr.bf16.mxu0 %v6477
  %7506 = vmatmul.mubr.bf16.gmra.mxu0 %v6476
  %v7507 = vpop.f32.mrf.mxu0
  %v7508 = vadd.f32 0.0, %v7507
  %v7509 = vpop.f32.mrf.mxu0
  %v7510 = vpop.f32.mrf.mxu0
  %v7511 = vadd.f32 0.0, %v7510
  %v7512 = vpop.f32.mrf.mxu0
  %7513 = vmatprep.mubr.bf16.mxu0 %v6486
  %7514 = vmatmul.mubr.bf16.gmra.mxu0 %v6485
  %v7515 = vpop.f32.mrf.mxu0
  %v7516 = vadd.f32 0.0, %v7515
  %v7517 = vpop.f32.mrf.mxu0
  %v7518 = vpop.f32.mrf.mxu0
  %v7519 = vadd.f32 0.0, %v7518
  %v7520 = vpop.f32.mrf.mxu0
  %7521 = vmatprep.mubr.bf16.mxu0 %v6495
  %7522 = vmatmul.mubr.bf16.gmra.mxu0 %v6494
  %v7523 = vpop.f32.mrf.mxu0
  %v7524 = vadd.f32 0.0, %v7523
  %v7525 = vpop.f32.mrf.mxu0
  %v7526 = vpop.f32.mrf.mxu0
  %v7527 = vadd.f32 0.0, %v7526
  %v7528 = vpop.f32.mrf.mxu0
  %7529 = vmatprep.mubr.bf16.mxu0 %v6504
  %7530 = vmatmul.mubr.bf16.gmra.mxu0 %v6503
  %v7531 = vpop.f32.mrf.mxu0
  %v7532 = vadd.f32 0.0, %v7531
  %v7533 = vpop.f32.mrf.mxu0
  %v7534 = vpop.f32.mrf.mxu0
  %v7535 = vadd.f32 0.0, %v7534
  %v7536 = vpop.f32.mrf.mxu0
  %7537 = vmatprep.mubr.bf16.mxu0 %v6513
  %7538 = vmatmul.mubr.bf16.gmra.mxu0 %v6512
  %v7539 = vpop.f32.mrf.mxu0
  %v7540 = vadd.f32 0.0, %v7539
  %v7541 = vpop.f32.mrf.mxu0
  %v7542 = vpop.f32.mrf.mxu0
  %v7543 = vadd.f32 0.0, %v7542
  %v7544 = vpop.f32.mrf.mxu0
  %7545 = vmatprep.mubr.bf16.mxu0 %v6522
  %7546 = vmatmul.mubr.bf16.gmra.mxu0 %v6521
  %v7547 = vpop.f32.mrf.mxu0
  %v7548 = vadd.f32 0.0, %v7547
  %v7549 = vpop.f32.mrf.mxu0
  %v7550 = vpop.f32.mrf.mxu0
  %v7551 = vadd.f32 0.0, %v7550
  %v7552 = vpop.f32.mrf.mxu0
  %7553 = vmatprep.mubr.bf16.mxu0 %v6531
  %7554 = vmatmul.mubr.bf16.gmra.mxu0 %v6530
  %v7555 = vpop.f32.mrf.mxu0
  %v7556 = vadd.f32 0.0, %v7555
  %v7557 = vpop.f32.mrf.mxu0
  %v7558 = vpop.f32.mrf.mxu0
  %v7559 = vadd.f32 0.0, %v7558
  %v7560 = vpop.f32.mrf.mxu0
  %7561 = vmatprep.mubr.bf16.mxu0 %v6540
  %7562 = vmatmul.mubr.bf16.gmra.mxu0 %v6539
  %v7563 = vpop.f32.mrf.mxu0
  %v7564 = vadd.f32 0.0, %v7563
  %v7565 = vpop.f32.mrf.mxu0
  %v7566 = vpop.f32.mrf.mxu0
  %v7567 = vadd.f32 0.0, %v7566
  %v7568 = vpop.f32.mrf.mxu0
  %7569 = vmatprep.mubr.bf16.mxu0 %v6549
  %7570 = vmatmul.mubr.bf16.gmra.mxu0 %v6548
  %v7571 = vpop.f32.mrf.mxu0
  %v7572 = vadd.f32 0.0, %v7571
  %v7573 = vpop.f32.mrf.mxu0
  %v7574 = vpop.f32.mrf.mxu0
  %v7575 = vadd.f32 0.0, %v7574
  %v7576 = vpop.f32.mrf.mxu0
  %7577 = vmatprep.mubr.bf16.mxu0 %v6558
  %7578 = vmatmul.mubr.bf16.gmra.mxu0 %v6557
  %v7579 = vpop.f32.mrf.mxu0
  %v7580 = vadd.f32 0.0, %v7579
  %v7581 = vpop.f32.mrf.mxu0
  %v7582 = vpop.f32.mrf.mxu0
  %v7583 = vadd.f32 0.0, %v7582
  %v7584 = vpop.f32.mrf.mxu0
  %7585 = vmatprep.mubr.bf16.mxu0 %v6567
  %7586 = vmatmul.mubr.bf16.gmra.mxu0 %v6566
  %v7587 = vpop.f32.mrf.mxu0
  %v7588 = vadd.f32 0.0, %v7587
  %v7589 = vpop.f32.mrf.mxu0
  %v7590 = vpop.f32.mrf.mxu0
  %v7591 = vadd.f32 0.0, %v7590
  %v7592 = vpop.f32.mrf.mxu0
  %7593 = vmatprep.mubr.bf16.mxu0 %v6576
  %7594 = vmatmul.mubr.bf16.gmra.mxu0 %v6575
  %v7595 = vpop.f32.mrf.mxu0
  %v7596 = vadd.f32 0.0, %v7595
  %v7597 = vpop.f32.mrf.mxu0
  %v7598 = vpop.f32.mrf.mxu0
  %v7599 = vadd.f32 0.0, %v7598
  %v7600 = vpop.f32.mrf.mxu0
  %7601 = vmatprep.mubr.bf16.mxu0 %v6585
  %7602 = vmatmul.mubr.bf16.gmra.mxu0 %v6584
  %v7603 = vpop.f32.mrf.mxu0
  %v7604 = vadd.f32 0.0, %v7603
  %v7605 = vpop.f32.mrf.mxu0
  %v7606 = vpop.f32.mrf.mxu0
  %v7607 = vadd.f32 0.0, %v7606
  %v7608 = vpop.f32.mrf.mxu0
  %7609 = vmatprep.mubr.bf16.mxu0 %v6594
  %7610 = vmatmul.mubr.bf16.gmra.mxu0 %v6593
  %v7611 = vpop.f32.mrf.mxu0
  %v7612 = vadd.f32 0.0, %v7611
  %v7613 = vpop.f32.mrf.mxu0
  %v7614 = vpop.f32.mrf.mxu0
  %v7615 = vadd.f32 0.0, %v7614
  %v7616 = vpop.f32.mrf.mxu0
  %7617 = vmatprep.mubr.bf16.mxu0 %v6603
  %7618 = vmatmul.mubr.bf16.gmra.mxu0 %v6602
  %v7619 = vpop.f32.mrf.mxu0
  %v7620 = vadd.f32 0.0, %v7619
  %v7621 = vpop.f32.mrf.mxu0
  %v7622 = vpop.f32.mrf.mxu0
  %v7623 = vadd.f32 0.0, %v7622
  %v7624 = vpop.f32.mrf.mxu0
  %7625 = vmatprep.mubr.bf16.mxu0 %v6612
  %7626 = vmatmul.mubr.bf16.gmra.mxu0 %v6611
  %v7627 = vpop.f32.mrf.mxu0
  %v7628 = vadd.f32 0.0, %v7627
  %v7629 = vpop.f32.mrf.mxu0
  %v7630 = vpop.f32.mrf.mxu0
  %v7631 = vadd.f32 0.0, %v7630
  %v7632 = vpop.f32.mrf.mxu0
  %7633 = vmatprep.mubr.bf16.mxu0 %v6621
  %7634 = vmatmul.mubr.bf16.gmra.mxu0 %v6620
  %v7635 = vpop.f32.mrf.mxu0
  %v7636 = vadd.f32 0.0, %v7635
  %v7637 = vpop.f32.mrf.mxu0
  %v7638 = vpop.f32.mrf.mxu0
  %v7639 = vadd.f32 0.0, %v7638
  %v7640 = vpop.f32.mrf.mxu0
  %7641 = vmatprep.mubr.bf16.mxu0 %v6630
  %7642 = vmatmul.mubr.bf16.gmra.mxu0 %v6629
  %v7643 = vpop.f32.mrf.mxu0
  %v7644 = vadd.f32 0.0, %v7643
  %v7645 = vpop.f32.mrf.mxu0
  %v7646 = vpop.f32.mrf.mxu0
  %v7647 = vadd.f32 0.0, %v7646
  %v7648 = vpop.f32.mrf.mxu0
  %7649 = vmatprep.mubr.bf16.mxu0 %v6639
  %7650 = vmatmul.mubr.bf16.gmra.mxu0 %v6638
  %v7651 = vpop.f32.mrf.mxu0
  %v7652 = vadd.f32 0.0, %v7651
  %v7653 = vpop.f32.mrf.mxu0
  %v7654 = vpop.f32.mrf.mxu0
  %v7655 = vadd.f32 0.0, %v7654
  %v7656 = vpop.f32.mrf.mxu0
  %7657 = vmatprep.mubr.bf16.mxu0 %v6648
  %7658 = vmatmul.mubr.bf16.gmra.mxu0 %v6647
  %v7659 = vpop.f32.mrf.mxu0
  %v7660 = vadd.f32 0.0, %v7659
  %v7661 = vpop.f32.mrf.mxu0
  %v7662 = vpop.f32.mrf.mxu0
  %v7663 = vadd.f32 0.0, %v7662
  %v7664 = vpop.f32.mrf.mxu0
  %7665 = vmatprep.mubr.bf16.mxu0 %v6657
  %7666 = vmatmul.mubr.bf16.gmra.mxu0 %v6656
  %v7667 = vpop.f32.mrf.mxu0
  %v7668 = vadd.f32 0.0, %v7667
  %v7669 = vpop.f32.mrf.mxu0
  %v7670 = vpop.f32.mrf.mxu0
  %v7671 = vadd.f32 0.0, %v7670
  %v7672 = vpop.f32.mrf.mxu0
  %7673 = vdwg.mxu0
  %7674 = vmatprep.subr.bf16.mxu0 0
  %7675 = vmatpush1.bf16.msra.mxu0 %v7264
  %7676 = vmatprep.subr.bf16.mxu0 0
  %7677 = vmatpush1.bf16.msra.mxu0 %v7263
  %7678 = vmatprep.subr.bf16.mxu0 0
  %7679 = vmatpush1.bf16.msra.mxu0 %v7262
  %7680 = vmatprep.subr.bf16.mxu0 0
  %7681 = vmatpush1.bf16.msra.mxu0 %v7261
  %7682 = vmatprep.subr.bf16.mxu0 0
  %7683 = vmatpush1.bf16.msra.mxu0 %v7260
  %7684 = vmatprep.subr.bf16.mxu0 0
  %7685 = vmatpush1.bf16.msra.mxu0 %v7259
  %7686 = vmatprep.subr.bf16.mxu0 0
  %7687 = vmatpush1.bf16.msra.mxu0 %v7258
  %7688 = vmatprep.subr.bf16.mxu0 0
  %7689 = vmatpush1.bf16.msra.mxu0 %v7257
  %7690 = vmatprep.subr.bf16.mxu0 0
  %7691 = vmatpush2.bf16.msra.mxu0 %v7272
  %7692 = vmatprep.subr.bf16.mxu0 0
  %7693 = vmatpush2.bf16.msra.mxu0 %v7271
  %7694 = vmatprep.subr.bf16.mxu0 0
  %7695 = vmatpush2.bf16.msra.mxu0 %v7270
  %7696 = vmatprep.subr.bf16.mxu0 0
  %7697 = vmatpush2.bf16.msra.mxu0 %v7269
  %7698 = vmatprep.subr.bf16.mxu0 0
  %7699 = vmatpush2.bf16.msra.mxu0 %v7268
  %7700 = vmatprep.subr.bf16.mxu0 0
  %7701 = vmatpush2.bf16.msra.mxu0 %v7267
  %7702 = vmatprep.subr.bf16.mxu0 0
  %7703 = vmatpush2.bf16.msra.mxu0 %v7266
  %7704 = vmatprep.subr.bf16.mxu0 0
  %7705 = vmatpush2.bf16.msra.mxu0 %v7265
  %7706 = vmatprep.mubr.bf16.mxu0 %v6380
  %7707 = vmatmul.mubr.bf16.gmra.mxu0 %v6379
  %v7708 = vpop.f32.mrf.mxu0
  %v7709 = vadd.f32 %v7420, %v7708
  %v7710 = vpop.f32.mrf.mxu0
  %v7711 = vpop.f32.mrf.mxu0
  %v7712 = vadd.f32 %v7423, %v7711
  %v7713 = vpop.f32.mrf.mxu0
  %7714 = vmatprep.mubr.bf16.mxu0 %v6389
  %7715 = vmatmul.mubr.bf16.gmra.mxu0 %v6388
  %v7716 = vpop.f32.mrf.mxu0
  %v7717 = vadd.f32 %v7428, %v7716
  %v7718 = vpop.f32.mrf.mxu0
  %v7719 = vpop.f32.mrf.mxu0
  %v7720 = vadd.f32 %v7431, %v7719
  %v7721 = vpop.f32.mrf.mxu0
  %7722 = vmatprep.mubr.bf16.mxu0 %v6398
  %7723 = vmatmul.mubr.bf16.gmra.mxu0 %v6397
  %v7724 = vpop.f32.mrf.mxu0
  %v7725 = vadd.f32 %v7436, %v7724
  %v7726 = vpop.f32.mrf.mxu0
  %v7727 = vpop.f32.mrf.mxu0
  %v7728 = vadd.f32 %v7439, %v7727
  %v7729 = vpop.f32.mrf.mxu0
  %7730 = vmatprep.mubr.bf16.mxu0 %v6407
  %7731 = vmatmul.mubr.bf16.gmra.mxu0 %v6406
  %v7732 = vpop.f32.mrf.mxu0
  %v7733 = vadd.f32 %v7444, %v7732
  %v7734 = vpop.f32.mrf.mxu0
  %v7735 = vpop.f32.mrf.mxu0
  %v7736 = vadd.f32 %v7447, %v7735
  %v7737 = vpop.f32.mrf.mxu0
  %7738 = vmatprep.mubr.bf16.mxu0 %v6416
  %7739 = vmatmul.mubr.bf16.gmra.mxu0 %v6415
  %v7740 = vpop.f32.mrf.mxu0
  %v7741 = vadd.f32 %v7452, %v7740
  %v7742 = vpop.f32.mrf.mxu0
  %v7743 = vpop.f32.mrf.mxu0
  %v7744 = vadd.f32 %v7455, %v7743
  %v7745 = vpop.f32.mrf.mxu0
  %7746 = vmatprep.mubr.bf16.mxu0 %v6425
  %7747 = vmatmul.mubr.bf16.gmra.mxu0 %v6424
  %v7748 = vpop.f32.mrf.mxu0
  %v7749 = vadd.f32 %v7460, %v7748
  %v7750 = vpop.f32.mrf.mxu0
  %v7751 = vpop.f32.mrf.mxu0
  %v7752 = vadd.f32 %v7463, %v7751
  %v7753 = vpop.f32.mrf.mxu0
  %7754 = vmatprep.mubr.bf16.mxu0 %v6434
  %7755 = vmatmul.mubr.bf16.gmra.mxu0 %v6433
  %v7756 = vpop.f32.mrf.mxu0
  %v7757 = vadd.f32 %v7468, %v7756
  %v7758 = vpop.f32.mrf.mxu0
  %v7759 = vpop.f32.mrf.mxu0
  %v7760 = vadd.f32 %v7471, %v7759
  %v7761 = vpop.f32.mrf.mxu0
  %7762 = vmatprep.mubr.bf16.mxu0 %v6443
  %7763 = vmatmul.mubr.bf16.gmra.mxu0 %v6442
  %v7764 = vpop.f32.mrf.mxu0
  %v7765 = vadd.f32 %v7476, %v7764
  %v7766 = vpop.f32.mrf.mxu0
  %v7767 = vpop.f32.mrf.mxu0
  %v7768 = vadd.f32 %v7479, %v7767
  %v7769 = vpop.f32.mrf.mxu0
  %7770 = vmatprep.mubr.bf16.mxu0 %v6452
  %7771 = vmatmul.mubr.bf16.gmra.mxu0 %v6451
  %v7772 = vpop.f32.mrf.mxu0
  %v7773 = vadd.f32 %v7484, %v7772
  %v7774 = vpop.f32.mrf.mxu0
  %v7775 = vpop.f32.mrf.mxu0
  %v7776 = vadd.f32 %v7487, %v7775
  %v7777 = vpop.f32.mrf.mxu0
  %7778 = vmatprep.mubr.bf16.mxu0 %v6461
  %7779 = vmatmul.mubr.bf16.gmra.mxu0 %v6460
  %v7780 = vpop.f32.mrf.mxu0
  %v7781 = vadd.f32 %v7492, %v7780
  %v7782 = vpop.f32.mrf.mxu0
  %v7783 = vpop.f32.mrf.mxu0
  %v7784 = vadd.f32 %v7495, %v7783
  %v7785 = vpop.f32.mrf.mxu0
  %7786 = vmatprep.mubr.bf16.mxu0 %v6470
  %7787 = vmatmul.mubr.bf16.gmra.mxu0 %v6469
  %v7788 = vpop.f32.mrf.mxu0
  %v7789 = vadd.f32 %v7500, %v7788
  %v7790 = vpop.f32.mrf.mxu0
  %v7791 = vpop.f32.mrf.mxu0
  %v7792 = vadd.f32 %v7503, %v7791
  %v7793 = vpop.f32.mrf.mxu0
  %7794 = vmatprep.mubr.bf16.mxu0 %v6479
  %7795 = vmatmul.mubr.bf16.gmra.mxu0 %v6478
  %v7796 = vpop.f32.mrf.mxu0
  %v7797 = vadd.f32 %v7508, %v7796
  %v7798 = vpop.f32.mrf.mxu0
  %v7799 = vpop.f32.mrf.mxu0
  %v7800 = vadd.f32 %v7511, %v7799
  %v7801 = vpop.f32.mrf.mxu0
  %7802 = vmatprep.mubr.bf16.mxu0 %v6488
  %7803 = vmatmul.mubr.bf16.gmra.mxu0 %v6487
  %v7804 = vpop.f32.mrf.mxu0
  %v7805 = vadd.f32 %v7516, %v7804
  %v7806 = vpop.f32.mrf.mxu0
  %v7807 = vpop.f32.mrf.mxu0
  %v7808 = vadd.f32 %v7519, %v7807
  %v7809 = vpop.f32.mrf.mxu0
  %7810 = vmatprep.mubr.bf16.mxu0 %v6497
  %7811 = vmatmul.mubr.bf16.gmra.mxu0 %v6496
  %v7812 = vpop.f32.mrf.mxu0
  %v7813 = vadd.f32 %v7524, %v7812
  %v7814 = vpop.f32.mrf.mxu0
  %v7815 = vpop.f32.mrf.mxu0
  %v7816 = vadd.f32 %v7527, %v7815
  %v7817 = vpop.f32.mrf.mxu0
  %7818 = vmatprep.mubr.bf16.mxu0 %v6506
  %7819 = vmatmul.mubr.bf16.gmra.mxu0 %v6505
  %v7820 = vpop.f32.mrf.mxu0
  %v7821 = vadd.f32 %v7532, %v7820
  %v7822 = vpop.f32.mrf.mxu0
  %v7823 = vpop.f32.mrf.mxu0
  %v7824 = vadd.f32 %v7535, %v7823
  %v7825 = vpop.f32.mrf.mxu0
  %7826 = vmatprep.mubr.bf16.mxu0 %v6515
  %7827 = vmatmul.mubr.bf16.gmra.mxu0 %v6514
  %v7828 = vpop.f32.mrf.mxu0
  %v7829 = vadd.f32 %v7540, %v7828
  %v7830 = vpop.f32.mrf.mxu0
  %v7831 = vpop.f32.mrf.mxu0
  %v7832 = vadd.f32 %v7543, %v7831
  %v7833 = vpop.f32.mrf.mxu0
  %7834 = vmatprep.mubr.bf16.mxu0 %v6524
  %7835 = vmatmul.mubr.bf16.gmra.mxu0 %v6523
  %v7836 = vpop.f32.mrf.mxu0
  %v7837 = vadd.f32 %v7548, %v7836
  %v7838 = vpop.f32.mrf.mxu0
  %v7839 = vpop.f32.mrf.mxu0
  %v7840 = vadd.f32 %v7551, %v7839
  %v7841 = vpop.f32.mrf.mxu0
  %7842 = vmatprep.mubr.bf16.mxu0 %v6533
  %7843 = vmatmul.mubr.bf16.gmra.mxu0 %v6532
  %v7844 = vpop.f32.mrf.mxu0
  %v7845 = vadd.f32 %v7556, %v7844
  %v7846 = vpop.f32.mrf.mxu0
  %v7847 = vpop.f32.mrf.mxu0
  %v7848 = vadd.f32 %v7559, %v7847
  %v7849 = vpop.f32.mrf.mxu0
  %7850 = vmatprep.mubr.bf16.mxu0 %v6542
  %7851 = vmatmul.mubr.bf16.gmra.mxu0 %v6541
  %v7852 = vpop.f32.mrf.mxu0
  %v7853 = vadd.f32 %v7564, %v7852
  %v7854 = vpop.f32.mrf.mxu0
  %v7855 = vpop.f32.mrf.mxu0
  %v7856 = vadd.f32 %v7567, %v7855
  %v7857 = vpop.f32.mrf.mxu0
  %7858 = vmatprep.mubr.bf16.mxu0 %v6551
  %7859 = vmatmul.mubr.bf16.gmra.mxu0 %v6550
  %v7860 = vpop.f32.mrf.mxu0
  %v7861 = vadd.f32 %v7572, %v7860
  %v7862 = vpop.f32.mrf.mxu0
  %v7863 = vpop.f32.mrf.mxu0
  %v7864 = vadd.f32 %v7575, %v7863
  %v7865 = vpop.f32.mrf.mxu0
  %7866 = vmatprep.mubr.bf16.mxu0 %v6560
  %7867 = vmatmul.mubr.bf16.gmra.mxu0 %v6559
  %v7868 = vpop.f32.mrf.mxu0
  %v7869 = vadd.f32 %v7580, %v7868
  %v7870 = vpop.f32.mrf.mxu0
  %v7871 = vpop.f32.mrf.mxu0
  %v7872 = vadd.f32 %v7583, %v7871
  %v7873 = vpop.f32.mrf.mxu0
  %7874 = vmatprep.mubr.bf16.mxu0 %v6569
  %7875 = vmatmul.mubr.bf16.gmra.mxu0 %v6568
  %v7876 = vpop.f32.mrf.mxu0
  %v7877 = vadd.f32 %v7588, %v7876
  %v7878 = vpop.f32.mrf.mxu0
  %v7879 = vpop.f32.mrf.mxu0
  %v7880 = vadd.f32 %v7591, %v7879
  %v7881 = vpop.f32.mrf.mxu0
  %7882 = vmatprep.mubr.bf16.mxu0 %v6578
  %7883 = vmatmul.mubr.bf16.gmra.mxu0 %v6577
  %v7884 = vpop.f32.mrf.mxu0
  %v7885 = vadd.f32 %v7596, %v7884
  %v7886 = vpop.f32.mrf.mxu0
  %v7887 = vpop.f32.mrf.mxu0
  %v7888 = vadd.f32 %v7599, %v7887
  %v7889 = vpop.f32.mrf.mxu0
  %7890 = vmatprep.mubr.bf16.mxu0 %v6587
  %7891 = vmatmul.mubr.bf16.gmra.mxu0 %v6586
  %v7892 = vpop.f32.mrf.mxu0
  %v7893 = vadd.f32 %v7604, %v7892
  %v7894 = vpop.f32.mrf.mxu0
  %v7895 = vpop.f32.mrf.mxu0
  %v7896 = vadd.f32 %v7607, %v7895
  %v7897 = vpop.f32.mrf.mxu0
  %7898 = vmatprep.mubr.bf16.mxu0 %v6596
  %7899 = vmatmul.mubr.bf16.gmra.mxu0 %v6595
  %v7900 = vpop.f32.mrf.mxu0
  %v7901 = vadd.f32 %v7612, %v7900
  %v7902 = vpop.f32.mrf.mxu0
  %v7903 = vpop.f32.mrf.mxu0
  %v7904 = vadd.f32 %v7615, %v7903
  %v7905 = vpop.f32.mrf.mxu0
  %7906 = vmatprep.mubr.bf16.mxu0 %v6605
  %7907 = vmatmul.mubr.bf16.gmra.mxu0 %v6604
  %v7908 = vpop.f32.mrf.mxu0
  %v7909 = vadd.f32 %v7620, %v7908
  %v7910 = vpop.f32.mrf.mxu0
  %v7911 = vpop.f32.mrf.mxu0
  %v7912 = vadd.f32 %v7623, %v7911
  %v7913 = vpop.f32.mrf.mxu0
  %7914 = vmatprep.mubr.bf16.mxu0 %v6614
  %7915 = vmatmul.mubr.bf16.gmra.mxu0 %v6613
  %v7916 = vpop.f32.mrf.mxu0
  %v7917 = vadd.f32 %v7628, %v7916
  %v7918 = vpop.f32.mrf.mxu0
  %v7919 = vpop.f32.mrf.mxu0
  %v7920 = vadd.f32 %v7631, %v7919
  %v7921 = vpop.f32.mrf.mxu0
  %7922 = vmatprep.mubr.bf16.mxu0 %v6623
  %7923 = vmatmul.mubr.bf16.gmra.mxu0 %v6622
  %v7924 = vpop.f32.mrf.mxu0
  %v7925 = vadd.f32 %v7636, %v7924
  %v7926 = vpop.f32.mrf.mxu0
  %v7927 = vpop.f32.mrf.mxu0
  %v7928 = vadd.f32 %v7639, %v7927
  %v7929 = vpop.f32.mrf.mxu0
  %7930 = vmatprep.mubr.bf16.mxu0 %v6632
  %7931 = vmatmul.mubr.bf16.gmra.mxu0 %v6631
  %v7932 = vpop.f32.mrf.mxu0
  %v7933 = vadd.f32 %v7644, %v7932
  %v7934 = vpop.f32.mrf.mxu0
  %v7935 = vpop.f32.mrf.mxu0
  %v7936 = vadd.f32 %v7647, %v7935
  %v7937 = vpop.f32.mrf.mxu0
  %7938 = vmatprep.mubr.bf16.mxu0 %v6641
  %7939 = vmatmul.mubr.bf16.gmra.mxu0 %v6640
  %v7940 = vpop.f32.mrf.mxu0
  %v7941 = vadd.f32 %v7652, %v7940
  %v7942 = vpop.f32.mrf.mxu0
  %v7943 = vpop.f32.mrf.mxu0
  %v7944 = vadd.f32 %v7655, %v7943
  %v7945 = vpop.f32.mrf.mxu0
  %7946 = vmatprep.mubr.bf16.mxu0 %v6650
  %7947 = vmatmul.mubr.bf16.gmra.mxu0 %v6649
  %v7948 = vpop.f32.mrf.mxu0
  %v7949 = vadd.f32 %v7660, %v7948
  %v7950 = vpop.f32.mrf.mxu0
  %v7951 = vpop.f32.mrf.mxu0
  %v7952 = vadd.f32 %v7663, %v7951
  %v7953 = vpop.f32.mrf.mxu0
  %7954 = vmatprep.mubr.bf16.mxu0 %v6659
  %7955 = vmatmul.mubr.bf16.gmra.mxu0 %v6658
  %v7956 = vpop.f32.mrf.mxu0
  %v7957 = vadd.f32 %v7668, %v7956
  %v7958 = vpop.f32.mrf.mxu0
  %v7959 = vpop.f32.mrf.mxu0
  %v7960 = vadd.f32 %v7671, %v7959
  %v7961 = vpop.f32.mrf.mxu0
  %7962 = vdwg.mxu0
  %7963 = vmatprep.subr.bf16.mxu0 0
  %7964 = vmatpush1.bf16.msra.mxu0 %v7280
  %7965 = vmatprep.subr.bf16.mxu0 0
  %7966 = vmatpush1.bf16.msra.mxu0 %v7279
  %7967 = vmatprep.subr.bf16.mxu0 0
  %7968 = vmatpush1.bf16.msra.mxu0 %v7278
  %7969 = vmatprep.subr.bf16.mxu0 0
  %7970 = vmatpush1.bf16.msra.mxu0 %v7277
  %7971 = vmatprep.subr.bf16.mxu0 0
  %7972 = vmatpush1.bf16.msra.mxu0 %v7276
  %7973 = vmatprep.subr.bf16.mxu0 0
  %7974 = vmatpush1.bf16.msra.mxu0 %v7275
  %7975 = vmatprep.subr.bf16.mxu0 0
  %7976 = vmatpush1.bf16.msra.mxu0 %v7274
  %7977 = vmatprep.subr.bf16.mxu0 0
  %7978 = vmatpush1.bf16.msra.mxu0 %v7273
  %7979 = vmatprep.subr.bf16.mxu0 0
  %7980 = vmatpush2.bf16.msra.mxu0 %v7288
  %7981 = vmatprep.subr.bf16.mxu0 0
  %7982 = vmatpush2.bf16.msra.mxu0 %v7287
  %7983 = vmatprep.subr.bf16.mxu0 0
  %7984 = vmatpush2.bf16.msra.mxu0 %v7286
  %7985 = vmatprep.subr.bf16.mxu0 0
  %7986 = vmatpush2.bf16.msra.mxu0 %v7285
  %7987 = vmatprep.subr.bf16.mxu0 0
  %7988 = vmatpush2.bf16.msra.mxu0 %v7284
  %7989 = vmatprep.subr.bf16.mxu0 0
  %7990 = vmatpush2.bf16.msra.mxu0 %v7283
  %7991 = vmatprep.subr.bf16.mxu0 0
  %7992 = vmatpush2.bf16.msra.mxu0 %v7282
  %7993 = vmatprep.subr.bf16.mxu0 0
  %7994 = vmatpush2.bf16.msra.mxu0 %v7281
  %7995 = vmatprep.mubr.bf16.mxu0 %v6382
  %7996 = vmatmul.mubr.bf16.gmra.mxu0 %v6381
  %v7997 = vpop.f32.mrf.mxu0
  %v7998 = vadd.f32 %v7709, %v7997
  %v7999 = vpop.f32.mrf.mxu0
  %v8000 = vpop.f32.mrf.mxu0
  %v8001 = vadd.f32 %v7712, %v8000
  %v8002 = vpop.f32.mrf.mxu0
  %8003 = vmatprep.mubr.bf16.mxu0 %v6391
  %8004 = vmatmul.mubr.bf16.gmra.mxu0 %v6390
  %v8005 = vpop.f32.mrf.mxu0
  %v8006 = vadd.f32 %v7717, %v8005
  %v8007 = vpop.f32.mrf.mxu0
  %v8008 = vpop.f32.mrf.mxu0
  %v8009 = vadd.f32 %v7720, %v8008
  %v8010 = vpop.f32.mrf.mxu0
  %8011 = vmatprep.mubr.bf16.mxu0 %v6400
  %8012 = vmatmul.mubr.bf16.gmra.mxu0 %v6399
  %v8013 = vpop.f32.mrf.mxu0
  %v8014 = vadd.f32 %v7725, %v8013
  %v8015 = vpop.f32.mrf.mxu0
  %v8016 = vpop.f32.mrf.mxu0
  %v8017 = vadd.f32 %v7728, %v8016
  %v8018 = vpop.f32.mrf.mxu0
  %8019 = vmatprep.mubr.bf16.mxu0 %v6409
  %8020 = vmatmul.mubr.bf16.gmra.mxu0 %v6408
  %v8021 = vpop.f32.mrf.mxu0
  %v8022 = vadd.f32 %v7733, %v8021
  %v8023 = vpop.f32.mrf.mxu0
  %v8024 = vpop.f32.mrf.mxu0
  %v8025 = vadd.f32 %v7736, %v8024
  %v8026 = vpop.f32.mrf.mxu0
  %8027 = vmatprep.mubr.bf16.mxu0 %v6418
  %8028 = vmatmul.mubr.bf16.gmra.mxu0 %v6417
  %v8029 = vpop.f32.mrf.mxu0
  %v8030 = vadd.f32 %v7741, %v8029
  %v8031 = vpop.f32.mrf.mxu0
  %v8032 = vpop.f32.mrf.mxu0
  %v8033 = vadd.f32 %v7744, %v8032
  %v8034 = vpop.f32.mrf.mxu0
  %8035 = vmatprep.mubr.bf16.mxu0 %v6427
  %8036 = vmatmul.mubr.bf16.gmra.mxu0 %v6426
  %v8037 = vpop.f32.mrf.mxu0
  %v8038 = vadd.f32 %v7749, %v8037
  %v8039 = vpop.f32.mrf.mxu0
  %v8040 = vpop.f32.mrf.mxu0
  %v8041 = vadd.f32 %v7752, %v8040
  %v8042 = vpop.f32.mrf.mxu0
  %8043 = vmatprep.mubr.bf16.mxu0 %v6436
  %8044 = vmatmul.mubr.bf16.gmra.mxu0 %v6435
  %v8045 = vpop.f32.mrf.mxu0
  %v8046 = vadd.f32 %v7757, %v8045
  %v8047 = vpop.f32.mrf.mxu0
  %v8048 = vpop.f32.mrf.mxu0
  %v8049 = vadd.f32 %v7760, %v8048
  %v8050 = vpop.f32.mrf.mxu0
  %8051 = vmatprep.mubr.bf16.mxu0 %v6445
  %8052 = vmatmul.mubr.bf16.gmra.mxu0 %v6444
  %v8053 = vpop.f32.mrf.mxu0
  %v8054 = vadd.f32 %v7765, %v8053
  %v8055 = vpop.f32.mrf.mxu0
  %v8056 = vpop.f32.mrf.mxu0
  %v8057 = vadd.f32 %v7768, %v8056
  %v8058 = vpop.f32.mrf.mxu0
  %8059 = vmatprep.mubr.bf16.mxu0 %v6454
  %8060 = vmatmul.mubr.bf16.gmra.mxu0 %v6453
  %v8061 = vpop.f32.mrf.mxu0
  %v8062 = vadd.f32 %v7773, %v8061
  %v8063 = vpop.f32.mrf.mxu0
  %v8064 = vpop.f32.mrf.mxu0
  %v8065 = vadd.f32 %v7776, %v8064
  %v8066 = vpop.f32.mrf.mxu0
  %8067 = vmatprep.mubr.bf16.mxu0 %v6463
  %8068 = vmatmul.mubr.bf16.gmra.mxu0 %v6462
  %v8069 = vpop.f32.mrf.mxu0
  %v8070 = vadd.f32 %v7781, %v8069
  %v8071 = vpop.f32.mrf.mxu0
  %v8072 = vpop.f32.mrf.mxu0
  %v8073 = vadd.f32 %v7784, %v8072
  %v8074 = vpop.f32.mrf.mxu0
  %8075 = vmatprep.mubr.bf16.mxu0 %v6472
  %8076 = vmatmul.mubr.bf16.gmra.mxu0 %v6471
  %v8077 = vpop.f32.mrf.mxu0
  %v8078 = vadd.f32 %v7789, %v8077
  %v8079 = vpop.f32.mrf.mxu0
  %v8080 = vpop.f32.mrf.mxu0
  %v8081 = vadd.f32 %v7792, %v8080
  %v8082 = vpop.f32.mrf.mxu0
  %8083 = vmatprep.mubr.bf16.mxu0 %v6481
  %8084 = vmatmul.mubr.bf16.gmra.mxu0 %v6480
  %v8085 = vpop.f32.mrf.mxu0
  %v8086 = vadd.f32 %v7797, %v8085
  %v8087 = vpop.f32.mrf.mxu0
  %v8088 = vpop.f32.mrf.mxu0
  %v8089 = vadd.f32 %v7800, %v8088
  %v8090 = vpop.f32.mrf.mxu0
  %8091 = vmatprep.mubr.bf16.mxu0 %v6490
  %8092 = vmatmul.mubr.bf16.gmra.mxu0 %v6489
  %v8093 = vpop.f32.mrf.mxu0
  %v8094 = vadd.f32 %v7805, %v8093
  %v8095 = vpop.f32.mrf.mxu0
  %v8096 = vpop.f32.mrf.mxu0
  %v8097 = vadd.f32 %v7808, %v8096
  %v8098 = vpop.f32.mrf.mxu0
  %8099 = vmatprep.mubr.bf16.mxu0 %v6499
  %8100 = vmatmul.mubr.bf16.gmra.mxu0 %v6498
  %v8101 = vpop.f32.mrf.mxu0
  %v8102 = vadd.f32 %v7813, %v8101
  %v8103 = vpop.f32.mrf.mxu0
  %v8104 = vpop.f32.mrf.mxu0
  %v8105 = vadd.f32 %v7816, %v8104
  %v8106 = vpop.f32.mrf.mxu0
  %8107 = vmatprep.mubr.bf16.mxu0 %v6508
  %8108 = vmatmul.mubr.bf16.gmra.mxu0 %v6507
  %v8109 = vpop.f32.mrf.mxu0
  %v8110 = vadd.f32 %v7821, %v8109
  %v8111 = vpop.f32.mrf.mxu0
  %v8112 = vpop.f32.mrf.mxu0
  %v8113 = vadd.f32 %v7824, %v8112
  %v8114 = vpop.f32.mrf.mxu0
  %8115 = vmatprep.mubr.bf16.mxu0 %v6517
  %8116 = vmatmul.mubr.bf16.gmra.mxu0 %v6516
  %v8117 = vpop.f32.mrf.mxu0
  %v8118 = vadd.f32 %v7829, %v8117
  %v8119 = vpop.f32.mrf.mxu0
  %v8120 = vpop.f32.mrf.mxu0
  %v8121 = vadd.f32 %v7832, %v8120
  %v8122 = vpop.f32.mrf.mxu0
  %8123 = vmatprep.mubr.bf16.mxu0 %v6526
  %8124 = vmatmul.mubr.bf16.gmra.mxu0 %v6525
  %v8125 = vpop.f32.mrf.mxu0
  %v8126 = vadd.f32 %v7837, %v8125
  %v8127 = vpop.f32.mrf.mxu0
  %v8128 = vpop.f32.mrf.mxu0
  %v8129 = vadd.f32 %v7840, %v8128
  %v8130 = vpop.f32.mrf.mxu0
  %8131 = vmatprep.mubr.bf16.mxu0 %v6535
  %8132 = vmatmul.mubr.bf16.gmra.mxu0 %v6534
  %v8133 = vpop.f32.mrf.mxu0
  %v8134 = vadd.f32 %v7845, %v8133
  %v8135 = vpop.f32.mrf.mxu0
  %v8136 = vpop.f32.mrf.mxu0
  %v8137 = vadd.f32 %v7848, %v8136
  %v8138 = vpop.f32.mrf.mxu0
  %8139 = vmatprep.mubr.bf16.mxu0 %v6544
  %8140 = vmatmul.mubr.bf16.gmra.mxu0 %v6543
  %v8141 = vpop.f32.mrf.mxu0
  %v8142 = vadd.f32 %v7853, %v8141
  %v8143 = vpop.f32.mrf.mxu0
  %v8144 = vpop.f32.mrf.mxu0
  %v8145 = vadd.f32 %v7856, %v8144
  %v8146 = vpop.f32.mrf.mxu0
  %8147 = vmatprep.mubr.bf16.mxu0 %v6553
  %8148 = vmatmul.mubr.bf16.gmra.mxu0 %v6552
  %v8149 = vpop.f32.mrf.mxu0
  %v8150 = vadd.f32 %v7861, %v8149
  %v8151 = vpop.f32.mrf.mxu0
  %v8152 = vpop.f32.mrf.mxu0
  %v8153 = vadd.f32 %v7864, %v8152
  %v8154 = vpop.f32.mrf.mxu0
  %8155 = vmatprep.mubr.bf16.mxu0 %v6562
  %8156 = vmatmul.mubr.bf16.gmra.mxu0 %v6561
  %v8157 = vpop.f32.mrf.mxu0
  %v8158 = vadd.f32 %v7869, %v8157
  %v8159 = vpop.f32.mrf.mxu0
  %v8160 = vpop.f32.mrf.mxu0
  %v8161 = vadd.f32 %v7872, %v8160
  %v8162 = vpop.f32.mrf.mxu0
  %8163 = vmatprep.mubr.bf16.mxu0 %v6571
  %8164 = vmatmul.mubr.bf16.gmra.mxu0 %v6570
  %v8165 = vpop.f32.mrf.mxu0
  %v8166 = vadd.f32 %v7877, %v8165
  %v8167 = vpop.f32.mrf.mxu0
  %v8168 = vpop.f32.mrf.mxu0
  %v8169 = vadd.f32 %v7880, %v8168
  %v8170 = vpop.f32.mrf.mxu0
  %8171 = vmatprep.mubr.bf16.mxu0 %v6580
  %8172 = vmatmul.mubr.bf16.gmra.mxu0 %v6579
  %v8173 = vpop.f32.mrf.mxu0
  %v8174 = vadd.f32 %v7885, %v8173
  %v8175 = vpop.f32.mrf.mxu0
  %v8176 = vpop.f32.mrf.mxu0
  %v8177 = vadd.f32 %v7888, %v8176
  %v8178 = vpop.f32.mrf.mxu0
  %8179 = vmatprep.mubr.bf16.mxu0 %v6589
  %8180 = vmatmul.mubr.bf16.gmra.mxu0 %v6588
  %v8181 = vpop.f32.mrf.mxu0
  %v8182 = vadd.f32 %v7893, %v8181
  %v8183 = vpop.f32.mrf.mxu0
  %v8184 = vpop.f32.mrf.mxu0
  %v8185 = vadd.f32 %v7896, %v8184
  %v8186 = vpop.f32.mrf.mxu0
  %8187 = vmatprep.mubr.bf16.mxu0 %v6598
  %8188 = vmatmul.mubr.bf16.gmra.mxu0 %v6597
  %v8189 = vpop.f32.mrf.mxu0
  %v8190 = vadd.f32 %v7901, %v8189
  %v8191 = vpop.f32.mrf.mxu0
  %v8192 = vpop.f32.mrf.mxu0
  %v8193 = vadd.f32 %v7904, %v8192
  %v8194 = vpop.f32.mrf.mxu0
  %8195 = vmatprep.mubr.bf16.mxu0 %v6607
  %8196 = vmatmul.mubr.bf16.gmra.mxu0 %v6606
  %v8197 = vpop.f32.mrf.mxu0
  %v8198 = vadd.f32 %v7909, %v8197
  %v8199 = vpop.f32.mrf.mxu0
  %v8200 = vpop.f32.mrf.mxu0
  %v8201 = vadd.f32 %v7912, %v8200
  %v8202 = vpop.f32.mrf.mxu0
  %8203 = vmatprep.mubr.bf16.mxu0 %v6616
  %8204 = vmatmul.mubr.bf16.gmra.mxu0 %v6615
  %v8205 = vpop.f32.mrf.mxu0
  %v8206 = vadd.f32 %v7917, %v8205
  %v8207 = vpop.f32.mrf.mxu0
  %v8208 = vpop.f32.mrf.mxu0
  %v8209 = vadd.f32 %v7920, %v8208
  %v8210 = vpop.f32.mrf.mxu0
  %8211 = vmatprep.mubr.bf16.mxu0 %v6625
  %8212 = vmatmul.mubr.bf16.gmra.mxu0 %v6624
  %v8213 = vpop.f32.mrf.mxu0
  %v8214 = vadd.f32 %v7925, %v8213
  %v8215 = vpop.f32.mrf.mxu0
  %v8216 = vpop.f32.mrf.mxu0
  %v8217 = vadd.f32 %v7928, %v8216
  %v8218 = vpop.f32.mrf.mxu0
  %8219 = vmatprep.mubr.bf16.mxu0 %v6634
  %8220 = vmatmul.mubr.bf16.gmra.mxu0 %v6633
  %v8221 = vpop.f32.mrf.mxu0
  %v8222 = vadd.f32 %v7933, %v8221
  %v8223 = vpop.f32.mrf.mxu0
  %v8224 = vpop.f32.mrf.mxu0
  %v8225 = vadd.f32 %v7936, %v8224
  %v8226 = vpop.f32.mrf.mxu0
  %8227 = vmatprep.mubr.bf16.mxu0 %v6643
  %8228 = vmatmul.mubr.bf16.gmra.mxu0 %v6642
  %v8229 = vpop.f32.mrf.mxu0
  %v8230 = vadd.f32 %v7941, %v8229
  %v8231 = vpop.f32.mrf.mxu0
  %v8232 = vpop.f32.mrf.mxu0
  %v8233 = vadd.f32 %v7944, %v8232
  %v8234 = vpop.f32.mrf.mxu0
  %8235 = vmatprep.mubr.bf16.mxu0 %v6652
  %8236 = vmatmul.mubr.bf16.gmra.mxu0 %v6651
  %v8237 = vpop.f32.mrf.mxu0
  %v8238 = vadd.f32 %v7949, %v8237
  %v8239 = vpop.f32.mrf.mxu0
  %v8240 = vpop.f32.mrf.mxu0
  %v8241 = vadd.f32 %v7952, %v8240
  %v8242 = vpop.f32.mrf.mxu0
  %8243 = vmatprep.mubr.bf16.mxu0 %v6661
  %8244 = vmatmul.mubr.bf16.gmra.mxu0 %v6660
  %v8245 = vpop.f32.mrf.mxu0
  %v8246 = vadd.f32 %v7957, %v8245
  %v8247 = vpop.f32.mrf.mxu0
  %v8248 = vpop.f32.mrf.mxu0
  %v8249 = vadd.f32 %v7960, %v8248
  %v8250 = vpop.f32.mrf.mxu0
  %8251 = vdwg.mxu0
  %8252 = vmatprep.subr.bf16.mxu0 0
  %8253 = vmatpush1.bf16.msra.mxu0 %v7296
  %8254 = vmatprep.subr.bf16.mxu0 0
  %8255 = vmatpush1.bf16.msra.mxu0 %v7295
  %8256 = vmatprep.subr.bf16.mxu0 0
  %8257 = vmatpush1.bf16.msra.mxu0 %v7294
  %8258 = vmatprep.subr.bf16.mxu0 0
  %8259 = vmatpush1.bf16.msra.mxu0 %v7293
  %8260 = vmatprep.subr.bf16.mxu0 0
  %8261 = vmatpush1.bf16.msra.mxu0 %v7292
  %8262 = vmatprep.subr.bf16.mxu0 0
  %8263 = vmatpush1.bf16.msra.mxu0 %v7291
  %8264 = vmatprep.subr.bf16.mxu0 0
  %8265 = vmatpush1.bf16.msra.mxu0 %v7290
  %8266 = vmatprep.subr.bf16.mxu0 0
  %8267 = vmatpush1.bf16.msra.mxu0 %v7289
  %8268 = vmatprep.subr.bf16.mxu0 0
  %8269 = vmatpush2.bf16.msra.mxu0 %v7304
  %8270 = vmatprep.subr.bf16.mxu0 0
  %8271 = vmatpush2.bf16.msra.mxu0 %v7303
  %8272 = vmatprep.subr.bf16.mxu0 0
  %8273 = vmatpush2.bf16.msra.mxu0 %v7302
  %8274 = vmatprep.subr.bf16.mxu0 0
  %8275 = vmatpush2.bf16.msra.mxu0 %v7301
  %8276 = vmatprep.subr.bf16.mxu0 0
  %8277 = vmatpush2.bf16.msra.mxu0 %v7300
  %8278 = vmatprep.subr.bf16.mxu0 0
  %8279 = vmatpush2.bf16.msra.mxu0 %v7299
  %8280 = vmatprep.subr.bf16.mxu0 0
  %8281 = vmatpush2.bf16.msra.mxu0 %v7298
  %8282 = vmatprep.subr.bf16.mxu0 0
  %8283 = vmatpush2.bf16.msra.mxu0 %v7297
  %8284 = vmatprep.mubr.bf16.mxu0 %v6384
  %8285 = vmatmul.mubr.bf16.gmra.mxu0 %v6383
  %v8286 = vpop.f32.mrf.mxu0
  %v8287 = vadd.f32 %v7998, %v8286
  %v8288 = vpop.f32.mrf.mxu0
  %v8289 = vpop.f32.mrf.mxu0
  %v8290 = vadd.f32 %v8001, %v8289
  %v8291 = vpop.f32.mrf.mxu0
  %8292 = vmatprep.mubr.bf16.mxu0 %v6393
  %8293 = vmatmul.mubr.bf16.gmra.mxu0 %v6392
  %v8294 = vpop.f32.mrf.mxu0
  %v8295 = vadd.f32 %v8006, %v8294
  %v8296 = vpop.f32.mrf.mxu0
  %v8297 = vpop.f32.mrf.mxu0
  %v8298 = vadd.f32 %v8009, %v8297
  %v8299 = vpop.f32.mrf.mxu0
  %8300 = vmatprep.mubr.bf16.mxu0 %v6402
  %8301 = vmatmul.mubr.bf16.gmra.mxu0 %v6401
  %v8302 = vpop.f32.mrf.mxu0
  %v8303 = vadd.f32 %v8014, %v8302
  %v8304 = vpop.f32.mrf.mxu0
  %v8305 = vpop.f32.mrf.mxu0
  %v8306 = vadd.f32 %v8017, %v8305
  %v8307 = vpop.f32.mrf.mxu0
  %8308 = vmatprep.mubr.bf16.mxu0 %v6411
  %8309 = vmatmul.mubr.bf16.gmra.mxu0 %v6410
  %v8310 = vpop.f32.mrf.mxu0
  %v8311 = vadd.f32 %v8022, %v8310
  %v8312 = vpop.f32.mrf.mxu0
  %v8313 = vpop.f32.mrf.mxu0
  %v8314 = vadd.f32 %v8025, %v8313
  %v8315 = vpop.f32.mrf.mxu0
  %8316 = vmatprep.mubr.bf16.mxu0 %v6420
  %8317 = vmatmul.mubr.bf16.gmra.mxu0 %v6419
  %v8318 = vpop.f32.mrf.mxu0
  %v8319 = vadd.f32 %v8030, %v8318
  %v8320 = vpop.f32.mrf.mxu0
  %v8321 = vpop.f32.mrf.mxu0
  %v8322 = vadd.f32 %v8033, %v8321
  %v8323 = vpop.f32.mrf.mxu0
  %8324 = vmatprep.mubr.bf16.mxu0 %v6429
  %8325 = vmatmul.mubr.bf16.gmra.mxu0 %v6428
  %v8326 = vpop.f32.mrf.mxu0
  %v8327 = vadd.f32 %v8038, %v8326
  %v8328 = vpop.f32.mrf.mxu0
  %v8329 = vpop.f32.mrf.mxu0
  %v8330 = vadd.f32 %v8041, %v8329
  %v8331 = vpop.f32.mrf.mxu0
  %8332 = vmatprep.mubr.bf16.mxu0 %v6438
  %8333 = vmatmul.mubr.bf16.gmra.mxu0 %v6437
  %v8334 = vpop.f32.mrf.mxu0
  %v8335 = vadd.f32 %v8046, %v8334
  %v8336 = vpop.f32.mrf.mxu0
  %v8337 = vpop.f32.mrf.mxu0
  %v8338 = vadd.f32 %v8049, %v8337
  %v8339 = vpop.f32.mrf.mxu0
  %8340 = vmatprep.mubr.bf16.mxu0 %v6447
  %8341 = vmatmul.mubr.bf16.gmra.mxu0 %v6446
  %v8342 = vpop.f32.mrf.mxu0
  %v8343 = vadd.f32 %v8054, %v8342
  %v8344 = vpop.f32.mrf.mxu0
  %v8345 = vpop.f32.mrf.mxu0
  %v8346 = vadd.f32 %v8057, %v8345
  %v8347 = vpop.f32.mrf.mxu0
  %8348 = vmatprep.mubr.bf16.mxu0 %v6456
  %8349 = vmatmul.mubr.bf16.gmra.mxu0 %v6455
  %v8350 = vpop.f32.mrf.mxu0
  %v8351 = vadd.f32 %v8062, %v8350
  %v8352 = vpop.f32.mrf.mxu0
  %v8353 = vpop.f32.mrf.mxu0
  %v8354 = vadd.f32 %v8065, %v8353
  %v8355 = vpop.f32.mrf.mxu0
  %8356 = vmatprep.mubr.bf16.mxu0 %v6465
  %8357 = vmatmul.mubr.bf16.gmra.mxu0 %v6464
  %v8358 = vpop.f32.mrf.mxu0
  %v8359 = vadd.f32 %v8070, %v8358
  %v8360 = vpop.f32.mrf.mxu0
  %v8361 = vpop.f32.mrf.mxu0
  %v8362 = vadd.f32 %v8073, %v8361
  %v8363 = vpop.f32.mrf.mxu0
  %8364 = vmatprep.mubr.bf16.mxu0 %v6474
  %8365 = vmatmul.mubr.bf16.gmra.mxu0 %v6473
  %v8366 = vpop.f32.mrf.mxu0
  %v8367 = vadd.f32 %v8078, %v8366
  %v8368 = vpop.f32.mrf.mxu0
  %v8369 = vpop.f32.mrf.mxu0
  %v8370 = vadd.f32 %v8081, %v8369
  %v8371 = vpop.f32.mrf.mxu0
  %8372 = vmatprep.mubr.bf16.mxu0 %v6483
  %8373 = vmatmul.mubr.bf16.gmra.mxu0 %v6482
  %v8374 = vpop.f32.mrf.mxu0
  %v8375 = vadd.f32 %v8086, %v8374
  %v8376 = vpop.f32.mrf.mxu0
  %v8377 = vpop.f32.mrf.mxu0
  %v8378 = vadd.f32 %v8089, %v8377
  %v8379 = vpop.f32.mrf.mxu0
  %8380 = vmatprep.mubr.bf16.mxu0 %v6492
  %8381 = vmatmul.mubr.bf16.gmra.mxu0 %v6491
  %v8382 = vpop.f32.mrf.mxu0
  %v8383 = vadd.f32 %v8094, %v8382
  %v8384 = vpop.f32.mrf.mxu0
  %v8385 = vpop.f32.mrf.mxu0
  %v8386 = vadd.f32 %v8097, %v8385
  %v8387 = vpop.f32.mrf.mxu0
  %8388 = vmatprep.mubr.bf16.mxu0 %v6501
  %8389 = vmatmul.mubr.bf16.gmra.mxu0 %v6500
  %v8390 = vpop.f32.mrf.mxu0
  %v8391 = vadd.f32 %v8102, %v8390
  %v8392 = vpop.f32.mrf.mxu0
  %v8393 = vpop.f32.mrf.mxu0
  %v8394 = vadd.f32 %v8105, %v8393
  %v8395 = vpop.f32.mrf.mxu0
  %8396 = vmatprep.mubr.bf16.mxu0 %v6510
  %8397 = vmatmul.mubr.bf16.gmra.mxu0 %v6509
  %v8398 = vpop.f32.mrf.mxu0
  %v8399 = vadd.f32 %v8110, %v8398
  %v8400 = vpop.f32.mrf.mxu0
  %v8401 = vpop.f32.mrf.mxu0
  %v8402 = vadd.f32 %v8113, %v8401
  %v8403 = vpop.f32.mrf.mxu0
  %8404 = vmatprep.mubr.bf16.mxu0 %v6519
  %8405 = vmatmul.mubr.bf16.gmra.mxu0 %v6518
  %v8406 = vpop.f32.mrf.mxu0
  %v8407 = vadd.f32 %v8118, %v8406
  %v8408 = vpop.f32.mrf.mxu0
  %v8409 = vpop.f32.mrf.mxu0
  %v8410 = vadd.f32 %v8121, %v8409
  %v8411 = vpop.f32.mrf.mxu0
  %8412 = vmatprep.mubr.bf16.mxu0 %v6528
  %8413 = vmatmul.mubr.bf16.gmra.mxu0 %v6527
  %v8414 = vpop.f32.mrf.mxu0
  %v8415 = vadd.f32 %v8126, %v8414
  %v8416 = vpop.f32.mrf.mxu0
  %v8417 = vpop.f32.mrf.mxu0
  %v8418 = vadd.f32 %v8129, %v8417
  %v8419 = vpop.f32.mrf.mxu0
  %8420 = vmatprep.mubr.bf16.mxu0 %v6537
  %8421 = vmatmul.mubr.bf16.gmra.mxu0 %v6536
  %v8422 = vpop.f32.mrf.mxu0
  %v8423 = vadd.f32 %v8134, %v8422
  %v8424 = vpop.f32.mrf.mxu0
  %v8425 = vpop.f32.mrf.mxu0
  %v8426 = vadd.f32 %v8137, %v8425
  %v8427 = vpop.f32.mrf.mxu0
  %8428 = vmatprep.mubr.bf16.mxu0 %v6546
  %8429 = vmatmul.mubr.bf16.gmra.mxu0 %v6545
  %v8430 = vpop.f32.mrf.mxu0
  %v8431 = vadd.f32 %v8142, %v8430
  %v8432 = vpop.f32.mrf.mxu0
  %v8433 = vpop.f32.mrf.mxu0
  %v8434 = vadd.f32 %v8145, %v8433
  %v8435 = vpop.f32.mrf.mxu0
  %8436 = vmatprep.mubr.bf16.mxu0 %v6555
  %8437 = vmatmul.mubr.bf16.gmra.mxu0 %v6554
  %v8438 = vpop.f32.mrf.mxu0
  %v8439 = vadd.f32 %v8150, %v8438
  %v8440 = vpop.f32.mrf.mxu0
  %v8441 = vpop.f32.mrf.mxu0
  %v8442 = vadd.f32 %v8153, %v8441
  %v8443 = vpop.f32.mrf.mxu0
  %8444 = vmatprep.mubr.bf16.mxu0 %v6564
  %8445 = vmatmul.mubr.bf16.gmra.mxu0 %v6563
  %v8446 = vpop.f32.mrf.mxu0
  %v8447 = vadd.f32 %v8158, %v8446
  %v8448 = vpop.f32.mrf.mxu0
  %v8449 = vpop.f32.mrf.mxu0
  %v8450 = vadd.f32 %v8161, %v8449
  %v8451 = vpop.f32.mrf.mxu0
  %8452 = vmatprep.mubr.bf16.mxu0 %v6573
  %8453 = vmatmul.mubr.bf16.gmra.mxu0 %v6572
  %v8454 = vpop.f32.mrf.mxu0
  %v8455 = vadd.f32 %v8166, %v8454
  %v8456 = vpop.f32.mrf.mxu0
  %v8457 = vpop.f32.mrf.mxu0
  %v8458 = vadd.f32 %v8169, %v8457
  %v8459 = vpop.f32.mrf.mxu0
  %8460 = vmatprep.mubr.bf16.mxu0 %v6582
  %8461 = vmatmul.mubr.bf16.gmra.mxu0 %v6581
  %v8462 = vpop.f32.mrf.mxu0
  %v8463 = vadd.f32 %v8174, %v8462
  %v8464 = vpop.f32.mrf.mxu0
  %v8465 = vpop.f32.mrf.mxu0
  %v8466 = vadd.f32 %v8177, %v8465
  %v8467 = vpop.f32.mrf.mxu0
  %8468 = vmatprep.mubr.bf16.mxu0 %v6591
  %8469 = vmatmul.mubr.bf16.gmra.mxu0 %v6590
  %v8470 = vpop.f32.mrf.mxu0
  %v8471 = vadd.f32 %v8182, %v8470
  %v8472 = vpop.f32.mrf.mxu0
  %v8473 = vpop.f32.mrf.mxu0
  %v8474 = vadd.f32 %v8185, %v8473
  %v8475 = vpop.f32.mrf.mxu0
  %8476 = vmatprep.mubr.bf16.mxu0 %v6600
  %8477 = vmatmul.mubr.bf16.gmra.mxu0 %v6599
  %v8478 = vpop.f32.mrf.mxu0
  %v8479 = vadd.f32 %v8190, %v8478
  %v8480 = vpop.f32.mrf.mxu0
  %v8481 = vpop.f32.mrf.mxu0
  %v8482 = vadd.f32 %v8193, %v8481
  %v8483 = vpop.f32.mrf.mxu0
  %8484 = vmatprep.mubr.bf16.mxu0 %v6609
  %8485 = vmatmul.mubr.bf16.gmra.mxu0 %v6608
  %v8486 = vpop.f32.mrf.mxu0
  %v8487 = vadd.f32 %v8198, %v8486
  %v8488 = vpop.f32.mrf.mxu0
  %v8489 = vpop.f32.mrf.mxu0
  %v8490 = vadd.f32 %v8201, %v8489
  %v8491 = vpop.f32.mrf.mxu0
  %8492 = vmatprep.mubr.bf16.mxu0 %v6618
  %8493 = vmatmul.mubr.bf16.gmra.mxu0 %v6617
  %v8494 = vpop.f32.mrf.mxu0
  %v8495 = vadd.f32 %v8206, %v8494
  %v8496 = vpop.f32.mrf.mxu0
  %v8497 = vpop.f32.mrf.mxu0
  %v8498 = vadd.f32 %v8209, %v8497
  %v8499 = vpop.f32.mrf.mxu0
  %8500 = vmatprep.mubr.bf16.mxu0 %v6627
  %8501 = vmatmul.mubr.bf16.gmra.mxu0 %v6626
  %v8502 = vpop.f32.mrf.mxu0
  %v8503 = vadd.f32 %v8214, %v8502
  %v8504 = vpop.f32.mrf.mxu0
  %v8505 = vpop.f32.mrf.mxu0
  %v8506 = vadd.f32 %v8217, %v8505
  %v8507 = vpop.f32.mrf.mxu0
  %8508 = vmatprep.mubr.bf16.mxu0 %v6636
  %8509 = vmatmul.mubr.bf16.gmra.mxu0 %v6635
  %v8510 = vpop.f32.mrf.mxu0
  %v8511 = vadd.f32 %v8222, %v8510
  %v8512 = vpop.f32.mrf.mxu0
  %v8513 = vpop.f32.mrf.mxu0
  %v8514 = vadd.f32 %v8225, %v8513
  %v8515 = vpop.f32.mrf.mxu0
  %8516 = vmatprep.mubr.bf16.mxu0 %v6645
  %8517 = vmatmul.mubr.bf16.gmra.mxu0 %v6644
  %v8518 = vpop.f32.mrf.mxu0
  %v8519 = vadd.f32 %v8230, %v8518
  %v8520 = vpop.f32.mrf.mxu0
  %v8521 = vpop.f32.mrf.mxu0
  %v8522 = vadd.f32 %v8233, %v8521
  %v8523 = vpop.f32.mrf.mxu0
  %8524 = vmatprep.mubr.bf16.mxu0 %v6654
  %8525 = vmatmul.mubr.bf16.gmra.mxu0 %v6653
  %v8526 = vpop.f32.mrf.mxu0
  %v8527 = vadd.f32 %v8238, %v8526
  %v8528 = vpop.f32.mrf.mxu0
  %v8529 = vpop.f32.mrf.mxu0
  %v8530 = vadd.f32 %v8241, %v8529
  %v8531 = vpop.f32.mrf.mxu0
  %8532 = vmatprep.mubr.bf16.mxu0 %v6663
  %8533 = vmatmul.mubr.bf16.gmra.mxu0 %v6662
  %v8534 = vpop.f32.mrf.mxu0
  %v8535 = vadd.f32 %v8246, %v8534
  %v8536 = vpop.f32.mrf.mxu0
  %v8537 = vpop.f32.mrf.mxu0
  %v8538 = vadd.f32 %v8249, %v8537
  %v8539 = vpop.f32.mrf.mxu0
  %8540 = vdwg.mxu0
  %8541 = vmatprep.subr.bf16.mxu0 0
  %8542 = vmatpush1.bf16.msra.mxu0 %v7312
  %8543 = vmatprep.subr.bf16.mxu0 0
  %8544 = vmatpush1.bf16.msra.mxu0 %v7311
  %8545 = vmatprep.subr.bf16.mxu0 0
  %8546 = vmatpush1.bf16.msra.mxu0 %v7310
  %8547 = vmatprep.subr.bf16.mxu0 0
  %8548 = vmatpush1.bf16.msra.mxu0 %v7309
  %8549 = vmatprep.subr.bf16.mxu0 0
  %8550 = vmatpush1.bf16.msra.mxu0 %v7308
  %8551 = vmatprep.subr.bf16.mxu0 0
  %8552 = vmatpush1.bf16.msra.mxu0 %v7307
  %8553 = vmatprep.subr.bf16.mxu0 0
  %8554 = vmatpush1.bf16.msra.mxu0 %v7306
  %8555 = vmatprep.subr.bf16.mxu0 0
  %8556 = vmatpush1.bf16.msra.mxu0 %v7305
  %8557 = vmatprep.subr.bf16.mxu0 0
  %8558 = vmatpush2.bf16.msra.mxu0 0
  %8559 = vmatprep.subr.bf16.mxu0 0
  %8560 = vmatpush2.bf16.msra.mxu0 0
  %8561 = vmatprep.subr.bf16.mxu0 0
  %8562 = vmatpush2.bf16.msra.mxu0 0
  %8563 = vmatprep.subr.bf16.mxu0 0
  %8564 = vmatpush2.bf16.msra.mxu0 0
  %8565 = vmatprep.subr.bf16.mxu0 0
  %8566 = vmatpush2.bf16.msra.mxu0 0
  %8567 = vmatprep.subr.bf16.mxu0 0
  %8568 = vmatpush2.bf16.msra.mxu0 0
  %8569 = vmatprep.subr.bf16.mxu0 0
  %8570 = vmatpush2.bf16.msra.mxu0 0
  %8571 = vmatprep.subr.bf16.mxu0 0
  %8572 = vmatpush2.bf16.msra.mxu0 0
  %8573 = vmatprep.mubr.bf16.mxu0 0
  %8574 = vmatmul.mubr.bf16.gmra.mxu0 %v6385
  %v8575 = vpop.f32.mrf.mxu0
  %v8576 = vadd.f32 %v8287, %v8575
  %v8577 = vpop.f32.mrf.mxu0
  %v8578 = vpop.f32.mrf.mxu0
  %v8579 = vadd.f32 %v8290, %v8578
  %v8580 = vpop.f32.mrf.mxu0
  %8581 = vmatprep.mubr.bf16.mxu0 0
  %8582 = vmatmul.mubr.bf16.gmra.mxu0 %v6394
  %v8583 = vpop.f32.mrf.mxu0
  %v8584 = vadd.f32 %v8295, %v8583
  %v8585 = vpop.f32.mrf.mxu0
  %v8586 = vpop.f32.mrf.mxu0
  %v8587 = vadd.f32 %v8298, %v8586
  %v8588 = vpop.f32.mrf.mxu0
  %8589 = vmatprep.mubr.bf16.mxu0 0
  %8590 = vmatmul.mubr.bf16.gmra.mxu0 %v6403
  %v8591 = vpop.f32.mrf.mxu0
  %v8592 = vadd.f32 %v8303, %v8591
  %v8593 = vpop.f32.mrf.mxu0
  %v8594 = vpop.f32.mrf.mxu0
  %v8595 = vadd.f32 %v8306, %v8594
  %v8596 = vpop.f32.mrf.mxu0
  %8597 = vmatprep.mubr.bf16.mxu0 0
  %8598 = vmatmul.mubr.bf16.gmra.mxu0 %v6412
  %v8599 = vpop.f32.mrf.mxu0
  %v8600 = vadd.f32 %v8311, %v8599
  %v8601 = vpop.f32.mrf.mxu0
  %v8602 = vpop.f32.mrf.mxu0
  %v8603 = vadd.f32 %v8314, %v8602
  %v8604 = vpop.f32.mrf.mxu0
  %8605 = vmatprep.mubr.bf16.mxu0 0
  %8606 = vmatmul.mubr.bf16.gmra.mxu0 %v6421
  %v8607 = vpop.f32.mrf.mxu0
  %v8608 = vadd.f32 %v8319, %v8607
  %v8609 = vpop.f32.mrf.mxu0
  %v8610 = vpop.f32.mrf.mxu0
  %v8611 = vadd.f32 %v8322, %v8610
  %v8612 = vpop.f32.mrf.mxu0
  %8613 = vmatprep.mubr.bf16.mxu0 0
  %8614 = vmatmul.mubr.bf16.gmra.mxu0 %v6430
  %v8615 = vpop.f32.mrf.mxu0
  %v8616 = vadd.f32 %v8327, %v8615
  %v8617 = vpop.f32.mrf.mxu0
  %v8618 = vpop.f32.mrf.mxu0
  %v8619 = vadd.f32 %v8330, %v8618
  %v8620 = vpop.f32.mrf.mxu0
  %8621 = vmatprep.mubr.bf16.mxu0 0
  %8622 = vmatmul.mubr.bf16.gmra.mxu0 %v6439
  %v8623 = vpop.f32.mrf.mxu0
  %v8624 = vadd.f32 %v8335, %v8623
  %v8625 = vpop.f32.mrf.mxu0
  %v8626 = vpop.f32.mrf.mxu0
  %v8627 = vadd.f32 %v8338, %v8626
  %v8628 = vpop.f32.mrf.mxu0
  %8629 = vmatprep.mubr.bf16.mxu0 0
  %8630 = vmatmul.mubr.bf16.gmra.mxu0 %v6448
  %v8631 = vpop.f32.mrf.mxu0
  %v8632 = vadd.f32 %v8343, %v8631
  %v8633 = vpop.f32.mrf.mxu0
  %v8634 = vpop.f32.mrf.mxu0
  %v8635 = vadd.f32 %v8346, %v8634
  %v8636 = vpop.f32.mrf.mxu0
  %8637 = vmatprep.mubr.bf16.mxu0 0
  %8638 = vmatmul.mubr.bf16.gmra.mxu0 %v6457
  %v8639 = vpop.f32.mrf.mxu0
  %v8640 = vadd.f32 %v8351, %v8639
  %v8641 = vpop.f32.mrf.mxu0
  %v8642 = vpop.f32.mrf.mxu0
  %v8643 = vadd.f32 %v8354, %v8642
  %v8644 = vpop.f32.mrf.mxu0
  %8645 = vmatprep.mubr.bf16.mxu0 0
  %8646 = vmatmul.mubr.bf16.gmra.mxu0 %v6466
  %v8647 = vpop.f32.mrf.mxu0
  %v8648 = vadd.f32 %v8359, %v8647
  %v8649 = vpop.f32.mrf.mxu0
  %v8650 = vpop.f32.mrf.mxu0
  %v8651 = vadd.f32 %v8362, %v8650
  %v8652 = vpop.f32.mrf.mxu0
  %8653 = vmatprep.mubr.bf16.mxu0 0
  %8654 = vmatmul.mubr.bf16.gmra.mxu0 %v6475
  %v8655 = vpop.f32.mrf.mxu0
  %v8656 = vadd.f32 %v8367, %v8655
  %v8657 = vpop.f32.mrf.mxu0
  %v8658 = vpop.f32.mrf.mxu0
  %v8659 = vadd.f32 %v8370, %v8658
  %v8660 = vpop.f32.mrf.mxu0
  %8661 = vmatprep.mubr.bf16.mxu0 0
  %8662 = vmatmul.mubr.bf16.gmra.mxu0 %v6484
  %v8663 = vpop.f32.mrf.mxu0
  %v8664 = vadd.f32 %v8375, %v8663
  %v8665 = vpop.f32.mrf.mxu0
  %v8666 = vpop.f32.mrf.mxu0
  %v8667 = vadd.f32 %v8378, %v8666
  %v8668 = vpop.f32.mrf.mxu0
  %8669 = vmatprep.mubr.bf16.mxu0 0
  %8670 = vmatmul.mubr.bf16.gmra.mxu0 %v6493
  %v8671 = vpop.f32.mrf.mxu0
  %v8672 = vadd.f32 %v8383, %v8671
  %v8673 = vpop.f32.mrf.mxu0
  %v8674 = vpop.f32.mrf.mxu0
  %v8675 = vadd.f32 %v8386, %v8674
  %v8676 = vpop.f32.mrf.mxu0
  %8677 = vmatprep.mubr.bf16.mxu0 0
  %8678 = vmatmul.mubr.bf16.gmra.mxu0 %v6502
  %v8679 = vpop.f32.mrf.mxu0
  %v8680 = vadd.f32 %v8391, %v8679
  %v8681 = vpop.f32.mrf.mxu0
  %v8682 = vpop.f32.mrf.mxu0
  %v8683 = vadd.f32 %v8394, %v8682
  %v8684 = vpop.f32.mrf.mxu0
  %8685 = vmatprep.mubr.bf16.mxu0 0
  %8686 = vmatmul.mubr.bf16.gmra.mxu0 %v6511
  %v8687 = vpop.f32.mrf.mxu0
  %v8688 = vadd.f32 %v8399, %v8687
  %v8689 = vpop.f32.mrf.mxu0
  %v8690 = vpop.f32.mrf.mxu0
  %v8691 = vadd.f32 %v8402, %v8690
  %v8692 = vpop.f32.mrf.mxu0
  %8693 = vmatprep.mubr.bf16.mxu0 0
  %8694 = vmatmul.mubr.bf16.gmra.mxu0 %v6520
  %v8695 = vpop.f32.mrf.mxu0
  %v8696 = vadd.f32 %v8407, %v8695
  %v8697 = vpop.f32.mrf.mxu0
  %v8698 = vpop.f32.mrf.mxu0
  %v8699 = vadd.f32 %v8410, %v8698
  %v8700 = vpop.f32.mrf.mxu0
  %8701 = vmatprep.mubr.bf16.mxu0 0
  %8702 = vmatmul.mubr.bf16.gmra.mxu0 %v6529
  %v8703 = vpop.f32.mrf.mxu0
  %v8704 = vadd.f32 %v8415, %v8703
  %v8705 = vpop.f32.mrf.mxu0
  %v8706 = vpop.f32.mrf.mxu0
  %v8707 = vadd.f32 %v8418, %v8706
  %v8708 = vpop.f32.mrf.mxu0
  %8709 = vmatprep.mubr.bf16.mxu0 0
  %8710 = vmatmul.mubr.bf16.gmra.mxu0 %v6538
  %v8711 = vpop.f32.mrf.mxu0
  %v8712 = vadd.f32 %v8423, %v8711
  %v8713 = vpop.f32.mrf.mxu0
  %v8714 = vpop.f32.mrf.mxu0
  %v8715 = vadd.f32 %v8426, %v8714
  %v8716 = vpop.f32.mrf.mxu0
  %8717 = vmatprep.mubr.bf16.mxu0 0
  %8718 = vmatmul.mubr.bf16.gmra.mxu0 %v6547
  %v8719 = vpop.f32.mrf.mxu0
  %v8720 = vadd.f32 %v8431, %v8719
  %v8721 = vpop.f32.mrf.mxu0
  %v8722 = vpop.f32.mrf.mxu0
  %v8723 = vadd.f32 %v8434, %v8722
  %v8724 = vpop.f32.mrf.mxu0
  %8725 = vmatprep.mubr.bf16.mxu0 0
  %8726 = vmatmul.mubr.bf16.gmra.mxu0 %v6556
  %v8727 = vpop.f32.mrf.mxu0
  %v8728 = vadd.f32 %v8439, %v8727
  %v8729 = vpop.f32.mrf.mxu0
  %v8730 = vpop.f32.mrf.mxu0
  %v8731 = vadd.f32 %v8442, %v8730
  %v8732 = vpop.f32.mrf.mxu0
  %8733 = vmatprep.mubr.bf16.mxu0 0
  %8734 = vmatmul.mubr.bf16.gmra.mxu0 %v6565
  %v8735 = vpop.f32.mrf.mxu0
  %v8736 = vadd.f32 %v8447, %v8735
  %v8737 = vpop.f32.mrf.mxu0
  %v8738 = vpop.f32.mrf.mxu0
  %v8739 = vadd.f32 %v8450, %v8738
  %v8740 = vpop.f32.mrf.mxu0
  %8741 = vmatprep.mubr.bf16.mxu0 0
  %8742 = vmatmul.mubr.bf16.gmra.mxu0 %v6574
  %v8743 = vpop.f32.mrf.mxu0
  %v8744 = vadd.f32 %v8455, %v8743
  %v8745 = vpop.f32.mrf.mxu0
  %v8746 = vpop.f32.mrf.mxu0
  %v8747 = vadd.f32 %v8458, %v8746
  %v8748 = vpop.f32.mrf.mxu0
  %8749 = vmatprep.mubr.bf16.mxu0 0
  %8750 = vmatmul.mubr.bf16.gmra.mxu0 %v6583
  %v8751 = vpop.f32.mrf.mxu0
  %v8752 = vadd.f32 %v8463, %v8751
  %v8753 = vpop.f32.mrf.mxu0
  %v8754 = vpop.f32.mrf.mxu0
  %v8755 = vadd.f32 %v8466, %v8754
  %v8756 = vpop.f32.mrf.mxu0
  %8757 = vmatprep.mubr.bf16.mxu0 0
  %8758 = vmatmul.mubr.bf16.gmra.mxu0 %v6592
  %v8759 = vpop.f32.mrf.mxu0
  %v8760 = vadd.f32 %v8471, %v8759
  %v8761 = vpop.f32.mrf.mxu0
  %v8762 = vpop.f32.mrf.mxu0
  %v8763 = vadd.f32 %v8474, %v8762
  %v8764 = vpop.f32.mrf.mxu0
  %8765 = vmatprep.mubr.bf16.mxu0 0
  %8766 = vmatmul.mubr.bf16.gmra.mxu0 %v6601
  %v8767 = vpop.f32.mrf.mxu0
  %v8768 = vadd.f32 %v8479, %v8767
  %v8769 = vpop.f32.mrf.mxu0
  %v8770 = vpop.f32.mrf.mxu0
  %v8771 = vadd.f32 %v8482, %v8770
  %v8772 = vpop.f32.mrf.mxu0
  %8773 = vmatprep.mubr.bf16.mxu0 0
  %8774 = vmatmul.mubr.bf16.gmra.mxu0 %v6610
  %v8775 = vpop.f32.mrf.mxu0
  %v8776 = vadd.f32 %v8487, %v8775
  %v8777 = vpop.f32.mrf.mxu0
  %v8778 = vpop.f32.mrf.mxu0
  %v8779 = vadd.f32 %v8490, %v8778
  %v8780 = vpop.f32.mrf.mxu0
  %8781 = vmatprep.mubr.bf16.mxu0 0
  %8782 = vmatmul.mubr.bf16.gmra.mxu0 %v6619
  %v8783 = vpop.f32.mrf.mxu0
  %v8784 = vadd.f32 %v8495, %v8783
  %v8785 = vpop.f32.mrf.mxu0
  %v8786 = vpop.f32.mrf.mxu0
  %v8787 = vadd.f32 %v8498, %v8786
  %v8788 = vpop.f32.mrf.mxu0
  %8789 = vmatprep.mubr.bf16.mxu0 0
  %8790 = vmatmul.mubr.bf16.gmra.mxu0 %v6628
  %v8791 = vpop.f32.mrf.mxu0
  %v8792 = vadd.f32 %v8503, %v8791
  %v8793 = vpop.f32.mrf.mxu0
  %v8794 = vpop.f32.mrf.mxu0
  %v8795 = vadd.f32 %v8506, %v8794
  %v8796 = vpop.f32.mrf.mxu0
  %8797 = vmatprep.mubr.bf16.mxu0 0
  %8798 = vmatmul.mubr.bf16.gmra.mxu0 %v6637
  %v8799 = vpop.f32.mrf.mxu0
  %v8800 = vadd.f32 %v8511, %v8799
  %v8801 = vpop.f32.mrf.mxu0
  %v8802 = vpop.f32.mrf.mxu0
  %v8803 = vadd.f32 %v8514, %v8802
  %v8804 = vpop.f32.mrf.mxu0
  %8805 = vmatprep.mubr.bf16.mxu0 0
  %8806 = vmatmul.mubr.bf16.gmra.mxu0 %v6646
  %v8807 = vpop.f32.mrf.mxu0
  %v8808 = vadd.f32 %v8519, %v8807
  %v8809 = vpop.f32.mrf.mxu0
  %v8810 = vpop.f32.mrf.mxu0
  %v8811 = vadd.f32 %v8522, %v8810
  %v8812 = vpop.f32.mrf.mxu0
  %8813 = vmatprep.mubr.bf16.mxu0 0
  %8814 = vmatmul.mubr.bf16.gmra.mxu0 %v6655
  %v8815 = vpop.f32.mrf.mxu0
  %v8816 = vadd.f32 %v8527, %v8815
  %v8817 = vpop.f32.mrf.mxu0
  %v8818 = vpop.f32.mrf.mxu0
  %v8819 = vadd.f32 %v8530, %v8818
  %v8820 = vpop.f32.mrf.mxu0
  %8821 = vmatprep.mubr.bf16.mxu0 0
  %8822 = vmatmul.mubr.bf16.gmra.mxu0 %v6664
  %v8823 = vpop.f32.mrf.mxu0
  %v8824 = vadd.f32 %v8535, %v8823
  %v8825 = vpop.f32.mrf.mxu0
  %v8826 = vpop.f32.mrf.mxu0
  %v8827 = vadd.f32 %v8538, %v8826
  %v8828 = vpop.f32.mrf.mxu0
  %8829 = vdwg.mxu0
  %v8830 = vadd.f32 %v8576, %v8579
  %v8831 = vadd.f32 %v8830, %v8584
  %v8832 = vadd.f32 %v8831, %v8587
  %v8833 = vadd.f32 %v8832, %v8592
  %v8834 = vadd.f32 %v8833, %v8595
  %v8835 = vadd.f32 %v8834, %v8600
  %v8836 = vadd.f32 %v8835, %v8603
  %v8837 = vadd.f32 %v8836, %v8608
  %v8838 = vadd.f32 %v8837, %v8611
  %v8839 = vadd.f32 %v8838, %v8616
  %v8840 = vadd.f32 %v8839, %v8619
  %v8841 = vadd.f32 %v8840, %v8624
  %v8842 = vadd.f32 %v8841, %v8627
  %v8843 = vadd.f32 %v8842, %v8632
  %v8844 = vadd.f32 %v8843, %v8635
  %v8845 = vadd.f32 %v8844, %v8640
  %v8846 = vadd.f32 %v8845, %v8643
  %v8847 = vadd.f32 %v8846, %v8648
  %v8848 = vadd.f32 %v8847, %v8651
  %v8849 = vadd.f32 %v8848, %v8656
  %v8850 = vadd.f32 %v8849, %v8659
  %v8851 = vadd.f32 %v8850, %v8664
  %v8852 = vadd.f32 %v8851, %v8667
  %v8853 = vadd.f32 %v8852, %v8672
  %v8854 = vadd.f32 %v8853, %v8675
  %v8855 = vadd.f32 %v8854, %v8680
  %v8856 = vadd.f32 %v8855, %v8683
  %v8857 = vadd.f32 %v8856, %v8688
  %v8858 = vadd.f32 %v8857, %v8691
  %v8859 = vadd.f32 %v8858, %v8696
  %v8860 = vadd.f32 %v8859, %v8699
  %v8861 = vadd.f32 %v8860, %v8704
  %v8862 = vadd.f32 %v8861, %v8707
  %v8863 = vadd.f32 %v8862, %v8712
  %v8864 = vadd.f32 %v8863, %v8715
  %v8865 = vadd.f32 %v8864, %v8720
  %v8866 = vadd.f32 %v8865, %v8723
  %v8867 = vadd.f32 %v8866, %v8728
  %v8868 = vadd.f32 %v8867, %v8731
  %v8869 = vadd.f32 %v8868, %v8736
  %v8870 = vadd.f32 %v8869, %v8739
  %v8871 = vadd.f32 %v8870, %v8744
  %v8872 = vadd.f32 %v8871, %v8747
  %v8873 = vadd.f32 %v8872, %v8752
  %v8874 = vadd.f32 %v8873, %v8755
  %v8875 = vadd.f32 %v8874, %v8760
  %v8876 = vadd.f32 %v8875, %v8763
  %v8877 = vadd.f32 %v8876, %v8768
  %v8878 = vadd.f32 %v8877, %v8771
  %v8879 = vadd.f32 %v8878, %v8776
  %v8880 = vadd.f32 %v8879, %v8779
  %v8881 = vadd.f32 %v8880, %v8784
  %v8882 = vadd.f32 %v8881, %v8787
  %v8883 = vadd.f32 %v8882, %v8792
  %v8884 = vadd.f32 %v8883, %v8795
  %v8885 = vadd.f32 %v8884, %v8800
  %v8886 = vadd.f32 %v8885, %v8803
  %v8887 = vadd.f32 %v8886, %v8808
  %v8888 = vadd.f32 %v8887, %v8811
  %v8889 = vadd.f32 %v8888, %v8816
  %v8890 = vadd.f32 %v8889, %v8819
  %v8891 = vadd.f32 %v8890, %v8824
  %v8892 = vadd.f32 %v8891, %v8827
  %v8893 = vrot.slane %v8892, 4
  %v8894 = vadd.f32 %v8892, %v8893
  %v8895 = vrot.slane %v8894, 2
  %v8896 = vadd.f32 %v8894, %v8895
  %v8897 = vrot.slane %v8896, 1
  %v8898 = vadd.f32 %v8896, %v8897
  %v8899 = vmul.f32 %v8898, 0.001953125
  %v8900 = vmul.f32 %v8576, %v8576
  %v8901 = vmul.f32 %v8579, %v8579
  %v8902 = vmul.f32 %v8584, %v8584
  %v8903 = vmul.f32 %v8587, %v8587
  %v8904 = vmul.f32 %v8592, %v8592
  %v8905 = vmul.f32 %v8595, %v8595
  %v8906 = vmul.f32 %v8600, %v8600
  %v8907 = vmul.f32 %v8603, %v8603
  %v8908 = vmul.f32 %v8608, %v8608
  %v8909 = vmul.f32 %v8611, %v8611
  %v8910 = vmul.f32 %v8616, %v8616
  %v8911 = vmul.f32 %v8619, %v8619
  %v8912 = vmul.f32 %v8624, %v8624
  %v8913 = vmul.f32 %v8627, %v8627
  %v8914 = vmul.f32 %v8632, %v8632
  %v8915 = vmul.f32 %v8635, %v8635
  %v8916 = vmul.f32 %v8640, %v8640
  %v8917 = vmul.f32 %v8643, %v8643
  %v8918 = vmul.f32 %v8648, %v8648
  %v8919 = vmul.f32 %v8651, %v8651
  %v8920 = vmul.f32 %v8656, %v8656
  %v8921 = vmul.f32 %v8659, %v8659
  %v8922 = vmul.f32 %v8664, %v8664
  %v8923 = vmul.f32 %v8667, %v8667
  %v8924 = vmul.f32 %v8672, %v8672
  %v8925 = vmul.f32 %v8675, %v8675
  %v8926 = vmul.f32 %v8680, %v8680
  %v8927 = vmul.f32 %v8683, %v8683
  %v8928 = vmul.f32 %v8688, %v8688
  %v8929 = vmul.f32 %v8691, %v8691
  %v8930 = vmul.f32 %v8696, %v8696
  %v8931 = vmul.f32 %v8699, %v8699
  %v8932 = vmul.f32 %v8704, %v8704
  %v8933 = vmul.f32 %v8707, %v8707
  %v8934 = vmul.f32 %v8712, %v8712
  %v8935 = vmul.f32 %v8715, %v8715
  %v8936 = vmul.f32 %v8720, %v8720
  %v8937 = vmul.f32 %v8723, %v8723
  %v8938 = vmul.f32 %v8728, %v8728
  %v8939 = vmul.f32 %v8731, %v8731
  %v8940 = vmul.f32 %v8736, %v8736
  %v8941 = vmul.f32 %v8739, %v8739
  %v8942 = vmul.f32 %v8744, %v8744
  %v8943 = vmul.f32 %v8747, %v8747
  %v8944 = vmul.f32 %v8752, %v8752
  %v8945 = vmul.f32 %v8755, %v8755
  %v8946 = vmul.f32 %v8760, %v8760
  %v8947 = vmul.f32 %v8763, %v8763
  %v8948 = vmul.f32 %v8768, %v8768
  %v8949 = vmul.f32 %v8771, %v8771
  %v8950 = vmul.f32 %v8776, %v8776
  %v8951 = vmul.f32 %v8779, %v8779
  %v8952 = vmul.f32 %v8784, %v8784
  %v8953 = vmul.f32 %v8787, %v8787
  %v8954 = vmul.f32 %v8792, %v8792
  %v8955 = vmul.f32 %v8795, %v8795
  %v8956 = vmul.f32 %v8800, %v8800
  %v8957 = vmul.f32 %v8803, %v8803
  %v8958 = vmul.f32 %v8808, %v8808
  %v8959 = vmul.f32 %v8811, %v8811
  %v8960 = vmul.f32 %v8816, %v8816
  %v8961 = vmul.f32 %v8819, %v8819
  %v8962 = vmul.f32 %v8824, %v8824
  %v8963 = vmul.f32 %v8827, %v8827
  %v8964 = vadd.f32 %v8900, %v8901
  %v8965 = vadd.f32 %v8964, %v8902
  %v8966 = vadd.f32 %v8965, %v8903
  %v8967 = vadd.f32 %v8966, %v8904
  %v8968 = vadd.f32 %v8967, %v8905
  %v8969 = vadd.f32 %v8968, %v8906
  %v8970 = vadd.f32 %v8969, %v8907
  %v8971 = vadd.f32 %v8970, %v8908
  %v8972 = vadd.f32 %v8971, %v8909
  %v8973 = vadd.f32 %v8972, %v8910
  %v8974 = vadd.f32 %v8973, %v8911
  %v8975 = vadd.f32 %v8974, %v8912
  %v8976 = vadd.f32 %v8975, %v8913
  %v8977 = vadd.f32 %v8976, %v8914
  %v8978 = vadd.f32 %v8977, %v8915
  %v8979 = vadd.f32 %v8978, %v8916
  %v8980 = vadd.f32 %v8979, %v8917
  %v8981 = vadd.f32 %v8980, %v8918
  %v8982 = vadd.f32 %v8981, %v8919
  %v8983 = vadd.f32 %v8982, %v8920
  %v8984 = vadd.f32 %v8983, %v8921
  %v8985 = vadd.f32 %v8984, %v8922
  %v8986 = vadd.f32 %v8985, %v8923
  %v8987 = vadd.f32 %v8986, %v8924
  %v8988 = vadd.f32 %v8987, %v8925
  %v8989 = vadd.f32 %v8988, %v8926
  %v8990 = vadd.f32 %v8989, %v8927
  %v8991 = vadd.f32 %v8990, %v8928
  %v8992 = vadd.f32 %v8991, %v8929
  %v8993 = vadd.f32 %v8992, %v8930
  %v8994 = vadd.f32 %v8993, %v8931
  %v8995 = vadd.f32 %v8994, %v8932
  %v8996 = vadd.f32 %v8995, %v8933
  %v8997 = vadd.f32 %v8996, %v8934
  %v8998 = vadd.f32 %v8997, %v8935
  %v8999 = vadd.f32 %v8998, %v8936
  %v9000 = vadd.f32 %v8999, %v8937
  %v9001 = vadd.f32 %v9000, %v8938
  %v9002 = vadd.f32 %v9001, %v8939
  %v9003 = vadd.f32 %v9002, %v8940
  %v9004 = vadd.f32 %v9003, %v8941
  %v9005 = vadd.f32 %v9004, %v8942
  %v9006 = vadd.f32 %v9005, %v8943
  %v9007 = vadd.f32 %v9006, %v8944
  %v9008 = vadd.f32 %v9007, %v8945
  %v9009 = vadd.f32 %v9008, %v8946
  %v9010 = vadd.f32 %v9009, %v8947
  %v9011 = vadd.f32 %v9010, %v8948
  %v9012 = vadd.f32 %v9011, %v8949
  %v9013 = vadd.f32 %v9012, %v8950
  %v9014 = vadd.f32 %v9013, %v8951
  %v9015 = vadd.f32 %v9014, %v8952
  %v9016 = vadd.f32 %v9015, %v8953
  %v9017 = vadd.f32 %v9016, %v8954
  %v9018 = vadd.f32 %v9017, %v8955
  %v9019 = vadd.f32 %v9018, %v8956
  %v9020 = vadd.f32 %v9019, %v8957
  %v9021 = vadd.f32 %v9020, %v8958
  %v9022 = vadd.f32 %v9021, %v8959
  %v9023 = vadd.f32 %v9022, %v8960
  %v9024 = vadd.f32 %v9023, %v8961
  %v9025 = vadd.f32 %v9024, %v8962
  %v9026 = vadd.f32 %v9025, %v8963
  %v9027 = vrot.slane %v9026, 4
  %v9028 = vadd.f32 %v9026, %v9027
  %v9029 = vrot.slane %v9028, 2
  %v9030 = vadd.f32 %v9028, %v9029
  %v9031 = vrot.slane %v9030, 1
  %v9032 = vadd.f32 %v9030, %v9031
  %v9033 = vmul.f32 %v9032, 0.001953125
  %v9034 = vmul.f32 %v8899, %v8899
  %v9035 = vsub.f32 %v9033, %v9034
  %v9036 = vmax.f32 %v9035, 0.0
  %v9037 = vld [vmem:[%s2] sm:$0x1]
  %v9038 = vld [vmem:[%s2 + $0x1] sm:$0x1]
  %v9039 = vsub.f32 %v8576, %v8899
  %v9040 = vsub.f32 %v8579, %v8899
  %v9041 = vsub.f32 %v8584, %v8899
  %v9042 = vsub.f32 %v8587, %v8899
  %v9043 = vsub.f32 %v8592, %v8899
  %v9044 = vsub.f32 %v8595, %v8899
  %v9045 = vsub.f32 %v8600, %v8899
  %v9046 = vsub.f32 %v8603, %v8899
  %v9047 = vsub.f32 %v8608, %v8899
  %v9048 = vsub.f32 %v8611, %v8899
  %v9049 = vsub.f32 %v8616, %v8899
  %v9050 = vsub.f32 %v8619, %v8899
  %v9051 = vsub.f32 %v8624, %v8899
  %v9052 = vsub.f32 %v8627, %v8899
  %v9053 = vsub.f32 %v8632, %v8899
  %v9054 = vsub.f32 %v8635, %v8899
  %v9055 = vsub.f32 %v8640, %v8899
  %v9056 = vsub.f32 %v8643, %v8899
  %v9057 = vsub.f32 %v8648, %v8899
  %v9058 = vsub.f32 %v8651, %v8899
  %v9059 = vsub.f32 %v8656, %v8899
  %v9060 = vsub.f32 %v8659, %v8899
  %v9061 = vsub.f32 %v8664, %v8899
  %v9062 = vsub.f32 %v8667, %v8899
  %v9063 = vsub.f32 %v8672, %v8899
  %v9064 = vsub.f32 %v8675, %v8899
  %v9065 = vsub.f32 %v8680, %v8899
  %v9066 = vsub.f32 %v8683, %v8899
  %v9067 = vsub.f32 %v8688, %v8899
  %v9068 = vsub.f32 %v8691, %v8899
  %v9069 = vsub.f32 %v8696, %v8899
  %v9070 = vsub.f32 %v8699, %v8899
  %v9071 = vsub.f32 %v8704, %v8899
  %v9072 = vsub.f32 %v8707, %v8899
  %v9073 = vsub.f32 %v8712, %v8899
  %v9074 = vsub.f32 %v8715, %v8899
  %v9075 = vsub.f32 %v8720, %v8899
  %v9076 = vsub.f32 %v8723, %v8899
  %v9077 = vsub.f32 %v8728, %v8899
  %v9078 = vsub.f32 %v8731, %v8899
  %v9079 = vsub.f32 %v8736, %v8899
  %v9080 = vsub.f32 %v8739, %v8899
  %v9081 = vsub.f32 %v8744, %v8899
  %v9082 = vsub.f32 %v8747, %v8899
  %v9083 = vsub.f32 %v8752, %v8899
  %v9084 = vsub.f32 %v8755, %v8899
  %v9085 = vsub.f32 %v8760, %v8899
  %v9086 = vsub.f32 %v8763, %v8899
  %v9087 = vsub.f32 %v8768, %v8899
  %v9088 = vsub.f32 %v8771, %v8899
  %v9089 = vsub.f32 %v8776, %v8899
  %v9090 = vsub.f32 %v8779, %v8899
  %v9091 = vsub.f32 %v8784, %v8899
  %v9092 = vsub.f32 %v8787, %v8899
  %v9093 = vsub.f32 %v8792, %v8899
  %v9094 = vsub.f32 %v8795, %v8899
  %v9095 = vsub.f32 %v8800, %v8899
  %v9096 = vsub.f32 %v8803, %v8899
  %v9097 = vsub.f32 %v8808, %v8899
  %v9098 = vsub.f32 %v8811, %v8899
  %v9099 = vsub.f32 %v8816, %v8899
  %v9100 = vsub.f32 %v8819, %v8899
  %v9101 = vsub.f32 %v8824, %v8899
  %v9102 = vsub.f32 %v8827, %v8899
  %v9103 = vadd.f32 %v9036, 1e-05
  %v9104 = vrsqrt.pop %v9103
  %v9105 = vmul.f32 %v9039, %v9104
  %v9106 = vmul.f32 %v9040, %v9104
  %v9107 = vmul.f32 %v9041, %v9104
  %v9108 = vmul.f32 %v9042, %v9104
  %v9109 = vmul.f32 %v9043, %v9104
  %v9110 = vmul.f32 %v9044, %v9104
  %v9111 = vmul.f32 %v9045, %v9104
  %v9112 = vmul.f32 %v9046, %v9104
  %v9113 = vmul.f32 %v9047, %v9104
  %v9114 = vmul.f32 %v9048, %v9104
  %v9115 = vmul.f32 %v9049, %v9104
  %v9116 = vmul.f32 %v9050, %v9104
  %v9117 = vmul.f32 %v9051, %v9104
  %v9118 = vmul.f32 %v9052, %v9104
  %v9119 = vmul.f32 %v9053, %v9104
  %v9120 = vmul.f32 %v9054, %v9104
  %v9121 = vmul.f32 %v9055, %v9104
  %v9122 = vmul.f32 %v9056, %v9104
  %v9123 = vmul.f32 %v9057, %v9104
  %v9124 = vmul.f32 %v9058, %v9104
  %v9125 = vmul.f32 %v9059, %v9104
  %v9126 = vmul.f32 %v9060, %v9104
  %v9127 = vmul.f32 %v9061, %v9104
  %v9128 = vmul.f32 %v9062, %v9104
  %v9129 = vmul.f32 %v9063, %v9104
  %v9130 = vmul.f32 %v9064, %v9104
  %v9131 = vmul.f32 %v9065, %v9104
  %v9132 = vmul.f32 %v9066, %v9104
  %v9133 = vmul.f32 %v9067, %v9104
  %v9134 = vmul.f32 %v9068, %v9104
  %v9135 = vmul.f32 %v9069, %v9104
  %v9136 = vmul.f32 %v9070, %v9104
  %v9137 = vmul.f32 %v9071, %v9104
  %v9138 = vmul.f32 %v9072, %v9104
  %v9139 = vmul.f32 %v9073, %v9104
  %v9140 = vmul.f32 %v9074, %v9104
  %v9141 = vmul.f32 %v9075, %v9104
  %v9142 = vmul.f32 %v9076, %v9104
  %v9143 = vmul.f32 %v9077, %v9104
  %v9144 = vmul.f32 %v9078, %v9104
  %v9145 = vmul.f32 %v9079, %v9104
  %v9146 = vmul.f32 %v9080, %v9104
  %v9147 = vmul.f32 %v9081, %v9104
  %v9148 = vmul.f32 %v9082, %v9104
  %v9149 = vmul.f32 %v9083, %v9104
  %v9150 = vmul.f32 %v9084, %v9104
  %v9151 = vmul.f32 %v9085, %v9104
  %v9152 = vmul.f32 %v9086, %v9104
  %v9153 = vmul.f32 %v9087, %v9104
  %v9154 = vmul.f32 %v9088, %v9104
  %v9155 = vmul.f32 %v9089, %v9104
  %v9156 = vmul.f32 %v9090, %v9104
  %v9157 = vmul.f32 %v9091, %v9104
  %v9158 = vmul.f32 %v9092, %v9104
  %v9159 = vmul.f32 %v9093, %v9104
  %v9160 = vmul.f32 %v9094, %v9104
  %v9161 = vmul.f32 %v9095, %v9104
  %v9162 = vmul.f32 %v9096, %v9104
  %v9163 = vmul.f32 %v9097, %v9104
  %v9164 = vmul.f32 %v9098, %v9104
  %v9165 = vmul.f32 %v9099, %v9104
  %v9166 = vmul.f32 %v9100, %v9104
  %v9167 = vmul.f32 %v9101, %v9104
  %v9168 = vmul.f32 %v9102, %v9104
  %v9169 = vlaneseq
  %v9170 = vshrl.u32 %v9169, 7
  %v9171 = vsub.s32 0, %v9170
  %v9172 = vrot.slane %v9037, %v9171
  %v9173 = vmul.f32 %v9105, %v9172
  %v9174 = vmul.f32 %v9106, %v9172
  %v9175 = vmul.f32 %v9107, %v9172
  %v9176 = vmul.f32 %v9108, %v9172
  %v9177 = vmul.f32 %v9109, %v9172
  %v9178 = vmul.f32 %v9110, %v9172
  %v9179 = vmul.f32 %v9111, %v9172
  %v9180 = vmul.f32 %v9112, %v9172
  %v9181 = vmul.f32 %v9113, %v9172
  %v9182 = vmul.f32 %v9114, %v9172
  %v9183 = vmul.f32 %v9115, %v9172
  %v9184 = vmul.f32 %v9116, %v9172
  %v9185 = vmul.f32 %v9117, %v9172
  %v9186 = vmul.f32 %v9118, %v9172
  %v9187 = vmul.f32 %v9119, %v9172
  %v9188 = vmul.f32 %v9120, %v9172
  %v9189 = vmul.f32 %v9121, %v9172
  %v9190 = vmul.f32 %v9122, %v9172
  %v9191 = vmul.f32 %v9123, %v9172
  %v9192 = vmul.f32 %v9124, %v9172
  %v9193 = vmul.f32 %v9125, %v9172
  %v9194 = vmul.f32 %v9126, %v9172
  %v9195 = vmul.f32 %v9127, %v9172
  %v9196 = vmul.f32 %v9128, %v9172
  %v9197 = vmul.f32 %v9129, %v9172
  %v9198 = vmul.f32 %v9130, %v9172
  %v9199 = vmul.f32 %v9131, %v9172
  %v9200 = vmul.f32 %v9132, %v9172
  %v9201 = vmul.f32 %v9133, %v9172
  %v9202 = vmul.f32 %v9134, %v9172
  %v9203 = vmul.f32 %v9135, %v9172
  %v9204 = vmul.f32 %v9136, %v9172
  %v9205 = vmul.f32 %v9137, %v9172
  %v9206 = vmul.f32 %v9138, %v9172
  %v9207 = vmul.f32 %v9139, %v9172
  %v9208 = vmul.f32 %v9140, %v9172
  %v9209 = vmul.f32 %v9141, %v9172
  %v9210 = vmul.f32 %v9142, %v9172
  %v9211 = vmul.f32 %v9143, %v9172
  %v9212 = vmul.f32 %v9144, %v9172
  %v9213 = vmul.f32 %v9145, %v9172
  %v9214 = vmul.f32 %v9146, %v9172
  %v9215 = vmul.f32 %v9147, %v9172
  %v9216 = vmul.f32 %v9148, %v9172
  %v9217 = vmul.f32 %v9149, %v9172
  %v9218 = vmul.f32 %v9150, %v9172
  %v9219 = vmul.f32 %v9151, %v9172
  %v9220 = vmul.f32 %v9152, %v9172
  %v9221 = vmul.f32 %v9153, %v9172
  %v9222 = vmul.f32 %v9154, %v9172
  %v9223 = vmul.f32 %v9155, %v9172
  %v9224 = vmul.f32 %v9156, %v9172
  %v9225 = vmul.f32 %v9157, %v9172
  %v9226 = vmul.f32 %v9158, %v9172
  %v9227 = vmul.f32 %v9159, %v9172
  %v9228 = vmul.f32 %v9160, %v9172
  %v9229 = vmul.f32 %v9161, %v9172
  %v9230 = vmul.f32 %v9162, %v9172
  %v9231 = vmul.f32 %v9163, %v9172
  %v9232 = vmul.f32 %v9164, %v9172
  %v9233 = vmul.f32 %v9165, %v9172
  %v9234 = vmul.f32 %v9166, %v9172
  %v9235 = vmul.f32 %v9167, %v9172
  %v9236 = vmul.f32 %v9168, %v9172
  %v9237 = vlaneseq
  %v9238 = vshrl.u32 %v9237, 7
  %v9239 = vsub.s32 0, %v9238
  %v9240 = vrot.slane %v9038, %v9239
  %v9241 = vadd.f32 %v9173, %v9240
  %v9242 = vadd.f32 %v9174, %v9240
  %v9243 = vadd.f32 %v9175, %v9240
  %v9244 = vadd.f32 %v9176, %v9240
  %v9245 = vadd.f32 %v9177, %v9240
  %v9246 = vadd.f32 %v9178, %v9240
  %v9247 = vadd.f32 %v9179, %v9240
  %v9248 = vadd.f32 %v9180, %v9240
  %v9249 = vadd.f32 %v9181, %v9240
  %v9250 = vadd.f32 %v9182, %v9240
  %v9251 = vadd.f32 %v9183, %v9240
  %v9252 = vadd.f32 %v9184, %v9240
  %v9253 = vadd.f32 %v9185, %v9240
  %v9254 = vadd.f32 %v9186, %v9240
  %v9255 = vadd.f32 %v9187, %v9240
  %v9256 = vadd.f32 %v9188, %v9240
  %v9257 = vadd.f32 %v9189, %v9240
  %v9258 = vadd.f32 %v9190, %v9240
  %v9259 = vadd.f32 %v9191, %v9240
  %v9260 = vadd.f32 %v9192, %v9240
  %v9261 = vadd.f32 %v9193, %v9240
  %v9262 = vadd.f32 %v9194, %v9240
  %v9263 = vadd.f32 %v9195, %v9240
  %v9264 = vadd.f32 %v9196, %v9240
  %v9265 = vadd.f32 %v9197, %v9240
  %v9266 = vadd.f32 %v9198, %v9240
  %v9267 = vadd.f32 %v9199, %v9240
  %v9268 = vadd.f32 %v9200, %v9240
  %v9269 = vadd.f32 %v9201, %v9240
  %v9270 = vadd.f32 %v9202, %v9240
  %v9271 = vadd.f32 %v9203, %v9240
  %v9272 = vadd.f32 %v9204, %v9240
  %v9273 = vadd.f32 %v9205, %v9240
  %v9274 = vadd.f32 %v9206, %v9240
  %v9275 = vadd.f32 %v9207, %v9240
  %v9276 = vadd.f32 %v9208, %v9240
  %v9277 = vadd.f32 %v9209, %v9240
  %v9278 = vadd.f32 %v9210, %v9240
  %v9279 = vadd.f32 %v9211, %v9240
  %v9280 = vadd.f32 %v9212, %v9240
  %v9281 = vadd.f32 %v9213, %v9240
  %v9282 = vadd.f32 %v9214, %v9240
  %v9283 = vadd.f32 %v9215, %v9240
  %v9284 = vadd.f32 %v9216, %v9240
  %v9285 = vadd.f32 %v9217, %v9240
  %v9286 = vadd.f32 %v9218, %v9240
  %v9287 = vadd.f32 %v9219, %v9240
  %v9288 = vadd.f32 %v9220, %v9240
  %v9289 = vadd.f32 %v9221, %v9240
  %v9290 = vadd.f32 %v9222, %v9240
  %v9291 = vadd.f32 %v9223, %v9240
  %v9292 = vadd.f32 %v9224, %v9240
  %v9293 = vadd.f32 %v9225, %v9240
  %v9294 = vadd.f32 %v9226, %v9240
  %v9295 = vadd.f32 %v9227, %v9240
  %v9296 = vadd.f32 %v9228, %v9240
  %v9297 = vadd.f32 %v9229, %v9240
  %v9298 = vadd.f32 %v9230, %v9240
  %v9299 = vadd.f32 %v9231, %v9240
  %v9300 = vadd.f32 %v9232, %v9240
  %v9301 = vadd.f32 %v9233, %v9240
  %v9302 = vadd.f32 %v9234, %v9240
  %v9303 = vadd.f32 %v9235, %v9240
  %v9304 = vadd.f32 %v9236, %v9240
  %v9305 = vmax.f32 %v9241, 0.0
  %v9306 = vmax.f32 %v9242, 0.0
  %v9307 = vmax.f32 %v9243, 0.0
  %v9308 = vmax.f32 %v9244, 0.0
  %v9309 = vmax.f32 %v9245, 0.0
  %v9310 = vmax.f32 %v9246, 0.0
  %v9311 = vmax.f32 %v9247, 0.0
  %v9312 = vmax.f32 %v9248, 0.0
  %v9313 = vmax.f32 %v9249, 0.0
  %v9314 = vmax.f32 %v9250, 0.0
  %v9315 = vmax.f32 %v9251, 0.0
  %v9316 = vmax.f32 %v9252, 0.0
  %v9317 = vmax.f32 %v9253, 0.0
  %v9318 = vmax.f32 %v9254, 0.0
  %v9319 = vmax.f32 %v9255, 0.0
  %v9320 = vmax.f32 %v9256, 0.0
  %v9321 = vmax.f32 %v9257, 0.0
  %v9322 = vmax.f32 %v9258, 0.0
  %v9323 = vmax.f32 %v9259, 0.0
  %v9324 = vmax.f32 %v9260, 0.0
  %v9325 = vmax.f32 %v9261, 0.0
  %v9326 = vmax.f32 %v9262, 0.0
  %v9327 = vmax.f32 %v9263, 0.0
  %v9328 = vmax.f32 %v9264, 0.0
  %v9329 = vmax.f32 %v9265, 0.0
  %v9330 = vmax.f32 %v9266, 0.0
  %v9331 = vmax.f32 %v9267, 0.0
  %v9332 = vmax.f32 %v9268, 0.0
  %v9333 = vmax.f32 %v9269, 0.0
  %v9334 = vmax.f32 %v9270, 0.0
  %v9335 = vmax.f32 %v9271, 0.0
  %v9336 = vmax.f32 %v9272, 0.0
  %v9337 = vmax.f32 %v9273, 0.0
  %v9338 = vmax.f32 %v9274, 0.0
  %v9339 = vmax.f32 %v9275, 0.0
  %v9340 = vmax.f32 %v9276, 0.0
  %v9341 = vmax.f32 %v9277, 0.0
  %v9342 = vmax.f32 %v9278, 0.0
  %v9343 = vmax.f32 %v9279, 0.0
  %v9344 = vmax.f32 %v9280, 0.0
  %v9345 = vmax.f32 %v9281, 0.0
  %v9346 = vmax.f32 %v9282, 0.0
  %v9347 = vmax.f32 %v9283, 0.0
  %v9348 = vmax.f32 %v9284, 0.0
  %v9349 = vmax.f32 %v9285, 0.0
  %v9350 = vmax.f32 %v9286, 0.0
  %v9351 = vmax.f32 %v9287, 0.0
  %v9352 = vmax.f32 %v9288, 0.0
  %v9353 = vmax.f32 %v9289, 0.0
  %v9354 = vmax.f32 %v9290, 0.0
  %v9355 = vmax.f32 %v9291, 0.0
  %v9356 = vmax.f32 %v9292, 0.0
  %v9357 = vmax.f32 %v9293, 0.0
  %v9358 = vmax.f32 %v9294, 0.0
  %v9359 = vmax.f32 %v9295, 0.0
  %v9360 = vmax.f32 %v9296, 0.0
  %v9361 = vmax.f32 %v9297, 0.0
  %v9362 = vmax.f32 %v9298, 0.0
  %v9363 = vmax.f32 %v9299, 0.0
  %v9364 = vmax.f32 %v9300, 0.0
  %v9365 = vmax.f32 %v9301, 0.0
  %v9366 = vmax.f32 %v9302, 0.0
  %v9367 = vmax.f32 %v9303, 0.0
  %v9368 = vmax.f32 %v9304, 0.0
  %9369 = vst [vmem:[%s3] sm:$0xff] %v9305
  %9370 = vst [vmem:[%s3 + $0x8] sm:$0xff] %v9306
  %9371 = vst [vmem:[%s3 + $0x10] sm:$0xff] %v9307
  %9372 = vst [vmem:[%s3 + $0x18] sm:$0xff] %v9308
  %9373 = vst [vmem:[%s3 + $0x20] sm:$0xff] %v9309
  %9374 = vst [vmem:[%s3 + $0x28] sm:$0xff] %v9310
  %9375 = vst [vmem:[%s3 + $0x30] sm:$0xff] %v9311
  %9376 = vst [vmem:[%s3 + $0x38] sm:$0xff] %v9312
  %9377 = vst [vmem:[%s3 + $0x40] sm:$0xff] %v9313
  %9378 = vst [vmem:[%s3 + $0x48] sm:$0xff] %v9314
  %9379 = vst [vmem:[%s3 + $0x50] sm:$0xff] %v9315
  %9380 = vst [vmem:[%s3 + $0x58] sm:$0xff] %v9316
  %9381 = vst [vmem:[%s3 + $0x60] sm:$0xff] %v9317
  %9382 = vst [vmem:[%s3 + $0x68] sm:$0xff] %v9318
  %9383 = vst [vmem:[%s3 + $0x70] sm:$0xff] %v9319
  %9384 = vst [vmem:[%s3 + $0x78] sm:$0xff] %v9320
  %9385 = vst [vmem:[%s3 + $0x80] sm:$0xff] %v9321
  %9386 = vst [vmem:[%s3 + $0x88] sm:$0xff] %v9322
  %9387 = vst [vmem:[%s3 + $0x90] sm:$0xff] %v9323
  %9388 = vst [vmem:[%s3 + $0x98] sm:$0xff] %v9324
  %9389 = vst [vmem:[%s3 + $0xa0] sm:$0xff] %v9325
  %9390 = vst [vmem:[%s3 + $0xa8] sm:$0xff] %v9326
  %9391 = vst [vmem:[%s3 + $0xb0] sm:$0xff] %v9327
  %9392 = vst [vmem:[%s3 + $0xb8] sm:$0xff] %v9328
  %9393 = vst [vmem:[%s3 + $0xc0] sm:$0xff] %v9329
  %9394 = vst [vmem:[%s3 + $0xc8] sm:$0xff] %v9330
  %9395 = vst [vmem:[%s3 + $0xd0] sm:$0xff] %v9331
  %9396 = vst [vmem:[%s3 + $0xd8] sm:$0xff] %v9332
  %9397 = vst [vmem:[%s3 + $0xe0] sm:$0xff] %v9333
  %9398 = vst [vmem:[%s3 + $0xe8] sm:$0xff] %v9334
  %9399 = vst [vmem:[%s3 + $0xf0] sm:$0xff] %v9335
  %9400 = vst [vmem:[%s3 + $0xf8] sm:$0xff] %v9336
  %9401 = vst [vmem:[%s3 + $0x100] sm:$0xff] %v9337
  %9402 = vst [vmem:[%s3 + $0x108] sm:$0xff] %v9338
  %9403 = vst [vmem:[%s3 + $0x110] sm:$0xff] %v9339
  %9404 = vst [vmem:[%s3 + $0x118] sm:$0xff] %v9340
  %9405 = vst [vmem:[%s3 + $0x120] sm:$0xff] %v9341
  %9406 = vst [vmem:[%s3 + $0x128] sm:$0xff] %v9342
  %9407 = vst [vmem:[%s3 + $0x130] sm:$0xff] %v9343
  %9408 = vst [vmem:[%s3 + $0x138] sm:$0xff] %v9344
  %9409 = vst [vmem:[%s3 + $0x140] sm:$0xff] %v9345
  %9410 = vst [vmem:[%s3 + $0x148] sm:$0xff] %v9346
  %9411 = vst [vmem:[%s3 + $0x150] sm:$0xff] %v9347
  %9412 = vst [vmem:[%s3 + $0x158] sm:$0xff] %v9348
  %9413 = vst [vmem:[%s3 + $0x160] sm:$0xff] %v9349
  %9414 = vst [vmem:[%s3 + $0x168] sm:$0xff] %v9350
  %9415 = vst [vmem:[%s3 + $0x170] sm:$0xff] %v9351
  %9416 = vst [vmem:[%s3 + $0x178] sm:$0xff] %v9352
  %9417 = vst [vmem:[%s3 + $0x180] sm:$0xff] %v9353
  %9418 = vst [vmem:[%s3 + $0x188] sm:$0xff] %v9354
  %9419 = vst [vmem:[%s3 + $0x190] sm:$0xff] %v9355
  %9420 = vst [vmem:[%s3 + $0x198] sm:$0xff] %v9356
  %9421 = vst [vmem:[%s3 + $0x1a0] sm:$0xff] %v9357
  %9422 = vst [vmem:[%s3 + $0x1a8] sm:$0xff] %v9358
  %9423 = vst [vmem:[%s3 + $0x1b0] sm:$0xff] %v9359
  %9424 = vst [vmem:[%s3 + $0x1b8] sm:$0xff] %v9360
  %9425 = vst [vmem:[%s3 + $0x1c0] sm:$0xff] %v9361
  %9426 = vst [vmem:[%s3 + $0x1c8] sm:$0xff] %v9362
  %9427 = vst [vmem:[%s3 + $0x1d0] sm:$0xff] %v9363
  %9428 = vst [vmem:[%s3 + $0x1d8] sm:$0xff] %v9364
  %9429 = vst [vmem:[%s3 + $0x1e0] sm:$0xff] %v9365
  %9430 = vst [vmem:[%s3 + $0x1e8] sm:$0xff] %v9366
  %9431 = vst [vmem:[%s3 + $0x1f0] sm:$0xff] %v9367
  %9432 = vst [vmem:[%s3 + $0x1f8] sm:$0xff] %v9368
  %9433 = vst [vmem:[%s4] sm:$0xf] 0
  %9434 = vst [vmem:[%s4 + $0x4] sm:$0xf] 0
  %9435 = vst [vmem:[%s4 + $0x8] sm:$0x1] 0
  %9436 = vst [vmem:[%s4 + $0xc] sm:$0xf] 0
  %9437 = vst [vmem:[%s4 + $0x10] sm:$0xf] 0
  %9438 = vst [vmem:[%s4 + $0x14] sm:$0x1] 0
  %9439 = vst [vmem:[%s4 + $0x18] sm:$0xf] 0
  %9440 = vst [vmem:[%s4 + $0x1c] sm:$0xf] 0
  %9441 = vst [vmem:[%s4 + $0x20] sm:$0x1] 0
  %9442 = vst [vmem:[%s4 + $0x24] sm:$0xf] 0
  %9443 = vst [vmem:[%s4 + $0x28] sm:$0xf] 0
  %9444 = vst [vmem:[%s4 + $0x2c] sm:$0x1] 0
  %9445 = vst [vmem:[%s4 + $0x30] sm:$0xf] 0
  %9446 = vst [vmem:[%s4 + $0x34] sm:$0xf] 0
  %9447 = vst [vmem:[%s4 + $0x38] sm:$0x1] 0
  %9448 = vst [vmem:[%s4 + $0x3c] sm:$0xf] 0
  %9449 = vst [vmem:[%s4 + $0x40] sm:$0xf] 0
  %9450 = vst [vmem:[%s4 + $0x44] sm:$0x1] 0
  %9451 = vst [vmem:[%s4 + $0x48] sm:$0xf] 0
  %9452 = vst [vmem:[%s4 + $0x4c] sm:$0xf] 0
  %9453 = vst [vmem:[%s4 + $0x50] sm:$0x1] 0
  %9454 = vst [vmem:[%s4 + $0x54] sm:$0xf] 0
  %9455 = vst [vmem:[%s4 + $0x58] sm:$0xf] 0
  %9456 = vst [vmem:[%s4 + $0x5c] sm:$0x1] 0
  %9457 = vst [vmem:[%s4 + $0x60] sm:$0xf] 0
  %9458 = vst [vmem:[%s4 + $0x64] sm:$0xf] 0
  %9459 = vst [vmem:[%s4 + $0x68] sm:$0x1] 0
  %9460 = vst [vmem:[%s4 + $0x6c] sm:$0xf] 0
  %9461 = vst [vmem:[%s4 + $0x70] sm:$0xf] 0
  %9462 = vst [vmem:[%s4 + $0x74] sm:$0x1] 0
  %9463 = vst [vmem:[%s4 + $0x78] sm:$0xf] 0
  %9464 = vst [vmem:[%s4 + $0x7c] sm:$0xf] 0
  %9465 = vst [vmem:[%s4 + $0x80] sm:$0x1] 0
  %9466 = vst [vmem:[%s4 + $0x84] sm:$0xf] 0
  %9467 = vst [vmem:[%s4 + $0x88] sm:$0xf] 0
  %9468 = vst [vmem:[%s4 + $0x8c] sm:$0x1] 0
  %9469 = vst [vmem:[%s4 + $0x90] sm:$0xf] 0
  %9470 = vst [vmem:[%s4 + $0x94] sm:$0xf] 0
  %9471 = vst [vmem:[%s4 + $0x98] sm:$0x1] 0
  %9472 = vst [vmem:[%s4 + $0x9c] sm:$0xf] 0
  %9473 = vst [vmem:[%s4 + $0xa0] sm:$0xf] 0
  %9474 = vst [vmem:[%s4 + $0xa4] sm:$0x1] 0
  %9475 = vst [vmem:[%s4 + $0xa8] sm:$0xf] 0
  %9476 = vst [vmem:[%s4 + $0xac] sm:$0xf] 0
  %9477 = vst [vmem:[%s4 + $0xb0] sm:$0x1] 0
  %9478 = vst [vmem:[%s4 + $0xb4] sm:$0xf] 0
  %9479 = vst [vmem:[%s4 + $0xb8] sm:$0xf] 0
  %9480 = vst [vmem:[%s4 + $0xbc] sm:$0x1] 0
  %9481 = vst [vmem:[%s4 + $0xc0] sm:$0xf] 0
  %9482 = vst [vmem:[%s4 + $0xc4] sm:$0xf] 0
  %9483 = vst [vmem:[%s4 + $0xc8] sm:$0x1] 0
  %9484 = vst [vmem:[%s4 + $0xcc] sm:$0xf] 0
  %9485 = vst [vmem:[%s4 + $0xd0] sm:$0xf] 0
  %9486 = vst [vmem:[%s4 + $0xd4] sm:$0x1] 0
  %9487 = vst [vmem:[%s4 + $0xd8] sm:$0xf] 0
  %9488 = vst [vmem:[%s4 + $0xdc] sm:$0xf] 0
  %9489 = vst [vmem:[%s4 + $0xe0] sm:$0x1] 0
  %9490 = vst [vmem:[%s4 + $0xe4] sm:$0xf] 0
  %9491 = vst [vmem:[%s4 + $0xe8] sm:$0xf] 0
  %9492 = vst [vmem:[%s4 + $0xec] sm:$0x1] 0
  %9493 = vst [vmem:[%s4 + $0xf0] sm:$0xf] 0
  %9494 = vst [vmem:[%s4 + $0xf4] sm:$0xf] 0
  %9495 = vst [vmem:[%s4 + $0xf8] sm:$0x1] 0
  %9496 = vst [vmem:[%s4 + $0xfc] sm:$0xf] 0
  %9497 = vst [vmem:[%s4 + $0x100] sm:$0xf] 0
  %9498 = vst [vmem:[%s4 + $0x104] sm:$0x1] 0
  %9499 = vst [vmem:[%s4 + $0x108] sm:$0xf] 0
  %9500 = vst [vmem:[%s4 + $0x10c] sm:$0xf] 0
  %9501 = vst [vmem:[%s4 + $0x110] sm:$0x1] 0
  %9502 = vst [vmem:[%s4 + $0x114] sm:$0xf] 0
  %9503 = vst [vmem:[%s4 + $0x118] sm:$0xf] 0
  %9504 = vst [vmem:[%s4 + $0x11c] sm:$0x1] 0
  %9505 = vst [vmem:[%s4 + $0x120] sm:$0xf] 0
  %9506 = vst [vmem:[%s4 + $0x124] sm:$0xf] 0
  %9507 = vst [vmem:[%s4 + $0x128] sm:$0x1] 0
  %9508 = vst [vmem:[%s4 + $0x12c] sm:$0xf] 0
  %9509 = vst [vmem:[%s4 + $0x130] sm:$0xf] 0
  %9510 = vst [vmem:[%s4 + $0x134] sm:$0x1] 0
  %9511 = vst [vmem:[%s4 + $0x138] sm:$0xf] 0
  %9512 = vst [vmem:[%s4 + $0x13c] sm:$0xf] 0
  %9513 = vst [vmem:[%s4 + $0x140] sm:$0x1] 0
  %9514 = vst [vmem:[%s4 + $0x144] sm:$0xf] 0
  %9515 = vst [vmem:[%s4 + $0x148] sm:$0xf] 0
  %9516 = vst [vmem:[%s4 + $0x14c] sm:$0x1] 0
  %9517 = vst [vmem:[%s4 + $0x150] sm:$0xf] 0
  %9518 = vst [vmem:[%s4 + $0x154] sm:$0xf] 0
  %9519 = vst [vmem:[%s4 + $0x158] sm:$0x1] 0
  %9520 = vst [vmem:[%s4 + $0x15c] sm:$0xf] 0
  %9521 = vst [vmem:[%s4 + $0x160] sm:$0xf] 0
  %9522 = vst [vmem:[%s4 + $0x164] sm:$0x1] 0
  %9523 = vst [vmem:[%s4 + $0x168] sm:$0xf] 0
  %9524 = vst [vmem:[%s4 + $0x16c] sm:$0xf] 0
  %9525 = vst [vmem:[%s4 + $0x170] sm:$0x1] 0
  %9526 = vst [vmem:[%s4 + $0x174] sm:$0xf] 0
  %9527 = vst [vmem:[%s4 + $0x178] sm:$0xf] 0
  %9528 = vst [vmem:[%s4 + $0x17c] sm:$0x1] 0
  %9529 = vst [vmem:[%s4 + $0x180] sm:$0xf] 0
  %9530 = vst [vmem:[%s4 + $0x184] sm:$0xf] 0
  %9531 = vst [vmem:[%s4 + $0x188] sm:$0x1] 0
  %9532 = vst [vmem:[%s4 + $0x18c] sm:$0xf] 0
  %9533 = vst [vmem:[%s4 + $0x190] sm:$0xf] 0
  %9534 = vst [vmem:[%s4 + $0x194] sm:$0x1] 0
  %9535 = vst [vmem:[%s4 + $0x198] sm:$0xf] 0
  %9536 = vst [vmem:[%s4 + $0x19c] sm:$0xf] 0
  %9537 = vst [vmem:[%s4 + $0x1a0] sm:$0x1] 0
  %9538 = vst [vmem:[%s4 + $0x1a4] sm:$0xf] 0
  %9539 = vst [vmem:[%s4 + $0x1a8] sm:$0xf] 0
  %9540 = vst [vmem:[%s4 + $0x1ac] sm:$0x1] 0
  %v9541 = vpack.c.bf16 %v9306, %v9305
  %v9542 = vpack.c.bf16 %v9308, %v9307
  %v9543 = vpack.c.bf16 %v9310, %v9309
  %v9544 = vpack.c.bf16 %v9312, %v9311
  %v9545 = vpack.c.bf16 %v9314, %v9313
  %v9546 = vpack.c.bf16 %v9316, %v9315
  %v9547 = vpack.c.bf16 %v9318, %v9317
  %v9548 = vpack.c.bf16 %v9320, %v9319
  %v9549 = vpack.c.bf16 %v9322, %v9321
  %v9550 = vpack.c.bf16 %v9324, %v9323
  %v9551 = vpack.c.bf16 %v9326, %v9325
  %v9552 = vpack.c.bf16 %v9328, %v9327
  %v9553 = vpack.c.bf16 %v9330, %v9329
  %v9554 = vpack.c.bf16 %v9332, %v9331
  %v9555 = vpack.c.bf16 %v9334, %v9333
  %v9556 = vpack.c.bf16 %v9336, %v9335
  %v9557 = vpack.c.bf16 %v9338, %v9337
  %v9558 = vpack.c.bf16 %v9340, %v9339
  %v9559 = vpack.c.bf16 %v9342, %v9341
  %v9560 = vpack.c.bf16 %v9344, %v9343
  %v9561 = vpack.c.bf16 %v9346, %v9345
  %v9562 = vpack.c.bf16 %v9348, %v9347
  %v9563 = vpack.c.bf16 %v9350, %v9349
  %v9564 = vpack.c.bf16 %v9352, %v9351
  %v9565 = vpack.c.bf16 %v9354, %v9353
  %v9566 = vpack.c.bf16 %v9356, %v9355
  %v9567 = vpack.c.bf16 %v9358, %v9357
  %v9568 = vpack.c.bf16 %v9360, %v9359
  %v9569 = vpack.c.bf16 %v9362, %v9361
  %v9570 = vpack.c.bf16 %v9364, %v9363
  %v9571 = vpack.c.bf16 %v9366, %v9365
  %v9572 = vpack.c.bf16 %v9368, %v9367
  %v9605 = vunpack.c.l.b16 %v9541
  %v9606 = vunpack.c.h.b16 %v9541
  %v9607 = vunpack.c.l.b16 %v9542
  %v9608 = vunpack.c.h.b16 %v9542
  %v9609 = vunpack.c.l.b16 %v9543
  %v9610 = vunpack.c.h.b16 %v9543
  %v9611 = vunpack.c.l.b16 %v9544
  %v9612 = vunpack.c.h.b16 %v9544
  %v9613 = vunpack.c.l.b16 %v9545
  %v9614 = vunpack.c.h.b16 %v9545
  %v9615 = vunpack.c.l.b16 %v9546
  %v9616 = vunpack.c.h.b16 %v9546
  %v9617 = vunpack.c.l.b16 %v9547
  %v9618 = vunpack.c.h.b16 %v9547
  %v9619 = vunpack.c.l.b16 %v9548
  %v9620 = vunpack.c.h.b16 %v9548
  %v9621 = vunpack.c.l.b16 %v9549
  %v9622 = vunpack.c.h.b16 %v9549
  %v9623 = vunpack.c.l.b16 %v9550
  %v9624 = vunpack.c.h.b16 %v9550
  %v9625 = vunpack.c.l.b16 %v9551
  %v9626 = vunpack.c.h.b16 %v9551
  %v9627 = vunpack.c.l.b16 %v9552
  %v9628 = vunpack.c.h.b16 %v9552
  %v9629 = vunpack.c.l.b16 %v9553
  %v9630 = vunpack.c.h.b16 %v9553
  %v9631 = vunpack.c.l.b16 %v9554
  %v9632 = vunpack.c.h.b16 %v9554
  %v9633 = vunpack.c.l.b16 %v9555
  %v9634 = vunpack.c.h.b16 %v9555
  %v9635 = vunpack.c.l.b16 %v9556
  %v9636 = vunpack.c.h.b16 %v9556
  %v9637 = vunpack.c.l.b16 %v9557
  %v9638 = vunpack.c.h.b16 %v9557
  %v9639 = vunpack.c.l.b16 %v9558
  %v9640 = vunpack.c.h.b16 %v9558
  %v9641 = vunpack.c.l.b16 %v9559
  %v9642 = vunpack.c.h.b16 %v9559
  %v9643 = vunpack.c.l.b16 %v9560
  %v9644 = vunpack.c.h.b16 %v9560
  %v9645 = vunpack.c.l.b16 %v9561
  %v9646 = vunpack.c.h.b16 %v9561
  %v9647 = vunpack.c.l.b16 %v9562
  %v9648 = vunpack.c.h.b16 %v9562
  %v9649 = vunpack.c.l.b16 %v9563
  %v9650 = vunpack.c.h.b16 %v9563
  %v9651 = vunpack.c.l.b16 %v9564
  %v9652 = vunpack.c.h.b16 %v9564
  %v9653 = vunpack.c.l.b16 %v9565
  %v9654 = vunpack.c.h.b16 %v9565
  %v9655 = vunpack.c.l.b16 %v9566
  %v9656 = vunpack.c.h.b16 %v9566
  %v9657 = vunpack.c.l.b16 %v9567
  %v9658 = vunpack.c.h.b16 %v9567
  %v9659 = vunpack.c.l.b16 %v9568
  %v9660 = vunpack.c.h.b16 %v9568
  %v9661 = vunpack.c.l.b16 %v9569
  %v9662 = vunpack.c.h.b16 %v9569
  %v9663 = vunpack.c.l.b16 %v9570
  %v9664 = vunpack.c.h.b16 %v9570
  %v9665 = vunpack.c.l.b16 %v9571
  %v9666 = vunpack.c.h.b16 %v9571
  %v9667 = vunpack.c.l.b16 %v9572
  %v9668 = vunpack.c.h.b16 %v9572
  %v9669 = vpack.c.b16 %v9605, %v9605
  %v9670 = vpack.c.b16 %v9606, %v9606
  %v9671 = vpack.c.b16 %v9607, %v9607
  %v9672 = vpack.c.b16 %v9608, %v9608
  %v9673 = vpack.c.b16 %v9609, %v9609
  %v9674 = vpack.c.b16 %v9610, %v9610
  %v9675 = vpack.c.b16 %v9611, %v9611
  %v9676 = vpack.c.b16 %v9612, %v9612
  %v9677 = vpack.c.b16 %v9613, %v9613
  %v9678 = vpack.c.b16 %v9614, %v9614
  %v9679 = vpack.c.b16 %v9615, %v9615
  %v9680 = vpack.c.b16 %v9616, %v9616
  %v9681 = vpack.c.b16 %v9617, %v9617
  %v9682 = vpack.c.b16 %v9618, %v9618
  %v9683 = vpack.c.b16 %v9619, %v9619
  %v9684 = vpack.c.b16 %v9620, %v9620
  %v9685 = vpack.c.b16 %v9621, %v9621
  %v9686 = vpack.c.b16 %v9622, %v9622
  %v9687 = vpack.c.b16 %v9623, %v9623
  %v9688 = vpack.c.b16 %v9624, %v9624
  %v9689 = vpack.c.b16 %v9625, %v9625
  %v9690 = vpack.c.b16 %v9626, %v9626
  %v9691 = vpack.c.b16 %v9627, %v9627
  %v9692 = vpack.c.b16 %v9628, %v9628
  %v9693 = vpack.c.b16 %v9629, %v9629
  %v9694 = vpack.c.b16 %v9630, %v9630
  %v9695 = vpack.c.b16 %v9631, %v9631
  %v9696 = vpack.c.b16 %v9632, %v9632
  %v9697 = vpack.c.b16 %v9633, %v9633
  %v9698 = vpack.c.b16 %v9634, %v9634
  %v9699 = vpack.c.b16 %v9635, %v9635
  %v9700 = vpack.c.b16 %v9636, %v9636
  %v9701 = vpack.c.b16 %v9637, %v9637
  %v9702 = vpack.c.b16 %v9638, %v9638
  %v9703 = vpack.c.b16 %v9639, %v9639
  %v9704 = vpack.c.b16 %v9640, %v9640
  %v9705 = vpack.c.b16 %v9641, %v9641
  %v9706 = vpack.c.b16 %v9642, %v9642
  %v9707 = vpack.c.b16 %v9643, %v9643
  %v9708 = vpack.c.b16 %v9644, %v9644
  %v9709 = vpack.c.b16 %v9645, %v9645
  %v9710 = vpack.c.b16 %v9646, %v9646
  %v9711 = vpack.c.b16 %v9647, %v9647
  %v9712 = vpack.c.b16 %v9648, %v9648
  %v9713 = vpack.c.b16 %v9649, %v9649
  %v9714 = vpack.c.b16 %v9650, %v9650
  %v9715 = vpack.c.b16 %v9651, %v9651
  %v9716 = vpack.c.b16 %v9652, %v9652
  %v9717 = vpack.c.b16 %v9653, %v9653
  %v9718 = vpack.c.b16 %v9654, %v9654
  %v9719 = vpack.c.b16 %v9655, %v9655
  %v9720 = vpack.c.b16 %v9656, %v9656
  %v9721 = vpack.c.b16 %v9657, %v9657
  %v9722 = vpack.c.b16 %v9658, %v9658
  %v9723 = vpack.c.b16 %v9659, %v9659
  %v9724 = vpack.c.b16 %v9660, %v9660
  %v9725 = vpack.c.b16 %v9661, %v9661
  %v9726 = vpack.c.b16 %v9662, %v9662
  %v9727 = vpack.c.b16 %v9663, %v9663
  %v9728 = vpack.c.b16 %v9664, %v9664
  %v9729 = vpack.c.b16 %v9665, %v9665
  %v9730 = vpack.c.b16 %v9666, %v9666
  %v9731 = vpack.c.b16 %v9667, %v9667
  %v9732 = vpack.c.b16 %v9668, %v9668
  %vm9733 = vsmask.f32 256
  %vm9734 = vsmask.f32 4368
  %vm9735 = vmor %vm9733, %vm9734
  %v9737 = vshrl.u32 %v9669, 16
  %v9739 = vrot.slane %v9737, 7
  %v9740 = vshll.u32 %v9669, 16
  %v9742 = vor.u32 %v9739, %v9740
  %v9743 = vrot.slane %v9739, 4
  %v9745 = vshrl.u32 %v9670, 16
  %v9747 = vrot.slane %v9745, 7
  %v9748 = vshll.u32 %v9670, 16
  %v9750 = vor.u32 %v9747, %v9748
  %v9751 = vsel %vm9735, %v9743, %v9750
  %v9752 = vrot.slane %v9747, 4
  %v9754 = vshrl.u32 %v9671, 16
  %v9756 = vrot.slane %v9754, 7
  %v9757 = vshll.u32 %v9671, 16
  %v9759 = vor.u32 %v9756, %v9757
  %v9760 = vrot.slane %v9756, 4
  %v9762 = vshrl.u32 %v9672, 16
  %v9764 = vrot.slane %v9762, 7
  %v9765 = vshll.u32 %v9672, 16
  %v9767 = vor.u32 %v9764, %v9765
  %v9768 = vsel %vm9735, %v9760, %v9767
  %v9769 = vrot.slane %v9764, 4
  %v9771 = vshrl.u32 %v9673, 16
  %v9773 = vrot.slane %v9771, 7
  %v9774 = vshll.u32 %v9673, 16
  %v9776 = vor.u32 %v9773, %v9774
  %v9777 = vrot.slane %v9773, 4
  %v9779 = vshrl.u32 %v9674, 16
  %v9781 = vrot.slane %v9779, 7
  %v9782 = vshll.u32 %v9674, 16
  %v9784 = vor.u32 %v9781, %v9782
  %v9785 = vsel %vm9735, %v9777, %v9784
  %v9786 = vrot.slane %v9781, 4
  %v9788 = vshrl.u32 %v9675, 16
  %v9790 = vrot.slane %v9788, 7
  %v9791 = vshll.u32 %v9675, 16
  %v9793 = vor.u32 %v9790, %v9791
  %v9794 = vrot.slane %v9790, 4
  %v9796 = vshrl.u32 %v9676, 16
  %v9798 = vrot.slane %v9796, 7
  %v9799 = vshll.u32 %v9676, 16
  %v9801 = vor.u32 %v9798, %v9799
  %v9802 = vsel %vm9735, %v9794, %v9801
  %v9803 = vrot.slane %v9798, 4
  %v9805 = vshrl.u32 %v9677, 16
  %v9807 = vrot.slane %v9805, 7
  %v9808 = vshll.u32 %v9677, 16
  %v9810 = vor.u32 %v9807, %v9808
  %v9811 = vrot.slane %v9807, 4
  %v9813 = vshrl.u32 %v9678, 16
  %v9815 = vrot.slane %v9813, 7
  %v9816 = vshll.u32 %v9678, 16
  %v9818 = vor.u32 %v9815, %v9816
  %v9819 = vsel %vm9735, %v9811, %v9818
  %v9820 = vrot.slane %v9815, 4
  %v9822 = vshrl.u32 %v9679, 16
  %v9824 = vrot.slane %v9822, 7
  %v9825 = vshll.u32 %v9679, 16
  %v9827 = vor.u32 %v9824, %v9825
  %v9828 = vrot.slane %v9824, 4
  %v9830 = vshrl.u32 %v9680, 16
  %v9832 = vrot.slane %v9830, 7
  %v9833 = vshll.u32 %v9680, 16
  %v9835 = vor.u32 %v9832, %v9833
  %v9836 = vsel %vm9735, %v9828, %v9835
  %v9837 = vrot.slane %v9832, 4
  %v9839 = vshrl.u32 %v9681, 16
  %v9841 = vrot.slane %v9839, 7
  %v9842 = vshll.u32 %v9681, 16
  %v9844 = vor.u32 %v9841, %v9842
  %v9845 = vrot.slane %v9841, 4
  %v9847 = vshrl.u32 %v9682, 16
  %v9849 = vrot.slane %v9847, 7
  %v9850 = vshll.u32 %v9682, 16
  %v9852 = vor.u32 %v9849, %v9850
  %v9853 = vsel %vm9735, %v9845, %v9852
  %v9854 = vrot.slane %v9849, 4
  %v9856 = vshrl.u32 %v9683, 16
  %v9858 = vrot.slane %v9856, 7
  %v9859 = vshll.u32 %v9683, 16
  %v9861 = vor.u32 %v9858, %v9859
  %v9862 = vrot.slane %v9858, 4
  %v9864 = vshrl.u32 %v9684, 16
  %v9866 = vrot.slane %v9864, 7
  %v9867 = vshll.u32 %v9684, 16
  %v9869 = vor.u32 %v9866, %v9867
  %v9870 = vsel %vm9735, %v9862, %v9869
  %v9871 = vrot.slane %v9866, 4
  %v9873 = vshrl.u32 %v9685, 16
  %v9875 = vrot.slane %v9873, 7
  %v9876 = vshll.u32 %v9685, 16
  %v9878 = vor.u32 %v9875, %v9876
  %v9879 = vrot.slane %v9875, 4
  %v9881 = vshrl.u32 %v9686, 16
  %v9883 = vrot.slane %v9881, 7
  %v9884 = vshll.u32 %v9686, 16
  %v9886 = vor.u32 %v9883, %v9884
  %v9887 = vsel %vm9735, %v9879, %v9886
  %v9888 = vrot.slane %v9883, 4
  %v9890 = vshrl.u32 %v9687, 16
  %v9892 = vrot.slane %v9890, 7
  %v9893 = vshll.u32 %v9687, 16
  %v9895 = vor.u32 %v9892, %v9893
  %v9896 = vrot.slane %v9892, 4
  %v9898 = vshrl.u32 %v9688, 16
  %v9900 = vrot.slane %v9898, 7
  %v9901 = vshll.u32 %v9688, 16
  %v9903 = vor.u32 %v9900, %v9901
  %v9904 = vsel %vm9735, %v9896, %v9903
  %v9905 = vrot.slane %v9900, 4
  %v9907 = vshrl.u32 %v9689, 16
  %v9909 = vrot.slane %v9907, 7
  %v9910 = vshll.u32 %v9689, 16
  %v9912 = vor.u32 %v9909, %v9910
  %v9913 = vrot.slane %v9909, 4
  %v9915 = vshrl.u32 %v9690, 16
  %v9917 = vrot.slane %v9915, 7
  %v9918 = vshll.u32 %v9690, 16
  %v9920 = vor.u32 %v9917, %v9918
  %v9921 = vsel %vm9735, %v9913, %v9920
  %v9922 = vrot.slane %v9917, 4
  %v9924 = vshrl.u32 %v9691, 16
  %v9926 = vrot.slane %v9924, 7
  %v9927 = vshll.u32 %v9691, 16
  %v9929 = vor.u32 %v9926, %v9927
  %v9930 = vrot.slane %v9926, 4
  %v9932 = vshrl.u32 %v9692, 16
  %v9934 = vrot.slane %v9932, 7
  %v9935 = vshll.u32 %v9692, 16
  %v9937 = vor.u32 %v9934, %v9935
  %v9938 = vsel %vm9735, %v9930, %v9937
  %v9939 = vrot.slane %v9934, 4
  %v9941 = vshrl.u32 %v9693, 16
  %v9943 = vrot.slane %v9941, 7
  %v9944 = vshll.u32 %v9693, 16
  %v9946 = vor.u32 %v9943, %v9944
  %v9947 = vrot.slane %v9943, 4
  %v9949 = vshrl.u32 %v9694, 16
  %v9951 = vrot.slane %v9949, 7
  %v9952 = vshll.u32 %v9694, 16
  %v9954 = vor.u32 %v9951, %v9952
  %v9955 = vsel %vm9735, %v9947, %v9954
  %v9956 = vrot.slane %v9951, 4
  %v9958 = vshrl.u32 %v9695, 16
  %v9960 = vrot.slane %v9958, 7
  %v9961 = vshll.u32 %v9695, 16
  %v9963 = vor.u32 %v9960, %v9961
  %v9964 = vrot.slane %v9960, 4
  %v9966 = vshrl.u32 %v9696, 16
  %v9968 = vrot.slane %v9966, 7
  %v9969 = vshll.u32 %v9696, 16
  %v9971 = vor.u32 %v9968, %v9969
  %v9972 = vsel %vm9735, %v9964, %v9971
  %v9973 = vrot.slane %v9968, 4
  %v9975 = vshrl.u32 %v9697, 16
  %v9977 = vrot.slane %v9975, 7
  %v9978 = vshll.u32 %v9697, 16
  %v9980 = vor.u32 %v9977, %v9978
  %v9981 = vrot.slane %v9977, 4
  %v9983 = vshrl.u32 %v9698, 16
  %v9985 = vrot.slane %v9983, 7
  %v9986 = vshll.u32 %v9698, 16
  %v9988 = vor.u32 %v9985, %v9986
  %v9989 = vsel %vm9735, %v9981, %v9988
  %v9990 = vrot.slane %v9985, 4
  %v9992 = vshrl.u32 %v9699, 16
  %v9994 = vrot.slane %v9992, 7
  %v9995 = vshll.u32 %v9699, 16
  %v9997 = vor.u32 %v9994, %v9995
  %v9998 = vrot.slane %v9994, 4
  %v10000 = vshrl.u32 %v9700, 16
  %v10002 = vrot.slane %v10000, 7
  %v10003 = vshll.u32 %v9700, 16
  %v10005 = vor.u32 %v10002, %v10003
  %v10006 = vsel %vm9735, %v9998, %v10005
  %v10007 = vrot.slane %v10002, 4
  %v10009 = vshrl.u32 %v9701, 16
  %v10011 = vrot.slane %v10009, 7
  %v10012 = vshll.u32 %v9701, 16
  %v10014 = vor.u32 %v10011, %v10012
  %v10015 = vrot.slane %v10011, 4
  %v10017 = vshrl.u32 %v9702, 16
  %v10019 = vrot.slane %v10017, 7
  %v10020 = vshll.u32 %v9702, 16
  %v10022 = vor.u32 %v10019, %v10020
  %v10023 = vsel %vm9735, %v10015, %v10022
  %v10024 = vrot.slane %v10019, 4
  %v10026 = vshrl.u32 %v9703, 16
  %v10028 = vrot.slane %v10026, 7
  %v10029 = vshll.u32 %v9703, 16
  %v10031 = vor.u32 %v10028, %v10029
  %v10032 = vrot.slane %v10028, 4
  %v10034 = vshrl.u32 %v9704, 16
  %v10036 = vrot.slane %v10034, 7
  %v10037 = vshll.u32 %v9704, 16
  %v10039 = vor.u32 %v10036, %v10037
  %v10040 = vsel %vm9735, %v10032, %v10039
  %v10041 = vrot.slane %v10036, 4
  %v10043 = vshrl.u32 %v9705, 16
  %v10045 = vrot.slane %v10043, 7
  %v10046 = vshll.u32 %v9705, 16
  %v10048 = vor.u32 %v10045, %v10046
  %v10049 = vrot.slane %v10045, 4
  %v10051 = vshrl.u32 %v9706, 16
  %v10053 = vrot.slane %v10051, 7
  %v10054 = vshll.u32 %v9706, 16
  %v10056 = vor.u32 %v10053, %v10054
  %v10057 = vsel %vm9735, %v10049, %v10056
  %v10058 = vrot.slane %v10053, 4
  %v10060 = vshrl.u32 %v9707, 16
  %v10062 = vrot.slane %v10060, 7
  %v10063 = vshll.u32 %v9707, 16
  %v10065 = vor.u32 %v10062, %v10063
  %v10066 = vrot.slane %v10062, 4
  %v10068 = vshrl.u32 %v9708, 16
  %v10070 = vrot.slane %v10068, 7
  %v10071 = vshll.u32 %v9708, 16
  %v10073 = vor.u32 %v10070, %v10071
  %v10074 = vsel %vm9735, %v10066, %v10073
  %v10075 = vrot.slane %v10070, 4
  %v10077 = vshrl.u32 %v9709, 16
  %v10079 = vrot.slane %v10077, 7
  %v10080 = vshll.u32 %v9709, 16
  %v10082 = vor.u32 %v10079, %v10080
  %v10083 = vrot.slane %v10079, 4
  %v10085 = vshrl.u32 %v9710, 16
  %v10087 = vrot.slane %v10085, 7
  %v10088 = vshll.u32 %v9710, 16
  %v10090 = vor.u32 %v10087, %v10088
  %v10091 = vsel %vm9735, %v10083, %v10090
  %v10092 = vrot.slane %v10087, 4
  %v10094 = vshrl.u32 %v9711, 16
  %v10096 = vrot.slane %v10094, 7
  %v10097 = vshll.u32 %v9711, 16
  %v10099 = vor.u32 %v10096, %v10097
  %v10100 = vrot.slane %v10096, 4
  %v10102 = vshrl.u32 %v9712, 16
  %v10104 = vrot.slane %v10102, 7
  %v10105 = vshll.u32 %v9712, 16
  %v10107 = vor.u32 %v10104, %v10105
  %v10108 = vsel %vm9735, %v10100, %v10107
  %v10109 = vrot.slane %v10104, 4
  %v10111 = vshrl.u32 %v9713, 16
  %v10113 = vrot.slane %v10111, 7
  %v10114 = vshll.u32 %v9713, 16
  %v10116 = vor.u32 %v10113, %v10114
  %v10117 = vrot.slane %v10113, 4
  %v10119 = vshrl.u32 %v9714, 16
  %v10121 = vrot.slane %v10119, 7
  %v10122 = vshll.u32 %v9714, 16
  %v10124 = vor.u32 %v10121, %v10122
  %v10125 = vsel %vm9735, %v10117, %v10124
  %v10126 = vrot.slane %v10121, 4
  %v10128 = vshrl.u32 %v9715, 16
  %v10130 = vrot.slane %v10128, 7
  %v10131 = vshll.u32 %v9715, 16
  %v10133 = vor.u32 %v10130, %v10131
  %v10134 = vrot.slane %v10130, 4
  %v10136 = vshrl.u32 %v9716, 16
  %v10138 = vrot.slane %v10136, 7
  %v10139 = vshll.u32 %v9716, 16
  %v10141 = vor.u32 %v10138, %v10139
  %v10142 = vsel %vm9735, %v10134, %v10141
  %v10143 = vrot.slane %v10138, 4
  %v10145 = vshrl.u32 %v9717, 16
  %v10147 = vrot.slane %v10145, 7
  %v10148 = vshll.u32 %v9717, 16
  %v10150 = vor.u32 %v10147, %v10148
  %v10151 = vrot.slane %v10147, 4
  %v10153 = vshrl.u32 %v9718, 16
  %v10155 = vrot.slane %v10153, 7
  %v10156 = vshll.u32 %v9718, 16
  %v10158 = vor.u32 %v10155, %v10156
  %v10159 = vsel %vm9735, %v10151, %v10158
  %v10160 = vrot.slane %v10155, 4
  %v10162 = vshrl.u32 %v9719, 16
  %v10164 = vrot.slane %v10162, 7
  %v10165 = vshll.u32 %v9719, 16
  %v10167 = vor.u32 %v10164, %v10165
  %v10168 = vrot.slane %v10164, 4
  %v10170 = vshrl.u32 %v9720, 16
  %v10172 = vrot.slane %v10170, 7
  %v10173 = vshll.u32 %v9720, 16
  %v10175 = vor.u32 %v10172, %v10173
  %v10176 = vsel %vm9735, %v10168, %v10175
  %v10177 = vrot.slane %v10172, 4
  %v10179 = vshrl.u32 %v9721, 16
  %v10181 = vrot.slane %v10179, 7
  %v10182 = vshll.u32 %v9721, 16
  %v10184 = vor.u32 %v10181, %v10182
  %v10185 = vrot.slane %v10181, 4
  %v10187 = vshrl.u32 %v9722, 16
  %v10189 = vrot.slane %v10187, 7
  %v10190 = vshll.u32 %v9722, 16
  %v10192 = vor.u32 %v10189, %v10190
  %v10193 = vsel %vm9735, %v10185, %v10192
  %v10194 = vrot.slane %v10189, 4
  %v10196 = vshrl.u32 %v9723, 16
  %v10198 = vrot.slane %v10196, 7
  %v10199 = vshll.u32 %v9723, 16
  %v10201 = vor.u32 %v10198, %v10199
  %v10202 = vrot.slane %v10198, 4
  %v10204 = vshrl.u32 %v9724, 16
  %v10206 = vrot.slane %v10204, 7
  %v10207 = vshll.u32 %v9724, 16
  %v10209 = vor.u32 %v10206, %v10207
  %v10210 = vsel %vm9735, %v10202, %v10209
  %v10211 = vrot.slane %v10206, 4
  %v10213 = vshrl.u32 %v9725, 16
  %v10215 = vrot.slane %v10213, 7
  %v10216 = vshll.u32 %v9725, 16
  %v10218 = vor.u32 %v10215, %v10216
  %v10219 = vrot.slane %v10215, 4
  %v10221 = vshrl.u32 %v9726, 16
  %v10223 = vrot.slane %v10221, 7
  %v10224 = vshll.u32 %v9726, 16
  %v10226 = vor.u32 %v10223, %v10224
  %v10227 = vsel %vm9735, %v10219, %v10226
  %v10228 = vrot.slane %v10223, 4
  %v10230 = vshrl.u32 %v9727, 16
  %v10232 = vrot.slane %v10230, 7
  %v10233 = vshll.u32 %v9727, 16
  %v10235 = vor.u32 %v10232, %v10233
  %v10236 = vrot.slane %v10232, 4
  %v10238 = vshrl.u32 %v9728, 16
  %v10240 = vrot.slane %v10238, 7
  %v10241 = vshll.u32 %v9728, 16
  %v10243 = vor.u32 %v10240, %v10241
  %v10244 = vsel %vm9735, %v10236, %v10243
  %v10245 = vrot.slane %v10240, 4
  %v10247 = vshrl.u32 %v9729, 16
  %v10249 = vrot.slane %v10247, 7
  %v10250 = vshll.u32 %v9729, 16
  %v10252 = vor.u32 %v10249, %v10250
  %v10253 = vrot.slane %v10249, 4
  %v10255 = vshrl.u32 %v9730, 16
  %v10257 = vrot.slane %v10255, 7
  %v10258 = vshll.u32 %v9730, 16
  %v10260 = vor.u32 %v10257, %v10258
  %v10261 = vsel %vm9735, %v10253, %v10260
  %v10262 = vrot.slane %v10257, 4
  %v10264 = vshrl.u32 %v9731, 16
  %v10266 = vrot.slane %v10264, 7
  %v10267 = vshll.u32 %v9731, 16
  %v10269 = vor.u32 %v10266, %v10267
  %v10270 = vrot.slane %v10266, 4
  %v10272 = vshrl.u32 %v9732, 16
  %v10274 = vrot.slane %v10272, 7
  %v10275 = vshll.u32 %v9732, 16
  %v10277 = vor.u32 %v10274, %v10275
  %v10278 = vsel %vm9735, %v10270, %v10277
  %v10279 = vrot.slane %v10274, 4
  %s10376 = scalar_lea.vmem %s4, 12
  %vm10377 = vcmask 1043456
  %vm10378 = vsmask.f32 7938
  %vm10379 = vmand %vm10377, %vm10378
  %v10380 = vld [vmem:[%s10376] sm:$0xf]
  %v10381 = vsel %vm10379, %v9742, %v10380
  %10382 = vst [vmem:[%s10376] sm:$0xf] %v10381
  %10383 = vst [vmem:[%s10376 + $0x4] sm:$0xf] %v9751
  %vm10384 = vcmask 1040384
  %vm10385 = vmand %vm10384, %vm9733
  %v10386 = vld [vmem:[%s10376 + $0x8] sm:$0x1]
  %v10387 = vsel %vm10385, %v9752, %v10386
  %10388 = vst [vmem:[%s10376 + $0x8] sm:$0x1] %v10387
  %v10389 = vld [vmem:[%s10376 + $0xc] sm:$0xf]
  %v10390 = vsel %vm10379, %v9759, %v10389
  %10391 = vst [vmem:[%s10376 + $0xc] sm:$0xf] %v10390
  %10392 = vst [vmem:[%s10376 + $0x10] sm:$0xf] %v9768
  %v10393 = vld [vmem:[%s10376 + $0x14] sm:$0x1]
  %v10394 = vsel %vm10385, %v9769, %v10393
  %10395 = vst [vmem:[%s10376 + $0x14] sm:$0x1] %v10394
  %v10396 = vld [vmem:[%s10376 + $0x18] sm:$0xf]
  %v10397 = vsel %vm10379, %v9776, %v10396
  %10398 = vst [vmem:[%s10376 + $0x18] sm:$0xf] %v10397
  %10399 = vst [vmem:[%s10376 + $0x1c] sm:$0xf] %v9785
  %v10400 = vld [vmem:[%s10376 + $0x20] sm:$0x1]
  %v10401 = vsel %vm10385, %v9786, %v10400
  %10402 = vst [vmem:[%s10376 + $0x20] sm:$0x1] %v10401
  %v10403 = vld [vmem:[%s10376 + $0x24] sm:$0xf]
  %v10404 = vsel %vm10379, %v9793, %v10403
  %10405 = vst [vmem:[%s10376 + $0x24] sm:$0xf] %v10404
  %10406 = vst [vmem:[%s10376 + $0x28] sm:$0xf] %v9802
  %v10407 = vld [vmem:[%s10376 + $0x2c] sm:$0x1]
  %v10408 = vsel %vm10385, %v9803, %v10407
  %10409 = vst [vmem:[%s10376 + $0x2c] sm:$0x1] %v10408
  %v10410 = vld [vmem:[%s10376 + $0x30] sm:$0xf]
  %v10411 = vsel %vm10379, %v9810, %v10410
  %10412 = vst [vmem:[%s10376 + $0x30] sm:$0xf] %v10411
  %10413 = vst [vmem:[%s10376 + $0x34] sm:$0xf] %v9819
  %v10414 = vld [vmem:[%s10376 + $0x38] sm:$0x1]
  %v10415 = vsel %vm10385, %v9820, %v10414
  %10416 = vst [vmem:[%s10376 + $0x38] sm:$0x1] %v10415
  %v10417 = vld [vmem:[%s10376 + $0x3c] sm:$0xf]
  %v10418 = vsel %vm10379, %v9827, %v10417
  %10419 = vst [vmem:[%s10376 + $0x3c] sm:$0xf] %v10418
  %10420 = vst [vmem:[%s10376 + $0x40] sm:$0xf] %v9836
  %v10421 = vld [vmem:[%s10376 + $0x44] sm:$0x1]
  %v10422 = vsel %vm10385, %v9837, %v10421
  %10423 = vst [vmem:[%s10376 + $0x44] sm:$0x1] %v10422
  %v10424 = vld [vmem:[%s10376 + $0x48] sm:$0xf]
  %v10425 = vsel %vm10379, %v9844, %v10424
  %10426 = vst [vmem:[%s10376 + $0x48] sm:$0xf] %v10425
  %10427 = vst [vmem:[%s10376 + $0x4c] sm:$0xf] %v9853
  %v10428 = vld [vmem:[%s10376 + $0x50] sm:$0x1]
  %v10429 = vsel %vm10385, %v9854, %v10428
  %10430 = vst [vmem:[%s10376 + $0x50] sm:$0x1] %v10429
  %v10431 = vld [vmem:[%s10376 + $0x54] sm:$0xf]
  %v10432 = vsel %vm10379, %v9861, %v10431
  %10433 = vst [vmem:[%s10376 + $0x54] sm:$0xf] %v10432
  %10434 = vst [vmem:[%s10376 + $0x58] sm:$0xf] %v9870
  %v10435 = vld [vmem:[%s10376 + $0x5c] sm:$0x1]
  %v10436 = vsel %vm10385, %v9871, %v10435
  %10437 = vst [vmem:[%s10376 + $0x5c] sm:$0x1] %v10436
  %v10438 = vld [vmem:[%s10376 + $0x60] sm:$0xf]
  %v10439 = vsel %vm10379, %v9878, %v10438
  %10440 = vst [vmem:[%s10376 + $0x60] sm:$0xf] %v10439
  %10441 = vst [vmem:[%s10376 + $0x64] sm:$0xf] %v9887
  %v10442 = vld [vmem:[%s10376 + $0x68] sm:$0x1]
  %v10443 = vsel %vm10385, %v9888, %v10442
  %10444 = vst [vmem:[%s10376 + $0x68] sm:$0x1] %v10443
  %v10445 = vld [vmem:[%s10376 + $0x6c] sm:$0xf]
  %v10446 = vsel %vm10379, %v9895, %v10445
  %10447 = vst [vmem:[%s10376 + $0x6c] sm:$0xf] %v10446
  %10448 = vst [vmem:[%s10376 + $0x70] sm:$0xf] %v9904
  %v10449 = vld [vmem:[%s10376 + $0x74] sm:$0x1]
  %v10450 = vsel %vm10385, %v9905, %v10449
  %10451 = vst [vmem:[%s10376 + $0x74] sm:$0x1] %v10450
  %v10452 = vld [vmem:[%s10376 + $0x78] sm:$0xf]
  %v10453 = vsel %vm10379, %v9912, %v10452
  %10454 = vst [vmem:[%s10376 + $0x78] sm:$0xf] %v10453
  %10455 = vst [vmem:[%s10376 + $0x7c] sm:$0xf] %v9921
  %v10456 = vld [vmem:[%s10376 + $0x80] sm:$0x1]
  %v10457 = vsel %vm10385, %v9922, %v10456
  %10458 = vst [vmem:[%s10376 + $0x80] sm:$0x1] %v10457
  %v10459 = vld [vmem:[%s10376 + $0x84] sm:$0xf]
  %v10460 = vsel %vm10379, %v9929, %v10459
  %10461 = vst [vmem:[%s10376 + $0x84] sm:$0xf] %v10460
  %10462 = vst [vmem:[%s10376 + $0x88] sm:$0xf] %v9938
  %v10463 = vld [vmem:[%s10376 + $0x8c] sm:$0x1]
  %v10464 = vsel %vm10385, %v9939, %v10463
  %10465 = vst [vmem:[%s10376 + $0x8c] sm:$0x1] %v10464
  %v10466 = vld [vmem:[%s10376 + $0x90] sm:$0xf]
  %v10467 = vsel %vm10379, %v9946, %v10466
  %10468 = vst [vmem:[%s10376 + $0x90] sm:$0xf] %v10467
  %10469 = vst [vmem:[%s10376 + $0x94] sm:$0xf] %v9955
  %v10470 = vld [vmem:[%s10376 + $0x98] sm:$0x1]
  %v10471 = vsel %vm10385, %v9956, %v10470
  %10472 = vst [vmem:[%s10376 + $0x98] sm:$0x1] %v10471
  %v10473 = vld [vmem:[%s10376 + $0x9c] sm:$0xf]
  %v10474 = vsel %vm10379, %v9963, %v10473
  %10475 = vst [vmem:[%s10376 + $0x9c] sm:$0xf] %v10474
  %10476 = vst [vmem:[%s10376 + $0xa0] sm:$0xf] %v9972
  %v10477 = vld [vmem:[%s10376 + $0xa4] sm:$0x1]
  %v10478 = vsel %vm10385, %v9973, %v10477
  %10479 = vst [vmem:[%s10376 + $0xa4] sm:$0x1] %v10478
  %v10480 = vld [vmem:[%s10376 + $0xa8] sm:$0xf]
  %v10481 = vsel %vm10379, %v9980, %v10480
  %10482 = vst [vmem:[%s10376 + $0xa8] sm:$0xf] %v10481
  %10483 = vst [vmem:[%s10376 + $0xac] sm:$0xf] %v9989
  %v10484 = vld [vmem:[%s10376 + $0xb0] sm:$0x1]
  %v10485 = vsel %vm10385, %v9990, %v10484
  %10486 = vst [vmem:[%s10376 + $0xb0] sm:$0x1] %v10485
  %v10487 = vld [vmem:[%s10376 + $0xb4] sm:$0xf]
  %v10488 = vsel %vm10379, %v9997, %v10487
  %10489 = vst [vmem:[%s10376 + $0xb4] sm:$0xf] %v10488
  %10490 = vst [vmem:[%s10376 + $0xb8] sm:$0xf] %v10006
  %v10491 = vld [vmem:[%s10376 + $0xbc] sm:$0x1]
  %v10492 = vsel %vm10385, %v10007, %v10491
  %10493 = vst [vmem:[%s10376 + $0xbc] sm:$0x1] %v10492
  %v10494 = vld [vmem:[%s10376 + $0xd8] sm:$0xf]
  %v10495 = vsel %vm10379, %v10014, %v10494
  %10496 = vst [vmem:[%s10376 + $0xd8] sm:$0xf] %v10495
  %10497 = vst [vmem:[%s10376 + $0xdc] sm:$0xf] %v10023
  %v10498 = vld [vmem:[%s10376 + $0xe0] sm:$0x1]
  %v10499 = vsel %vm10385, %v10024, %v10498
  %10500 = vst [vmem:[%s10376 + $0xe0] sm:$0x1] %v10499
  %v10501 = vld [vmem:[%s10376 + $0xe4] sm:$0xf]
  %v10502 = vsel %vm10379, %v10031, %v10501
  %10503 = vst [vmem:[%s10376 + $0xe4] sm:$0xf] %v10502
  %10504 = vst [vmem:[%s10376 + $0xe8] sm:$0xf] %v10040
  %v10505 = vld [vmem:[%s10376 + $0xec] sm:$0x1]
  %v10506 = vsel %vm10385, %v10041, %v10505
  %10507 = vst [vmem:[%s10376 + $0xec] sm:$0x1] %v10506
  %v10508 = vld [vmem:[%s10376 + $0xf0] sm:$0xf]
  %v10509 = vsel %vm10379, %v10048, %v10508
  %10510 = vst [vmem:[%s10376 + $0xf0] sm:$0xf] %v10509
  %10511 = vst [vmem:[%s10376 + $0xf4] sm:$0xf] %v10057
  %v10512 = vld [vmem:[%s10376 + $0xf8] sm:$0x1]
  %v10513 = vsel %vm10385, %v10058, %v10512
  %10514 = vst [vmem:[%s10376 + $0xf8] sm:$0x1] %v10513
  %v10515 = vld [vmem:[%s10376 + $0xfc] sm:$0xf]
  %v10516 = vsel %vm10379, %v10065, %v10515
  %10517 = vst [vmem:[%s10376 + $0xfc] sm:$0xf] %v10516
  %10518 = vst [vmem:[%s10376 + $0x100] sm:$0xf] %v10074
  %v10519 = vld [vmem:[%s10376 + $0x104] sm:$0x1]
  %v10520 = vsel %vm10385, %v10075, %v10519
  %10521 = vst [vmem:[%s10376 + $0x104] sm:$0x1] %v10520
  %v10522 = vld [vmem:[%s10376 + $0x108] sm:$0xf]
  %v10523 = vsel %vm10379, %v10082, %v10522
  %10524 = vst [vmem:[%s10376 + $0x108] sm:$0xf] %v10523
  %10525 = vst [vmem:[%s10376 + $0x10c] sm:$0xf] %v10091
  %v10526 = vld [vmem:[%s10376 + $0x110] sm:$0x1]
  %v10527 = vsel %vm10385, %v10092, %v10526
  %10528 = vst [vmem:[%s10376 + $0x110] sm:$0x1] %v10527
  %v10529 = vld [vmem:[%s10376 + $0x114] sm:$0xf]
  %v10530 = vsel %vm10379, %v10099, %v10529
  %10531 = vst [vmem:[%s10376 + $0x114] sm:$0xf] %v10530
  %10532 = vst [vmem:[%s10376 + $0x118] sm:$0xf] %v10108
  %v10533 = vld [vmem:[%s10376 + $0x11c] sm:$0x1]
  %v10534 = vsel %vm10385, %v10109, %v10533
  %10535 = vst [vmem:[%s10376 + $0x11c] sm:$0x1] %v10534
  %v10536 = vld [vmem:[%s10376 + $0x120] sm:$0xf]
  %v10537 = vsel %vm10379, %v10116, %v10536
  %10538 = vst [vmem:[%s10376 + $0x120] sm:$0xf] %v10537
  %10539 = vst [vmem:[%s10376 + $0x124] sm:$0xf] %v10125
  %v10540 = vld [vmem:[%s10376 + $0x128] sm:$0x1]
  %v10541 = vsel %vm10385, %v10126, %v10540
  %10542 = vst [vmem:[%s10376 + $0x128] sm:$0x1] %v10541
  %v10543 = vld [vmem:[%s10376 + $0x12c] sm:$0xf]
  %v10544 = vsel %vm10379, %v10133, %v10543
  %10545 = vst [vmem:[%s10376 + $0x12c] sm:$0xf] %v10544
  %10546 = vst [vmem:[%s10376 + $0x130] sm:$0xf] %v10142
  %v10547 = vld [vmem:[%s10376 + $0x134] sm:$0x1]
  %v10548 = vsel %vm10385, %v10143, %v10547
  %10549 = vst [vmem:[%s10376 + $0x134] sm:$0x1] %v10548
  %v10550 = vld [vmem:[%s10376 + $0x138] sm:$0xf]
  %v10551 = vsel %vm10379, %v10150, %v10550
  %10552 = vst [vmem:[%s10376 + $0x138] sm:$0xf] %v10551
  %10553 = vst [vmem:[%s10376 + $0x13c] sm:$0xf] %v10159
  %v10554 = vld [vmem:[%s10376 + $0x140] sm:$0x1]
  %v10555 = vsel %vm10385, %v10160, %v10554
  %10556 = vst [vmem:[%s10376 + $0x140] sm:$0x1] %v10555
  %v10557 = vld [vmem:[%s10376 + $0x144] sm:$0xf]
  %v10558 = vsel %vm10379, %v10167, %v10557
  %10559 = vst [vmem:[%s10376 + $0x144] sm:$0xf] %v10558
  %10560 = vst [vmem:[%s10376 + $0x148] sm:$0xf] %v10176
  %v10561 = vld [vmem:[%s10376 + $0x14c] sm:$0x1]
  %v10562 = vsel %vm10385, %v10177, %v10561
  %10563 = vst [vmem:[%s10376 + $0x14c] sm:$0x1] %v10562
  %v10564 = vld [vmem:[%s10376 + $0x150] sm:$0xf]
  %v10565 = vsel %vm10379, %v10184, %v10564
  %10566 = vst [vmem:[%s10376 + $0x150] sm:$0xf] %v10565
  %10567 = vst [vmem:[%s10376 + $0x154] sm:$0xf] %v10193
  %v10568 = vld [vmem:[%s10376 + $0x158] sm:$0x1]
  %v10569 = vsel %vm10385, %v10194, %v10568
  %10570 = vst [vmem:[%s10376 + $0x158] sm:$0x1] %v10569
  %v10571 = vld [vmem:[%s10376 + $0x15c] sm:$0xf]
  %v10572 = vsel %vm10379, %v10201, %v10571
  %10573 = vst [vmem:[%s10376 + $0x15c] sm:$0xf] %v10572
  %10574 = vst [vmem:[%s10376 + $0x160] sm:$0xf] %v10210
  %v10575 = vld [vmem:[%s10376 + $0x164] sm:$0x1]
  %v10576 = vsel %vm10385, %v10211, %v10575
  %10577 = vst [vmem:[%s10376 + $0x164] sm:$0x1] %v10576
  %v10578 = vld [vmem:[%s10376 + $0x168] sm:$0xf]
  %v10579 = vsel %vm10379, %v10218, %v10578
  %10580 = vst [vmem:[%s10376 + $0x168] sm:$0xf] %v10579
  %10581 = vst [vmem:[%s10376 + $0x16c] sm:$0xf] %v10227
  %v10582 = vld [vmem:[%s10376 + $0x170] sm:$0x1]
  %v10583 = vsel %vm10385, %v10228, %v10582
  %10584 = vst [vmem:[%s10376 + $0x170] sm:$0x1] %v10583
  %v10585 = vld [vmem:[%s10376 + $0x174] sm:$0xf]
  %v10586 = vsel %vm10379, %v10235, %v10585
  %10587 = vst [vmem:[%s10376 + $0x174] sm:$0xf] %v10586
  %10588 = vst [vmem:[%s10376 + $0x178] sm:$0xf] %v10244
  %v10589 = vld [vmem:[%s10376 + $0x17c] sm:$0x1]
  %v10590 = vsel %vm10385, %v10245, %v10589
  %10591 = vst [vmem:[%s10376 + $0x17c] sm:$0x1] %v10590
  %v10592 = vld [vmem:[%s10376 + $0x180] sm:$0xf]
  %v10593 = vsel %vm10379, %v10252, %v10592
  %10594 = vst [vmem:[%s10376 + $0x180] sm:$0xf] %v10593
  %10595 = vst [vmem:[%s10376 + $0x184] sm:$0xf] %v10261
  %v10596 = vld [vmem:[%s10376 + $0x188] sm:$0x1]
  %v10597 = vsel %vm10385, %v10262, %v10596
  %10598 = vst [vmem:[%s10376 + $0x188] sm:$0x1] %v10597
  %v10599 = vld [vmem:[%s10376 + $0x18c] sm:$0xf]
  %v10600 = vsel %vm10379, %v10269, %v10599
  %10601 = vst [vmem:[%s10376 + $0x18c] sm:$0xf] %v10600
  %10602 = vst [vmem:[%s10376 + $0x190] sm:$0xf] %v10278
  %v10603 = vld [vmem:[%s10376 + $0x194] sm:$0x1]
  %v10604 = vsel %vm10385, %v10279, %v10603
  %10605 = vst [vmem:[%s10376 + $0x194] sm:$0x1] %v10604
  // Predicated region
  $region14: #{_step_first.1} parent=0 // pred_check
    _
  $region15: #{_step_first.1} parent=0 // pred_check_branch
    %10607 = sbr.rel (0) target = $region17
  $region16: #{_step_first.1} parent=0 // pred_region
    _
  $region17: #{_step_first.1} parent=0 // pred_fallthru
    _
  // Predicated region
  $region18: #{_step_first.1} parent=0 // pred_check
    _
  $region19: #{_step_first.1} parent=0 // pred_check_branch
    %10609 = sbr.rel (0) target = $region21
  $region20: #{_step_first.1} parent=0 // pred_region
    _
  $region21: #{_step_first.1} parent=0 // pred_fallthru
    _
  // Predicated region
  $region22: #{_step_first.1} parent=0 // pred_check
    _
  $region23: #{_step_first.1} parent=0 // pred_check_branch
    %10611 = sbr.rel (0) target = $region25
  $region24: #{_step_first.1} parent=0 // pred_region
    _
  $region25: #{_step_first.1} parent=0 // pred_fallthru
    _
  // Predicated region
  $region26: #{_step_first.1} parent=0 // pred_check
    _
  $region27: #{_step_first.1} parent=0 // pred_check_branch
    %10613 = sbr.rel (0) target = $region29
  $region28: #{_step_first.1} parent=0 // pred_region
    _
  $region29: #{_step_first.1} parent=0 // pred_fallthru
    _

</llo_original>
